<compile_context>
chip_gen: v6e
topology: v6e:2x2x1
jax: 0.10.0
libtpu: 0.0.40
codegen_flags: <defaults>
</compile_context>

<pallas_src>
import math
import functools

import jax
import jax.numpy as jnp
from jax.experimental import pallas as pl
from jax.experimental.pallas import tpu as pltpu


# MXU compute dtype for all matmuls (accumulation & epilogue stay f32).
# Set to jnp.float32 to recover bit-faithful f32 behaviour vs. the PyTorch ref.
COMPUTE_DTYPE = jnp.bfloat16

# Explicit scoped-VMEM budget: above the 16/32 MiB defaults, comfortably below
# v7x's 64 MiB physical VMEM.
VMEM_LIMIT = 48 * 1024 * 1024


def _mosaic_params(*semantics):
    return pltpu.CompilerParams(dimension_semantics=semantics,
                                vmem_limit_bytes=VMEM_LIMIT)


def _round_up(v, m):
    return ((v + m - 1) // m) * m


def _pick_tile_m(M, max_tm=512):
    # Big M tiles amortise the ~0.35us per-grid-step overhead (29% -> ~85% of
    # HBM roofline going 128 -> 512 rows), but keep >= 2 grid steps so v7x's
    # two TensorCores both get a "parallel" slice of the M axis.
    tm = min(max_tm, _round_up(M, 8))
    if M > 16 and _round_up(M, tm) // tm < 2:
        tm = _round_up((M + 1) // 2, 8)
    return tm


def _pick_tile_k(K, max_tk=1024):
    # Whole K in one block while it fits comfortably in VMEM; otherwise use
    # 512-wide K tiles (multiple of 128 satisfies the lane constraint) that are
    # accumulated in the f32 scratch across the "arbitrary" K grid axis.
    return K if K <= max_tk else 512


# ----------------------------------------------------------------------------
# Pallas kernels
# ----------------------------------------------------------------------------
def _mm_bn_relu_kernel(x_ref, w_ref, scale_ref, shift_ref, o_ref, acc_ref):
    """relu((x @ w) * scale + shift), K-accumulated into an f32 VMEM scratch."""
    k = pl.program_id(1)

    @pl.when(k == 0)
    def _init():
        acc_ref[...] = jnp.zeros_like(acc_ref)

    acc_ref[...] += jnp.dot(x_ref[...].astype(COMPUTE_DTYPE),
                            w_ref[...].astype(COMPUTE_DTYPE),
                            preferred_element_type=jnp.float32)

    @pl.when(k == pl.num_programs(1) - 1)
    def _finalize():
        o_ref[...] = jnp.maximum(
            acc_ref[...] * scale_ref[...] + shift_ref[...], 0.0
        ).astype(o_ref.dtype)


def _conv3x3_bn_relu_kernel(xp_ref, w_ref, scale_ref, shift_ref, o_ref):
    """3x3 conv (pad=1) + BN + ReLU as 9 shifted dots; no im2col in HBM.

    xp_ref : (1, H+2, W+2, Cin)  zero-padded activation block (one image)
    w_ref  : (9, Cin, Cout)      taps laid out as kh*3 + kw
    scale/shift : (1, Cout)      folded BatchNorm (+conv bias)
    o_ref  : (1, H, W, Cout)
    """
    H, W, Cout = o_ref.shape[1], o_ref.shape[2], o_ref.shape[3]
    Cin = xp_ref.shape[3]
    xp = xp_ref[0].astype(COMPUTE_DTYPE)                       # (H+2, W+2, Cin)
    acc = jnp.zeros((H * W, Cout), jnp.float32)
    for dh in range(3):
        for dw in range(3):
            patch = xp[dh:dh + H, dw:dw + W, :].reshape(H * W, Cin)
            acc = acc + jnp.dot(patch, w_ref[dh * 3 + dw],
                                preferred_element_type=jnp.float32)
    y = jnp.maximum(acc * scale_ref[...] + shift_ref[...], 0.0)
    o_ref[0] = y.reshape(H, W, Cout).astype(o_ref.dtype)


def _maxpool3x3_conv1x1_bn_relu_kernel(xp_ref, w_ref, scale_ref, shift_ref, o_ref):
    """Fused MaxPool2d(3, stride=1, pad=1) + 1x1 conv + BN + ReLU.

    xp_ref : (1, H+2, W+2, Cin)  -inf padded original activation
    w_ref  : (Cin, Cout)
    """
    H, W, Cout = o_ref.shape[1], o_ref.shape[2], o_ref.shape[3]
    Cin = xp_ref.shape[3]
    xp = xp_ref[0]                                             # (H+2, W+2, Cin)
    # Separable 3x3 max: 4 maximum ops instead of 8.
    v = jnp.maximum(jnp.maximum(xp[0:H], xp[1:H + 1]), xp[2:H + 2])        # (H, W+2, C)
    p = jnp.maximum(jnp.maximum(v[:, 0:W], v[:, 1:W + 1]), v[:, 2:W + 2])  # (H, W, C)
    acc = jnp.dot(p.reshape(H * W, Cin).astype(COMPUTE_DTYPE), w_ref[...],
                  preferred_element_type=jnp.float32)
    y = jnp.maximum(acc * scale_ref[...] + shift_ref[...], 0.0)
    o_ref[0] = y.reshape(H, W, Cout).astype(o_ref.dtype)


# ----------------------------------------------------------------------------
# Pallas wrappers
# ----------------------------------------------------------------------------
def fused_matmul_bn_relu(x, w, scale, shift):
    """relu((x @ w) * scale + shift), tiled over M and (if large) K."""
    M, K = x.shape
    Cout = w.shape[1]
    w = w.astype(COMPUTE_DTYPE)

    tm = _pick_tile_m(M)
    m_pad = _round_up(M, tm)
    if m_pad != M:
        x = jnp.pad(x, ((0, m_pad - M), (0, 0)))

    tk = _pick_tile_k(K)
    k_pad = _round_up(K, tk)
    if k_pad != K:
        x = jnp.pad(x, ((0, 0), (0, k_pad - K)))
        w = jnp.pad(w, ((0, k_pad - K), (0, 0)))

    nm, nk = m_pad // tm, k_pad // tk
    out = pl.pallas_call(
        _mm_bn_relu_kernel,
        out_shape=jax.ShapeDtypeStruct((m_pad, Cout), jnp.float32),
        grid_spec=pltpu.PrefetchScalarGridSpec(
            num_scalar_prefetch=0,
            grid=(nm, nk),
            in_specs=[
                pl.BlockSpec((tm, tk), lambda i, k: (i, k)),
                # weight / scale / shift are grid-invariant along M
                # (index_map constant in i) so they are DMA'd once per revisit.
                pl.BlockSpec((tk, Cout), lambda i, k: (k, 0)),
                pl.BlockSpec((1, Cout), lambda i, k: (0, 0)),
                pl.BlockSpec((1, Cout), lambda i, k: (0, 0)),
            ],
            out_specs=pl.BlockSpec((tm, Cout), lambda i, k: (i, 0)),
            scratch_shapes=[pltpu.VMEM((tm, Cout), jnp.float32)],
        ),
        compiler_params=_mosaic_params("parallel", "arbitrary"),
    )(x, w, scale, shift)
    return out[:M]


def conv3x3_bn_relu(x_nhwc, p, ticket):
    """SoftMaskedConv2d(3x3, pad=1) + BN + ReLU, one image per grid step."""
    N, H, W, Cin = x_nhwc.shape
    mw = apply_mask(p["w"], p["mw"], ticket)
    Cout = mw.shape[0]
    w9 = jnp.transpose(mw, (2, 3, 1, 0)).reshape(9, Cin, Cout).astype(COMPUTE_DTYPE)
    scale, shift = fold_bn(p)
    # Small zero halo only ((H+2)(W+2)Cin) — the 9x im2col blowup is gone.
    xp = jnp.pad(x_nhwc, ((0, 0), (1, 1), (1, 1), (0, 0)))
    return pl.pallas_call(
        _conv3x3_bn_relu_kernel,
        out_shape=jax.ShapeDtypeStruct((N, H, W, Cout), jnp.float32),
        grid_spec=pltpu.PrefetchScalarGridSpec(
            num_scalar_prefetch=0,
            grid=(N,),
            in_specs=[
                pl.BlockSpec((1, H + 2, W + 2, Cin), lambda n: (n, 0, 0, 0)),
                pl.BlockSpec((9, Cin, Cout), lambda n: (0, 0, 0)),
                pl.BlockSpec((1, Cout), lambda n: (0, 0)),
                pl.BlockSpec((1, Cout), lambda n: (0, 0)),
            ],
            out_specs=pl.BlockSpec((1, H, W, Cout), lambda n: (n, 0, 0, 0)),
        ),
        compiler_params=_mosaic_params("parallel"),
    )(xp, w9, scale, shift)


def maxpool3x3_conv1x1_bn_relu(x_nhwc, p, ticket):
    """Fused MaxPool2d(3,1,1) + SoftMaskedConv2d(1x1) + BN + ReLU."""
    N, H, W, Cin = x_nhwc.shape
    mw = apply_mask(p["w"], p["mw"], ticket)
    Cout = mw.shape[0]
    wmat = mw.reshape(Cout, Cin).T.astype(COMPUTE_DTYPE)       # (Cin, Cout)
    scale, shift = fold_bn(p)
    xp = jnp.pad(x_nhwc, ((0, 0), (1, 1), (1, 1), (0, 0)),
                 constant_values=-jnp.inf)
    return pl.pallas_call(
        _maxpool3x3_conv1x1_bn_relu_kernel,
        out_shape=jax.ShapeDtypeStruct((N, H, W, Cout), jnp.float32),
        grid_spec=pltpu.PrefetchScalarGridSpec(
            num_scalar_prefetch=0,
            grid=(N,),
            in_specs=[
                pl.BlockSpec((1, H + 2, W + 2, Cin), lambda n: (n, 0, 0, 0)),
                pl.BlockSpec((Cin, Cout), lambda n: (0, 0)),
                pl.BlockSpec((1, Cout), lambda n: (0, 0)),
                pl.BlockSpec((1, Cout), lambda n: (0, 0)),
            ],
            out_specs=pl.BlockSpec((1, H, W, Cout), lambda n: (n, 0, 0, 0)),
        ),
        compiler_params=_mosaic_params("parallel"),
    )(xp, wmat, scale, shift)


# ----------------------------------------------------------------------------
# Parameter setup / glue (plain JAX)
# ----------------------------------------------------------------------------
def make_conv_bn_params(key, cin, cout, k):
    ks = jax.random.split(key, 7)
    bound = 1.0 / math.sqrt(cin * k * k)
    return dict(
        w=jax.random.uniform(ks[0], (cout, cin, k, k), jnp.float32, -bound, bound),
        b=jax.random.uniform(ks[1], (cout,), jnp.float32, -bound, bound),
        mw=0.5 * jax.random.normal(ks[2], (cout, cin, k, k), jnp.float32),
        gamma=1.0 + 0.1 * jax.random.normal(ks[3], (cout,), jnp.float32),
        beta=0.1 * jax.random.normal(ks[4], (cout,), jnp.float32),
        rmean=0.1 * jax.random.normal(ks[5], (cout,), jnp.float32),
        rvar=1.0 + 0.1 * jax.random.uniform(ks[6], (cout,), jnp.float32),
    )


def apply_mask(w, mw, ticket):
    mask = (mw > 0).astype(w.dtype) if ticket else jax.nn.sigmoid(mw)
    return w * mask


def fold_bn(p, eps=1e-5):
    s = p["gamma"] / jnp.sqrt(p["rvar"] + eps)
    scale = s.reshape(1, -1)
    shift = (p["beta"] + (p["b"] - p["rmean"]) * s).reshape(1, -1)
    return scale, shift


def init_inception_params(key, in_planes, n1x1, n3x3red, n3x3, n5x5red, n5x5,
                          pool_planes):
    ks = jax.random.split(key, 8)
    params = {}
    if n1x1:
        params["b1"] = [make_conv_bn_params(ks[0], in_planes, n1x1, 1)]
    if n3x3:
        params["b2"] = [make_conv_bn_params(ks[1], in_planes, n3x3red, 1),
                        make_conv_bn_params(ks[2], n3x3red, n3x3, 3)]
    if n5x5 > 0:
        params["b3"] = [make_conv_bn_params(ks[3], in_planes, n5x5red, 1),
                        make_conv_bn_params(ks[4], n5x5red, n5x5, 3),
                        make_conv_bn_params(ks[5], n5x5, n5x5, 3)]
    if pool_planes > 0:
        params["b4"] = [make_conv_bn_params(ks[6], in_planes, pool_planes, 1)]
    return params


# ----------------------------------------------------------------------------
# Forward
# ----------------------------------------------------------------------------
def inception_sparse_forward(x_nchw, params, cfg, ticket):
    # Wrapper converts NCHW -> NHWC, kernels run channels-last, result is
    # converted back to NCHW to match torch.cat(out, 1).
    x = jnp.transpose(x_nchw, (0, 2, 3, 1)).astype(jnp.float32)
    N, H, W, Cin = x.shape
    M = N * H * W

    # ---- fused 1x1 "stem": branch1x1 + 3x3-reduce + 5x5-reduce share input x.
    # One lane-denser matmul (concat weight columns / scale / shift), x is read
    # from HBM once instead of three times.
    stem = []
    if cfg["n1x1"]:
        stem.append(("b1", params["b1"][0]))
    if cfg["n3x3"]:
        stem.append(("b2", params["b2"][0]))
    if cfg["n5x5"]:
        stem.append(("b3", params["b3"][0]))

    stem_out = {}
    if stem:
        ws, scs, shs, cols = [], [], [], []
        for _, p in stem:
            mw = apply_mask(p["w"], p["mw"], ticket)
            co = mw.shape[0]
            ws.append(mw.reshape(co, Cin).T)                   # (Cin, co)
            s, sh = fold_bn(p)
            scs.append(s)
            shs.append(sh)
            cols.append(co)
        y = fused_matmul_bn_relu(
            x.reshape(M, Cin),
            jnp.concatenate(ws, axis=1),
            jnp.concatenate(scs, axis=1),
            jnp.concatenate(shs, axis=1),
        ).reshape(N, H, W, sum(cols))
        off = 0
        for (bk, _), co in zip(stem, cols):
            stem_out[bk] = y[..., off:off + co]
            off += co

    outs = []
    if cfg["n1x1"]:
        outs.append(stem_out["b1"])
    if cfg["n3x3"]:
        y2 = conv3x3_bn_relu(stem_out["b2"], params["b2"][1], ticket)
        outs.append(y2)
    if cfg["n5x5"]:
        y3 = conv3x3_bn_relu(stem_out["b3"], params["b3"][1], ticket)
        y3 = conv3x3_bn_relu(y3, params["b3"][2], ticket)
        outs.append(y3)
    if cfg["pool_planes"]:
        outs.append(maxpool3x3_conv1x1_bn_relu(x, params["b4"][0], ticket))

    out = jnp.concatenate(outs, axis=-1)                       # NHWC concat == NCHW dim-1
    return jnp.transpose(out, (0, 3, 1, 2))


# ----------------------------------------------------------------------------
if __name__ == "__main__":
    # Small config consistent with the module: Inception_sparse(4, 8, 4, 8, 4, 8, 8)
    cfg = dict(in_planes=4, n1x1=8, n3x3red=4, n3x3=8, n5x5red=4, n5x5=8,
               pool_planes=8)

    key = jax.random.PRNGKey(0)
    kx, kp = jax.random.split(key)
    x = jax.random.normal(kx, (2, cfg["in_planes"], 16, 16), jnp.float32)  # NCHW

    params = init_inception_params(
        kp, cfg["in_planes"], cfg["n1x1"], cfg["n3x3red"], cfg["n3x3"],
        cfg["n5x5red"], cfg["n5x5"], cfg["pool_planes"])

    ticket = False  # soft (sigmoid) mask; True would use the hard (>0) ticket mask

    fwd = jax.jit(functools.partial(
        inception_sparse_forward, params=params, cfg=cfg, ticket=ticket))
    out = jax.block_until_ready(fwd(x))

    expected_c = cfg["n1x1"] + cfg["n3x3"] + cfg["n5x5"] + cfg["pool_planes"]
    assert out.shape == (2, expected_c, 16, 16), out.shape
    assert bool(jnp.all(out >= 0.0))  # ReLU epilogue
    print("KERNEL_OK")
</pallas_src>

<mosaic_0001>
module attributes {stable_mosaic.version = 11 : i64} {
  func.func @_maxpool3x3_conv1x1_bn_relu_kernel(%arg0: i32, %arg1: memref<1x18x18x4xf32, #tpu.memory_space<vmem>>, %arg2: memref<4x8xbf16, #tpu.memory_space<vmem>>, %arg3: memref<1x8xf32, #tpu.memory_space<vmem>>, %arg4: memref<1x8xf32, #tpu.memory_space<vmem>>, %arg5: memref<1x16x16x8xf32, #tpu.memory_space<vmem>>) attributes {dimension_semantics = [#tpu.dimension_semantics<parallel>], iteration_bounds = array<i64: 2>, scalar_prefetch = 0 : i64, scratch_operands = 0 : i64, tpu.core_type = #tpu.core_type<tc>, window_params = [{transform_indices = @transform_0, window_bounds = array<i64: 1, 18, 18, 4>}, {pipeline_mode = #tpu.pipeline_mode<synchronous>, transform_indices = @transform_1, window_bounds = array<i64: 4, 8>}, {pipeline_mode = #tpu.pipeline_mode<synchronous>, transform_indices = @transform_2, window_bounds = array<i64: 1, 8>}, {pipeline_mode = #tpu.pipeline_mode<synchronous>, transform_indices = @transform_3, window_bounds = array<i64: 1, 8>}, {transform_indices = @transform_4, window_bounds = array<i64: 1, 16, 16, 8>}]} {
    %c0 = arith.constant 0 : index
    %c0_0 = arith.constant 0 : index
    %c0_1 = arith.constant 0 : index
    %c0_2 = arith.constant 0 : index
    %0 = vector.load %arg1[%c0, %c0_0, %c0_1, %c0_2] : memref<1x18x18x4xf32, #tpu.memory_space<vmem>>, vector<1x18x18x4xf32>
    %1 = vector.shape_cast %0 : vector<1x18x18x4xf32> to vector<18x18x4xf32>
    %2 = vector.extract_strided_slice %1 {offsets = [0, 0, 0], sizes = [16, 18, 4], strides = [1, 1, 1]} : vector<18x18x4xf32> to vector<16x18x4xf32>
    %3 = vector.extract_strided_slice %1 {offsets = [1, 0, 0], sizes = [16, 18, 4], strides = [1, 1, 1]} : vector<18x18x4xf32> to vector<16x18x4xf32>
    %4 = arith.maximumf %2, %3 : vector<16x18x4xf32>
    %5 = vector.extract_strided_slice %1 {offsets = [2, 0, 0], sizes = [16, 18, 4], strides = [1, 1, 1]} : vector<18x18x4xf32> to vector<16x18x4xf32>
    %6 = arith.maximumf %4, %5 : vector<16x18x4xf32>
    %7 = vector.extract_strided_slice %6 {offsets = [0, 0, 0], sizes = [16, 16, 4], strides = [1, 1, 1]} : vector<16x18x4xf32> to vector<16x16x4xf32>
    %8 = vector.extract_strided_slice %6 {offsets = [0, 1, 0], sizes = [16, 16, 4], strides = [1, 1, 1]} : vector<16x18x4xf32> to vector<16x16x4xf32>
    %9 = arith.maximumf %7, %8 : vector<16x16x4xf32>
    %10 = vector.extract_strided_slice %6 {offsets = [0, 2, 0], sizes = [16, 16, 4], strides = [1, 1, 1]} : vector<16x18x4xf32> to vector<16x16x4xf32>
    %11 = arith.maximumf %9, %10 : vector<16x16x4xf32>
    %12 = vector.shape_cast %11 : vector<16x16x4xf32> to vector<256x4xf32>
    %13 = arith.truncf %12 : vector<256x4xf32> to vector<256x4xbf16>
    %c0_3 = arith.constant 0 : index
    %c0_4 = arith.constant 0 : index
    %14 = vector.load %arg2[%c0_3, %c0_4] : memref<4x8xbf16, #tpu.memory_space<vmem>>, vector<4x8xbf16>
    %cst = arith.constant dense<0.000000e+00> : vector<256x8xf32>
    %15 = tpu.matmul %13, %14, %cst {dimension_numbers = #tpu.dot_dimension_numbers<[1], [0], [0], [1], [0, 0, 1, 1], [], []>} : vector<256x4xbf16>, vector<4x8xbf16>, vector<256x8xf32> -> vector<256x8xf32>
    %c0_5 = arith.constant 0 : index
    %c0_6 = arith.constant 0 : index
    %16 = vector.load %arg3[%c0_5, %c0_6] : memref<1x8xf32, #tpu.memory_space<vmem>>, vector<1x8xf32>
    %17 = vector.broadcast %16 : vector<1x8xf32> to vector<256x8xf32>
    %18 = arith.mulf %15, %17 : vector<256x8xf32>
    %c0_7 = arith.constant 0 : index
    %c0_8 = arith.constant 0 : index
    %19 = vector.load %arg4[%c0_7, %c0_8] : memref<1x8xf32, #tpu.memory_space<vmem>>, vector<1x8xf32>
    %20 = vector.broadcast %19 : vector<1x8xf32> to vector<256x8xf32>
    %21 = arith.addf %18, %20 : vector<256x8xf32>
    %cst_9 = arith.constant 0.000000e+00 : f32
    %22 = vector.broadcast %cst_9 : f32 to vector<256x8xf32>
    %23 = arith.maximumf %21, %22 : vector<256x8xf32>
    %24 = vector.shape_cast %23 : vector<256x8xf32> to vector<16x16x8xf32>
    %c0_10 = arith.constant 0 : index
    %c0_11 = arith.constant 0 : index
    %c0_12 = arith.constant 0 : index
    %c0_13 = arith.constant 0 : index
    %25 = vector.load %arg5[%c0_10, %c0_11, %c0_12, %c0_13] : memref<1x16x16x8xf32, #tpu.memory_space<vmem>>, vector<1x16x16x8xf32>
    %26 = vector.shape_cast %25 : vector<1x16x16x8xf32> to vector<16x16x8xf32>
    %27 = vector.shape_cast %24 : vector<16x16x8xf32> to vector<1x16x16x8xf32>
    tpu.vector_store %arg5[%c0_10, %c0_11, %c0_12, %c0_13], %27 {strides = array<i32>} : memref<1x16x16x8xf32, #tpu.memory_space<vmem>>, vector<1x16x16x8xf32>,
    return
  }
  func.func @transform_0(%arg0: i32) -> (i32, i32, i32, i32) {
    %c0_i32 = arith.constant 0 : i32
    %c0_i32_0 = arith.constant 0 : i32
    %c0_i32_1 = arith.constant 0 : i32
    %c0_i32_2 = arith.constant 0 : i32
    return %arg0, %c0_i32, %c0_i32_0, %c0_i32_1 : i32, i32, i32, i32
  }
  func.func @transform_1(%arg0: i32) -> (i32, i32) {
    %c0_i32 = arith.constant 0 : i32
    %c0_i32_0 = arith.constant 0 : i32
    %c0_i32_1 = arith.constant 0 : i32
    return %c0_i32, %c0_i32_0 : i32, i32
  }
  func.func @transform_2(%arg0: i32) -> (i32, i32) {
    %c0_i32 = arith.constant 0 : i32
    %c0_i32_0 = arith.constant 0 : i32
    %c0_i32_1 = arith.constant 0 : i32
    return %c0_i32, %c0_i32_0 : i32, i32
  }
  func.func @transform_3(%arg0: i32) -> (i32, i32) {
    %c0_i32 = arith.constant 0 : i32
    %c0_i32_0 = arith.constant 0 : i32
    %c0_i32_1 = arith.constant 0 : i32
    return %c0_i32, %c0_i32_0 : i32, i32
  }
  func.func @transform_4(%arg0: i32) -> (i32, i32, i32, i32) {
    %c0_i32 = arith.constant 0 : i32
    %c0_i32_0 = arith.constant 0 : i32
    %c0_i32_1 = arith.constant 0 : i32
    %c0_i32_2 = arith.constant 0 : i32
    return %arg0, %c0_i32, %c0_i32_0, %c0_i32_1 : i32, i32, i32, i32
  }
}

module attributes {stable_mosaic.version = 11 : i64} {
  func.func @_mm_bn_relu_kernel(%arg0: i32, %arg1: i32, %arg2: memref<256x4xf32, #tpu.memory_space<vmem>>, %arg3: memref<4x16xbf16, #tpu.memory_space<vmem>>, %arg4: memref<1x16xf32, #tpu.memory_space<vmem>>, %arg5: memref<1x16xf32, #tpu.memory_space<vmem>>, %arg6: memref<256x16xf32, #tpu.memory_space<vmem>>, %arg7: memref<256x16xf32, #tpu.memory_space<vmem>>) attributes {dimension_semantics = [#tpu.dimension_semantics<parallel>, #tpu.dimension_semantics<arbitrary>], iteration_bounds = array<i64: 2, 1>, scalar_prefetch = 0 : i64, scratch_operands = 1 : i64, tpu.core_type = #tpu.core_type<tc>, window_params = [{transform_indices = @transform_0, window_bounds = array<i64: 256, 4>}, {transform_indices = @transform_1, window_bounds = array<i64: 4, 16>}, {pipeline_mode = #tpu.pipeline_mode<synchronous>, transform_indices = @transform_2, window_bounds = array<i64: 1, 16>}, {pipeline_mode = #tpu.pipeline_mode<synchronous>, transform_indices = @transform_3, window_bounds = array<i64: 1, 16>}, {transform_indices = @transform_4, window_bounds = array<i64: 256, 16>}]} {
    %c0_i32 = arith.constant 0 : i32
    %0 = arith.cmpi eq, %arg1, %c0_i32 : i32
    %1 = arith.extui %0 : i1 to i32
    %c0_i32_0 = arith.constant 0 : i32
    %2 = arith.cmpi ne, %1, %c0_i32_0 : i32
    scf.if %2 {
      %cst_10 = arith.constant 0.000000e+00 : f32
      %13 = vector.broadcast %cst_10 : f32 to vector<256x16xf32>
      %c0_11 = arith.constant 0 : index
      %c0_12 = arith.constant 0 : index
      %14 = vector.load %arg7[%c0_11, %c0_12] : memref<256x16xf32, #tpu.memory_space<vmem>>, vector<256x16xf32>
      tpu.vector_store %arg7[%c0_11, %c0_12], %13 {strides = array<i32>} : memref<256x16xf32, #tpu.memory_space<vmem>>, vector<256x16xf32>,
    } else {
    }
    %c0 = arith.constant 0 : index
    %c0_1 = arith.constant 0 : index
    %3 = vector.load %arg7[%c0, %c0_1] : memref<256x16xf32, #tpu.memory_space<vmem>>, vector<256x16xf32>
    %c0_2 = arith.constant 0 : index
    %c0_3 = arith.constant 0 : index
    %4 = vector.load %arg2[%c0_2, %c0_3] : memref<256x4xf32, #tpu.memory_space<vmem>>, vector<256x4xf32>
    %5 = arith.truncf %4 : vector<256x4xf32> to vector<256x4xbf16>
    %c0_4 = arith.constant 0 : index
    %c0_5 = arith.constant 0 : index
    %6 = vector.load %arg3[%c0_4, %c0_5] : memref<4x16xbf16, #tpu.memory_space<vmem>>, vector<4x16xbf16>
    %cst = arith.constant dense<0.000000e+00> : vector<256x16xf32>
    %7 = tpu.matmul %5, %6, %cst {dimension_numbers = #tpu.dot_dimension_numbers<[1], [0], [0], [1], [0, 0, 1, 1], [], []>} : vector<256x4xbf16>, vector<4x16xbf16>, vector<256x16xf32> -> vector<256x16xf32>
    %8 = arith.addf %3, %7 : vector<256x16xf32>
    %c0_6 = arith.constant 0 : index
    %c0_7 = arith.constant 0 : index
    %9 = vector.load %arg7[%c0_6, %c0_7] : memref<256x16xf32, #tpu.memory_space<vmem>>, vector<256x16xf32>
    tpu.vector_store %arg7[%c0_6, %c0_7], %8 {strides = array<i32>} : memref<256x16xf32, #tpu.memory_space<vmem>>, vector<256x16xf32>,
    %c0_i32_8 = arith.constant 0 : i32
    %10 = arith.cmpi eq, %arg1, %c0_i32_8 : i32
    %11 = arith.extui %10 : i1 to i32
    %c0_i32_9 = arith.constant 0 : i32
    %12 = arith.cmpi ne, %11, %c0_i32_9 : i32
    scf.if %12 {
      %c0_10 = arith.constant 0 : index
      %c0_11 = arith.constant 0 : index
      %13 = vector.load %arg7[%c0_10, %c0_11] : memref<256x16xf32, #tpu.memory_space<vmem>>, vector<256x16xf32>
      %c0_12 = arith.constant 0 : index
      %c0_13 = arith.constant 0 : index
      %14 = vector.load %arg4[%c0_12, %c0_13] : memref<1x16xf32, #tpu.memory_space<vmem>>, vector<1x16xf32>
      %15 = vector.broadcast %14 : vector<1x16xf32> to vector<256x16xf32>
      %16 = arith.mulf %13, %15 : vector<256x16xf32>
      %c0_14 = arith.constant 0 : index
      %c0_15 = arith.constant 0 : index
      %17 = vector.load %arg5[%c0_14, %c0_15] : memref<1x16xf32, #tpu.memory_space<vmem>>, vector<1x16xf32>
      %18 = vector.broadcast %17 : vector<1x16xf32> to vector<256x16xf32>
      %19 = arith.addf %16, %18 : vector<256x16xf32>
      %cst_16 = arith.constant 0.000000e+00 : f32
      %20 = vector.broadcast %cst_16 : f32 to vector<256x16xf32>
      %21 = arith.maximumf %19, %20 : vector<256x16xf32>
      %c0_17 = arith.constant 0 : index
      %c0_18 = arith.constant 0 : index
      %22 = vector.load %arg6[%c0_17, %c0_18] : memref<256x16xf32, #tpu.memory_space<vmem>>, vector<256x16xf32>
      tpu.vector_store %arg6[%c0_17, %c0_18], %21 {strides = array<i32>} : memref<256x16xf32, #tpu.memory_space<vmem>>, vector<256x16xf32>,
    } else {
    }
    return
  }
  func.func @transform_0(%arg0: i32, %arg1: i32) -> (i32, i32) {
    %c0_i32 = arith.constant 0 : i32
    return %arg0, %arg1 : i32, i32
  }
  func.func @transform_1(%arg0: i32, %arg1: i32) -> (i32, i32) {
    %c0_i32 = arith.constant 0 : i32
    %c0_i32_0 = arith.constant 0 : i32
    return %arg1, %c0_i32 : i32, i32
  }
  func.func @transform_2(%arg0: i32, %arg1: i32) -> (i32, i32) {
    %c0_i32 = arith.constant 0 : i32
    %c0_i32_0 = arith.constant 0 : i32
    %c0_i32_1 = arith.constant 0 : i32
    return %c0_i32, %c0_i32_0 : i32, i32
  }
  func.func @transform_3(%arg0: i32, %arg1: i32) -> (i32, i32) {
    %c0_i32 = arith.constant 0 : i32
    %c0_i32_0 = arith.constant 0 : i32
    %c0_i32_1 = arith.constant 0 : i32
    return %c0_i32, %c0_i32_0 : i32, i32
  }
  func.func @transform_4(%arg0: i32, %arg1: i32) -> (i32, i32) {
    %c0_i32 = arith.constant 0 : i32
    %c0_i32_0 = arith.constant 0 : i32
    return %arg0, %c0_i32 : i32, i32
  }
}

module attributes {stable_mosaic.version = 11 : i64} {
  func.func @_conv3x3_bn_relu_kernel(%arg0: i32, %arg1: memref<1x18x18x4xf32, #tpu.memory_space<vmem>>, %arg2: memref<9x4x8xbf16, #tpu.memory_space<vmem>>, %arg3: memref<1x8xf32, #tpu.memory_space<vmem>>, %arg4: memref<1x8xf32, #tpu.memory_space<vmem>>, %arg5: memref<1x16x16x8xf32, #tpu.memory_space<vmem>>) attributes {dimension_semantics = [#tpu.dimension_semantics<parallel>], iteration_bounds = array<i64: 2>, scalar_prefetch = 0 : i64, scratch_operands = 0 : i64, tpu.core_type = #tpu.core_type<tc>, window_params = [{transform_indices = @transform_0, window_bounds = array<i64: 1, 18, 18, 4>}, {pipeline_mode = #tpu.pipeline_mode<synchronous>, transform_indices = @transform_1, window_bounds = array<i64: 9, 4, 8>}, {pipeline_mode = #tpu.pipeline_mode<synchronous>, transform_indices = @transform_2, window_bounds = array<i64: 1, 8>}, {pipeline_mode = #tpu.pipeline_mode<synchronous>, transform_indices = @transform_3, window_bounds = array<i64: 1, 8>}, {transform_indices = @transform_4, window_bounds = array<i64: 1, 16, 16, 8>}]} {
    %c0 = arith.constant 0 : index
    %c0_0 = arith.constant 0 : index
    %c0_1 = arith.constant 0 : index
    %c0_2 = arith.constant 0 : index
    %0 = vector.load %arg1[%c0, %c0_0, %c0_1, %c0_2] : memref<1x18x18x4xf32, #tpu.memory_space<vmem>>, vector<1x18x18x4xf32>
    %1 = vector.shape_cast %0 : vector<1x18x18x4xf32> to vector<18x18x4xf32>
    %2 = arith.truncf %1 : vector<18x18x4xf32> to vector<18x18x4xbf16>
    %cst = arith.constant 0.000000e+00 : f32
    %3 = vector.broadcast %cst : f32 to vector<256x8xf32>
    %4 = vector.extract_strided_slice %2 {offsets = [0, 0, 0], sizes = [16, 16, 4], strides = [1, 1, 1]} : vector<18x18x4xbf16> to vector<16x16x4xbf16>
    %5 = vector.shape_cast %4 : vector<16x16x4xbf16> to vector<256x4xbf16>
    %c0_3 = arith.constant 0 : index
    %c0_4 = arith.constant 0 : index
    %c0_5 = arith.constant 0 : index
    %6 = vector.load %arg2[%c0_3, %c0_4, %c0_5] : memref<9x4x8xbf16, #tpu.memory_space<vmem>>, vector<1x4x8xbf16>
    %7 = vector.shape_cast %6 : vector<1x4x8xbf16> to vector<4x8xbf16>
    %cst_6 = arith.constant dense<0.000000e+00> : vector<256x8xf32>
    %8 = tpu.matmul %5, %7, %cst_6 {dimension_numbers = #tpu.dot_dimension_numbers<[1], [0], [0], [1], [0, 0, 1, 1], [], []>} : vector<256x4xbf16>, vector<4x8xbf16>, vector<256x8xf32> -> vector<256x8xf32>
    %9 = arith.addf %3, %8 : vector<256x8xf32>
    %10 = vector.extract_strided_slice %2 {offsets = [0, 1, 0], sizes = [16, 16, 4], strides = [1, 1, 1]} : vector<18x18x4xbf16> to vector<16x16x4xbf16>
    %11 = vector.shape_cast %10 : vector<16x16x4xbf16> to vector<256x4xbf16>
    %c1 = arith.constant 1 : index
    %c0_7 = arith.constant 0 : index
    %c0_8 = arith.constant 0 : index
    %12 = vector.load %arg2[%c1, %c0_7, %c0_8] : memref<9x4x8xbf16, #tpu.memory_space<vmem>>, vector<1x4x8xbf16>
    %13 = vector.shape_cast %12 : vector<1x4x8xbf16> to vector<4x8xbf16>
    %cst_9 = arith.constant dense<0.000000e+00> : vector<256x8xf32>
    %14 = tpu.matmul %11, %13, %cst_9 {dimension_numbers = #tpu.dot_dimension_numbers<[1], [0], [0], [1], [0, 0, 1, 1], [], []>} : vector<256x4xbf16>, vector<4x8xbf16>, vector<256x8xf32> -> vector<256x8xf32>
    %15 = arith.addf %9, %14 : vector<256x8xf32>
    %16 = vector.extract_strided_slice %2 {offsets = [0, 2, 0], sizes = [16, 16, 4], strides = [1, 1, 1]} : vector<18x18x4xbf16> to vector<16x16x4xbf16>
    %17 = vector.shape_cast %16 : vector<16x16x4xbf16> to vector<256x4xbf16>
    %c2 = arith.constant 2 : index
    %c0_10 = arith.constant 0 : index
    %c0_11 = arith.constant 0 : index
    %18 = vector.load %arg2[%c2, %c0_10, %c0_11] : memref<9x4x8xbf16, #tpu.memory_space<vmem>>, vector<1x4x8xbf16>
    %19 = vector.shape_cast %18 : vector<1x4x8xbf16> to vector<4x8xbf16>
    %cst_12 = arith.constant dense<0.000000e+00> : vector<256x8xf32>
    %20 = tpu.matmul %17, %19, %cst_12 {dimension_numbers = #tpu.dot_dimension_numbers<[1], [0], [0], [1], [0, 0, 1, 1], [], []>} : vector<256x4xbf16>, vector<4x8xbf16>, vector<256x8xf32> -> vector<256x8xf32>
    %21 = arith.addf %15, %20 : vector<256x8xf32>
    %22 = vector.extract_strided_slice %2 {offsets = [1, 0, 0], sizes = [16, 16, 4], strides = [1, 1, 1]} : vector<18x18x4xbf16> to vector<16x16x4xbf16>
    %23 = vector.shape_cast %22 : vector<16x16x4xbf16> to vector<256x4xbf16>
    %c3 = arith.constant 3 : index
    %c0_13 = arith.constant 0 : index
    %c0_14 = arith.constant 0 : index
    %24 = vector.load %arg2[%c3, %c0_13, %c0_14] : memref<9x4x8xbf16, #tpu.memory_space<vmem>>, vector<1x4x8xbf16>
    %25 = vector.shape_cast %24 : vector<1x4x8xbf16> to vector<4x8xbf16>
    %cst_15 = arith.constant dense<0.000000e+00> : vector<256x8xf32>
    %26 = tpu.matmul %23, %25, %cst_15 {dimension_numbers = #tpu.dot_dimension_numbers<[1], [0], [0], [1], [0, 0, 1, 1], [], []>} : vector<256x4xbf16>, vector<4x8xbf16>, vector<256x8xf32> -> vector<256x8xf32>
    %27 = arith.addf %21, %26 : vector<256x8xf32>
    %28 = vector.extract_strided_slice %2 {offsets = [1, 1, 0], sizes = [16, 16, 4], strides = [1, 1, 1]} : vector<18x18x4xbf16> to vector<16x16x4xbf16>
    %29 = vector.shape_cast %28 : vector<16x16x4xbf16> to vector<256x4xbf16>
    %c4 = arith.constant 4 : index
    %c0_16 = arith.constant 0 : index
    %c0_17 = arith.constant 0 : index
    %30 = vector.load %arg2[%c4, %c0_16, %c0_17] : memref<9x4x8xbf16, #tpu.memory_space<vmem>>, vector<1x4x8xbf16>
    %31 = vector.shape_cast %30 : vector<1x4x8xbf16> to vector<4x8xbf16>
    %cst_18 = arith.constant dense<0.000000e+00> : vector<256x8xf32>
    %32 = tpu.matmul %29, %31, %cst_18 {dimension_numbers = #tpu.dot_dimension_numbers<[1], [0], [0], [1], [0, 0, 1, 1], [], []>} : vector<256x4xbf16>, vector<4x8xbf16>, vector<256x8xf32> -> vector<256x8xf32>
    %33 = arith.addf %27, %32 : vector<256x8xf32>
    %34 = vector.extract_strided_slice %2 {offsets = [1, 2, 0], sizes = [16, 16, 4], strides = [1, 1, 1]} : vector<18x18x4xbf16> to vector<16x16x4xbf16>
    %35 = vector.shape_cast %34 : vector<16x16x4xbf16> to vector<256x4xbf16>
    %c5 = arith.constant 5 : index
    %c0_19 = arith.constant 0 : index
    %c0_20 = arith.constant 0 : index
    %36 = vector.load %arg2[%c5, %c0_19, %c0_20] : memref<9x4x8xbf16, #tpu.memory_space<vmem>>, vector<1x4x8xbf16>
    %37 = vector.shape_cast %36 : vector<1x4x8xbf16> to vector<4x8xbf16>
    %cst_21 = arith.constant dense<0.000000e+00> : vector<256x8xf32>
    %38 = tpu.matmul %35, %37, %cst_21 {dimension_numbers = #tpu.dot_dimension_numbers<[1], [0], [0], [1], [0, 0, 1, 1], [], []>} : vector<256x4xbf16>, vector<4x8xbf16>, vector<256x8xf32> -> vector<256x8xf32>
    %39 = arith.addf %33, %38 : vector<256x8xf32>
    %40 = vector.extract_strided_slice %2 {offsets = [2, 0, 0], sizes = [16, 16, 4], strides = [1, 1, 1]} : vector<18x18x4xbf16> to vector<16x16x4xbf16>
    %41 = vector.shape_cast %40 : vector<16x16x4xbf16> to vector<256x4xbf16>
    %c6 = arith.constant 6 : index
    %c0_22 = arith.constant 0 : index
    %c0_23 = arith.constant 0 : index
    %42 = vector.load %arg2[%c6, %c0_22, %c0_23] : memref<9x4x8xbf16, #tpu.memory_space<vmem>>, vector<1x4x8xbf16>
    %43 = vector.shape_cast %42 : vector<1x4x8xbf16> to vector<4x8xbf16>
    %cst_24 = arith.constant dense<0.000000e+00> : vector<256x8xf32>
    %44 = tpu.matmul %41, %43, %cst_24 {dimension_numbers = #tpu.dot_dimension_numbers<[1], [0], [0], [1], [0, 0, 1, 1], [], []>} : vector<256x4xbf16>, vector<4x8xbf16>, vector<256x8xf32> -> vector<256x8xf32>
    %45 = arith.addf %39, %44 : vector<256x8xf32>
    %46 = vector.extract_strided_slice %2 {offsets = [2, 1, 0], sizes = [16, 16, 4], strides = [1, 1, 1]} : vector<18x18x4xbf16> to vector<16x16x4xbf16>
    %47 = vector.shape_cast %46 : vector<16x16x4xbf16> to vector<256x4xbf16>
    %c7 = arith.constant 7 : index
    %c0_25 = arith.constant 0 : index
    %c0_26 = arith.constant 0 : index
    %48 = vector.load %arg2[%c7, %c0_25, %c0_26] : memref<9x4x8xbf16, #tpu.memory_space<vmem>>, vector<1x4x8xbf16>
    %49 = vector.shape_cast %48 : vector<1x4x8xbf16> to vector<4x8xbf16>
    %cst_27 = arith.constant dense<0.000000e+00> : vector<256x8xf32>
    %50 = tpu.matmul %47, %49, %cst_27 {dimension_numbers = #tpu.dot_dimension_numbers<[1], [0], [0], [1], [0, 0, 1, 1], [], []>} : vector<256x4xbf16>, vector<4x8xbf16>, vector<256x8xf32> -> vector<256x8xf32>
    %51 = arith.addf %45, %50 : vector<256x8xf32>
    %52 = vector.extract_strided_slice %2 {offsets = [2, 2, 0], sizes = [16, 16, 4], strides = [1, 1, 1]} : vector<18x18x4xbf16> to vector<16x16x4xbf16>
    %53 = vector.shape_cast %52 : vector<16x16x4xbf16> to vector<256x4xbf16>
    %c8 = arith.constant 8 : index
    %c0_28 = arith.constant 0 : index
    %c0_29 = arith.constant 0 : index
    %54 = vector.load %arg2[%c8, %c0_28, %c0_29] : memref<9x4x8xbf16, #tpu.memory_space<vmem>>, vector<1x4x8xbf16>
    %55 = vector.shape_cast %54 : vector<1x4x8xbf16> to vector<4x8xbf16>
    %cst_30 = arith.constant dense<0.000000e+00> : vector<256x8xf32>
    %56 = tpu.matmul %53, %55, %cst_30 {dimension_numbers = #tpu.dot_dimension_numbers<[1], [0], [0], [1], [0, 0, 1, 1], [], []>} : vector<256x4xbf16>, vector<4x8xbf16>, vector<256x8xf32> -> vector<256x8xf32>
    %57 = arith.addf %51, %56 : vector<256x8xf32>
    %c0_31 = arith.constant 0 : index
    %c0_32 = arith.constant 0 : index
    %58 = vector.load %arg3[%c0_31, %c0_32] : memref<1x8xf32, #tpu.memory_space<vmem>>, vector<1x8xf32>
    %59 = vector.broadcast %58 : vector<1x8xf32> to vector<256x8xf32>
    %60 = arith.mulf %57, %59 : vector<256x8xf32>
    %c0_33 = arith.constant 0 : index
    %c0_34 = arith.constant 0 : index
    %61 = vector.load %arg4[%c0_33, %c0_34] : memref<1x8xf32, #tpu.memory_space<vmem>>, vector<1x8xf32>
    %62 = vector.broadcast %61 : vector<1x8xf32> to vector<256x8xf32>
    %63 = arith.addf %60, %62 : vector<256x8xf32>
    %cst_35 = arith.constant 0.000000e+00 : f32
    %64 = vector.broadcast %cst_35 : f32 to vector<256x8xf32>
    %65 = arith.maximumf %63, %64 : vector<256x8xf32>
    %66 = vector.shape_cast %65 : vector<256x8xf32> to vector<16x16x8xf32>
    %c0_36 = arith.constant 0 : index
    %c0_37 = arith.constant 0 : index
    %c0_38 = arith.constant 0 : index
    %c0_39 = arith.constant 0 : index
    %67 = vector.load %arg5[%c0_36, %c0_37, %c0_38, %c0_39] : memref<1x16x16x8xf32, #tpu.memory_space<vmem>>, vector<1x16x16x8xf32>
    %68 = vector.shape_cast %67 : vector<1x16x16x8xf32> to vector<16x16x8xf32>
    %69 = vector.shape_cast %66 : vector<16x16x8xf32> to vector<1x16x16x8xf32>
    tpu.vector_store %arg5[%c0_36, %c0_37, %c0_38, %c0_39], %69 {strides = array<i32>} : memref<1x16x16x8xf32, #tpu.memory_space<vmem>>, vector<1x16x16x8xf32>,
    return
  }
  func.func @transform_0(%arg0: i32) -> (i32, i32, i32, i32) {
    %c0_i32 = arith.constant 0 : i32
    %c0_i32_0 = arith.constant 0 : i32
    %c0_i32_1 = arith.constant 0 : i32
    %c0_i32_2 = arith.constant 0 : i32
    return %arg0, %c0_i32, %c0_i32_0, %c0_i32_1 : i32, i32, i32, i32
  }
  func.func @transform_1(%arg0: i32) -> (i32, i32, i32) {
    %c0_i32 = arith.constant 0 : i32
    %c0_i32_0 = arith.constant 0 : i32
    %c0_i32_1 = arith.constant 0 : i32
    %c0_i32_2 = arith.constant 0 : i32
    return %c0_i32, %c0_i32_0, %c0_i32_1 : i32, i32, i32
  }
  func.func @transform_2(%arg0: i32) -> (i32, i32) {
    %c0_i32 = arith.constant 0 : i32
    %c0_i32_0 = arith.constant 0 : i32
    %c0_i32_1 = arith.constant 0 : i32
    return %c0_i32, %c0_i32_0 : i32, i32
  }
  func.func @transform_3(%arg0: i32) -> (i32, i32) {
    %c0_i32 = arith.constant 0 : i32
    %c0_i32_0 = arith.constant 0 : i32
    %c0_i32_1 = arith.constant 0 : i32
    return %c0_i32, %c0_i32_0 : i32, i32
  }
  func.func @transform_4(%arg0: i32) -> (i32, i32, i32, i32) {
    %c0_i32 = arith.constant 0 : i32
    %c0_i32_0 = arith.constant 0 : i32
    %c0_i32_1 = arith.constant 0 : i32
    %c0_i32_2 = arith.constant 0 : i32
    return %arg0, %c0_i32, %c0_i32_0, %c0_i32_1 : i32, i32, i32, i32
  }
}

module attributes {stable_mosaic.version = 11 : i64} {
  func.func @_conv3x3_bn_relu_kernel(%arg0: i32, %arg1: memref<1x18x18x8xf32, #tpu.memory_space<vmem>>, %arg2: memref<9x8x8xbf16, #tpu.memory_space<vmem>>, %arg3: memref<1x8xf32, #tpu.memory_space<vmem>>, %arg4: memref<1x8xf32, #tpu.memory_space<vmem>>, %arg5: memref<1x16x16x8xf32, #tpu.memory_space<vmem>>) attributes {dimension_semantics = [#tpu.dimension_semantics<parallel>], iteration_bounds = array<i64: 2>, scalar_prefetch = 0 : i64, scratch_operands = 0 : i64, tpu.core_type = #tpu.core_type<tc>, window_params = [{transform_indices = @transform_0, window_bounds = array<i64: 1, 18, 18, 8>}, {pipeline_mode = #tpu.pipeline_mode<synchronous>, transform_indices = @transform_1, window_bounds = array<i64: 9, 8, 8>}, {pipeline_mode = #tpu.pipeline_mode<synchronous>, transform_indices = @transform_2, window_bounds = array<i64: 1, 8>}, {pipeline_mode = #tpu.pipeline_mode<synchronous>, transform_indices = @transform_3, window_bounds = array<i64: 1, 8>}, {transform_indices = @transform_4, window_bounds = array<i64: 1, 16, 16, 8>}]} {
    %c0 = arith.constant 0 : index
    %c0_0 = arith.constant 0 : index
    %c0_1 = arith.constant 0 : index
    %c0_2 = arith.constant 0 : index
    %0 = vector.load %arg1[%c0, %c0_0, %c0_1, %c0_2] : memref<1x18x18x8xf32, #tpu.memory_space<vmem>>, vector<1x18x18x8xf32>
    %1 = vector.shape_cast %0 : vector<1x18x18x8xf32> to vector<18x18x8xf32>
    %2 = arith.truncf %1 : vector<18x18x8xf32> to vector<18x18x8xbf16>
    %cst = arith.constant 0.000000e+00 : f32
    %3 = vector.broadcast %cst : f32 to vector<256x8xf32>
    %4 = vector.extract_strided_slice %2 {offsets = [0, 0, 0], sizes = [16, 16, 8], strides = [1, 1, 1]} : vector<18x18x8xbf16> to vector<16x16x8xbf16>
    %5 = vector.shape_cast %4 : vector<16x16x8xbf16> to vector<256x8xbf16>
    %c0_3 = arith.constant 0 : index
    %c0_4 = arith.constant 0 : index
    %c0_5 = arith.constant 0 : index
    %6 = vector.load %arg2[%c0_3, %c0_4, %c0_5] : memref<9x8x8xbf16, #tpu.memory_space<vmem>>, vector<1x8x8xbf16>
    %7 = vector.shape_cast %6 : vector<1x8x8xbf16> to vector<8x8xbf16>
    %cst_6 = arith.constant dense<0.000000e+00> : vector<256x8xf32>
    %8 = tpu.matmul %5, %7, %cst_6 {dimension_numbers = #tpu.dot_dimension_numbers<[1], [0], [0], [1], [0, 0, 1, 1], [], []>} : vector<256x8xbf16>, vector<8x8xbf16>, vector<256x8xf32> -> vector<256x8xf32>
    %9 = arith.addf %3, %8 : vector<256x8xf32>
    %10 = vector.extract_strided_slice %2 {offsets = [0, 1, 0], sizes = [16, 16, 8], strides = [1, 1, 1]} : vector<18x18x8xbf16> to vector<16x16x8xbf16>
    %11 = vector.shape_cast %10 : vector<16x16x8xbf16> to vector<256x8xbf16>
    %c1 = arith.constant 1 : index
    %c0_7 = arith.constant 0 : index
    %c0_8 = arith.constant 0 : index
    %12 = vector.load %arg2[%c1, %c0_7, %c0_8] : memref<9x8x8xbf16, #tpu.memory_space<vmem>>, vector<1x8x8xbf16>
    %13 = vector.shape_cast %12 : vector<1x8x8xbf16> to vector<8x8xbf16>
    %cst_9 = arith.constant dense<0.000000e+00> : vector<256x8xf32>
    %14 = tpu.matmul %11, %13, %cst_9 {dimension_numbers = #tpu.dot_dimension_numbers<[1], [0], [0], [1], [0, 0, 1, 1], [], []>} : vector<256x8xbf16>, vector<8x8xbf16>, vector<256x8xf32> -> vector<256x8xf32>
    %15 = arith.addf %9, %14 : vector<256x8xf32>
    %16 = vector.extract_strided_slice %2 {offsets = [0, 2, 0], sizes = [16, 16, 8], strides = [1, 1, 1]} : vector<18x18x8xbf16> to vector<16x16x8xbf16>
    %17 = vector.shape_cast %16 : vector<16x16x8xbf16> to vector<256x8xbf16>
    %c2 = arith.constant 2 : index
    %c0_10 = arith.constant 0 : index
    %c0_11 = arith.constant 0 : index
    %18 = vector.load %arg2[%c2, %c0_10, %c0_11] : memref<9x8x8xbf16, #tpu.memory_space<vmem>>, vector<1x8x8xbf16>
    %19 = vector.shape_cast %18 : vector<1x8x8xbf16> to vector<8x8xbf16>
    %cst_12 = arith.constant dense<0.000000e+00> : vector<256x8xf32>
    %20 = tpu.matmul %17, %19, %cst_12 {dimension_numbers = #tpu.dot_dimension_numbers<[1], [0], [0], [1], [0, 0, 1, 1], [], []>} : vector<256x8xbf16>, vector<8x8xbf16>, vector<256x8xf32> -> vector<256x8xf32>
    %21 = arith.addf %15, %20 : vector<256x8xf32>
    %22 = vector.extract_strided_slice %2 {offsets = [1, 0, 0], sizes = [16, 16, 8], strides = [1, 1, 1]} : vector<18x18x8xbf16> to vector<16x16x8xbf16>
    %23 = vector.shape_cast %22 : vector<16x16x8xbf16> to vector<256x8xbf16>
    %c3 = arith.constant 3 : index
    %c0_13 = arith.constant 0 : index
    %c0_14 = arith.constant 0 : index
    %24 = vector.load %arg2[%c3, %c0_13, %c0_14] : memref<9x8x8xbf16, #tpu.memory_space<vmem>>, vector<1x8x8xbf16>
    %25 = vector.shape_cast %24 : vector<1x8x8xbf16> to vector<8x8xbf16>
    %cst_15 = arith.constant dense<0.000000e+00> : vector<256x8xf32>
    %26 = tpu.matmul %23, %25, %cst_15 {dimension_numbers = #tpu.dot_dimension_numbers<[1], [0], [0], [1], [0, 0, 1, 1], [], []>} : vector<256x8xbf16>, vector<8x8xbf16>, vector<256x8xf32> -> vector<256x8xf32>
    %27 = arith.addf %21, %26 : vector<256x8xf32>
    %28 = vector.extract_strided_slice %2 {offsets = [1, 1, 0], sizes = [16, 16, 8], strides = [1, 1, 1]} : vector<18x18x8xbf16> to vector<16x16x8xbf16>
    %29 = vector.shape_cast %28 : vector<16x16x8xbf16> to vector<256x8xbf16>
    %c4 = arith.constant 4 : index
    %c0_16 = arith.constant 0 : index
    %c0_17 = arith.constant 0 : index
    %30 = vector.load %arg2[%c4, %c0_16, %c0_17] : memref<9x8x8xbf16, #tpu.memory_space<vmem>>, vector<1x8x8xbf16>
    %31 = vector.shape_cast %30 : vector<1x8x8xbf16> to vector<8x8xbf16>
    %cst_18 = arith.constant dense<0.000000e+00> : vector<256x8xf32>
    %32 = tpu.matmul %29, %31, %cst_18 {dimension_numbers = #tpu.dot_dimension_numbers<[1], [0], [0], [1], [0, 0, 1, 1], [], []>} : vector<256x8xbf16>, vector<8x8xbf16>, vector<256x8xf32> -> vector<256x8xf32>
    %33 = arith.addf %27, %32 : vector<256x8xf32>
    %34 = vector.extract_strided_slice %2 {offsets = [1, 2, 0], sizes = [16, 16, 8], strides = [1, 1, 1]} : vector<18x18x8xbf16> to vector<16x16x8xbf16>
    %35 = vector.shape_cast %34 : vector<16x16x8xbf16> to vector<256x8xbf16>
    %c5 = arith.constant 5 : index
    %c0_19 = arith.constant 0 : index
    %c0_20 = arith.constant 0 : index
    %36 = vector.load %arg2[%c5, %c0_19, %c0_20] : memref<9x8x8xbf16, #tpu.memory_space<vmem>>, vector<1x8x8xbf16>
    %37 = vector.shape_cast %36 : vector<1x8x8xbf16> to vector<8x8xbf16>
    %cst_21 = arith.constant dense<0.000000e+00> : vector<256x8xf32>
    %38 = tpu.matmul %35, %37, %cst_21 {dimension_numbers = #tpu.dot_dimension_numbers<[1], [0], [0], [1], [0, 0, 1, 1], [], []>} : vector<256x8xbf16>, vector<8x8xbf16>, vector<256x8xf32> -> vector<256x8xf32>
    %39 = arith.addf %33, %38 : vector<256x8xf32>
    %40 = vector.extract_strided_slice %2 {offsets = [2, 0, 0], sizes = [16, 16, 8], strides = [1, 1, 1]} : vector<18x18x8xbf16> to vector<16x16x8xbf16>
    %41 = vector.shape_cast %40 : vector<16x16x8xbf16> to vector<256x8xbf16>
    %c6 = arith.constant 6 : index
    %c0_22 = arith.constant 0 : index
    %c0_23 = arith.constant 0 : index
    %42 = vector.load %arg2[%c6, %c0_22, %c0_23] : memref<9x8x8xbf16, #tpu.memory_space<vmem>>, vector<1x8x8xbf16>
    %43 = vector.shape_cast %42 : vector<1x8x8xbf16> to vector<8x8xbf16>
    %cst_24 = arith.constant dense<0.000000e+00> : vector<256x8xf32>
    %44 = tpu.matmul %41, %43, %cst_24 {dimension_numbers = #tpu.dot_dimension_numbers<[1], [0], [0], [1], [0, 0, 1, 1], [], []>} : vector<256x8xbf16>, vector<8x8xbf16>, vector<256x8xf32> -> vector<256x8xf32>
    %45 = arith.addf %39, %44 : vector<256x8xf32>
    %46 = vector.extract_strided_slice %2 {offsets = [2, 1, 0], sizes = [16, 16, 8], strides = [1, 1, 1]} : vector<18x18x8xbf16> to vector<16x16x8xbf16>
    %47 = vector.shape_cast %46 : vector<16x16x8xbf16> to vector<256x8xbf16>
    %c7 = arith.constant 7 : index
    %c0_25 = arith.constant 0 : index
    %c0_26 = arith.constant 0 : index
    %48 = vector.load %arg2[%c7, %c0_25, %c0_26] : memref<9x8x8xbf16, #tpu.memory_space<vmem>>, vector<1x8x8xbf16>
    %49 = vector.shape_cast %48 : vector<1x8x8xbf16> to vector<8x8xbf16>
    %cst_27 = arith.constant dense<0.000000e+00> : vector<256x8xf32>
    %50 = tpu.matmul %47, %49, %cst_27 {dimension_numbers = #tpu.dot_dimension_numbers<[1], [0], [0], [1], [0, 0, 1, 1], [], []>} : vector<256x8xbf16>, vector<8x8xbf16>, vector<256x8xf32> -> vector<256x8xf32>
    %51 = arith.addf %45, %50 : vector<256x8xf32>
    %52 = vector.extract_strided_slice %2 {offsets = [2, 2, 0], sizes = [16, 16, 8], strides = [1, 1, 1]} : vector<18x18x8xbf16> to vector<16x16x8xbf16>
    %53 = vector.shape_cast %52 : vector<16x16x8xbf16> to vector<256x8xbf16>
    %c8 = arith.constant 8 : index
    %c0_28 = arith.constant 0 : index
    %c0_29 = arith.constant 0 : index
    %54 = vector.load %arg2[%c8, %c0_28, %c0_29] : memref<9x8x8xbf16, #tpu.memory_space<vmem>>, vector<1x8x8xbf16>
    %55 = vector.shape_cast %54 : vector<1x8x8xbf16> to vector<8x8xbf16>
    %cst_30 = arith.constant dense<0.000000e+00> : vector<256x8xf32>
    %56 = tpu.matmul %53, %55, %cst_30 {dimension_numbers = #tpu.dot_dimension_numbers<[1], [0], [0], [1], [0, 0, 1, 1], [], []>} : vector<256x8xbf16>, vector<8x8xbf16>, vector<256x8xf32> -> vector<256x8xf32>
    %57 = arith.addf %51, %56 : vector<256x8xf32>
    %c0_31 = arith.constant 0 : index
    %c0_32 = arith.constant 0 : index
    %58 = vector.load %arg3[%c0_31, %c0_32] : memref<1x8xf32, #tpu.memory_space<vmem>>, vector<1x8xf32>
    %59 = vector.broadcast %58 : vector<1x8xf32> to vector<256x8xf32>
    %60 = arith.mulf %57, %59 : vector<256x8xf32>
    %c0_33 = arith.constant 0 : index
    %c0_34 = arith.constant 0 : index
    %61 = vector.load %arg4[%c0_33, %c0_34] : memref<1x8xf32, #tpu.memory_space<vmem>>, vector<1x8xf32>
    %62 = vector.broadcast %61 : vector<1x8xf32> to vector<256x8xf32>
    %63 = arith.addf %60, %62 : vector<256x8xf32>
    %cst_35 = arith.constant 0.000000e+00 : f32
    %64 = vector.broadcast %cst_35 : f32 to vector<256x8xf32>
    %65 = arith.maximumf %63, %64 : vector<256x8xf32>
    %66 = vector.shape_cast %65 : vector<256x8xf32> to vector<16x16x8xf32>
    %c0_36 = arith.constant 0 : index
    %c0_37 = arith.constant 0 : index
    %c0_38 = arith.constant 0 : index
    %c0_39 = arith.constant 0 : index
    %67 = vector.load %arg5[%c0_36, %c0_37, %c0_38, %c0_39] : memref<1x16x16x8xf32, #tpu.memory_space<vmem>>, vector<1x16x16x8xf32>
    %68 = vector.shape_cast %67 : vector<1x16x16x8xf32> to vector<16x16x8xf32>
    %69 = vector.shape_cast %66 : vector<16x16x8xf32> to vector<1x16x16x8xf32>
    tpu.vector_store %arg5[%c0_36, %c0_37, %c0_38, %c0_39], %69 {strides = array<i32>} : memref<1x16x16x8xf32, #tpu.memory_space<vmem>>, vector<1x16x16x8xf32>,
    return
  }
  func.func @transform_0(%arg0: i32) -> (i32, i32, i32, i32) {
    %c0_i32 = arith.constant 0 : i32
    %c0_i32_0 = arith.constant 0 : i32
    %c0_i32_1 = arith.constant 0 : i32
    %c0_i32_2 = arith.constant 0 : i32
    return %arg0, %c0_i32, %c0_i32_0, %c0_i32_1 : i32, i32, i32, i32
  }
  func.func @transform_1(%arg0: i32) -> (i32, i32, i32) {
    %c0_i32 = arith.constant 0 : i32
    %c0_i32_0 = arith.constant 0 : i32
    %c0_i32_1 = arith.constant 0 : i32
    %c0_i32_2 = arith.constant 0 : i32
    return %c0_i32, %c0_i32_0, %c0_i32_1 : i32, i32, i32
  }
  func.func @transform_2(%arg0: i32) -> (i32, i32) {
    %c0_i32 = arith.constant 0 : i32
    %c0_i32_0 = arith.constant 0 : i32
    %c0_i32_1 = arith.constant 0 : i32
    return %c0_i32, %c0_i32_0 : i32, i32
  }
  func.func @transform_3(%arg0: i32) -> (i32, i32) {
    %c0_i32 = arith.constant 0 : i32
    %c0_i32_0 = arith.constant 0 : i32
    %c0_i32_1 = arith.constant 0 : i32
    return %c0_i32, %c0_i32_0 : i32, i32
  }
  func.func @transform_4(%arg0: i32) -> (i32, i32, i32, i32) {
    %c0_i32 = arith.constant 0 : i32
    %c0_i32_0 = arith.constant 0 : i32
    %c0_i32_1 = arith.constant 0 : i32
    %c0_i32_2 = arith.constant 0 : i32
    return %arg0, %c0_i32, %c0_i32_0, %c0_i32_1 : i32, i32, i32, i32
  }
}

</mosaic_0001>

<llo_original>
// kernel: inception_sparse_forward.5
$region0: #{inception_sparse_forward.5}
  #allocation0 [shape = 'u32[]', space=smem, size = 0x4, offset = 0x4, fixed_abs, tag = 'smem constant byte address 0x4 - core index']
  #allocation1 [shape = 'u32[144,128]{1,0:T(1,128)}', space=vmem, size = 0x12000, scoped, tag = 'internal scratch']
  #allocation2 [shape = 'f32[256,16]{1,0:T(8,128)}', space=vmem, size = 0x20000, scoped, tag = 'scratch operand']
  %s0 = inlined_call_operand.vmem [shape: f32[512,4], index: 0, kind: input, shape index: {}]
  %s1 = inlined_call_operand.vmem [shape: bf16[4,16], index: 1, kind: input, shape index: {}]
  %s2 = inlined_call_operand.vmem [shape: f32[1,16], index: 2, kind: input, shape index: {}]
  %s3 = inlined_call_operand.vmem [shape: f32[1,16], index: 3, kind: input, shape index: {}]
  %s4 = inlined_call_operand.vmem [shape: f32[512,16], index: 4, kind: output, shape index: {}]
  %s5 = sld [smem:[#allocation0]]
  $region57: #{inception_sparse_forward.5} parent=0
    _
  %s7 = ssub.s32 1, %s5
  %s8 = scalar_select 0, %s7, %s5
  loop: start=0, step=1, limit=4
  $region2: #{inception_sparse_forward.5} parent=0 // loop_pre_header
    _
  $region3: #{inception_sparse_forward.5} parent=0 // loop_header
    %s10 = sphi 0, %s14
    %p11 = scmp.ge.s32.totalorder %s10, 4
    %s17 = sphi 0, %s29
    %s18 = sphi 0, %s25
    %s19 = sphi 0, %s17
    %s20 = sphi 0, %s18
    %s21 = sphi 0, %s19
    %s22 = sphi 0, %s20
    %s34 = sphi 0, %s36
    %s37 = sphi 0, %s34
    %s38 = sphi 0, %s37
    %s54 = sphi 0, %s38
    %s60 = sphi 0, %s62
    %s63 = sphi 0, %s60
    %s64 = sphi 0, %s63
    %s80 = sphi 0, %s64
    %s84 = sphi 0, %s84
    %s86 = sphi 0, %s84
    %s87 = sphi 0, %s86
    %s101 = sphi 0, %s87
    %s105 = sphi 0, %s105
    %s107 = sphi 0, %s105
    %s108 = sphi 0, %s107
    %s122 = sphi 0, %s108
    %s128 = sphi 0, %s130
    %s131 = sphi 0, %s128
    %s132 = sphi 0, %s131
    %s148 = sphi 0, %s132
  $region4: #{inception_sparse_forward.5} parent=0 // loop_header_branch
    %13 = sbr.rel (%p11) target = $region8
  $region5: #{inception_sparse_forward.5} parent=0 // loop_body
    %s15 = ssub.s32 %s10, 1
    %s16 = ssub.s32 %s10, 2
    %s23 = sadd.s32 1, %s18
    %p24 = scmp.ge.s32.totalorder %s23, 1
    %s25 = scalar_select %p24, 0, %s23
    %s26 = sadd.s32 1, %s17
    %s27 = scalar_select %p24, %s26, %s17
    %p28 = scmp.ge.s32.totalorder %s27, 2
    %s29 = scalar_select %p28, 0, %s27
    %s30 = ssub.s32 %s17, %s29
    %s31 = ssub.s32 %s18, %s25
    %s32 = sor.u32 %s30, %s31
    %p33 = scmp.eq.s32.totalorder %s32, 0
    %s35 = sadd.s32 %s34, 1
    %s36 = scalar_select %p33, %s34, %s35
    %p39 = pneg %p33
    %p40 = scmp.eq.s32.totalorder %s10, 1
    %p41 = por %p39, %p40
    %p42 = scmp.ne.s32.totalorder %s34, %s37
    %p43 = scmp.eq.s32.totalorder %s10, 0
    %p44 = por %p42, %p43
    %p45 = scmp.ne.s32.totalorder %s34, %s37
    %p46 = scmp.eq.s32.totalorder %s15, 1
    %p47 = por %p45, %p46
    %p48 = scmp.ne.s32.totalorder %s37, %s38
    %p49 = scmp.eq.s32.totalorder %s15, 0
    %p50 = por %p48, %p49
    %p51 = scmp.ne.s32.totalorder %s37, %s38
    %p52 = scmp.eq.s32.totalorder %s16, 1
    %p53 = por %p51, %p52
    %p55 = scmp.ne.s32.totalorder %s38, %s54
    %p56 = scmp.eq.s32.totalorder %s16, 0
    %p57 = por %p55, %p56
    %s58 = ssub.s32 %s18, %s25
    %p59 = scmp.eq.s32.totalorder %s58, 0
    %s61 = sadd.s32 %s60, 1
    %s62 = scalar_select %p59, %s60, %s61
    %p65 = pneg %p59
    %p66 = scmp.eq.s32.totalorder %s10, 1
    %p67 = por %p65, %p66
    %p68 = scmp.ne.s32.totalorder %s60, %s63
    %p69 = scmp.eq.s32.totalorder %s10, 0
    %p70 = por %p68, %p69
    %p71 = scmp.ne.s32.totalorder %s60, %s63
    %p72 = scmp.eq.s32.totalorder %s15, 1
    %p73 = por %p71, %p72
    %p74 = scmp.ne.s32.totalorder %s63, %s64
    %p75 = scmp.eq.s32.totalorder %s15, 0
    %p76 = por %p74, %p75
    %p77 = scmp.ne.s32.totalorder %s63, %s64
    %p78 = scmp.eq.s32.totalorder %s16, 1
    %p79 = por %p77, %p78
    %p81 = scmp.ne.s32.totalorder %s64, %s80
    %p82 = scmp.eq.s32.totalorder %s16, 0
    %p83 = por %p81, %p82
    %s85 = sadd.s32 %s84, 1
    %p88 = scmp.eq.s32.totalorder %s10, 1
    %p89 = scmp.ne.s32.totalorder %s84, %s86
    %p90 = scmp.eq.s32.totalorder %s10, 0
    %p91 = por %p89, %p90
    %p92 = scmp.ne.s32.totalorder %s84, %s86
    %p93 = scmp.eq.s32.totalorder %s15, 1
    %p94 = por %p92, %p93
    %p95 = scmp.ne.s32.totalorder %s86, %s87
    %p96 = scmp.eq.s32.totalorder %s15, 0
    %p97 = por %p95, %p96
    %p98 = scmp.ne.s32.totalorder %s86, %s87
    %p99 = scmp.eq.s32.totalorder %s16, 1
    %p100 = por %p98, %p99
    %p102 = scmp.ne.s32.totalorder %s87, %s101
    %p103 = scmp.eq.s32.totalorder %s16, 0
    %p104 = por %p102, %p103
    %s106 = sadd.s32 %s105, 1
    %p109 = scmp.eq.s32.totalorder %s10, 1
    %p110 = scmp.ne.s32.totalorder %s105, %s107
    %p111 = scmp.eq.s32.totalorder %s10, 0
    %p112 = por %p110, %p111
    %p113 = scmp.ne.s32.totalorder %s105, %s107
    %p114 = scmp.eq.s32.totalorder %s15, 1
    %p115 = por %p113, %p114
    %p116 = scmp.ne.s32.totalorder %s107, %s108
    %p117 = scmp.eq.s32.totalorder %s15, 0
    %p118 = por %p116, %p117
    %p119 = scmp.ne.s32.totalorder %s107, %s108
    %p120 = scmp.eq.s32.totalorder %s16, 1
    %p121 = por %p119, %p120
    %p123 = scmp.ne.s32.totalorder %s108, %s122
    %p124 = scmp.eq.s32.totalorder %s16, 0
    %p125 = por %p123, %p124
    %s126 = ssub.s32 %s17, %s29
    %p127 = scmp.eq.s32.totalorder %s126, 0
    %s129 = sadd.s32 %s128, 1
    %s130 = scalar_select %p127, %s128, %s129
    %p133 = pneg %p127
    %p134 = scmp.eq.s32.totalorder %s10, 1
    %p135 = por %p133, %p134
    %p136 = scmp.ne.s32.totalorder %s128, %s131
    %p137 = scmp.eq.s32.totalorder %s10, 0
    %p138 = por %p136, %p137
    %p139 = scmp.ne.s32.totalorder %s128, %s131
    %p140 = scmp.eq.s32.totalorder %s15, 1
    %p141 = por %p139, %p140
    %p142 = scmp.ne.s32.totalorder %s131, %s132
    %p143 = scmp.eq.s32.totalorder %s15, 0
    %p144 = por %p142, %p143
    %p145 = scmp.ne.s32.totalorder %s131, %s132
    %p146 = scmp.eq.s32.totalorder %s16, 1
    %p147 = por %p145, %p146
    %p149 = scmp.ne.s32.totalorder %s132, %s148
    %p150 = scmp.eq.s32.totalorder %s16, 0
    %p151 = por %p149, %p150
    %p152 = scmp.le.s32.totalorder 1, %s10
    %p153 = scmp.lt.s32.totalorder %s10, 3
    %p154 = pnand %p152, %p153
    %p155 = pneg %p154
    // Predicated region
    $region9: #{inception_sparse_forward.5} parent=5 // pred_check
      _
    $region10: #{inception_sparse_forward.5} parent=5 // pred_check_branch
      %157 = sbr.rel (%p154) target = $region12
    $region11: #{inception_sparse_forward.5} parent=5 // pred_region
      %s158 = ssub.s32 %s10, 1
      // Predicated region
      $region13: #{inception_sparse_forward.5} parent=11 // pred_check
        %p159 = pneg %p76
      $region14: #{inception_sparse_forward.5} parent=11 // pred_check_branch
        %161 = sbr.rel (%p159) target = $region16
      $region15: #{inception_sparse_forward.5} parent=11 // pred_region
        %p162 = scmp.lt.s32.totalorder %s20, 0
        %s163 = scalar_select %p162, %s20, 0
        %s164 = smul.addr %s163, 2
        %s165 = scalar_lea.vmem %s1, %s164
      $region16: #{inception_sparse_forward.5} parent=11 // pred_fallthru
        _
      // Predicated region
      $region17: #{inception_sparse_forward.5} parent=11 // pred_check
        %p166 = pneg %p97
      $region18: #{inception_sparse_forward.5} parent=11 // pred_check_branch
        %168 = sbr.rel (%p166) target = $region20
      $region19: #{inception_sparse_forward.5} parent=11 // pred_region
        _
      $region20: #{inception_sparse_forward.5} parent=11 // pred_fallthru
        _
      // Predicated region
      $region21: #{inception_sparse_forward.5} parent=11 // pred_check
        %p169 = pneg %p118
      $region22: #{inception_sparse_forward.5} parent=11 // pred_check_branch
        %171 = sbr.rel (%p169) target = $region24
      $region23: #{inception_sparse_forward.5} parent=11 // pred_region
        _
      $region24: #{inception_sparse_forward.5} parent=11 // pred_fallthru
        _
    $region12: #{inception_sparse_forward.5} parent=5 // pred_fallthru
      _
    %p172 = scmp.lt.s32.totalorder %s10, 2
    // Predicated region
    $region25: #{inception_sparse_forward.5} parent=5 // pred_check
      %p173 = pneg %p172
    $region26: #{inception_sparse_forward.5} parent=5 // pred_check_branch
      %175 = sbr.rel (%p173) target = $region28
    $region27: #{inception_sparse_forward.5} parent=5 // pred_region
      // Predicated region
      $region29: #{inception_sparse_forward.5} parent=27 // pred_check
        %p176 = pneg %p44
      $region30: #{inception_sparse_forward.5} parent=27 // pred_check_branch
        %178 = sbr.rel (%p176) target = $region32
      $region31: #{inception_sparse_forward.5} parent=27 // pred_region
        %s179 = smul.u32 32, %s17
        %p180 = scmp.lt.s32.totalorder %s179, 63
        %s181 = scalar_select %p180, %s179, 63
        %p182 = scmp.lt.s32.totalorder %s18, 0
        %s183 = scalar_select %p182, %s18, 0
        %s184 = sadd.s32 %s183, %s181
        %s185 = smul.addr %s184, 8
        %s186 = scalar_lea.vmem %s0, %s185
        %s187 = smul.u32 32, %s17
      $region32: #{inception_sparse_forward.5} parent=27 // pred_fallthru
        _
    $region28: #{inception_sparse_forward.5} parent=5 // pred_fallthru
      _
    %p188 = scmp.le.s32.totalorder 1, %s10
    %p189 = scmp.lt.s32.totalorder %s10, 3
    %p190 = pnand %p188, %p189
    %p191 = pneg %p190
    // Predicated region
    $region33: #{inception_sparse_forward.5} parent=5 // pred_check
      _
    $region34: #{inception_sparse_forward.5} parent=5 // pred_check_branch
      %193 = sbr.rel (%p190) target = $region36
    $region35: #{inception_sparse_forward.5} parent=5 // pred_region
      %s194 = ssub.s32 %s10, 1
      %s195 = smul.u32 32, %s19
      %p196 = scmp.lt.s32.totalorder %s195, 63
      %s197 = scalar_select %p196, %s195, 63
      %p198 = scmp.lt.s32.totalorder %s20, 0
      %s199 = scalar_select %p198, %s20, 0
      %s200 = sadd.s32 %s199, %s197
      %s201 = smul.addr %s200, 8
      %s202 = scalar_lea.vmem %s0, %s201
      %p203 = pneg %p50
      %p204 = pneg %p47
      %p205 = scmp.lt.s32.totalorder %s20, 0
      %s206 = scalar_select %p205, %s20, 0
      %s207 = smul.addr %s206, 2
      %s208 = scalar_lea.vmem %s1, %s207
      %p209 = pneg %p76
      %p210 = pneg %p73
      %p211 = pneg %p97
      %p212 = pneg %p94
      %p213 = pneg %p118
      %p214 = pneg %p115
      %p215 = pneg %p144
      %p216 = pneg %p141
      %s217 = smul.u32 32, %s19
      %p218 = scmp.lt.s32.totalorder %s217, 63
      %s219 = scalar_select %p218, %s217, 63
      %s220 = smul.addr %s219, 8
      %s221 = scalar_lea.vmem %s4, %s220
      %s222 = smul.u32 32, %s19
      %p223 = scmp.lt.s32.totalorder %s222, 63
      %s224 = scalar_select %p223, %s222, 63
      %p225 = scmp.lt.s32.totalorder %s20, 0
      %s226 = scalar_select %p225, %s20, 0
      %s227 = sadd.s32 %s226, %s224
      %s228 = smul.addr %s227, 8
      %s229 = scalar_lea.vmem %s0, %s228
      %s230 = smul.u32 32, %s19
      %p231 = scmp.lt.s32.totalorder %s20, 0
      %s232 = scalar_select %p231, %s20, 0
      %s233 = smul.addr %s232, 2
      %s234 = scalar_lea.vmem %s1, %s233
      %s235 = smul.u32 32, %s19
      %p236 = scmp.lt.s32.totalorder %s235, 63
      %s237 = scalar_select %p236, %s235, 63
      %s238 = smul.addr %s237, 8
      %s239 = scalar_lea.vmem %s4, %s238
      %s240 = smul.u32 32, %s19
      %p242 = scmp.eq.s32.totalorder %s20, 0
      // Predicated region
      $region37: #{inception_sparse_forward.5} parent=35 // pred_check
        %p243 = pneg %p242
      $region38: #{inception_sparse_forward.5} parent=35 // pred_check_branch
        %245 = sbr.rel (%p243) target = $region40
      $region39: #{inception_sparse_forward.5} parent=35 // pred_region
        %vm246 = vcmask 130048
        %247 = vst.msk [vmem:[#allocation2] sm:$0xff] %vm246, 0.0
        %248 = vst.msk [vmem:[#allocation2 + $0x8] sm:$0xff] %vm246, 0.0
        %249 = vst.msk [vmem:[#allocation2 + $0x10] sm:$0xff] %vm246, 0.0
        %250 = vst.msk [vmem:[#allocation2 + $0x18] sm:$0xff] %vm246, 0.0
        %251 = vst.msk [vmem:[#allocation2 + $0x20] sm:$0xff] %vm246, 0.0
        %252 = vst.msk [vmem:[#allocation2 + $0x28] sm:$0xff] %vm246, 0.0
        %253 = vst.msk [vmem:[#allocation2 + $0x30] sm:$0xff] %vm246, 0.0
        %254 = vst.msk [vmem:[#allocation2 + $0x38] sm:$0xff] %vm246, 0.0
        %255 = vst.msk [vmem:[#allocation2 + $0x40] sm:$0xff] %vm246, 0.0
        %256 = vst.msk [vmem:[#allocation2 + $0x48] sm:$0xff] %vm246, 0.0
        %257 = vst.msk [vmem:[#allocation2 + $0x50] sm:$0xff] %vm246, 0.0
        %258 = vst.msk [vmem:[#allocation2 + $0x58] sm:$0xff] %vm246, 0.0
        %259 = vst.msk [vmem:[#allocation2 + $0x60] sm:$0xff] %vm246, 0.0
        %260 = vst.msk [vmem:[#allocation2 + $0x68] sm:$0xff] %vm246, 0.0
        %261 = vst.msk [vmem:[#allocation2 + $0x70] sm:$0xff] %vm246, 0.0
        %262 = vst.msk [vmem:[#allocation2 + $0x78] sm:$0xff] %vm246, 0.0
        %263 = vst.msk [vmem:[#allocation2 + $0x80] sm:$0xff] %vm246, 0.0
        %264 = vst.msk [vmem:[#allocation2 + $0x88] sm:$0xff] %vm246, 0.0
        %265 = vst.msk [vmem:[#allocation2 + $0x90] sm:$0xff] %vm246, 0.0
        %266 = vst.msk [vmem:[#allocation2 + $0x98] sm:$0xff] %vm246, 0.0
        %267 = vst.msk [vmem:[#allocation2 + $0xa0] sm:$0xff] %vm246, 0.0
        %268 = vst.msk [vmem:[#allocation2 + $0xa8] sm:$0xff] %vm246, 0.0
        %269 = vst.msk [vmem:[#allocation2 + $0xb0] sm:$0xff] %vm246, 0.0
        %270 = vst.msk [vmem:[#allocation2 + $0xb8] sm:$0xff] %vm246, 0.0
        %271 = vst.msk [vmem:[#allocation2 + $0xc0] sm:$0xff] %vm246, 0.0
        %272 = vst.msk [vmem:[#allocation2 + $0xc8] sm:$0xff] %vm246, 0.0
        %273 = vst.msk [vmem:[#allocation2 + $0xd0] sm:$0xff] %vm246, 0.0
        %274 = vst.msk [vmem:[#allocation2 + $0xd8] sm:$0xff] %vm246, 0.0
        %275 = vst.msk [vmem:[#allocation2 + $0xe0] sm:$0xff] %vm246, 0.0
        %276 = vst.msk [vmem:[#allocation2 + $0xe8] sm:$0xff] %vm246, 0.0
        %277 = vst.msk [vmem:[#allocation2 + $0xf0] sm:$0xff] %vm246, 0.0
        %278 = vst.msk [vmem:[#allocation2 + $0xf8] sm:$0xff] %vm246, 0.0
      $region40: #{inception_sparse_forward.5} parent=35 // pred_fallthru
        _
      %v279 = vld [vmem:[#allocation2] sm:$0xff]
      %v280 = vld [vmem:[#allocation2 + $0x8] sm:$0xff]
      %v281 = vld [vmem:[#allocation2 + $0x10] sm:$0xff]
      %v282 = vld [vmem:[#allocation2 + $0x18] sm:$0xff]
      %v283 = vld [vmem:[#allocation2 + $0x20] sm:$0xff]
      %v284 = vld [vmem:[#allocation2 + $0x28] sm:$0xff]
      %v285 = vld [vmem:[#allocation2 + $0x30] sm:$0xff]
      %v286 = vld [vmem:[#allocation2 + $0x38] sm:$0xff]
      %v287 = vld [vmem:[#allocation2 + $0x40] sm:$0xff]
      %v288 = vld [vmem:[#allocation2 + $0x48] sm:$0xff]
      %v289 = vld [vmem:[#allocation2 + $0x50] sm:$0xff]
      %v290 = vld [vmem:[#allocation2 + $0x58] sm:$0xff]
      %v291 = vld [vmem:[#allocation2 + $0x60] sm:$0xff]
      %v292 = vld [vmem:[#allocation2 + $0x68] sm:$0xff]
      %v293 = vld [vmem:[#allocation2 + $0x70] sm:$0xff]
      %v294 = vld [vmem:[#allocation2 + $0x78] sm:$0xff]
      %v295 = vld [vmem:[#allocation2 + $0x80] sm:$0xff]
      %v296 = vld [vmem:[#allocation2 + $0x88] sm:$0xff]
      %v297 = vld [vmem:[#allocation2 + $0x90] sm:$0xff]
      %v298 = vld [vmem:[#allocation2 + $0x98] sm:$0xff]
      %v299 = vld [vmem:[#allocation2 + $0xa0] sm:$0xff]
      %v300 = vld [vmem:[#allocation2 + $0xa8] sm:$0xff]
      %v301 = vld [vmem:[#allocation2 + $0xb0] sm:$0xff]
      %v302 = vld [vmem:[#allocation2 + $0xb8] sm:$0xff]
      %v303 = vld [vmem:[#allocation2 + $0xc0] sm:$0xff]
      %v304 = vld [vmem:[#allocation2 + $0xc8] sm:$0xff]
      %v305 = vld [vmem:[#allocation2 + $0xd0] sm:$0xff]
      %v306 = vld [vmem:[#allocation2 + $0xd8] sm:$0xff]
      %v307 = vld [vmem:[#allocation2 + $0xe0] sm:$0xff]
      %v308 = vld [vmem:[#allocation2 + $0xe8] sm:$0xff]
      %v309 = vld [vmem:[#allocation2 + $0xf0] sm:$0xff]
      %v310 = vld [vmem:[#allocation2 + $0xf8] sm:$0xff]
      %v311 = vld [vmem:[%s229] sm:$0xff]
      %v312 = vld [vmem:[%s229 + $0x8] sm:$0xff]
      %v313 = vld [vmem:[%s229 + $0x10] sm:$0xff]
      %v314 = vld [vmem:[%s229 + $0x18] sm:$0xff]
      %v315 = vld [vmem:[%s229 + $0x20] sm:$0xff]
      %v316 = vld [vmem:[%s229 + $0x28] sm:$0xff]
      %v317 = vld [vmem:[%s229 + $0x30] sm:$0xff]
      %v318 = vld [vmem:[%s229 + $0x38] sm:$0xff]
      %v319 = vld [vmem:[%s229 + $0x40] sm:$0xff]
      %v320 = vld [vmem:[%s229 + $0x48] sm:$0xff]
      %v321 = vld [vmem:[%s229 + $0x50] sm:$0xff]
      %v322 = vld [vmem:[%s229 + $0x58] sm:$0xff]
      %v323 = vld [vmem:[%s229 + $0x60] sm:$0xff]
      %v324 = vld [vmem:[%s229 + $0x68] sm:$0xff]
      %v325 = vld [vmem:[%s229 + $0x70] sm:$0xff]
      %v326 = vld [vmem:[%s229 + $0x78] sm:$0xff]
      %v327 = vld [vmem:[%s229 + $0x80] sm:$0xff]
      %v328 = vld [vmem:[%s229 + $0x88] sm:$0xff]
      %v329 = vld [vmem:[%s229 + $0x90] sm:$0xff]
      %v330 = vld [vmem:[%s229 + $0x98] sm:$0xff]
      %v331 = vld [vmem:[%s229 + $0xa0] sm:$0xff]
      %v332 = vld [vmem:[%s229 + $0xa8] sm:$0xff]
      %v333 = vld [vmem:[%s229 + $0xb0] sm:$0xff]
      %v334 = vld [vmem:[%s229 + $0xb8] sm:$0xff]
      %v335 = vld [vmem:[%s229 + $0xc0] sm:$0xff]
      %v336 = vld [vmem:[%s229 + $0xc8] sm:$0xff]
      %v337 = vld [vmem:[%s229 + $0xd0] sm:$0xff]
      %v338 = vld [vmem:[%s229 + $0xd8] sm:$0xff]
      %v339 = vld [vmem:[%s229 + $0xe0] sm:$0xff]
      %v340 = vld [vmem:[%s229 + $0xe8] sm:$0xff]
      %v341 = vld [vmem:[%s229 + $0xf0] sm:$0xff]
      %v342 = vld [vmem:[%s229 + $0xf8] sm:$0xff]
      %v343 = vpack.c.bf16 %v312, %v311
      %v344 = vpack.c.bf16 %v314, %v313
      %v345 = vpack.c.bf16 %v316, %v315
      %v346 = vpack.c.bf16 %v318, %v317
      %v347 = vpack.c.bf16 %v320, %v319
      %v348 = vpack.c.bf16 %v322, %v321
      %v349 = vpack.c.bf16 %v324, %v323
      %v350 = vpack.c.bf16 %v326, %v325
      %v351 = vpack.c.bf16 %v328, %v327
      %v352 = vpack.c.bf16 %v330, %v329
      %v353 = vpack.c.bf16 %v332, %v331
      %v354 = vpack.c.bf16 %v334, %v333
      %v355 = vpack.c.bf16 %v336, %v335
      %v356 = vpack.c.bf16 %v338, %v337
      %v357 = vpack.c.bf16 %v340, %v339
      %v358 = vpack.c.bf16 %v342, %v341
      %v359 = vld [vmem:[%s234] sm:$0x3]
      %vm360 = vcmask 31744
      %v362 = vsel %vm360, %v343, 0
      %v365 = vsel %vm360, %v344, 0
      %v368 = vsel %vm360, %v345, 0
      %v371 = vsel %vm360, %v346, 0
      %v374 = vsel %vm360, %v347, 0
      %v377 = vsel %vm360, %v348, 0
      %v380 = vsel %vm360, %v349, 0
      %v383 = vsel %vm360, %v350, 0
      %v386 = vsel %vm360, %v351, 0
      %v389 = vsel %vm360, %v352, 0
      %v392 = vsel %vm360, %v353, 0
      %v395 = vsel %vm360, %v354, 0
      %v398 = vsel %vm360, %v355, 0
      %v401 = vsel %vm360, %v356, 0
      %v404 = vsel %vm360, %v357, 0
      %v407 = vsel %vm360, %v358, 0
      %vm409 = vcmask 1041408
      %v411 = vsel %vm409, %v359, 0
      %413 = vmatprep.subr.bf16.mxu0 0
      %414 = vmatpush1.bf16.msra.mxu0 0
      %415 = vmatprep.subr.bf16.mxu0 0
      %416 = vmatpush1.bf16.msra.mxu0 0
      %417 = vmatprep.subr.bf16.mxu0 0
      %418 = vmatpush1.bf16.msra.mxu0 0
      %419 = vmatprep.subr.bf16.mxu0 0
      %420 = vmatpush1.bf16.msra.mxu0 0
      %421 = vmatprep.subr.bf16.mxu0 0
      %422 = vmatpush1.bf16.msra.mxu0 0
      %423 = vmatprep.subr.bf16.mxu0 0
      %424 = vmatpush1.bf16.msra.mxu0 0
      %425 = vmatprep.subr.bf16.mxu0 0
      %426 = vmatpush1.bf16.msra.mxu0 0
      %427 = vmatprep.subr.bf16.mxu0 0
      %428 = vmatpush1.bf16.msra.mxu0 %v411
      %429 = vmatprep.subr.bf16.mxu0 0
      %430 = vmatpush2.bf16.msra.mxu0 0
      %431 = vmatprep.subr.bf16.mxu0 0
      %432 = vmatpush2.bf16.msra.mxu0 0
      %433 = vmatprep.subr.bf16.mxu0 0
      %434 = vmatpush2.bf16.msra.mxu0 0
      %435 = vmatprep.subr.bf16.mxu0 0
      %436 = vmatpush2.bf16.msra.mxu0 0
      %437 = vmatprep.subr.bf16.mxu0 0
      %438 = vmatpush2.bf16.msra.mxu0 0
      %439 = vmatprep.subr.bf16.mxu0 0
      %440 = vmatpush2.bf16.msra.mxu0 0
      %441 = vmatprep.subr.bf16.mxu0 0
      %442 = vmatpush2.bf16.msra.mxu0 0
      %443 = vmatprep.subr.bf16.mxu0 0
      %444 = vmatpush2.bf16.msra.mxu0 0
      %445 = vmatprep.mubr.bf16.mxu0 0
      %446 = vmatmul.mubr.bf16.gmra.mxu0 %v362
      %v447 = vpop.f32.mrf.mxu0
      %v448 = vadd.f32 0.0, %v447
      %v449 = vpop.f32.mrf.mxu0
      %v450 = vpop.f32.mrf.mxu0
      %v451 = vadd.f32 0.0, %v450
      %v452 = vpop.f32.mrf.mxu0
      %453 = vmatprep.mubr.bf16.mxu0 0
      %454 = vmatmul.mubr.bf16.gmra.mxu0 %v365
      %v455 = vpop.f32.mrf.mxu0
      %v456 = vadd.f32 0.0, %v455
      %v457 = vpop.f32.mrf.mxu0
      %v458 = vpop.f32.mrf.mxu0
      %v459 = vadd.f32 0.0, %v458
      %v460 = vpop.f32.mrf.mxu0
      %461 = vmatprep.mubr.bf16.mxu0 0
      %462 = vmatmul.mubr.bf16.gmra.mxu0 %v368
      %v463 = vpop.f32.mrf.mxu0
      %v464 = vadd.f32 0.0, %v463
      %v465 = vpop.f32.mrf.mxu0
      %v466 = vpop.f32.mrf.mxu0
      %v467 = vadd.f32 0.0, %v466
      %v468 = vpop.f32.mrf.mxu0
      %469 = vmatprep.mubr.bf16.mxu0 0
      %470 = vmatmul.mubr.bf16.gmra.mxu0 %v371
      %v471 = vpop.f32.mrf.mxu0
      %v472 = vadd.f32 0.0, %v471
      %v473 = vpop.f32.mrf.mxu0
      %v474 = vpop.f32.mrf.mxu0
      %v475 = vadd.f32 0.0, %v474
      %v476 = vpop.f32.mrf.mxu0
      %477 = vmatprep.mubr.bf16.mxu0 0
      %478 = vmatmul.mubr.bf16.gmra.mxu0 %v374
      %v479 = vpop.f32.mrf.mxu0
      %v480 = vadd.f32 0.0, %v479
      %v481 = vpop.f32.mrf.mxu0
      %v482 = vpop.f32.mrf.mxu0
      %v483 = vadd.f32 0.0, %v482
      %v484 = vpop.f32.mrf.mxu0
      %485 = vmatprep.mubr.bf16.mxu0 0
      %486 = vmatmul.mubr.bf16.gmra.mxu0 %v377
      %v487 = vpop.f32.mrf.mxu0
      %v488 = vadd.f32 0.0, %v487
      %v489 = vpop.f32.mrf.mxu0
      %v490 = vpop.f32.mrf.mxu0
      %v491 = vadd.f32 0.0, %v490
      %v492 = vpop.f32.mrf.mxu0
      %493 = vmatprep.mubr.bf16.mxu0 0
      %494 = vmatmul.mubr.bf16.gmra.mxu0 %v380
      %v495 = vpop.f32.mrf.mxu0
      %v496 = vadd.f32 0.0, %v495
      %v497 = vpop.f32.mrf.mxu0
      %v498 = vpop.f32.mrf.mxu0
      %v499 = vadd.f32 0.0, %v498
      %v500 = vpop.f32.mrf.mxu0
      %501 = vmatprep.mubr.bf16.mxu0 0
      %502 = vmatmul.mubr.bf16.gmra.mxu0 %v383
      %v503 = vpop.f32.mrf.mxu0
      %v504 = vadd.f32 0.0, %v503
      %v505 = vpop.f32.mrf.mxu0
      %v506 = vpop.f32.mrf.mxu0
      %v507 = vadd.f32 0.0, %v506
      %v508 = vpop.f32.mrf.mxu0
      %509 = vmatprep.mubr.bf16.mxu0 0
      %510 = vmatmul.mubr.bf16.gmra.mxu0 %v386
      %v511 = vpop.f32.mrf.mxu0
      %v512 = vadd.f32 0.0, %v511
      %v513 = vpop.f32.mrf.mxu0
      %v514 = vpop.f32.mrf.mxu0
      %v515 = vadd.f32 0.0, %v514
      %v516 = vpop.f32.mrf.mxu0
      %517 = vmatprep.mubr.bf16.mxu0 0
      %518 = vmatmul.mubr.bf16.gmra.mxu0 %v389
      %v519 = vpop.f32.mrf.mxu0
      %v520 = vadd.f32 0.0, %v519
      %v521 = vpop.f32.mrf.mxu0
      %v522 = vpop.f32.mrf.mxu0
      %v523 = vadd.f32 0.0, %v522
      %v524 = vpop.f32.mrf.mxu0
      %525 = vmatprep.mubr.bf16.mxu0 0
      %526 = vmatmul.mubr.bf16.gmra.mxu0 %v392
      %v527 = vpop.f32.mrf.mxu0
      %v528 = vadd.f32 0.0, %v527
      %v529 = vpop.f32.mrf.mxu0
      %v530 = vpop.f32.mrf.mxu0
      %v531 = vadd.f32 0.0, %v530
      %v532 = vpop.f32.mrf.mxu0
      %533 = vmatprep.mubr.bf16.mxu0 0
      %534 = vmatmul.mubr.bf16.gmra.mxu0 %v395
      %v535 = vpop.f32.mrf.mxu0
      %v536 = vadd.f32 0.0, %v535
      %v537 = vpop.f32.mrf.mxu0
      %v538 = vpop.f32.mrf.mxu0
      %v539 = vadd.f32 0.0, %v538
      %v540 = vpop.f32.mrf.mxu0
      %541 = vmatprep.mubr.bf16.mxu0 0
      %542 = vmatmul.mubr.bf16.gmra.mxu0 %v398
      %v543 = vpop.f32.mrf.mxu0
      %v544 = vadd.f32 0.0, %v543
      %v545 = vpop.f32.mrf.mxu0
      %v546 = vpop.f32.mrf.mxu0
      %v547 = vadd.f32 0.0, %v546
      %v548 = vpop.f32.mrf.mxu0
      %549 = vmatprep.mubr.bf16.mxu0 0
      %550 = vmatmul.mubr.bf16.gmra.mxu0 %v401
      %v551 = vpop.f32.mrf.mxu0
      %v552 = vadd.f32 0.0, %v551
      %v553 = vpop.f32.mrf.mxu0
      %v554 = vpop.f32.mrf.mxu0
      %v555 = vadd.f32 0.0, %v554
      %v556 = vpop.f32.mrf.mxu0
      %557 = vmatprep.mubr.bf16.mxu0 0
      %558 = vmatmul.mubr.bf16.gmra.mxu0 %v404
      %v559 = vpop.f32.mrf.mxu0
      %v560 = vadd.f32 0.0, %v559
      %v561 = vpop.f32.mrf.mxu0
      %v562 = vpop.f32.mrf.mxu0
      %v563 = vadd.f32 0.0, %v562
      %v564 = vpop.f32.mrf.mxu0
      %565 = vmatprep.mubr.bf16.mxu0 0
      %566 = vmatmul.mubr.bf16.gmra.mxu0 %v407
      %v567 = vpop.f32.mrf.mxu0
      %v568 = vadd.f32 0.0, %v567
      %v569 = vpop.f32.mrf.mxu0
      %v570 = vpop.f32.mrf.mxu0
      %v571 = vadd.f32 0.0, %v570
      %v572 = vpop.f32.mrf.mxu0
      %573 = vdwg.mxu0
      %v574 = vadd.f32 %v279, %v448
      %v575 = vadd.f32 %v280, %v451
      %v576 = vadd.f32 %v281, %v456
      %v577 = vadd.f32 %v282, %v459
      %v578 = vadd.f32 %v283, %v464
      %v579 = vadd.f32 %v284, %v467
      %v580 = vadd.f32 %v285, %v472
      %v581 = vadd.f32 %v286, %v475
      %v582 = vadd.f32 %v287, %v480
      %v583 = vadd.f32 %v288, %v483
      %v584 = vadd.f32 %v289, %v488
      %v585 = vadd.f32 %v290, %v491
      %v586 = vadd.f32 %v291, %v496
      %v587 = vadd.f32 %v292, %v499
      %v588 = vadd.f32 %v293, %v504
      %v589 = vadd.f32 %v294, %v507
      %v590 = vadd.f32 %v295, %v512
      %v591 = vadd.f32 %v296, %v515
      %v592 = vadd.f32 %v297, %v520
      %v593 = vadd.f32 %v298, %v523
      %v594 = vadd.f32 %v299, %v528
      %v595 = vadd.f32 %v300, %v531
      %v596 = vadd.f32 %v301, %v536
      %v597 = vadd.f32 %v302, %v539
      %v598 = vadd.f32 %v303, %v544
      %v599 = vadd.f32 %v304, %v547
      %v600 = vadd.f32 %v305, %v552
      %v601 = vadd.f32 %v306, %v555
      %v602 = vadd.f32 %v307, %v560
      %v603 = vadd.f32 %v308, %v563
      %v604 = vadd.f32 %v309, %v568
      %v605 = vadd.f32 %v310, %v571
      %vm606 = vcmask 130048
      %607 = vst.msk [vmem:[#allocation2] sm:$0xff] %vm606, %v574
      %608 = vst.msk [vmem:[#allocation2 + $0x8] sm:$0xff] %vm606, %v575
      %609 = vst.msk [vmem:[#allocation2 + $0x10] sm:$0xff] %vm606, %v576
      %610 = vst.msk [vmem:[#allocation2 + $0x18] sm:$0xff] %vm606, %v577
      %611 = vst.msk [vmem:[#allocation2 + $0x20] sm:$0xff] %vm606, %v578
      %612 = vst.msk [vmem:[#allocation2 + $0x28] sm:$0xff] %vm606, %v579
      %613 = vst.msk [vmem:[#allocation2 + $0x30] sm:$0xff] %vm606, %v580
      %614 = vst.msk [vmem:[#allocation2 + $0x38] sm:$0xff] %vm606, %v581
      %615 = vst.msk [vmem:[#allocation2 + $0x40] sm:$0xff] %vm606, %v582
      %616 = vst.msk [vmem:[#allocation2 + $0x48] sm:$0xff] %vm606, %v583
      %617 = vst.msk [vmem:[#allocation2 + $0x50] sm:$0xff] %vm606, %v584
      %618 = vst.msk [vmem:[#allocation2 + $0x58] sm:$0xff] %vm606, %v585
      %619 = vst.msk [vmem:[#allocation2 + $0x60] sm:$0xff] %vm606, %v586
      %620 = vst.msk [vmem:[#allocation2 + $0x68] sm:$0xff] %vm606, %v587
      %621 = vst.msk [vmem:[#allocation2 + $0x70] sm:$0xff] %vm606, %v588
      %622 = vst.msk [vmem:[#allocation2 + $0x78] sm:$0xff] %vm606, %v589
      %623 = vst.msk [vmem:[#allocation2 + $0x80] sm:$0xff] %vm606, %v590
      %624 = vst.msk [vmem:[#allocation2 + $0x88] sm:$0xff] %vm606, %v591
      %625 = vst.msk [vmem:[#allocation2 + $0x90] sm:$0xff] %vm606, %v592
      %626 = vst.msk [vmem:[#allocation2 + $0x98] sm:$0xff] %vm606, %v593
      %627 = vst.msk [vmem:[#allocation2 + $0xa0] sm:$0xff] %vm606, %v594
      %628 = vst.msk [vmem:[#allocation2 + $0xa8] sm:$0xff] %vm606, %v595
      %629 = vst.msk [vmem:[#allocation2 + $0xb0] sm:$0xff] %vm606, %v596
      %630 = vst.msk [vmem:[#allocation2 + $0xb8] sm:$0xff] %vm606, %v597
      %631 = vst.msk [vmem:[#allocation2 + $0xc0] sm:$0xff] %vm606, %v598
      %632 = vst.msk [vmem:[#allocation2 + $0xc8] sm:$0xff] %vm606, %v599
      %633 = vst.msk [vmem:[#allocation2 + $0xd0] sm:$0xff] %vm606, %v600
      %634 = vst.msk [vmem:[#allocation2 + $0xd8] sm:$0xff] %vm606, %v601
      %635 = vst.msk [vmem:[#allocation2 + $0xe0] sm:$0xff] %vm606, %v602
      %636 = vst.msk [vmem:[#allocation2 + $0xe8] sm:$0xff] %vm606, %v603
      %637 = vst.msk [vmem:[#allocation2 + $0xf0] sm:$0xff] %vm606, %v604
      %638 = vst.msk [vmem:[#allocation2 + $0xf8] sm:$0xff] %vm606, %v605
      // Predicated region
      $region41: #{inception_sparse_forward.5} parent=35 // pred_check
        %p639 = pneg %p242
      $region42: #{inception_sparse_forward.5} parent=35 // pred_check_branch
        %641 = sbr.rel (%p639) target = $region44
      $region43: #{inception_sparse_forward.5} parent=35 // pred_region
        %v642 = vld [vmem:[#allocation2] sm:$0xff]
        %v643 = vld [vmem:[#allocation2 + $0x8] sm:$0xff]
        %v644 = vld [vmem:[#allocation2 + $0x10] sm:$0xff]
        %v645 = vld [vmem:[#allocation2 + $0x18] sm:$0xff]
        %v646 = vld [vmem:[#allocation2 + $0x20] sm:$0xff]
        %v647 = vld [vmem:[#allocation2 + $0x28] sm:$0xff]
        %v648 = vld [vmem:[#allocation2 + $0x30] sm:$0xff]
        %v649 = vld [vmem:[#allocation2 + $0x38] sm:$0xff]
        %v650 = vld [vmem:[#allocation2 + $0x40] sm:$0xff]
        %v651 = vld [vmem:[#allocation2 + $0x48] sm:$0xff]
        %v652 = vld [vmem:[#allocation2 + $0x50] sm:$0xff]
        %v653 = vld [vmem:[#allocation2 + $0x58] sm:$0xff]
        %v654 = vld [vmem:[#allocation2 + $0x60] sm:$0xff]
        %v655 = vld [vmem:[#allocation2 + $0x68] sm:$0xff]
        %v656 = vld [vmem:[#allocation2 + $0x70] sm:$0xff]
        %v657 = vld [vmem:[#allocation2 + $0x78] sm:$0xff]
        %v658 = vld [vmem:[#allocation2 + $0x80] sm:$0xff]
        %v659 = vld [vmem:[#allocation2 + $0x88] sm:$0xff]
        %v660 = vld [vmem:[#allocation2 + $0x90] sm:$0xff]
        %v661 = vld [vmem:[#allocation2 + $0x98] sm:$0xff]
        %v662 = vld [vmem:[#allocation2 + $0xa0] sm:$0xff]
        %v663 = vld [vmem:[#allocation2 + $0xa8] sm:$0xff]
        %v664 = vld [vmem:[#allocation2 + $0xb0] sm:$0xff]
        %v665 = vld [vmem:[#allocation2 + $0xb8] sm:$0xff]
        %v666 = vld [vmem:[#allocation2 + $0xc0] sm:$0xff]
        %v667 = vld [vmem:[#allocation2 + $0xc8] sm:$0xff]
        %v668 = vld [vmem:[#allocation2 + $0xd0] sm:$0xff]
        %v669 = vld [vmem:[#allocation2 + $0xd8] sm:$0xff]
        %v670 = vld [vmem:[#allocation2 + $0xe0] sm:$0xff]
        %v671 = vld [vmem:[#allocation2 + $0xe8] sm:$0xff]
        %v672 = vld [vmem:[#allocation2 + $0xf0] sm:$0xff]
        %v673 = vld [vmem:[#allocation2 + $0xf8] sm:$0xff]
        %v674 = vld [vmem:[%s2] sm:$0x1]
        %v676 = vlaneseq
        %v677 = vshrl.u32 %v676, 7
        %v678 = vsub.s32 0, %v677
        %v679 = vrot.slane %v674, %v678
        %v681 = vmul.f32 %v642, %v679
        %v682 = vmul.f32 %v643, %v679
        %v683 = vmul.f32 %v644, %v679
        %v684 = vmul.f32 %v645, %v679
        %v685 = vmul.f32 %v646, %v679
        %v686 = vmul.f32 %v647, %v679
        %v687 = vmul.f32 %v648, %v679
        %v688 = vmul.f32 %v649, %v679
        %v689 = vmul.f32 %v650, %v679
        %v690 = vmul.f32 %v651, %v679
        %v691 = vmul.f32 %v652, %v679
        %v692 = vmul.f32 %v653, %v679
        %v693 = vmul.f32 %v654, %v679
        %v694 = vmul.f32 %v655, %v679
        %v695 = vmul.f32 %v656, %v679
        %v696 = vmul.f32 %v657, %v679
        %v697 = vmul.f32 %v658, %v679
        %v698 = vmul.f32 %v659, %v679
        %v699 = vmul.f32 %v660, %v679
        %v700 = vmul.f32 %v661, %v679
        %v701 = vmul.f32 %v662, %v679
        %v702 = vmul.f32 %v663, %v679
        %v703 = vmul.f32 %v664, %v679
        %v704 = vmul.f32 %v665, %v679
        %v705 = vmul.f32 %v666, %v679
        %v706 = vmul.f32 %v667, %v679
        %v707 = vmul.f32 %v668, %v679
        %v708 = vmul.f32 %v669, %v679
        %v709 = vmul.f32 %v670, %v679
        %v710 = vmul.f32 %v671, %v679
        %v711 = vmul.f32 %v672, %v679
        %v712 = vmul.f32 %v673, %v679
        %v713 = vld [vmem:[%s3] sm:$0x1]
        %v715 = vlaneseq
        %v716 = vshrl.u32 %v715, 7
        %v717 = vsub.s32 0, %v716
        %v718 = vrot.slane %v713, %v717
        %v720 = vadd.f32 %v681, %v718
        %v721 = vadd.f32 %v682, %v718
        %v722 = vadd.f32 %v683, %v718
        %v723 = vadd.f32 %v684, %v718
        %v724 = vadd.f32 %v685, %v718
        %v725 = vadd.f32 %v686, %v718
        %v726 = vadd.f32 %v687, %v718
        %v727 = vadd.f32 %v688, %v718
        %v728 = vadd.f32 %v689, %v718
        %v729 = vadd.f32 %v690, %v718
        %v730 = vadd.f32 %v691, %v718
        %v731 = vadd.f32 %v692, %v718
        %v732 = vadd.f32 %v693, %v718
        %v733 = vadd.f32 %v694, %v718
        %v734 = vadd.f32 %v695, %v718
        %v735 = vadd.f32 %v696, %v718
        %v736 = vadd.f32 %v697, %v718
        %v737 = vadd.f32 %v698, %v718
        %v738 = vadd.f32 %v699, %v718
        %v739 = vadd.f32 %v700, %v718
        %v740 = vadd.f32 %v701, %v718
        %v741 = vadd.f32 %v702, %v718
        %v742 = vadd.f32 %v703, %v718
        %v743 = vadd.f32 %v704, %v718
        %v744 = vadd.f32 %v705, %v718
        %v745 = vadd.f32 %v706, %v718
        %v746 = vadd.f32 %v707, %v718
        %v747 = vadd.f32 %v708, %v718
        %v748 = vadd.f32 %v709, %v718
        %v749 = vadd.f32 %v710, %v718
        %v750 = vadd.f32 %v711, %v718
        %v751 = vadd.f32 %v712, %v718
        %v752 = vmax.f32 %v720, 0.0
        %v753 = vmax.f32 %v721, 0.0
        %v754 = vmax.f32 %v722, 0.0
        %v755 = vmax.f32 %v723, 0.0
        %v756 = vmax.f32 %v724, 0.0
        %v757 = vmax.f32 %v725, 0.0
        %v758 = vmax.f32 %v726, 0.0
        %v759 = vmax.f32 %v727, 0.0
        %v760 = vmax.f32 %v728, 0.0
        %v761 = vmax.f32 %v729, 0.0
        %v762 = vmax.f32 %v730, 0.0
        %v763 = vmax.f32 %v731, 0.0
        %v764 = vmax.f32 %v732, 0.0
        %v765 = vmax.f32 %v733, 0.0
        %v766 = vmax.f32 %v734, 0.0
        %v767 = vmax.f32 %v735, 0.0
        %v768 = vmax.f32 %v736, 0.0
        %v769 = vmax.f32 %v737, 0.0
        %v770 = vmax.f32 %v738, 0.0
        %v771 = vmax.f32 %v739, 0.0
        %v772 = vmax.f32 %v740, 0.0
        %v773 = vmax.f32 %v741, 0.0
        %v774 = vmax.f32 %v742, 0.0
        %v775 = vmax.f32 %v743, 0.0
        %v776 = vmax.f32 %v744, 0.0
        %v777 = vmax.f32 %v745, 0.0
        %v778 = vmax.f32 %v746, 0.0
        %v779 = vmax.f32 %v747, 0.0
        %v780 = vmax.f32 %v748, 0.0
        %v781 = vmax.f32 %v749, 0.0
        %v782 = vmax.f32 %v750, 0.0
        %v783 = vmax.f32 %v751, 0.0
        %784 = vst.msk [vmem:[%s239] sm:$0xff] %vm606, %v752
        %785 = vst.msk [vmem:[%s239 + $0x8] sm:$0xff] %vm606, %v753
        %786 = vst.msk [vmem:[%s239 + $0x10] sm:$0xff] %vm606, %v754
        %787 = vst.msk [vmem:[%s239 + $0x18] sm:$0xff] %vm606, %v755
        %788 = vst.msk [vmem:[%s239 + $0x20] sm:$0xff] %vm606, %v756
        %789 = vst.msk [vmem:[%s239 + $0x28] sm:$0xff] %vm606, %v757
        %790 = vst.msk [vmem:[%s239 + $0x30] sm:$0xff] %vm606, %v758
        %791 = vst.msk [vmem:[%s239 + $0x38] sm:$0xff] %vm606, %v759
        %792 = vst.msk [vmem:[%s239 + $0x40] sm:$0xff] %vm606, %v760
        %793 = vst.msk [vmem:[%s239 + $0x48] sm:$0xff] %vm606, %v761
        %794 = vst.msk [vmem:[%s239 + $0x50] sm:$0xff] %vm606, %v762
        %795 = vst.msk [vmem:[%s239 + $0x58] sm:$0xff] %vm606, %v763
        %796 = vst.msk [vmem:[%s239 + $0x60] sm:$0xff] %vm606, %v764
        %797 = vst.msk [vmem:[%s239 + $0x68] sm:$0xff] %vm606, %v765
        %798 = vst.msk [vmem:[%s239 + $0x70] sm:$0xff] %vm606, %v766
        %799 = vst.msk [vmem:[%s239 + $0x78] sm:$0xff] %vm606, %v767
        %800 = vst.msk [vmem:[%s239 + $0x80] sm:$0xff] %vm606, %v768
        %801 = vst.msk [vmem:[%s239 + $0x88] sm:$0xff] %vm606, %v769
        %802 = vst.msk [vmem:[%s239 + $0x90] sm:$0xff] %vm606, %v770
        %803 = vst.msk [vmem:[%s239 + $0x98] sm:$0xff] %vm606, %v771
        %804 = vst.msk [vmem:[%s239 + $0xa0] sm:$0xff] %vm606, %v772
        %805 = vst.msk [vmem:[%s239 + $0xa8] sm:$0xff] %vm606, %v773
        %806 = vst.msk [vmem:[%s239 + $0xb0] sm:$0xff] %vm606, %v774
        %807 = vst.msk [vmem:[%s239 + $0xb8] sm:$0xff] %vm606, %v775
        %808 = vst.msk [vmem:[%s239 + $0xc0] sm:$0xff] %vm606, %v776
        %809 = vst.msk [vmem:[%s239 + $0xc8] sm:$0xff] %vm606, %v777
        %810 = vst.msk [vmem:[%s239 + $0xd0] sm:$0xff] %vm606, %v778
        %811 = vst.msk [vmem:[%s239 + $0xd8] sm:$0xff] %vm606, %v779
        %812 = vst.msk [vmem:[%s239 + $0xe0] sm:$0xff] %vm606, %v780
        %813 = vst.msk [vmem:[%s239 + $0xe8] sm:$0xff] %vm606, %v781
        %814 = vst.msk [vmem:[%s239 + $0xf0] sm:$0xff] %vm606, %v782
        %815 = vst.msk [vmem:[%s239 + $0xf8] sm:$0xff] %vm606, %v783
      $region44: #{inception_sparse_forward.5} parent=35 // pred_fallthru
        _
      %s816 = smul.u32 32, %s19
      %p817 = scmp.lt.s32.totalorder %s816, 63
      %s818 = scalar_select %p817, %s816, 63
      %s819 = smul.addr %s818, 8
      %s820 = scalar_lea.vmem %s4, %s819
      // Predicated region
      $region45: #{inception_sparse_forward.5} parent=35 // pred_check
        %p821 = pneg %p141
      $region46: #{inception_sparse_forward.5} parent=35 // pred_check_branch
        %823 = sbr.rel (%p821) target = $region48
      $region47: #{inception_sparse_forward.5} parent=35 // pred_region
        %s824 = smul.u32 32, %s19
      $region48: #{inception_sparse_forward.5} parent=35 // pred_fallthru
        _
    $region36: #{inception_sparse_forward.5} parent=5 // pred_fallthru
      _
    %p825 = scmp.le.s32.totalorder 2, %s10
    // Predicated region
    $region49: #{inception_sparse_forward.5} parent=5 // pred_check
      %p826 = pneg %p825
    $region50: #{inception_sparse_forward.5} parent=5 // pred_check_branch
      %828 = sbr.rel (%p826) target = $region52
    $region51: #{inception_sparse_forward.5} parent=5 // pred_region
      %s829 = ssub.s32 %s10, 2
      // Predicated region
      $region53: #{inception_sparse_forward.5} parent=51 // pred_check
        %p830 = pneg %p147
      $region54: #{inception_sparse_forward.5} parent=51 // pred_check_branch
        %832 = sbr.rel (%p830) target = $region56
      $region55: #{inception_sparse_forward.5} parent=51 // pred_region
        %s833 = smul.u32 32, %s21
        %p834 = scmp.lt.s32.totalorder %s833, 63
        %s835 = scalar_select %p834, %s833, 63
        %s836 = smul.addr %s835, 8
        %s837 = scalar_lea.vmem %s4, %s836
      $region56: #{inception_sparse_forward.5} parent=51 // pred_fallthru
        _
    $region52: #{inception_sparse_forward.5} parent=5 // pred_fallthru
      _
  $region6: #{inception_sparse_forward.5} parent=0 // loop_footer
    %s14 = sadd.s32 1, %s10
  $region7: #{inception_sparse_forward.5} parent=0 // loop_footer_branch
    %9 = sbr.rel target = $region3
  $region8: #{inception_sparse_forward.5} parent=0 // loop_exit
    _

// kernel: inception_sparse_forward.9
$region0: #{inception_sparse_forward.9}
  #allocation0 [shape = 'u32[]', space=smem, size = 0x4, offset = 0x4, fixed_abs, tag = 'smem constant byte address 0x4 - core index']
  #allocation1 [shape = 'u32[144,128]{1,0:T(1,128)}', space=vmem, size = 0x12000, scoped, tag = 'internal scratch']
  %s0 = inlined_call_operand.vmem [shape: f32[2,18,18,4], index: 0, kind: input, shape index: {}]
  %s1 = inlined_call_operand.vmem [shape: bf16[4,8], index: 1, kind: input, shape index: {}]
  %s2 = inlined_call_operand.vmem [shape: f32[1,8], index: 2, kind: input, shape index: {}]
  %s3 = inlined_call_operand.vmem [shape: f32[1,8], index: 3, kind: input, shape index: {}]
  %s4 = inlined_call_operand.vmem [shape: f32[2,16,16,8], index: 4, kind: output, shape index: {}]
  %s5 = sld [smem:[#allocation0]]
  $region49: #{inception_sparse_forward.9} parent=0
    _
  %s7 = ssub.s32 1, %s5
  %s8 = scalar_select 0, %s7, %s5
  loop: start=0, step=1, limit=4
  $region2: #{inception_sparse_forward.9} parent=0 // loop_pre_header
    _
  $region3: #{inception_sparse_forward.9} parent=0 // loop_header
    %s10 = sphi 0, %s14
    %p11 = scmp.ge.s32.totalorder %s10, 4
    %s20 = sphi 0, %s22
    %s23 = sphi 0, %s20
    %s24 = sphi 0, %s23
    %s40 = sphi 0, %s24
    %s44 = sphi 0, %s44
    %s46 = sphi 0, %s44
    %s47 = sphi 0, %s46
    %s61 = sphi 0, %s47
    %s65 = sphi 0, %s65
    %s67 = sphi 0, %s65
    %s68 = sphi 0, %s67
    %s82 = sphi 0, %s68
    %s86 = sphi 0, %s86
    %s88 = sphi 0, %s86
    %s89 = sphi 0, %s88
    %s103 = sphi 0, %s89
    %s109 = sphi 0, %s111
    %s112 = sphi 0, %s109
    %s113 = sphi 0, %s112
    %s129 = sphi 0, %s113
  $region4: #{inception_sparse_forward.9} parent=0 // loop_header_branch
    %13 = sbr.rel (%p11) target = $region8
  $region5: #{inception_sparse_forward.9} parent=0 // loop_body
    %s15 = ssub.s32 %s10, 1
    %s16 = ssub.s32 %s10, 2
    %s17 = sadd.s32 %s10, 1
    %s18 = ssub.s32 %s10, %s17
    %p19 = scmp.eq.s32.totalorder %s18, 0
    %s21 = sadd.s32 %s20, 1
    %s22 = scalar_select %p19, %s20, %s21
    %p25 = pneg %p19
    %p26 = scmp.eq.s32.totalorder %s10, 1
    %p27 = por %p25, %p26
    %p28 = scmp.ne.s32.totalorder %s20, %s23
    %p29 = scmp.eq.s32.totalorder %s10, 0
    %p30 = por %p28, %p29
    %p31 = scmp.ne.s32.totalorder %s20, %s23
    %p32 = scmp.eq.s32.totalorder %s15, 1
    %p33 = por %p31, %p32
    %p34 = scmp.ne.s32.totalorder %s23, %s24
    %p35 = scmp.eq.s32.totalorder %s15, 0
    %p36 = por %p34, %p35
    %p37 = scmp.ne.s32.totalorder %s23, %s24
    %p38 = scmp.eq.s32.totalorder %s16, 1
    %p39 = por %p37, %p38
    %p41 = scmp.ne.s32.totalorder %s24, %s40
    %p42 = scmp.eq.s32.totalorder %s16, 0
    %p43 = por %p41, %p42
    %s45 = sadd.s32 %s44, 1
    %p48 = scmp.eq.s32.totalorder %s10, 1
    %p49 = scmp.ne.s32.totalorder %s44, %s46
    %p50 = scmp.eq.s32.totalorder %s10, 0
    %p51 = por %p49, %p50
    %p52 = scmp.ne.s32.totalorder %s44, %s46
    %p53 = scmp.eq.s32.totalorder %s15, 1
    %p54 = por %p52, %p53
    %p55 = scmp.ne.s32.totalorder %s46, %s47
    %p56 = scmp.eq.s32.totalorder %s15, 0
    %p57 = por %p55, %p56
    %p58 = scmp.ne.s32.totalorder %s46, %s47
    %p59 = scmp.eq.s32.totalorder %s16, 1
    %p60 = por %p58, %p59
    %p62 = scmp.ne.s32.totalorder %s47, %s61
    %p63 = scmp.eq.s32.totalorder %s16, 0
    %p64 = por %p62, %p63
    %s66 = sadd.s32 %s65, 1
    %p69 = scmp.eq.s32.totalorder %s10, 1
    %p70 = scmp.ne.s32.totalorder %s65, %s67
    %p71 = scmp.eq.s32.totalorder %s10, 0
    %p72 = por %p70, %p71
    %p73 = scmp.ne.s32.totalorder %s65, %s67
    %p74 = scmp.eq.s32.totalorder %s15, 1
    %p75 = por %p73, %p74
    %p76 = scmp.ne.s32.totalorder %s67, %s68
    %p77 = scmp.eq.s32.totalorder %s15, 0
    %p78 = por %p76, %p77
    %p79 = scmp.ne.s32.totalorder %s67, %s68
    %p80 = scmp.eq.s32.totalorder %s16, 1
    %p81 = por %p79, %p80
    %p83 = scmp.ne.s32.totalorder %s68, %s82
    %p84 = scmp.eq.s32.totalorder %s16, 0
    %p85 = por %p83, %p84
    %s87 = sadd.s32 %s86, 1
    %p90 = scmp.eq.s32.totalorder %s10, 1
    %p91 = scmp.ne.s32.totalorder %s86, %s88
    %p92 = scmp.eq.s32.totalorder %s10, 0
    %p93 = por %p91, %p92
    %p94 = scmp.ne.s32.totalorder %s86, %s88
    %p95 = scmp.eq.s32.totalorder %s15, 1
    %p96 = por %p94, %p95
    %p97 = scmp.ne.s32.totalorder %s88, %s89
    %p98 = scmp.eq.s32.totalorder %s15, 0
    %p99 = por %p97, %p98
    %p100 = scmp.ne.s32.totalorder %s88, %s89
    %p101 = scmp.eq.s32.totalorder %s16, 1
    %p102 = por %p100, %p101
    %p104 = scmp.ne.s32.totalorder %s89, %s103
    %p105 = scmp.eq.s32.totalorder %s16, 0
    %p106 = por %p104, %p105
    %s107 = ssub.s32 %s10, %s17
    %p108 = scmp.eq.s32.totalorder %s107, 0
    %s110 = sadd.s32 %s109, 1
    %s111 = scalar_select %p108, %s109, %s110
    %p114 = pneg %p108
    %p115 = scmp.eq.s32.totalorder %s10, 1
    %p116 = por %p114, %p115
    %p117 = scmp.ne.s32.totalorder %s109, %s112
    %p118 = scmp.eq.s32.totalorder %s10, 0
    %p119 = por %p117, %p118
    %p120 = scmp.ne.s32.totalorder %s109, %s112
    %p121 = scmp.eq.s32.totalorder %s15, 1
    %p122 = por %p120, %p121
    %p123 = scmp.ne.s32.totalorder %s112, %s113
    %p124 = scmp.eq.s32.totalorder %s15, 0
    %p125 = por %p123, %p124
    %p126 = scmp.ne.s32.totalorder %s112, %s113
    %p127 = scmp.eq.s32.totalorder %s16, 1
    %p128 = por %p126, %p127
    %p130 = scmp.ne.s32.totalorder %s113, %s129
    %p131 = scmp.eq.s32.totalorder %s16, 0
    %p132 = por %p130, %p131
    %p133 = scmp.le.s32.totalorder 1, %s10
    %p134 = scmp.lt.s32.totalorder %s10, 3
    %p135 = pnand %p133, %p134
    %p136 = pneg %p135
    // Predicated region
    $region9: #{inception_sparse_forward.9} parent=5 // pred_check
      _
    $region10: #{inception_sparse_forward.9} parent=5 // pred_check_branch
      %138 = sbr.rel (%p135) target = $region12
    $region11: #{inception_sparse_forward.9} parent=5 // pred_region
      %s139 = ssub.s32 %s10, 1
      // Predicated region
      $region13: #{inception_sparse_forward.9} parent=11 // pred_check
        %p140 = pneg %p57
      $region14: #{inception_sparse_forward.9} parent=11 // pred_check_branch
        %142 = sbr.rel (%p140) target = $region16
      $region15: #{inception_sparse_forward.9} parent=11 // pred_region
        _
      $region16: #{inception_sparse_forward.9} parent=11 // pred_fallthru
        _
      // Predicated region
      $region17: #{inception_sparse_forward.9} parent=11 // pred_check
        %p143 = pneg %p78
      $region18: #{inception_sparse_forward.9} parent=11 // pred_check_branch
        %145 = sbr.rel (%p143) target = $region20
      $region19: #{inception_sparse_forward.9} parent=11 // pred_region
        _
      $region20: #{inception_sparse_forward.9} parent=11 // pred_fallthru
        _
      // Predicated region
      $region21: #{inception_sparse_forward.9} parent=11 // pred_check
        %p146 = pneg %p99
      $region22: #{inception_sparse_forward.9} parent=11 // pred_check_branch
        %148 = sbr.rel (%p146) target = $region24
      $region23: #{inception_sparse_forward.9} parent=11 // pred_region
        _
      $region24: #{inception_sparse_forward.9} parent=11 // pred_fallthru
        _
    $region12: #{inception_sparse_forward.9} parent=5 // pred_fallthru
      _
    %p149 = scmp.lt.s32.totalorder %s10, 2
    // Predicated region
    $region25: #{inception_sparse_forward.9} parent=5 // pred_check
      %p150 = pneg %p149
    $region26: #{inception_sparse_forward.9} parent=5 // pred_check_branch
      %152 = sbr.rel (%p150) target = $region28
    $region27: #{inception_sparse_forward.9} parent=5 // pred_region
      // Predicated region
      $region29: #{inception_sparse_forward.9} parent=27 // pred_check
        %p153 = pneg %p30
      $region30: #{inception_sparse_forward.9} parent=27 // pred_check_branch
        %155 = sbr.rel (%p153) target = $region32
      $region31: #{inception_sparse_forward.9} parent=27 // pred_region
        %p156 = scmp.lt.s32.totalorder %s10, 1
        %s157 = scalar_select %p156, %s10, 1
        %s158 = smul.addr %s157, 54
        %s159 = smul.addr %s158, 8
        %s160 = scalar_lea.vmem %s0, %s159
      $region32: #{inception_sparse_forward.9} parent=27 // pred_fallthru
        _
    $region28: #{inception_sparse_forward.9} parent=5 // pred_fallthru
      _
    %p161 = scmp.le.s32.totalorder 1, %s10
    %p162 = scmp.lt.s32.totalorder %s10, 3
    %p163 = pnand %p161, %p162
    %p164 = pneg %p163
    // Predicated region
    $region33: #{inception_sparse_forward.9} parent=5 // pred_check
      _
    $region34: #{inception_sparse_forward.9} parent=5 // pred_check_branch
      %166 = sbr.rel (%p163) target = $region36
    $region35: #{inception_sparse_forward.9} parent=5 // pred_region
      %s167 = ssub.s32 %s10, 1
      %p168 = scmp.lt.s32.totalorder %s15, 1
      %s169 = scalar_select %p168, %s15, 1
      %s170 = smul.addr %s169, 54
      %s171 = smul.addr %s170, 8
      %s172 = scalar_lea.vmem %s0, %s171
      %p173 = pneg %p36
      %p174 = pneg %p33
      %p175 = pneg %p57
      %p176 = pneg %p54
      %p177 = pneg %p78
      %p178 = pneg %p75
      %p179 = pneg %p99
      %p180 = pneg %p96
      %p181 = pneg %p125
      %p182 = pneg %p122
      %p183 = scmp.lt.s32.totalorder %s15, 1
      %s184 = scalar_select %p183, %s15, 1
      %s185 = smul.addr %s184, 32
      %s186 = smul.addr %s185, 8
      %s187 = scalar_lea.vmem %s4, %s186
      %p188 = scmp.lt.s32.totalorder %s15, 1
      %s189 = scalar_select %p188, %s15, 1
      %s190 = smul.addr %s189, 54
      %s191 = smul.addr %s190, 8
      %s192 = scalar_lea.vmem %s0, %s191
      %p193 = scmp.lt.s32.totalorder %s15, 1
      %s194 = scalar_select %p193, %s15, 1
      %s195 = smul.addr %s194, 32
      %s196 = smul.addr %s195, 8
      %s197 = scalar_lea.vmem %s4, %s196
      %v199 = vld [vmem:[%s192] sm:$0xff]
      %v200 = vld [vmem:[%s192 + $0x8] sm:$0xff]
      %v201 = vld [vmem:[%s192 + $0x10] sm:$0x3]
      %v202 = vld [vmem:[%s192 + $0x18] sm:$0xff]
      %v203 = vld [vmem:[%s192 + $0x20] sm:$0xff]
      %v204 = vld [vmem:[%s192 + $0x28] sm:$0x3]
      %v205 = vld [vmem:[%s192 + $0x30] sm:$0xff]
      %v206 = vld [vmem:[%s192 + $0x38] sm:$0xff]
      %v207 = vld [vmem:[%s192 + $0x40] sm:$0x3]
      %v208 = vld [vmem:[%s192 + $0x48] sm:$0xff]
      %v209 = vld [vmem:[%s192 + $0x50] sm:$0xff]
      %v210 = vld [vmem:[%s192 + $0x58] sm:$0x3]
      %v211 = vld [vmem:[%s192 + $0x60] sm:$0xff]
      %v212 = vld [vmem:[%s192 + $0x68] sm:$0xff]
      %v213 = vld [vmem:[%s192 + $0x70] sm:$0x3]
      %v214 = vld [vmem:[%s192 + $0x78] sm:$0xff]
      %v215 = vld [vmem:[%s192 + $0x80] sm:$0xff]
      %v216 = vld [vmem:[%s192 + $0x88] sm:$0x3]
      %v217 = vld [vmem:[%s192 + $0x90] sm:$0xff]
      %v218 = vld [vmem:[%s192 + $0x98] sm:$0xff]
      %v219 = vld [vmem:[%s192 + $0xa0] sm:$0x3]
      %v220 = vld [vmem:[%s192 + $0xa8] sm:$0xff]
      %v221 = vld [vmem:[%s192 + $0xb0] sm:$0xff]
      %v222 = vld [vmem:[%s192 + $0xb8] sm:$0x3]
      %v223 = vld [vmem:[%s192 + $0xc0] sm:$0xff]
      %v224 = vld [vmem:[%s192 + $0xc8] sm:$0xff]
      %v225 = vld [vmem:[%s192 + $0xd0] sm:$0x3]
      %v226 = vld [vmem:[%s192 + $0xd8] sm:$0xff]
      %v227 = vld [vmem:[%s192 + $0xe0] sm:$0xff]
      %v228 = vld [vmem:[%s192 + $0xe8] sm:$0x3]
      %v229 = vld [vmem:[%s192 + $0xf0] sm:$0xff]
      %v230 = vld [vmem:[%s192 + $0xf8] sm:$0xff]
      %v231 = vld [vmem:[%s192 + $0x100] sm:$0x3]
      %v232 = vld [vmem:[%s192 + $0x108] sm:$0xff]
      %v233 = vld [vmem:[%s192 + $0x110] sm:$0xff]
      %v234 = vld [vmem:[%s192 + $0x118] sm:$0x3]
      %v235 = vld [vmem:[%s192 + $0x120] sm:$0xff]
      %v236 = vld [vmem:[%s192 + $0x128] sm:$0xff]
      %v237 = vld [vmem:[%s192 + $0x130] sm:$0x3]
      %v238 = vld [vmem:[%s192 + $0x138] sm:$0xff]
      %v239 = vld [vmem:[%s192 + $0x140] sm:$0xff]
      %v240 = vld [vmem:[%s192 + $0x148] sm:$0x3]
      %v241 = vld [vmem:[%s192 + $0x150] sm:$0xff]
      %v242 = vld [vmem:[%s192 + $0x158] sm:$0xff]
      %v243 = vld [vmem:[%s192 + $0x160] sm:$0x3]
      %v244 = vld [vmem:[%s192 + $0x168] sm:$0xff]
      %v245 = vld [vmem:[%s192 + $0x170] sm:$0xff]
      %v246 = vld [vmem:[%s192 + $0x178] sm:$0x3]
      %v247 = vld [vmem:[%s192 + $0x180] sm:$0xff]
      %v248 = vld [vmem:[%s192 + $0x188] sm:$0xff]
      %v249 = vld [vmem:[%s192 + $0x190] sm:$0x3]
      %v250 = vld [vmem:[%s192 + $0x198] sm:$0xff]
      %v251 = vld [vmem:[%s192 + $0x1a0] sm:$0xff]
      %v252 = vld [vmem:[%s192 + $0x1a8] sm:$0x3]
      %v253 = vmax.f32 %v199, %v202
      %v254 = vmax.f32 %v200, %v203
      %v255 = vmax.f32 %v201, %v204
      %v256 = vmax.f32 %v202, %v205
      %v257 = vmax.f32 %v203, %v206
      %v258 = vmax.f32 %v204, %v207
      %v259 = vmax.f32 %v205, %v208
      %v260 = vmax.f32 %v206, %v209
      %v261 = vmax.f32 %v207, %v210
      %v262 = vmax.f32 %v208, %v211
      %v263 = vmax.f32 %v209, %v212
      %v264 = vmax.f32 %v210, %v213
      %v265 = vmax.f32 %v211, %v214
      %v266 = vmax.f32 %v212, %v215
      %v267 = vmax.f32 %v213, %v216
      %v268 = vmax.f32 %v214, %v217
      %v269 = vmax.f32 %v215, %v218
      %v270 = vmax.f32 %v216, %v219
      %v271 = vmax.f32 %v217, %v220
      %v272 = vmax.f32 %v218, %v221
      %v273 = vmax.f32 %v219, %v222
      %v274 = vmax.f32 %v220, %v223
      %v275 = vmax.f32 %v221, %v224
      %v276 = vmax.f32 %v222, %v225
      %v277 = vmax.f32 %v223, %v226
      %v278 = vmax.f32 %v224, %v227
      %v279 = vmax.f32 %v225, %v228
      %v280 = vmax.f32 %v226, %v229
      %v281 = vmax.f32 %v227, %v230
      %v282 = vmax.f32 %v228, %v231
      %v283 = vmax.f32 %v229, %v232
      %v284 = vmax.f32 %v230, %v233
      %v285 = vmax.f32 %v231, %v234
      %v286 = vmax.f32 %v232, %v235
      %v287 = vmax.f32 %v233, %v236
      %v288 = vmax.f32 %v234, %v237
      %v289 = vmax.f32 %v235, %v238
      %v290 = vmax.f32 %v236, %v239
      %v291 = vmax.f32 %v237, %v240
      %v292 = vmax.f32 %v238, %v241
      %v293 = vmax.f32 %v239, %v242
      %v294 = vmax.f32 %v240, %v243
      %v295 = vmax.f32 %v241, %v244
      %v296 = vmax.f32 %v242, %v245
      %v297 = vmax.f32 %v243, %v246
      %v298 = vmax.f32 %v244, %v247
      %v299 = vmax.f32 %v245, %v248
      %v300 = vmax.f32 %v246, %v249
      %v301 = vmax.f32 %v253, %v205
      %v302 = vmax.f32 %v254, %v206
      %v303 = vmax.f32 %v255, %v207
      %v304 = vmax.f32 %v256, %v208
      %v305 = vmax.f32 %v257, %v209
      %v306 = vmax.f32 %v258, %v210
      %v307 = vmax.f32 %v259, %v211
      %v308 = vmax.f32 %v260, %v212
      %v309 = vmax.f32 %v261, %v213
      %v310 = vmax.f32 %v262, %v214
      %v311 = vmax.f32 %v263, %v215
      %v312 = vmax.f32 %v264, %v216
      %v313 = vmax.f32 %v265, %v217
      %v314 = vmax.f32 %v266, %v218
      %v315 = vmax.f32 %v267, %v219
      %v316 = vmax.f32 %v268, %v220
      %v317 = vmax.f32 %v269, %v221
      %v318 = vmax.f32 %v270, %v222
      %v319 = vmax.f32 %v271, %v223
      %v320 = vmax.f32 %v272, %v224
      %v321 = vmax.f32 %v273, %v225
      %v322 = vmax.f32 %v274, %v226
      %v323 = vmax.f32 %v275, %v227
      %v324 = vmax.f32 %v276, %v228
      %v325 = vmax.f32 %v277, %v229
      %v326 = vmax.f32 %v278, %v230
      %v327 = vmax.f32 %v279, %v231
      %v328 = vmax.f32 %v280, %v232
      %v329 = vmax.f32 %v281, %v233
      %v330 = vmax.f32 %v282, %v234
      %v331 = vmax.f32 %v283, %v235
      %v332 = vmax.f32 %v284, %v236
      %v333 = vmax.f32 %v285, %v237
      %v334 = vmax.f32 %v286, %v238
      %v335 = vmax.f32 %v287, %v239
      %v336 = vmax.f32 %v288, %v240
      %v337 = vmax.f32 %v289, %v241
      %v338 = vmax.f32 %v290, %v242
      %v339 = vmax.f32 %v291, %v243
      %v340 = vmax.f32 %v292, %v244
      %v341 = vmax.f32 %v293, %v245
      %v342 = vmax.f32 %v294, %v246
      %v343 = vmax.f32 %v295, %v247
      %v344 = vmax.f32 %v296, %v248
      %v345 = vmax.f32 %v297, %v249
      %v346 = vmax.f32 %v298, %v250
      %v347 = vmax.f32 %v299, %v251
      %v348 = vmax.f32 %v300, %v252
      %vm397 = vcmask 1046528
      %v398 = vrot.slane %v301, 1
      %v399 = vrot.slane %v302, 1
      %v400 = vsel %vm397, %v398, %v399
      %v401 = vrot.slane %v303, 1
      %v402 = vsel %vm397, %v399, %v401
      %v403 = vrot.slane %v304, 1
      %v404 = vrot.slane %v305, 1
      %v405 = vsel %vm397, %v403, %v404
      %v406 = vrot.slane %v306, 1
      %v407 = vsel %vm397, %v404, %v406
      %v408 = vrot.slane %v307, 1
      %v409 = vrot.slane %v308, 1
      %v410 = vsel %vm397, %v408, %v409
      %v411 = vrot.slane %v309, 1
      %v412 = vsel %vm397, %v409, %v411
      %v413 = vrot.slane %v310, 1
      %v414 = vrot.slane %v311, 1
      %v415 = vsel %vm397, %v413, %v414
      %v416 = vrot.slane %v312, 1
      %v417 = vsel %vm397, %v414, %v416
      %v418 = vrot.slane %v313, 1
      %v419 = vrot.slane %v314, 1
      %v420 = vsel %vm397, %v418, %v419
      %v421 = vrot.slane %v315, 1
      %v422 = vsel %vm397, %v419, %v421
      %v423 = vrot.slane %v316, 1
      %v424 = vrot.slane %v317, 1
      %v425 = vsel %vm397, %v423, %v424
      %v426 = vrot.slane %v318, 1
      %v427 = vsel %vm397, %v424, %v426
      %v428 = vrot.slane %v319, 1
      %v429 = vrot.slane %v320, 1
      %v430 = vsel %vm397, %v428, %v429
      %v431 = vrot.slane %v321, 1
      %v432 = vsel %vm397, %v429, %v431
      %v433 = vrot.slane %v322, 1
      %v434 = vrot.slane %v323, 1
      %v435 = vsel %vm397, %v433, %v434
      %v436 = vrot.slane %v324, 1
      %v437 = vsel %vm397, %v434, %v436
      %v438 = vrot.slane %v325, 1
      %v439 = vrot.slane %v326, 1
      %v440 = vsel %vm397, %v438, %v439
      %v441 = vrot.slane %v327, 1
      %v442 = vsel %vm397, %v439, %v441
      %v443 = vrot.slane %v328, 1
      %v444 = vrot.slane %v329, 1
      %v445 = vsel %vm397, %v443, %v444
      %v446 = vrot.slane %v330, 1
      %v447 = vsel %vm397, %v444, %v446
      %v448 = vrot.slane %v331, 1
      %v449 = vrot.slane %v332, 1
      %v450 = vsel %vm397, %v448, %v449
      %v451 = vrot.slane %v333, 1
      %v452 = vsel %vm397, %v449, %v451
      %v453 = vrot.slane %v334, 1
      %v454 = vrot.slane %v335, 1
      %v455 = vsel %vm397, %v453, %v454
      %v456 = vrot.slane %v336, 1
      %v457 = vsel %vm397, %v454, %v456
      %v458 = vrot.slane %v337, 1
      %v459 = vrot.slane %v338, 1
      %v460 = vsel %vm397, %v458, %v459
      %v461 = vrot.slane %v339, 1
      %v462 = vsel %vm397, %v459, %v461
      %v463 = vrot.slane %v340, 1
      %v464 = vrot.slane %v341, 1
      %v465 = vsel %vm397, %v463, %v464
      %v466 = vrot.slane %v342, 1
      %v467 = vsel %vm397, %v464, %v466
      %v468 = vrot.slane %v343, 1
      %v469 = vrot.slane %v344, 1
      %v470 = vsel %vm397, %v468, %v469
      %v471 = vrot.slane %v345, 1
      %v472 = vsel %vm397, %v469, %v471
      %v473 = vrot.slane %v346, 1
      %v474 = vrot.slane %v347, 1
      %v475 = vsel %vm397, %v473, %v474
      %v476 = vrot.slane %v348, 1
      %v477 = vsel %vm397, %v474, %v476
      %v510 = vmax.f32 %v301, %v400
      %v511 = vmax.f32 %v302, %v402
      %v512 = vmax.f32 %v304, %v405
      %v513 = vmax.f32 %v305, %v407
      %v514 = vmax.f32 %v307, %v410
      %v515 = vmax.f32 %v308, %v412
      %v516 = vmax.f32 %v310, %v415
      %v517 = vmax.f32 %v311, %v417
      %v518 = vmax.f32 %v313, %v420
      %v519 = vmax.f32 %v314, %v422
      %v520 = vmax.f32 %v316, %v425
      %v521 = vmax.f32 %v317, %v427
      %v522 = vmax.f32 %v319, %v430
      %v523 = vmax.f32 %v320, %v432
      %v524 = vmax.f32 %v322, %v435
      %v525 = vmax.f32 %v323, %v437
      %v526 = vmax.f32 %v325, %v440
      %v527 = vmax.f32 %v326, %v442
      %v528 = vmax.f32 %v328, %v445
      %v529 = vmax.f32 %v329, %v447
      %v530 = vmax.f32 %v331, %v450
      %v531 = vmax.f32 %v332, %v452
      %v532 = vmax.f32 %v334, %v455
      %v533 = vmax.f32 %v335, %v457
      %v534 = vmax.f32 %v337, %v460
      %v535 = vmax.f32 %v338, %v462
      %v536 = vmax.f32 %v340, %v465
      %v537 = vmax.f32 %v341, %v467
      %v538 = vmax.f32 %v343, %v470
      %v539 = vmax.f32 %v344, %v472
      %v540 = vmax.f32 %v346, %v475
      %v541 = vmax.f32 %v347, %v477
      %vm542 = vcmask 1045504
      %v543 = vrot.slane %v301, 2
      %v544 = vrot.slane %v302, 2
      %v545 = vsel %vm542, %v543, %v544
      %v546 = vrot.slane %v303, 2
      %v547 = vsel %vm542, %v544, %v546
      %v548 = vrot.slane %v304, 2
      %v549 = vrot.slane %v305, 2
      %v550 = vsel %vm542, %v548, %v549
      %v551 = vrot.slane %v306, 2
      %v552 = vsel %vm542, %v549, %v551
      %v553 = vrot.slane %v307, 2
      %v554 = vrot.slane %v308, 2
      %v555 = vsel %vm542, %v553, %v554
      %v556 = vrot.slane %v309, 2
      %v557 = vsel %vm542, %v554, %v556
      %v558 = vrot.slane %v310, 2
      %v559 = vrot.slane %v311, 2
      %v560 = vsel %vm542, %v558, %v559
      %v561 = vrot.slane %v312, 2
      %v562 = vsel %vm542, %v559, %v561
      %v563 = vrot.slane %v313, 2
      %v564 = vrot.slane %v314, 2
      %v565 = vsel %vm542, %v563, %v564
      %v566 = vrot.slane %v315, 2
      %v567 = vsel %vm542, %v564, %v566
      %v568 = vrot.slane %v316, 2
      %v569 = vrot.slane %v317, 2
      %v570 = vsel %vm542, %v568, %v569
      %v571 = vrot.slane %v318, 2
      %v572 = vsel %vm542, %v569, %v571
      %v573 = vrot.slane %v319, 2
      %v574 = vrot.slane %v320, 2
      %v575 = vsel %vm542, %v573, %v574
      %v576 = vrot.slane %v321, 2
      %v577 = vsel %vm542, %v574, %v576
      %v578 = vrot.slane %v322, 2
      %v579 = vrot.slane %v323, 2
      %v580 = vsel %vm542, %v578, %v579
      %v581 = vrot.slane %v324, 2
      %v582 = vsel %vm542, %v579, %v581
      %v583 = vrot.slane %v325, 2
      %v584 = vrot.slane %v326, 2
      %v585 = vsel %vm542, %v583, %v584
      %v586 = vrot.slane %v327, 2
      %v587 = vsel %vm542, %v584, %v586
      %v588 = vrot.slane %v328, 2
      %v589 = vrot.slane %v329, 2
      %v590 = vsel %vm542, %v588, %v589
      %v591 = vrot.slane %v330, 2
      %v592 = vsel %vm542, %v589, %v591
      %v593 = vrot.slane %v331, 2
      %v594 = vrot.slane %v332, 2
      %v595 = vsel %vm542, %v593, %v594
      %v596 = vrot.slane %v333, 2
      %v597 = vsel %vm542, %v594, %v596
      %v598 = vrot.slane %v334, 2
      %v599 = vrot.slane %v335, 2
      %v600 = vsel %vm542, %v598, %v599
      %v601 = vrot.slane %v336, 2
      %v602 = vsel %vm542, %v599, %v601
      %v603 = vrot.slane %v337, 2
      %v604 = vrot.slane %v338, 2
      %v605 = vsel %vm542, %v603, %v604
      %v606 = vrot.slane %v339, 2
      %v607 = vsel %vm542, %v604, %v606
      %v608 = vrot.slane %v340, 2
      %v609 = vrot.slane %v341, 2
      %v610 = vsel %vm542, %v608, %v609
      %v611 = vrot.slane %v342, 2
      %v612 = vsel %vm542, %v609, %v611
      %v613 = vrot.slane %v343, 2
      %v614 = vrot.slane %v344, 2
      %v615 = vsel %vm542, %v613, %v614
      %v616 = vrot.slane %v345, 2
      %v617 = vsel %vm542, %v614, %v616
      %v618 = vrot.slane %v346, 2
      %v619 = vrot.slane %v347, 2
      %v620 = vsel %vm542, %v618, %v619
      %v621 = vrot.slane %v348, 2
      %v622 = vsel %vm542, %v619, %v621
      %v655 = vmax.f32 %v510, %v545
      %v656 = vmax.f32 %v511, %v547
      %v657 = vmax.f32 %v512, %v550
      %v658 = vmax.f32 %v513, %v552
      %v659 = vmax.f32 %v514, %v555
      %v660 = vmax.f32 %v515, %v557
      %v661 = vmax.f32 %v516, %v560
      %v662 = vmax.f32 %v517, %v562
      %v663 = vmax.f32 %v518, %v565
      %v664 = vmax.f32 %v519, %v567
      %v665 = vmax.f32 %v520, %v570
      %v666 = vmax.f32 %v521, %v572
      %v667 = vmax.f32 %v522, %v575
      %v668 = vmax.f32 %v523, %v577
      %v669 = vmax.f32 %v524, %v580
      %v670 = vmax.f32 %v525, %v582
      %v671 = vmax.f32 %v526, %v585
      %v672 = vmax.f32 %v527, %v587
      %v673 = vmax.f32 %v528, %v590
      %v674 = vmax.f32 %v529, %v592
      %v675 = vmax.f32 %v530, %v595
      %v676 = vmax.f32 %v531, %v597
      %v677 = vmax.f32 %v532, %v600
      %v678 = vmax.f32 %v533, %v602
      %v679 = vmax.f32 %v534, %v605
      %v680 = vmax.f32 %v535, %v607
      %v681 = vmax.f32 %v536, %v610
      %v682 = vmax.f32 %v537, %v612
      %v683 = vmax.f32 %v538, %v615
      %v684 = vmax.f32 %v539, %v617
      %v685 = vmax.f32 %v540, %v620
      %v686 = vmax.f32 %v541, %v622
      %v687 = vpack.c.bf16 %v656, %v655
      %v688 = vpack.c.bf16 %v658, %v657
      %v689 = vpack.c.bf16 %v660, %v659
      %v690 = vpack.c.bf16 %v662, %v661
      %v691 = vpack.c.bf16 %v664, %v663
      %v692 = vpack.c.bf16 %v666, %v665
      %v693 = vpack.c.bf16 %v668, %v667
      %v694 = vpack.c.bf16 %v670, %v669
      %v695 = vpack.c.bf16 %v672, %v671
      %v696 = vpack.c.bf16 %v674, %v673
      %v697 = vpack.c.bf16 %v676, %v675
      %v698 = vpack.c.bf16 %v678, %v677
      %v699 = vpack.c.bf16 %v680, %v679
      %v700 = vpack.c.bf16 %v682, %v681
      %v701 = vpack.c.bf16 %v684, %v683
      %v702 = vpack.c.bf16 %v686, %v685
      %v703 = vld [vmem:[%s1] sm:$0x3]
      %vm704 = vcmask 31744
      %v706 = vsel %vm704, %v687, 0
      %v709 = vsel %vm704, %v688, 0
      %v712 = vsel %vm704, %v689, 0
      %v715 = vsel %vm704, %v690, 0
      %v718 = vsel %vm704, %v691, 0
      %v721 = vsel %vm704, %v692, 0
      %v724 = vsel %vm704, %v693, 0
      %v727 = vsel %vm704, %v694, 0
      %v730 = vsel %vm704, %v695, 0
      %v733 = vsel %vm704, %v696, 0
      %v736 = vsel %vm704, %v697, 0
      %v739 = vsel %vm704, %v698, 0
      %v742 = vsel %vm704, %v699, 0
      %v745 = vsel %vm704, %v700, 0
      %v748 = vsel %vm704, %v701, 0
      %v751 = vsel %vm704, %v702, 0
      %vm753 = vcmask 1041408
      %v755 = vsel %vm753, %v703, 0
      %757 = vmatprep.subr.bf16.mxu0 0
      %758 = vmatpush1.bf16.msra.mxu0 0
      %759 = vmatprep.subr.bf16.mxu0 0
      %760 = vmatpush1.bf16.msra.mxu0 0
      %761 = vmatprep.subr.bf16.mxu0 0
      %762 = vmatpush1.bf16.msra.mxu0 0
      %763 = vmatprep.subr.bf16.mxu0 0
      %764 = vmatpush1.bf16.msra.mxu0 0
      %765 = vmatprep.subr.bf16.mxu0 0
      %766 = vmatpush1.bf16.msra.mxu0 0
      %767 = vmatprep.subr.bf16.mxu0 0
      %768 = vmatpush1.bf16.msra.mxu0 0
      %769 = vmatprep.subr.bf16.mxu0 0
      %770 = vmatpush1.bf16.msra.mxu0 0
      %771 = vmatprep.subr.bf16.mxu0 0
      %772 = vmatpush1.bf16.msra.mxu0 %v755
      %773 = vmatprep.subr.bf16.mxu0 0
      %774 = vmatpush2.bf16.msra.mxu0 0
      %775 = vmatprep.subr.bf16.mxu0 0
      %776 = vmatpush2.bf16.msra.mxu0 0
      %777 = vmatprep.subr.bf16.mxu0 0
      %778 = vmatpush2.bf16.msra.mxu0 0
      %779 = vmatprep.subr.bf16.mxu0 0
      %780 = vmatpush2.bf16.msra.mxu0 0
      %781 = vmatprep.subr.bf16.mxu0 0
      %782 = vmatpush2.bf16.msra.mxu0 0
      %783 = vmatprep.subr.bf16.mxu0 0
      %784 = vmatpush2.bf16.msra.mxu0 0
      %785 = vmatprep.subr.bf16.mxu0 0
      %786 = vmatpush2.bf16.msra.mxu0 0
      %787 = vmatprep.subr.bf16.mxu0 0
      %788 = vmatpush2.bf16.msra.mxu0 0
      %789 = vmatprep.mubr.bf16.mxu0 0
      %790 = vmatmul.mubr.bf16.gmra.mxu0 %v706
      %v791 = vpop.f32.mrf.mxu0
      %v792 = vadd.f32 0.0, %v791
      %v793 = vpop.f32.mrf.mxu0
      %v794 = vpop.f32.mrf.mxu0
      %v795 = vadd.f32 0.0, %v794
      %v796 = vpop.f32.mrf.mxu0
      %797 = vmatprep.mubr.bf16.mxu0 0
      %798 = vmatmul.mubr.bf16.gmra.mxu0 %v709
      %v799 = vpop.f32.mrf.mxu0
      %v800 = vadd.f32 0.0, %v799
      %v801 = vpop.f32.mrf.mxu0
      %v802 = vpop.f32.mrf.mxu0
      %v803 = vadd.f32 0.0, %v802
      %v804 = vpop.f32.mrf.mxu0
      %805 = vmatprep.mubr.bf16.mxu0 0
      %806 = vmatmul.mubr.bf16.gmra.mxu0 %v712
      %v807 = vpop.f32.mrf.mxu0
      %v808 = vadd.f32 0.0, %v807
      %v809 = vpop.f32.mrf.mxu0
      %v810 = vpop.f32.mrf.mxu0
      %v811 = vadd.f32 0.0, %v810
      %v812 = vpop.f32.mrf.mxu0
      %813 = vmatprep.mubr.bf16.mxu0 0
      %814 = vmatmul.mubr.bf16.gmra.mxu0 %v715
      %v815 = vpop.f32.mrf.mxu0
      %v816 = vadd.f32 0.0, %v815
      %v817 = vpop.f32.mrf.mxu0
      %v818 = vpop.f32.mrf.mxu0
      %v819 = vadd.f32 0.0, %v818
      %v820 = vpop.f32.mrf.mxu0
      %821 = vmatprep.mubr.bf16.mxu0 0
      %822 = vmatmul.mubr.bf16.gmra.mxu0 %v718
      %v823 = vpop.f32.mrf.mxu0
      %v824 = vadd.f32 0.0, %v823
      %v825 = vpop.f32.mrf.mxu0
      %v826 = vpop.f32.mrf.mxu0
      %v827 = vadd.f32 0.0, %v826
      %v828 = vpop.f32.mrf.mxu0
      %829 = vmatprep.mubr.bf16.mxu0 0
      %830 = vmatmul.mubr.bf16.gmra.mxu0 %v721
      %v831 = vpop.f32.mrf.mxu0
      %v832 = vadd.f32 0.0, %v831
      %v833 = vpop.f32.mrf.mxu0
      %v834 = vpop.f32.mrf.mxu0
      %v835 = vadd.f32 0.0, %v834
      %v836 = vpop.f32.mrf.mxu0
      %837 = vmatprep.mubr.bf16.mxu0 0
      %838 = vmatmul.mubr.bf16.gmra.mxu0 %v724
      %v839 = vpop.f32.mrf.mxu0
      %v840 = vadd.f32 0.0, %v839
      %v841 = vpop.f32.mrf.mxu0
      %v842 = vpop.f32.mrf.mxu0
      %v843 = vadd.f32 0.0, %v842
      %v844 = vpop.f32.mrf.mxu0
      %845 = vmatprep.mubr.bf16.mxu0 0
      %846 = vmatmul.mubr.bf16.gmra.mxu0 %v727
      %v847 = vpop.f32.mrf.mxu0
      %v848 = vadd.f32 0.0, %v847
      %v849 = vpop.f32.mrf.mxu0
      %v850 = vpop.f32.mrf.mxu0
      %v851 = vadd.f32 0.0, %v850
      %v852 = vpop.f32.mrf.mxu0
      %853 = vmatprep.mubr.bf16.mxu0 0
      %854 = vmatmul.mubr.bf16.gmra.mxu0 %v730
      %v855 = vpop.f32.mrf.mxu0
      %v856 = vadd.f32 0.0, %v855
      %v857 = vpop.f32.mrf.mxu0
      %v858 = vpop.f32.mrf.mxu0
      %v859 = vadd.f32 0.0, %v858
      %v860 = vpop.f32.mrf.mxu0
      %861 = vmatprep.mubr.bf16.mxu0 0
      %862 = vmatmul.mubr.bf16.gmra.mxu0 %v733
      %v863 = vpop.f32.mrf.mxu0
      %v864 = vadd.f32 0.0, %v863
      %v865 = vpop.f32.mrf.mxu0
      %v866 = vpop.f32.mrf.mxu0
      %v867 = vadd.f32 0.0, %v866
      %v868 = vpop.f32.mrf.mxu0
      %869 = vmatprep.mubr.bf16.mxu0 0
      %870 = vmatmul.mubr.bf16.gmra.mxu0 %v736
      %v871 = vpop.f32.mrf.mxu0
      %v872 = vadd.f32 0.0, %v871
      %v873 = vpop.f32.mrf.mxu0
      %v874 = vpop.f32.mrf.mxu0
      %v875 = vadd.f32 0.0, %v874
      %v876 = vpop.f32.mrf.mxu0
      %877 = vmatprep.mubr.bf16.mxu0 0
      %878 = vmatmul.mubr.bf16.gmra.mxu0 %v739
      %v879 = vpop.f32.mrf.mxu0
      %v880 = vadd.f32 0.0, %v879
      %v881 = vpop.f32.mrf.mxu0
      %v882 = vpop.f32.mrf.mxu0
      %v883 = vadd.f32 0.0, %v882
      %v884 = vpop.f32.mrf.mxu0
      %885 = vmatprep.mubr.bf16.mxu0 0
      %886 = vmatmul.mubr.bf16.gmra.mxu0 %v742
      %v887 = vpop.f32.mrf.mxu0
      %v888 = vadd.f32 0.0, %v887
      %v889 = vpop.f32.mrf.mxu0
      %v890 = vpop.f32.mrf.mxu0
      %v891 = vadd.f32 0.0, %v890
      %v892 = vpop.f32.mrf.mxu0
      %893 = vmatprep.mubr.bf16.mxu0 0
      %894 = vmatmul.mubr.bf16.gmra.mxu0 %v745
      %v895 = vpop.f32.mrf.mxu0
      %v896 = vadd.f32 0.0, %v895
      %v897 = vpop.f32.mrf.mxu0
      %v898 = vpop.f32.mrf.mxu0
      %v899 = vadd.f32 0.0, %v898
      %v900 = vpop.f32.mrf.mxu0
      %901 = vmatprep.mubr.bf16.mxu0 0
      %902 = vmatmul.mubr.bf16.gmra.mxu0 %v748
      %v903 = vpop.f32.mrf.mxu0
      %v904 = vadd.f32 0.0, %v903
      %v905 = vpop.f32.mrf.mxu0
      %v906 = vpop.f32.mrf.mxu0
      %v907 = vadd.f32 0.0, %v906
      %v908 = vpop.f32.mrf.mxu0
      %909 = vmatprep.mubr.bf16.mxu0 0
      %910 = vmatmul.mubr.bf16.gmra.mxu0 %v751
      %v911 = vpop.f32.mrf.mxu0
      %v912 = vadd.f32 0.0, %v911
      %v913 = vpop.f32.mrf.mxu0
      %v914 = vpop.f32.mrf.mxu0
      %v915 = vadd.f32 0.0, %v914
      %v916 = vpop.f32.mrf.mxu0
      %917 = vdwg.mxu0
      %v918 = vld [vmem:[%s2] sm:$0x1]
      %v920 = vlaneseq
      %v921 = vshrl.u32 %v920, 7
      %v922 = vsub.s32 0, %v921
      %v923 = vrot.slane %v918, %v922
      %v925 = vmul.f32 %v792, %v923
      %v926 = vmul.f32 %v795, %v923
      %v927 = vmul.f32 %v800, %v923
      %v928 = vmul.f32 %v803, %v923
      %v929 = vmul.f32 %v808, %v923
      %v930 = vmul.f32 %v811, %v923
      %v931 = vmul.f32 %v816, %v923
      %v932 = vmul.f32 %v819, %v923
      %v933 = vmul.f32 %v824, %v923
      %v934 = vmul.f32 %v827, %v923
      %v935 = vmul.f32 %v832, %v923
      %v936 = vmul.f32 %v835, %v923
      %v937 = vmul.f32 %v840, %v923
      %v938 = vmul.f32 %v843, %v923
      %v939 = vmul.f32 %v848, %v923
      %v940 = vmul.f32 %v851, %v923
      %v941 = vmul.f32 %v856, %v923
      %v942 = vmul.f32 %v859, %v923
      %v943 = vmul.f32 %v864, %v923
      %v944 = vmul.f32 %v867, %v923
      %v945 = vmul.f32 %v872, %v923
      %v946 = vmul.f32 %v875, %v923
      %v947 = vmul.f32 %v880, %v923
      %v948 = vmul.f32 %v883, %v923
      %v949 = vmul.f32 %v888, %v923
      %v950 = vmul.f32 %v891, %v923
      %v951 = vmul.f32 %v896, %v923
      %v952 = vmul.f32 %v899, %v923
      %v953 = vmul.f32 %v904, %v923
      %v954 = vmul.f32 %v907, %v923
      %v955 = vmul.f32 %v912, %v923
      %v956 = vmul.f32 %v915, %v923
      %v957 = vld [vmem:[%s3] sm:$0x1]
      %v959 = vlaneseq
      %v960 = vshrl.u32 %v959, 7
      %v961 = vsub.s32 0, %v960
      %v962 = vrot.slane %v957, %v961
      %v964 = vadd.f32 %v925, %v962
      %v965 = vadd.f32 %v926, %v962
      %v966 = vadd.f32 %v927, %v962
      %v967 = vadd.f32 %v928, %v962
      %v968 = vadd.f32 %v929, %v962
      %v969 = vadd.f32 %v930, %v962
      %v970 = vadd.f32 %v931, %v962
      %v971 = vadd.f32 %v932, %v962
      %v972 = vadd.f32 %v933, %v962
      %v973 = vadd.f32 %v934, %v962
      %v974 = vadd.f32 %v935, %v962
      %v975 = vadd.f32 %v936, %v962
      %v976 = vadd.f32 %v937, %v962
      %v977 = vadd.f32 %v938, %v962
      %v978 = vadd.f32 %v939, %v962
      %v979 = vadd.f32 %v940, %v962
      %v980 = vadd.f32 %v941, %v962
      %v981 = vadd.f32 %v942, %v962
      %v982 = vadd.f32 %v943, %v962
      %v983 = vadd.f32 %v944, %v962
      %v984 = vadd.f32 %v945, %v962
      %v985 = vadd.f32 %v946, %v962
      %v986 = vadd.f32 %v947, %v962
      %v987 = vadd.f32 %v948, %v962
      %v988 = vadd.f32 %v949, %v962
      %v989 = vadd.f32 %v950, %v962
      %v990 = vadd.f32 %v951, %v962
      %v991 = vadd.f32 %v952, %v962
      %v992 = vadd.f32 %v953, %v962
      %v993 = vadd.f32 %v954, %v962
      %v994 = vadd.f32 %v955, %v962
      %v995 = vadd.f32 %v956, %v962
      %v996 = vmax.f32 %v964, 0.0
      %v997 = vmax.f32 %v965, 0.0
      %v998 = vmax.f32 %v966, 0.0
      %v999 = vmax.f32 %v967, 0.0
      %v1000 = vmax.f32 %v968, 0.0
      %v1001 = vmax.f32 %v969, 0.0
      %v1002 = vmax.f32 %v970, 0.0
      %v1003 = vmax.f32 %v971, 0.0
      %v1004 = vmax.f32 %v972, 0.0
      %v1005 = vmax.f32 %v973, 0.0
      %v1006 = vmax.f32 %v974, 0.0
      %v1007 = vmax.f32 %v975, 0.0
      %v1008 = vmax.f32 %v976, 0.0
      %v1009 = vmax.f32 %v977, 0.0
      %v1010 = vmax.f32 %v978, 0.0
      %v1011 = vmax.f32 %v979, 0.0
      %v1012 = vmax.f32 %v980, 0.0
      %v1013 = vmax.f32 %v981, 0.0
      %v1014 = vmax.f32 %v982, 0.0
      %v1015 = vmax.f32 %v983, 0.0
      %v1016 = vmax.f32 %v984, 0.0
      %v1017 = vmax.f32 %v985, 0.0
      %v1018 = vmax.f32 %v986, 0.0
      %v1019 = vmax.f32 %v987, 0.0
      %v1020 = vmax.f32 %v988, 0.0
      %v1021 = vmax.f32 %v989, 0.0
      %v1022 = vmax.f32 %v990, 0.0
      %v1023 = vmax.f32 %v991, 0.0
      %v1024 = vmax.f32 %v992, 0.0
      %v1025 = vmax.f32 %v993, 0.0
      %v1026 = vmax.f32 %v994, 0.0
      %v1027 = vmax.f32 %v995, 0.0
      %vm1028 = vcmask 64512
      %1029 = vst.msk [vmem:[%s197] sm:$0xff] %vm1028, %v996
      %1030 = vst.msk [vmem:[%s197 + $0x8] sm:$0xff] %vm1028, %v997
      %1031 = vst.msk [vmem:[%s197 + $0x10] sm:$0xff] %vm1028, %v998
      %1032 = vst.msk [vmem:[%s197 + $0x18] sm:$0xff] %vm1028, %v999
      %1033 = vst.msk [vmem:[%s197 + $0x20] sm:$0xff] %vm1028, %v1000
      %1034 = vst.msk [vmem:[%s197 + $0x28] sm:$0xff] %vm1028, %v1001
      %1035 = vst.msk [vmem:[%s197 + $0x30] sm:$0xff] %vm1028, %v1002
      %1036 = vst.msk [vmem:[%s197 + $0x38] sm:$0xff] %vm1028, %v1003
      %1037 = vst.msk [vmem:[%s197 + $0x40] sm:$0xff] %vm1028, %v1004
      %1038 = vst.msk [vmem:[%s197 + $0x48] sm:$0xff] %vm1028, %v1005
      %1039 = vst.msk [vmem:[%s197 + $0x50] sm:$0xff] %vm1028, %v1006
      %1040 = vst.msk [vmem:[%s197 + $0x58] sm:$0xff] %vm1028, %v1007
      %1041 = vst.msk [vmem:[%s197 + $0x60] sm:$0xff] %vm1028, %v1008
      %1042 = vst.msk [vmem:[%s197 + $0x68] sm:$0xff] %vm1028, %v1009
      %1043 = vst.msk [vmem:[%s197 + $0x70] sm:$0xff] %vm1028, %v1010
      %1044 = vst.msk [vmem:[%s197 + $0x78] sm:$0xff] %vm1028, %v1011
      %1045 = vst.msk [vmem:[%s197 + $0x80] sm:$0xff] %vm1028, %v1012
      %1046 = vst.msk [vmem:[%s197 + $0x88] sm:$0xff] %vm1028, %v1013
      %1047 = vst.msk [vmem:[%s197 + $0x90] sm:$0xff] %vm1028, %v1014
      %1048 = vst.msk [vmem:[%s197 + $0x98] sm:$0xff] %vm1028, %v1015
      %1049 = vst.msk [vmem:[%s197 + $0xa0] sm:$0xff] %vm1028, %v1016
      %1050 = vst.msk [vmem:[%s197 + $0xa8] sm:$0xff] %vm1028, %v1017
      %1051 = vst.msk [vmem:[%s197 + $0xb0] sm:$0xff] %vm1028, %v1018
      %1052 = vst.msk [vmem:[%s197 + $0xb8] sm:$0xff] %vm1028, %v1019
      %1053 = vst.msk [vmem:[%s197 + $0xc0] sm:$0xff] %vm1028, %v1020
      %1054 = vst.msk [vmem:[%s197 + $0xc8] sm:$0xff] %vm1028, %v1021
      %1055 = vst.msk [vmem:[%s197 + $0xd0] sm:$0xff] %vm1028, %v1022
      %1056 = vst.msk [vmem:[%s197 + $0xd8] sm:$0xff] %vm1028, %v1023
      %1057 = vst.msk [vmem:[%s197 + $0xe0] sm:$0xff] %vm1028, %v1024
      %1058 = vst.msk [vmem:[%s197 + $0xe8] sm:$0xff] %vm1028, %v1025
      %1059 = vst.msk [vmem:[%s197 + $0xf0] sm:$0xff] %vm1028, %v1026
      %1060 = vst.msk [vmem:[%s197 + $0xf8] sm:$0xff] %vm1028, %v1027
      %p1061 = scmp.lt.s32.totalorder %s15, 1
      %s1062 = scalar_select %p1061, %s15, 1
      %s1063 = smul.addr %s1062, 32
      %s1064 = smul.addr %s1063, 8
      %s1065 = scalar_lea.vmem %s4, %s1064
      // Predicated region
      $region37: #{inception_sparse_forward.9} parent=35 // pred_check
        %p1066 = pneg %p122
      $region38: #{inception_sparse_forward.9} parent=35 // pred_check_branch
        %1068 = sbr.rel (%p1066) target = $region40
      $region39: #{inception_sparse_forward.9} parent=35 // pred_region
        _
      $region40: #{inception_sparse_forward.9} parent=35 // pred_fallthru
        _
    $region36: #{inception_sparse_forward.9} parent=5 // pred_fallthru
      _
    %p1069 = scmp.le.s32.totalorder 2, %s10
    // Predicated region
    $region41: #{inception_sparse_forward.9} parent=5 // pred_check
      %p1070 = pneg %p1069
    $region42: #{inception_sparse_forward.9} parent=5 // pred_check_branch
      %1072 = sbr.rel (%p1070) target = $region44
    $region43: #{inception_sparse_forward.9} parent=5 // pred_region
      %s1073 = ssub.s32 %s10, 2
      // Predicated region
      $region45: #{inception_sparse_forward.9} parent=43 // pred_check
        %p1074 = pneg %p128
      $region46: #{inception_sparse_forward.9} parent=43 // pred_check_branch
        %1076 = sbr.rel (%p1074) target = $region48
      $region47: #{inception_sparse_forward.9} parent=43 // pred_region
        %p1077 = scmp.lt.s32.totalorder %s16, 1
        %s1078 = scalar_select %p1077, %s16, 1
        %s1079 = smul.addr %s1078, 32
        %s1080 = smul.addr %s1079, 8
        %s1081 = scalar_lea.vmem %s4, %s1080
      $region48: #{inception_sparse_forward.9} parent=43 // pred_fallthru
        _
    $region44: #{inception_sparse_forward.9} parent=5 // pred_fallthru
      _
  $region6: #{inception_sparse_forward.9} parent=0 // loop_footer
    %s14 = sadd.s32 1, %s10
  $region7: #{inception_sparse_forward.9} parent=0 // loop_footer_branch
    %9 = sbr.rel target = $region3
  $region8: #{inception_sparse_forward.9} parent=0 // loop_exit
    _

// kernel: inception_sparse_forward.6
$region0: #{inception_sparse_forward.6}
  #allocation0 [shape = 'u32[]', space=smem, size = 0x4, offset = 0x4, fixed_abs, tag = 'smem constant byte address 0x4 - core index']
  #allocation1 [shape = 'u32[144,128]{1,0:T(1,128)}', space=vmem, size = 0x12000, scoped, tag = 'internal scratch']
  %s0 = inlined_call_operand.vmem [shape: f32[2,18,18,4], index: 0, kind: input, shape index: {}]
  %s1 = inlined_call_operand.vmem [shape: bf16[9,4,8], index: 1, kind: input, shape index: {}]
  %s2 = inlined_call_operand.vmem [shape: f32[1,8], index: 2, kind: input, shape index: {}]
  %s3 = inlined_call_operand.vmem [shape: f32[1,8], index: 3, kind: input, shape index: {}]
  %s4 = inlined_call_operand.vmem [shape: f32[2,16,16,8], index: 4, kind: output, shape index: {}]
  %s5 = sld [smem:[#allocation0]]
  $region49: #{inception_sparse_forward.6} parent=0
    _
  %s7 = ssub.s32 1, %s5
  %s8 = scalar_select 0, %s7, %s5
  loop: start=0, step=1, limit=4
  $region2: #{inception_sparse_forward.6} parent=0 // loop_pre_header
    _
  $region3: #{inception_sparse_forward.6} parent=0 // loop_header
    %s10 = sphi 0, %s14
    %p11 = scmp.ge.s32.totalorder %s10, 4
    %s20 = sphi 0, %s22
    %s23 = sphi 0, %s20
    %s24 = sphi 0, %s23
    %s40 = sphi 0, %s24
    %s44 = sphi 0, %s44
    %s46 = sphi 0, %s44
    %s47 = sphi 0, %s46
    %s61 = sphi 0, %s47
    %s65 = sphi 0, %s65
    %s67 = sphi 0, %s65
    %s68 = sphi 0, %s67
    %s82 = sphi 0, %s68
    %s86 = sphi 0, %s86
    %s88 = sphi 0, %s86
    %s89 = sphi 0, %s88
    %s103 = sphi 0, %s89
    %s109 = sphi 0, %s111
    %s112 = sphi 0, %s109
    %s113 = sphi 0, %s112
    %s129 = sphi 0, %s113
  $region4: #{inception_sparse_forward.6} parent=0 // loop_header_branch
    %13 = sbr.rel (%p11) target = $region8
  $region5: #{inception_sparse_forward.6} parent=0 // loop_body
    %s15 = ssub.s32 %s10, 1
    %s16 = ssub.s32 %s10, 2
    %s17 = sadd.s32 %s10, 1
    %s18 = ssub.s32 %s10, %s17
    %p19 = scmp.eq.s32.totalorder %s18, 0
    %s21 = sadd.s32 %s20, 1
    %s22 = scalar_select %p19, %s20, %s21
    %p25 = pneg %p19
    %p26 = scmp.eq.s32.totalorder %s10, 1
    %p27 = por %p25, %p26
    %p28 = scmp.ne.s32.totalorder %s20, %s23
    %p29 = scmp.eq.s32.totalorder %s10, 0
    %p30 = por %p28, %p29
    %p31 = scmp.ne.s32.totalorder %s20, %s23
    %p32 = scmp.eq.s32.totalorder %s15, 1
    %p33 = por %p31, %p32
    %p34 = scmp.ne.s32.totalorder %s23, %s24
    %p35 = scmp.eq.s32.totalorder %s15, 0
    %p36 = por %p34, %p35
    %p37 = scmp.ne.s32.totalorder %s23, %s24
    %p38 = scmp.eq.s32.totalorder %s16, 1
    %p39 = por %p37, %p38
    %p41 = scmp.ne.s32.totalorder %s24, %s40
    %p42 = scmp.eq.s32.totalorder %s16, 0
    %p43 = por %p41, %p42
    %s45 = sadd.s32 %s44, 1
    %p48 = scmp.eq.s32.totalorder %s10, 1
    %p49 = scmp.ne.s32.totalorder %s44, %s46
    %p50 = scmp.eq.s32.totalorder %s10, 0
    %p51 = por %p49, %p50
    %p52 = scmp.ne.s32.totalorder %s44, %s46
    %p53 = scmp.eq.s32.totalorder %s15, 1
    %p54 = por %p52, %p53
    %p55 = scmp.ne.s32.totalorder %s46, %s47
    %p56 = scmp.eq.s32.totalorder %s15, 0
    %p57 = por %p55, %p56
    %p58 = scmp.ne.s32.totalorder %s46, %s47
    %p59 = scmp.eq.s32.totalorder %s16, 1
    %p60 = por %p58, %p59
    %p62 = scmp.ne.s32.totalorder %s47, %s61
    %p63 = scmp.eq.s32.totalorder %s16, 0
    %p64 = por %p62, %p63
    %s66 = sadd.s32 %s65, 1
    %p69 = scmp.eq.s32.totalorder %s10, 1
    %p70 = scmp.ne.s32.totalorder %s65, %s67
    %p71 = scmp.eq.s32.totalorder %s10, 0
    %p72 = por %p70, %p71
    %p73 = scmp.ne.s32.totalorder %s65, %s67
    %p74 = scmp.eq.s32.totalorder %s15, 1
    %p75 = por %p73, %p74
    %p76 = scmp.ne.s32.totalorder %s67, %s68
    %p77 = scmp.eq.s32.totalorder %s15, 0
    %p78 = por %p76, %p77
    %p79 = scmp.ne.s32.totalorder %s67, %s68
    %p80 = scmp.eq.s32.totalorder %s16, 1
    %p81 = por %p79, %p80
    %p83 = scmp.ne.s32.totalorder %s68, %s82
    %p84 = scmp.eq.s32.totalorder %s16, 0
    %p85 = por %p83, %p84
    %s87 = sadd.s32 %s86, 1
    %p90 = scmp.eq.s32.totalorder %s10, 1
    %p91 = scmp.ne.s32.totalorder %s86, %s88
    %p92 = scmp.eq.s32.totalorder %s10, 0
    %p93 = por %p91, %p92
    %p94 = scmp.ne.s32.totalorder %s86, %s88
    %p95 = scmp.eq.s32.totalorder %s15, 1
    %p96 = por %p94, %p95
    %p97 = scmp.ne.s32.totalorder %s88, %s89
    %p98 = scmp.eq.s32.totalorder %s15, 0
    %p99 = por %p97, %p98
    %p100 = scmp.ne.s32.totalorder %s88, %s89
    %p101 = scmp.eq.s32.totalorder %s16, 1
    %p102 = por %p100, %p101
    %p104 = scmp.ne.s32.totalorder %s89, %s103
    %p105 = scmp.eq.s32.totalorder %s16, 0
    %p106 = por %p104, %p105
    %s107 = ssub.s32 %s10, %s17
    %p108 = scmp.eq.s32.totalorder %s107, 0
    %s110 = sadd.s32 %s109, 1
    %s111 = scalar_select %p108, %s109, %s110
    %p114 = pneg %p108
    %p115 = scmp.eq.s32.totalorder %s10, 1
    %p116 = por %p114, %p115
    %p117 = scmp.ne.s32.totalorder %s109, %s112
    %p118 = scmp.eq.s32.totalorder %s10, 0
    %p119 = por %p117, %p118
    %p120 = scmp.ne.s32.totalorder %s109, %s112
    %p121 = scmp.eq.s32.totalorder %s15, 1
    %p122 = por %p120, %p121
    %p123 = scmp.ne.s32.totalorder %s112, %s113
    %p124 = scmp.eq.s32.totalorder %s15, 0
    %p125 = por %p123, %p124
    %p126 = scmp.ne.s32.totalorder %s112, %s113
    %p127 = scmp.eq.s32.totalorder %s16, 1
    %p128 = por %p126, %p127
    %p130 = scmp.ne.s32.totalorder %s113, %s129
    %p131 = scmp.eq.s32.totalorder %s16, 0
    %p132 = por %p130, %p131
    %p133 = scmp.le.s32.totalorder 1, %s10
    %p134 = scmp.lt.s32.totalorder %s10, 3
    %p135 = pnand %p133, %p134
    %p136 = pneg %p135
    // Predicated region
    $region9: #{inception_sparse_forward.6} parent=5 // pred_check
      _
    $region10: #{inception_sparse_forward.6} parent=5 // pred_check_branch
      %138 = sbr.rel (%p135) target = $region12
    $region11: #{inception_sparse_forward.6} parent=5 // pred_region
      %s139 = ssub.s32 %s10, 1
      // Predicated region
      $region13: #{inception_sparse_forward.6} parent=11 // pred_check
        %p140 = pneg %p57
      $region14: #{inception_sparse_forward.6} parent=11 // pred_check_branch
        %142 = sbr.rel (%p140) target = $region16
      $region15: #{inception_sparse_forward.6} parent=11 // pred_region
        _
      $region16: #{inception_sparse_forward.6} parent=11 // pred_fallthru
        _
      // Predicated region
      $region17: #{inception_sparse_forward.6} parent=11 // pred_check
        %p143 = pneg %p78
      $region18: #{inception_sparse_forward.6} parent=11 // pred_check_branch
        %145 = sbr.rel (%p143) target = $region20
      $region19: #{inception_sparse_forward.6} parent=11 // pred_region
        _
      $region20: #{inception_sparse_forward.6} parent=11 // pred_fallthru
        _
      // Predicated region
      $region21: #{inception_sparse_forward.6} parent=11 // pred_check
        %p146 = pneg %p99
      $region22: #{inception_sparse_forward.6} parent=11 // pred_check_branch
        %148 = sbr.rel (%p146) target = $region24
      $region23: #{inception_sparse_forward.6} parent=11 // pred_region
        _
      $region24: #{inception_sparse_forward.6} parent=11 // pred_fallthru
        _
    $region12: #{inception_sparse_forward.6} parent=5 // pred_fallthru
      _
    %p149 = scmp.lt.s32.totalorder %s10, 2
    // Predicated region
    $region25: #{inception_sparse_forward.6} parent=5 // pred_check
      %p150 = pneg %p149
    $region26: #{inception_sparse_forward.6} parent=5 // pred_check_branch
      %152 = sbr.rel (%p150) target = $region28
    $region27: #{inception_sparse_forward.6} parent=5 // pred_region
      // Predicated region
      $region29: #{inception_sparse_forward.6} parent=27 // pred_check
        %p153 = pneg %p30
      $region30: #{inception_sparse_forward.6} parent=27 // pred_check_branch
        %155 = sbr.rel (%p153) target = $region32
      $region31: #{inception_sparse_forward.6} parent=27 // pred_region
        %p156 = scmp.lt.s32.totalorder %s10, 1
        %s157 = scalar_select %p156, %s10, 1
        %s158 = smul.addr %s157, 54
        %s159 = smul.addr %s158, 8
        %s160 = scalar_lea.vmem %s0, %s159
      $region32: #{inception_sparse_forward.6} parent=27 // pred_fallthru
        _
    $region28: #{inception_sparse_forward.6} parent=5 // pred_fallthru
      _
    %p161 = scmp.le.s32.totalorder 1, %s10
    %p162 = scmp.lt.s32.totalorder %s10, 3
    %p163 = pnand %p161, %p162
    %p164 = pneg %p163
    // Predicated region
    $region33: #{inception_sparse_forward.6} parent=5 // pred_check
      _
    $region34: #{inception_sparse_forward.6} parent=5 // pred_check_branch
      %166 = sbr.rel (%p163) target = $region36
    $region35: #{inception_sparse_forward.6} parent=5 // pred_region
      %s167 = ssub.s32 %s10, 1
      %p168 = scmp.lt.s32.totalorder %s15, 1
      %s169 = scalar_select %p168, %s15, 1
      %s170 = smul.addr %s169, 54
      %s171 = smul.addr %s170, 8
      %s172 = scalar_lea.vmem %s0, %s171
      %p173 = pneg %p36
      %p174 = pneg %p33
      %p175 = pneg %p57
      %p176 = pneg %p54
      %p177 = pneg %p78
      %p178 = pneg %p75
      %p179 = pneg %p99
      %p180 = pneg %p96
      %p181 = pneg %p125
      %p182 = pneg %p122
      %p183 = scmp.lt.s32.totalorder %s15, 1
      %s184 = scalar_select %p183, %s15, 1
      %s185 = smul.addr %s184, 32
      %s186 = smul.addr %s185, 8
      %s187 = scalar_lea.vmem %s4, %s186
      %p188 = scmp.lt.s32.totalorder %s15, 1
      %s189 = scalar_select %p188, %s15, 1
      %s190 = smul.addr %s189, 54
      %s191 = smul.addr %s190, 8
      %s192 = scalar_lea.vmem %s0, %s191
      %p193 = scmp.lt.s32.totalorder %s15, 1
      %s194 = scalar_select %p193, %s15, 1
      %s195 = smul.addr %s194, 32
      %s196 = smul.addr %s195, 8
      %s197 = scalar_lea.vmem %s4, %s196
      %v199 = vld [vmem:[%s192] sm:$0xff]
      %v200 = vld [vmem:[%s192 + $0x8] sm:$0xff]
      %v201 = vld [vmem:[%s192 + $0x10] sm:$0x3]
      %v202 = vld [vmem:[%s192 + $0x18] sm:$0xff]
      %v203 = vld [vmem:[%s192 + $0x20] sm:$0xff]
      %v204 = vld [vmem:[%s192 + $0x28] sm:$0x3]
      %v205 = vld [vmem:[%s192 + $0x30] sm:$0xff]
      %v206 = vld [vmem:[%s192 + $0x38] sm:$0xff]
      %v207 = vld [vmem:[%s192 + $0x40] sm:$0x3]
      %v208 = vld [vmem:[%s192 + $0x48] sm:$0xff]
      %v209 = vld [vmem:[%s192 + $0x50] sm:$0xff]
      %v210 = vld [vmem:[%s192 + $0x58] sm:$0x3]
      %v211 = vld [vmem:[%s192 + $0x60] sm:$0xff]
      %v212 = vld [vmem:[%s192 + $0x68] sm:$0xff]
      %v213 = vld [vmem:[%s192 + $0x70] sm:$0x3]
      %v214 = vld [vmem:[%s192 + $0x78] sm:$0xff]
      %v215 = vld [vmem:[%s192 + $0x80] sm:$0xff]
      %v216 = vld [vmem:[%s192 + $0x88] sm:$0x3]
      %v217 = vld [vmem:[%s192 + $0x90] sm:$0xff]
      %v218 = vld [vmem:[%s192 + $0x98] sm:$0xff]
      %v219 = vld [vmem:[%s192 + $0xa0] sm:$0x3]
      %v220 = vld [vmem:[%s192 + $0xa8] sm:$0xff]
      %v221 = vld [vmem:[%s192 + $0xb0] sm:$0xff]
      %v222 = vld [vmem:[%s192 + $0xb8] sm:$0x3]
      %v223 = vld [vmem:[%s192 + $0xc0] sm:$0xff]
      %v224 = vld [vmem:[%s192 + $0xc8] sm:$0xff]
      %v225 = vld [vmem:[%s192 + $0xd0] sm:$0x3]
      %v226 = vld [vmem:[%s192 + $0xd8] sm:$0xff]
      %v227 = vld [vmem:[%s192 + $0xe0] sm:$0xff]
      %v228 = vld [vmem:[%s192 + $0xe8] sm:$0x3]
      %v229 = vld [vmem:[%s192 + $0xf0] sm:$0xff]
      %v230 = vld [vmem:[%s192 + $0xf8] sm:$0xff]
      %v231 = vld [vmem:[%s192 + $0x100] sm:$0x3]
      %v232 = vld [vmem:[%s192 + $0x108] sm:$0xff]
      %v233 = vld [vmem:[%s192 + $0x110] sm:$0xff]
      %v234 = vld [vmem:[%s192 + $0x118] sm:$0x3]
      %v235 = vld [vmem:[%s192 + $0x120] sm:$0xff]
      %v236 = vld [vmem:[%s192 + $0x128] sm:$0xff]
      %v237 = vld [vmem:[%s192 + $0x130] sm:$0x3]
      %v238 = vld [vmem:[%s192 + $0x138] sm:$0xff]
      %v239 = vld [vmem:[%s192 + $0x140] sm:$0xff]
      %v240 = vld [vmem:[%s192 + $0x148] sm:$0x3]
      %v241 = vld [vmem:[%s192 + $0x150] sm:$0xff]
      %v242 = vld [vmem:[%s192 + $0x158] sm:$0xff]
      %v243 = vld [vmem:[%s192 + $0x160] sm:$0x3]
      %v244 = vld [vmem:[%s192 + $0x168] sm:$0xff]
      %v245 = vld [vmem:[%s192 + $0x170] sm:$0xff]
      %v246 = vld [vmem:[%s192 + $0x178] sm:$0x3]
      %v247 = vld [vmem:[%s192 + $0x180] sm:$0xff]
      %v248 = vld [vmem:[%s192 + $0x188] sm:$0xff]
      %v249 = vld [vmem:[%s192 + $0x190] sm:$0x3]
      %v250 = vld [vmem:[%s192 + $0x198] sm:$0xff]
      %v251 = vld [vmem:[%s192 + $0x1a0] sm:$0xff]
      %v252 = vld [vmem:[%s192 + $0x1a8] sm:$0x3]
      %v253 = vpack.c.bf16 %v200, %v199
      %v254 = vpack.c.bf16 %v201, %v201
      %v255 = vpack.c.bf16 %v203, %v202
      %v256 = vpack.c.bf16 %v204, %v204
      %v257 = vpack.c.bf16 %v206, %v205
      %v258 = vpack.c.bf16 %v207, %v207
      %v259 = vpack.c.bf16 %v209, %v208
      %v260 = vpack.c.bf16 %v210, %v210
      %v261 = vpack.c.bf16 %v212, %v211
      %v262 = vpack.c.bf16 %v213, %v213
      %v263 = vpack.c.bf16 %v215, %v214
      %v264 = vpack.c.bf16 %v216, %v216
      %v265 = vpack.c.bf16 %v218, %v217
      %v266 = vpack.c.bf16 %v219, %v219
      %v267 = vpack.c.bf16 %v221, %v220
      %v268 = vpack.c.bf16 %v222, %v222
      %v269 = vpack.c.bf16 %v224, %v223
      %v270 = vpack.c.bf16 %v225, %v225
      %v271 = vpack.c.bf16 %v227, %v226
      %v272 = vpack.c.bf16 %v228, %v228
      %v273 = vpack.c.bf16 %v230, %v229
      %v274 = vpack.c.bf16 %v231, %v231
      %v275 = vpack.c.bf16 %v233, %v232
      %v276 = vpack.c.bf16 %v234, %v234
      %v277 = vpack.c.bf16 %v236, %v235
      %v278 = vpack.c.bf16 %v237, %v237
      %v279 = vpack.c.bf16 %v239, %v238
      %v280 = vpack.c.bf16 %v240, %v240
      %v281 = vpack.c.bf16 %v242, %v241
      %v282 = vpack.c.bf16 %v243, %v243
      %v283 = vpack.c.bf16 %v245, %v244
      %v284 = vpack.c.bf16 %v246, %v246
      %v285 = vpack.c.bf16 %v248, %v247
      %v286 = vpack.c.bf16 %v249, %v249
      %v287 = vpack.c.bf16 %v251, %v250
      %v288 = vpack.c.bf16 %v252, %v252
      %v289 = vld [vmem:[%s1] sm:$0x3]
      %vm290 = vsmask.f32 7424
      %v292 = vshrl.u32 %v253, 16
      %v294 = vshll.u32 %v253, 16
      %v296 = vrot.slane %v294, 1
      %v297 = vor.u32 %v292, %v296
      %v299 = vshll.u32 %v254, 16
      %v301 = vrot.slane %v299, 1
      %v302 = vsel %vm290, %v297, %v301
      %v304 = vshrl.u32 %v255, 16
      %v306 = vshll.u32 %v255, 16
      %v308 = vrot.slane %v306, 1
      %v309 = vor.u32 %v304, %v308
      %v311 = vshll.u32 %v256, 16
      %v313 = vrot.slane %v311, 1
      %v314 = vsel %vm290, %v309, %v313
      %v316 = vshrl.u32 %v257, 16
      %v318 = vshll.u32 %v257, 16
      %v320 = vrot.slane %v318, 1
      %v321 = vor.u32 %v316, %v320
      %v323 = vshll.u32 %v258, 16
      %v325 = vrot.slane %v323, 1
      %v326 = vsel %vm290, %v321, %v325
      %v328 = vshrl.u32 %v259, 16
      %v330 = vshll.u32 %v259, 16
      %v332 = vrot.slane %v330, 1
      %v333 = vor.u32 %v328, %v332
      %v335 = vshll.u32 %v260, 16
      %v337 = vrot.slane %v335, 1
      %v338 = vsel %vm290, %v333, %v337
      %v340 = vshrl.u32 %v261, 16
      %v342 = vshll.u32 %v261, 16
      %v344 = vrot.slane %v342, 1
      %v345 = vor.u32 %v340, %v344
      %v347 = vshll.u32 %v262, 16
      %v349 = vrot.slane %v347, 1
      %v350 = vsel %vm290, %v345, %v349
      %v352 = vshrl.u32 %v263, 16
      %v354 = vshll.u32 %v263, 16
      %v356 = vrot.slane %v354, 1
      %v357 = vor.u32 %v352, %v356
      %v359 = vshll.u32 %v264, 16
      %v361 = vrot.slane %v359, 1
      %v362 = vsel %vm290, %v357, %v361
      %v364 = vshrl.u32 %v265, 16
      %v366 = vshll.u32 %v265, 16
      %v368 = vrot.slane %v366, 1
      %v369 = vor.u32 %v364, %v368
      %v371 = vshll.u32 %v266, 16
      %v373 = vrot.slane %v371, 1
      %v374 = vsel %vm290, %v369, %v373
      %v376 = vshrl.u32 %v267, 16
      %v378 = vshll.u32 %v267, 16
      %v380 = vrot.slane %v378, 1
      %v381 = vor.u32 %v376, %v380
      %v383 = vshll.u32 %v268, 16
      %v385 = vrot.slane %v383, 1
      %v386 = vsel %vm290, %v381, %v385
      %v388 = vshrl.u32 %v269, 16
      %v390 = vshll.u32 %v269, 16
      %v392 = vrot.slane %v390, 1
      %v393 = vor.u32 %v388, %v392
      %v395 = vshll.u32 %v270, 16
      %v397 = vrot.slane %v395, 1
      %v398 = vsel %vm290, %v393, %v397
      %v400 = vshrl.u32 %v271, 16
      %v402 = vshll.u32 %v271, 16
      %v404 = vrot.slane %v402, 1
      %v405 = vor.u32 %v400, %v404
      %v407 = vshll.u32 %v272, 16
      %v409 = vrot.slane %v407, 1
      %v410 = vsel %vm290, %v405, %v409
      %v412 = vshrl.u32 %v273, 16
      %v414 = vshll.u32 %v273, 16
      %v416 = vrot.slane %v414, 1
      %v417 = vor.u32 %v412, %v416
      %v419 = vshll.u32 %v274, 16
      %v421 = vrot.slane %v419, 1
      %v422 = vsel %vm290, %v417, %v421
      %v424 = vshrl.u32 %v275, 16
      %v426 = vshll.u32 %v275, 16
      %v428 = vrot.slane %v426, 1
      %v429 = vor.u32 %v424, %v428
      %v431 = vshll.u32 %v276, 16
      %v433 = vrot.slane %v431, 1
      %v434 = vsel %vm290, %v429, %v433
      %v436 = vshrl.u32 %v277, 16
      %v438 = vshll.u32 %v277, 16
      %v440 = vrot.slane %v438, 1
      %v441 = vor.u32 %v436, %v440
      %v443 = vshll.u32 %v278, 16
      %v445 = vrot.slane %v443, 1
      %v446 = vsel %vm290, %v441, %v445
      %v448 = vshrl.u32 %v279, 16
      %v450 = vshll.u32 %v279, 16
      %v452 = vrot.slane %v450, 1
      %v453 = vor.u32 %v448, %v452
      %v455 = vshll.u32 %v280, 16
      %v457 = vrot.slane %v455, 1
      %v458 = vsel %vm290, %v453, %v457
      %v460 = vshrl.u32 %v281, 16
      %v462 = vshll.u32 %v281, 16
      %v464 = vrot.slane %v462, 1
      %v465 = vor.u32 %v460, %v464
      %v467 = vshll.u32 %v282, 16
      %v469 = vrot.slane %v467, 1
      %v470 = vsel %vm290, %v465, %v469
      %v472 = vshrl.u32 %v283, 16
      %v474 = vshll.u32 %v283, 16
      %v476 = vrot.slane %v474, 1
      %v477 = vor.u32 %v472, %v476
      %v479 = vshll.u32 %v284, 16
      %v481 = vrot.slane %v479, 1
      %v482 = vsel %vm290, %v477, %v481
      %s483 = scalar_lea.vmem %s1, 2
      %v484 = vld [vmem:[%s483] sm:$0x3]
      %vm485 = vcmask 31744
      %v487 = vsel %vm485, %v302, 0
      %v490 = vsel %vm485, %v314, 0
      %v493 = vsel %vm485, %v326, 0
      %v496 = vsel %vm485, %v338, 0
      %v499 = vsel %vm485, %v350, 0
      %v502 = vsel %vm485, %v362, 0
      %v505 = vsel %vm485, %v374, 0
      %v508 = vsel %vm485, %v386, 0
      %v511 = vsel %vm485, %v398, 0
      %v514 = vsel %vm485, %v410, 0
      %v517 = vsel %vm485, %v422, 0
      %v520 = vsel %vm485, %v434, 0
      %v523 = vsel %vm485, %v446, 0
      %v526 = vsel %vm485, %v458, 0
      %v529 = vsel %vm485, %v470, 0
      %v532 = vsel %vm485, %v482, 0
      %vm534 = vcmask 1041408
      %v536 = vsel %vm534, %v484, 0
      %538 = vmatprep.subr.bf16.mxu0 0
      %539 = vmatpush1.bf16.msra.mxu0 0
      %540 = vmatprep.subr.bf16.mxu0 0
      %541 = vmatpush1.bf16.msra.mxu0 0
      %542 = vmatprep.subr.bf16.mxu0 0
      %543 = vmatpush1.bf16.msra.mxu0 0
      %544 = vmatprep.subr.bf16.mxu0 0
      %545 = vmatpush1.bf16.msra.mxu0 0
      %546 = vmatprep.subr.bf16.mxu0 0
      %547 = vmatpush1.bf16.msra.mxu0 0
      %548 = vmatprep.subr.bf16.mxu0 0
      %549 = vmatpush1.bf16.msra.mxu0 0
      %550 = vmatprep.subr.bf16.mxu0 0
      %551 = vmatpush1.bf16.msra.mxu0 0
      %552 = vmatprep.subr.bf16.mxu0 0
      %553 = vmatpush1.bf16.msra.mxu0 %v536
      %554 = vmatprep.subr.bf16.mxu0 0
      %555 = vmatpush2.bf16.msra.mxu0 0
      %556 = vmatprep.subr.bf16.mxu0 0
      %557 = vmatpush2.bf16.msra.mxu0 0
      %558 = vmatprep.subr.bf16.mxu0 0
      %559 = vmatpush2.bf16.msra.mxu0 0
      %560 = vmatprep.subr.bf16.mxu0 0
      %561 = vmatpush2.bf16.msra.mxu0 0
      %562 = vmatprep.subr.bf16.mxu0 0
      %563 = vmatpush2.bf16.msra.mxu0 0
      %564 = vmatprep.subr.bf16.mxu0 0
      %565 = vmatpush2.bf16.msra.mxu0 0
      %566 = vmatprep.subr.bf16.mxu0 0
      %567 = vmatpush2.bf16.msra.mxu0 0
      %568 = vmatprep.subr.bf16.mxu0 0
      %569 = vmatpush2.bf16.msra.mxu0 0
      %570 = vmatprep.mubr.bf16.mxu0 0
      %571 = vmatmul.mubr.bf16.gmra.mxu0 %v487
      %v572 = vpop.f32.mrf.mxu0
      %v573 = vadd.f32 0.0, %v572
      %v574 = vpop.f32.mrf.mxu0
      %v575 = vpop.f32.mrf.mxu0
      %v576 = vadd.f32 0.0, %v575
      %v577 = vpop.f32.mrf.mxu0
      %578 = vmatprep.mubr.bf16.mxu0 0
      %579 = vmatmul.mubr.bf16.gmra.mxu0 %v490
      %v580 = vpop.f32.mrf.mxu0
      %v581 = vadd.f32 0.0, %v580
      %v582 = vpop.f32.mrf.mxu0
      %v583 = vpop.f32.mrf.mxu0
      %v584 = vadd.f32 0.0, %v583
      %v585 = vpop.f32.mrf.mxu0
      %586 = vmatprep.mubr.bf16.mxu0 0
      %587 = vmatmul.mubr.bf16.gmra.mxu0 %v493
      %v588 = vpop.f32.mrf.mxu0
      %v589 = vadd.f32 0.0, %v588
      %v590 = vpop.f32.mrf.mxu0
      %v591 = vpop.f32.mrf.mxu0
      %v592 = vadd.f32 0.0, %v591
      %v593 = vpop.f32.mrf.mxu0
      %594 = vmatprep.mubr.bf16.mxu0 0
      %595 = vmatmul.mubr.bf16.gmra.mxu0 %v496
      %v596 = vpop.f32.mrf.mxu0
      %v597 = vadd.f32 0.0, %v596
      %v598 = vpop.f32.mrf.mxu0
      %v599 = vpop.f32.mrf.mxu0
      %v600 = vadd.f32 0.0, %v599
      %v601 = vpop.f32.mrf.mxu0
      %602 = vmatprep.mubr.bf16.mxu0 0
      %603 = vmatmul.mubr.bf16.gmra.mxu0 %v499
      %v604 = vpop.f32.mrf.mxu0
      %v605 = vadd.f32 0.0, %v604
      %v606 = vpop.f32.mrf.mxu0
      %v607 = vpop.f32.mrf.mxu0
      %v608 = vadd.f32 0.0, %v607
      %v609 = vpop.f32.mrf.mxu0
      %610 = vmatprep.mubr.bf16.mxu0 0
      %611 = vmatmul.mubr.bf16.gmra.mxu0 %v502
      %v612 = vpop.f32.mrf.mxu0
      %v613 = vadd.f32 0.0, %v612
      %v614 = vpop.f32.mrf.mxu0
      %v615 = vpop.f32.mrf.mxu0
      %v616 = vadd.f32 0.0, %v615
      %v617 = vpop.f32.mrf.mxu0
      %618 = vmatprep.mubr.bf16.mxu0 0
      %619 = vmatmul.mubr.bf16.gmra.mxu0 %v505
      %v620 = vpop.f32.mrf.mxu0
      %v621 = vadd.f32 0.0, %v620
      %v622 = vpop.f32.mrf.mxu0
      %v623 = vpop.f32.mrf.mxu0
      %v624 = vadd.f32 0.0, %v623
      %v625 = vpop.f32.mrf.mxu0
      %626 = vmatprep.mubr.bf16.mxu0 0
      %627 = vmatmul.mubr.bf16.gmra.mxu0 %v508
      %v628 = vpop.f32.mrf.mxu0
      %v629 = vadd.f32 0.0, %v628
      %v630 = vpop.f32.mrf.mxu0
      %v631 = vpop.f32.mrf.mxu0
      %v632 = vadd.f32 0.0, %v631
      %v633 = vpop.f32.mrf.mxu0
      %634 = vmatprep.mubr.bf16.mxu0 0
      %635 = vmatmul.mubr.bf16.gmra.mxu0 %v511
      %v636 = vpop.f32.mrf.mxu0
      %v637 = vadd.f32 0.0, %v636
      %v638 = vpop.f32.mrf.mxu0
      %v639 = vpop.f32.mrf.mxu0
      %v640 = vadd.f32 0.0, %v639
      %v641 = vpop.f32.mrf.mxu0
      %642 = vmatprep.mubr.bf16.mxu0 0
      %643 = vmatmul.mubr.bf16.gmra.mxu0 %v514
      %v644 = vpop.f32.mrf.mxu0
      %v645 = vadd.f32 0.0, %v644
      %v646 = vpop.f32.mrf.mxu0
      %v647 = vpop.f32.mrf.mxu0
      %v648 = vadd.f32 0.0, %v647
      %v649 = vpop.f32.mrf.mxu0
      %650 = vmatprep.mubr.bf16.mxu0 0
      %651 = vmatmul.mubr.bf16.gmra.mxu0 %v517
      %v652 = vpop.f32.mrf.mxu0
      %v653 = vadd.f32 0.0, %v652
      %v654 = vpop.f32.mrf.mxu0
      %v655 = vpop.f32.mrf.mxu0
      %v656 = vadd.f32 0.0, %v655
      %v657 = vpop.f32.mrf.mxu0
      %658 = vmatprep.mubr.bf16.mxu0 0
      %659 = vmatmul.mubr.bf16.gmra.mxu0 %v520
      %v660 = vpop.f32.mrf.mxu0
      %v661 = vadd.f32 0.0, %v660
      %v662 = vpop.f32.mrf.mxu0
      %v663 = vpop.f32.mrf.mxu0
      %v664 = vadd.f32 0.0, %v663
      %v665 = vpop.f32.mrf.mxu0
      %666 = vmatprep.mubr.bf16.mxu0 0
      %667 = vmatmul.mubr.bf16.gmra.mxu0 %v523
      %v668 = vpop.f32.mrf.mxu0
      %v669 = vadd.f32 0.0, %v668
      %v670 = vpop.f32.mrf.mxu0
      %v671 = vpop.f32.mrf.mxu0
      %v672 = vadd.f32 0.0, %v671
      %v673 = vpop.f32.mrf.mxu0
      %674 = vmatprep.mubr.bf16.mxu0 0
      %675 = vmatmul.mubr.bf16.gmra.mxu0 %v526
      %v676 = vpop.f32.mrf.mxu0
      %v677 = vadd.f32 0.0, %v676
      %v678 = vpop.f32.mrf.mxu0
      %v679 = vpop.f32.mrf.mxu0
      %v680 = vadd.f32 0.0, %v679
      %v681 = vpop.f32.mrf.mxu0
      %682 = vmatprep.mubr.bf16.mxu0 0
      %683 = vmatmul.mubr.bf16.gmra.mxu0 %v529
      %v684 = vpop.f32.mrf.mxu0
      %v685 = vadd.f32 0.0, %v684
      %v686 = vpop.f32.mrf.mxu0
      %v687 = vpop.f32.mrf.mxu0
      %v688 = vadd.f32 0.0, %v687
      %v689 = vpop.f32.mrf.mxu0
      %690 = vmatprep.mubr.bf16.mxu0 0
      %691 = vmatmul.mubr.bf16.gmra.mxu0 %v532
      %v692 = vpop.f32.mrf.mxu0
      %v693 = vadd.f32 0.0, %v692
      %v694 = vpop.f32.mrf.mxu0
      %v695 = vpop.f32.mrf.mxu0
      %v696 = vadd.f32 0.0, %v695
      %v697 = vpop.f32.mrf.mxu0
      %698 = vdwg.mxu0
      %v699 = vsel %vm485, %v253, 0
      %v701 = vsel %vm485, %v255, 0
      %v703 = vsel %vm485, %v257, 0
      %v705 = vsel %vm485, %v259, 0
      %v707 = vsel %vm485, %v261, 0
      %v709 = vsel %vm485, %v263, 0
      %v711 = vsel %vm485, %v265, 0
      %v713 = vsel %vm485, %v267, 0
      %v715 = vsel %vm485, %v269, 0
      %v717 = vsel %vm485, %v271, 0
      %v719 = vsel %vm485, %v273, 0
      %v721 = vsel %vm485, %v275, 0
      %v723 = vsel %vm485, %v277, 0
      %v725 = vsel %vm485, %v279, 0
      %v727 = vsel %vm485, %v281, 0
      %v729 = vsel %vm485, %v283, 0
      %v732 = vsel %vm534, %v289, 0
      %734 = vmatprep.subr.bf16.mxu0 0
      %735 = vmatpush1.bf16.msra.mxu0 0
      %736 = vmatprep.subr.bf16.mxu0 0
      %737 = vmatpush1.bf16.msra.mxu0 0
      %738 = vmatprep.subr.bf16.mxu0 0
      %739 = vmatpush1.bf16.msra.mxu0 0
      %740 = vmatprep.subr.bf16.mxu0 0
      %741 = vmatpush1.bf16.msra.mxu0 0
      %742 = vmatprep.subr.bf16.mxu0 0
      %743 = vmatpush1.bf16.msra.mxu0 0
      %744 = vmatprep.subr.bf16.mxu0 0
      %745 = vmatpush1.bf16.msra.mxu0 0
      %746 = vmatprep.subr.bf16.mxu0 0
      %747 = vmatpush1.bf16.msra.mxu0 0
      %748 = vmatprep.subr.bf16.mxu0 0
      %749 = vmatpush1.bf16.msra.mxu0 %v732
      %750 = vmatprep.subr.bf16.mxu0 0
      %751 = vmatpush2.bf16.msra.mxu0 0
      %752 = vmatprep.subr.bf16.mxu0 0
      %753 = vmatpush2.bf16.msra.mxu0 0
      %754 = vmatprep.subr.bf16.mxu0 0
      %755 = vmatpush2.bf16.msra.mxu0 0
      %756 = vmatprep.subr.bf16.mxu0 0
      %757 = vmatpush2.bf16.msra.mxu0 0
      %758 = vmatprep.subr.bf16.mxu0 0
      %759 = vmatpush2.bf16.msra.mxu0 0
      %760 = vmatprep.subr.bf16.mxu0 0
      %761 = vmatpush2.bf16.msra.mxu0 0
      %762 = vmatprep.subr.bf16.mxu0 0
      %763 = vmatpush2.bf16.msra.mxu0 0
      %764 = vmatprep.subr.bf16.mxu0 0
      %765 = vmatpush2.bf16.msra.mxu0 0
      %766 = vmatprep.mubr.bf16.mxu0 0
      %767 = vmatmul.mubr.bf16.gmra.mxu0 %v699
      %v768 = vpop.f32.mrf.mxu0
      %v769 = vadd.f32 %v573, %v768
      %v770 = vpop.f32.mrf.mxu0
      %v771 = vpop.f32.mrf.mxu0
      %v772 = vadd.f32 %v576, %v771
      %v773 = vpop.f32.mrf.mxu0
      %774 = vmatprep.mubr.bf16.mxu0 0
      %775 = vmatmul.mubr.bf16.gmra.mxu0 %v701
      %v776 = vpop.f32.mrf.mxu0
      %v777 = vadd.f32 %v581, %v776
      %v778 = vpop.f32.mrf.mxu0
      %v779 = vpop.f32.mrf.mxu0
      %v780 = vadd.f32 %v584, %v779
      %v781 = vpop.f32.mrf.mxu0
      %782 = vmatprep.mubr.bf16.mxu0 0
      %783 = vmatmul.mubr.bf16.gmra.mxu0 %v703
      %v784 = vpop.f32.mrf.mxu0
      %v785 = vadd.f32 %v589, %v784
      %v786 = vpop.f32.mrf.mxu0
      %v787 = vpop.f32.mrf.mxu0
      %v788 = vadd.f32 %v592, %v787
      %v789 = vpop.f32.mrf.mxu0
      %790 = vmatprep.mubr.bf16.mxu0 0
      %791 = vmatmul.mubr.bf16.gmra.mxu0 %v705
      %v792 = vpop.f32.mrf.mxu0
      %v793 = vadd.f32 %v597, %v792
      %v794 = vpop.f32.mrf.mxu0
      %v795 = vpop.f32.mrf.mxu0
      %v796 = vadd.f32 %v600, %v795
      %v797 = vpop.f32.mrf.mxu0
      %798 = vmatprep.mubr.bf16.mxu0 0
      %799 = vmatmul.mubr.bf16.gmra.mxu0 %v707
      %v800 = vpop.f32.mrf.mxu0
      %v801 = vadd.f32 %v605, %v800
      %v802 = vpop.f32.mrf.mxu0
      %v803 = vpop.f32.mrf.mxu0
      %v804 = vadd.f32 %v608, %v803
      %v805 = vpop.f32.mrf.mxu0
      %806 = vmatprep.mubr.bf16.mxu0 0
      %807 = vmatmul.mubr.bf16.gmra.mxu0 %v709
      %v808 = vpop.f32.mrf.mxu0
      %v809 = vadd.f32 %v613, %v808
      %v810 = vpop.f32.mrf.mxu0
      %v811 = vpop.f32.mrf.mxu0
      %v812 = vadd.f32 %v616, %v811
      %v813 = vpop.f32.mrf.mxu0
      %814 = vmatprep.mubr.bf16.mxu0 0
      %815 = vmatmul.mubr.bf16.gmra.mxu0 %v711
      %v816 = vpop.f32.mrf.mxu0
      %v817 = vadd.f32 %v621, %v816
      %v818 = vpop.f32.mrf.mxu0
      %v819 = vpop.f32.mrf.mxu0
      %v820 = vadd.f32 %v624, %v819
      %v821 = vpop.f32.mrf.mxu0
      %822 = vmatprep.mubr.bf16.mxu0 0
      %823 = vmatmul.mubr.bf16.gmra.mxu0 %v713
      %v824 = vpop.f32.mrf.mxu0
      %v825 = vadd.f32 %v629, %v824
      %v826 = vpop.f32.mrf.mxu0
      %v827 = vpop.f32.mrf.mxu0
      %v828 = vadd.f32 %v632, %v827
      %v829 = vpop.f32.mrf.mxu0
      %830 = vmatprep.mubr.bf16.mxu0 0
      %831 = vmatmul.mubr.bf16.gmra.mxu0 %v715
      %v832 = vpop.f32.mrf.mxu0
      %v833 = vadd.f32 %v637, %v832
      %v834 = vpop.f32.mrf.mxu0
      %v835 = vpop.f32.mrf.mxu0
      %v836 = vadd.f32 %v640, %v835
      %v837 = vpop.f32.mrf.mxu0
      %838 = vmatprep.mubr.bf16.mxu0 0
      %839 = vmatmul.mubr.bf16.gmra.mxu0 %v717
      %v840 = vpop.f32.mrf.mxu0
      %v841 = vadd.f32 %v645, %v840
      %v842 = vpop.f32.mrf.mxu0
      %v843 = vpop.f32.mrf.mxu0
      %v844 = vadd.f32 %v648, %v843
      %v845 = vpop.f32.mrf.mxu0
      %846 = vmatprep.mubr.bf16.mxu0 0
      %847 = vmatmul.mubr.bf16.gmra.mxu0 %v719
      %v848 = vpop.f32.mrf.mxu0
      %v849 = vadd.f32 %v653, %v848
      %v850 = vpop.f32.mrf.mxu0
      %v851 = vpop.f32.mrf.mxu0
      %v852 = vadd.f32 %v656, %v851
      %v853 = vpop.f32.mrf.mxu0
      %854 = vmatprep.mubr.bf16.mxu0 0
      %855 = vmatmul.mubr.bf16.gmra.mxu0 %v721
      %v856 = vpop.f32.mrf.mxu0
      %v857 = vadd.f32 %v661, %v856
      %v858 = vpop.f32.mrf.mxu0
      %v859 = vpop.f32.mrf.mxu0
      %v860 = vadd.f32 %v664, %v859
      %v861 = vpop.f32.mrf.mxu0
      %862 = vmatprep.mubr.bf16.mxu0 0
      %863 = vmatmul.mubr.bf16.gmra.mxu0 %v723
      %v864 = vpop.f32.mrf.mxu0
      %v865 = vadd.f32 %v669, %v864
      %v866 = vpop.f32.mrf.mxu0
      %v867 = vpop.f32.mrf.mxu0
      %v868 = vadd.f32 %v672, %v867
      %v869 = vpop.f32.mrf.mxu0
      %870 = vmatprep.mubr.bf16.mxu0 0
      %871 = vmatmul.mubr.bf16.gmra.mxu0 %v725
      %v872 = vpop.f32.mrf.mxu0
      %v873 = vadd.f32 %v677, %v872
      %v874 = vpop.f32.mrf.mxu0
      %v875 = vpop.f32.mrf.mxu0
      %v876 = vadd.f32 %v680, %v875
      %v877 = vpop.f32.mrf.mxu0
      %878 = vmatprep.mubr.bf16.mxu0 0
      %879 = vmatmul.mubr.bf16.gmra.mxu0 %v727
      %v880 = vpop.f32.mrf.mxu0
      %v881 = vadd.f32 %v685, %v880
      %v882 = vpop.f32.mrf.mxu0
      %v883 = vpop.f32.mrf.mxu0
      %v884 = vadd.f32 %v688, %v883
      %v885 = vpop.f32.mrf.mxu0
      %886 = vmatprep.mubr.bf16.mxu0 0
      %887 = vmatmul.mubr.bf16.gmra.mxu0 %v729
      %v888 = vpop.f32.mrf.mxu0
      %v889 = vadd.f32 %v693, %v888
      %v890 = vpop.f32.mrf.mxu0
      %v891 = vpop.f32.mrf.mxu0
      %v892 = vadd.f32 %v696, %v891
      %v893 = vpop.f32.mrf.mxu0
      %894 = vdwg.mxu0
      %vm927 = vcmask 1046528
      %v928 = vrot.slane %v253, 1
      %v929 = vrot.slane %v254, 1
      %v930 = vsel %vm927, %v928, %v929
      %v931 = vrot.slane %v255, 1
      %v932 = vrot.slane %v256, 1
      %v933 = vsel %vm927, %v931, %v932
      %v934 = vrot.slane %v257, 1
      %v935 = vrot.slane %v258, 1
      %v936 = vsel %vm927, %v934, %v935
      %v937 = vrot.slane %v259, 1
      %v938 = vrot.slane %v260, 1
      %v939 = vsel %vm927, %v937, %v938
      %v940 = vrot.slane %v261, 1
      %v941 = vrot.slane %v262, 1
      %v942 = vsel %vm927, %v940, %v941
      %v943 = vrot.slane %v263, 1
      %v944 = vrot.slane %v264, 1
      %v945 = vsel %vm927, %v943, %v944
      %v946 = vrot.slane %v265, 1
      %v947 = vrot.slane %v266, 1
      %v948 = vsel %vm927, %v946, %v947
      %v949 = vrot.slane %v267, 1
      %v950 = vrot.slane %v268, 1
      %v951 = vsel %vm927, %v949, %v950
      %v952 = vrot.slane %v269, 1
      %v953 = vrot.slane %v270, 1
      %v954 = vsel %vm927, %v952, %v953
      %v955 = vrot.slane %v271, 1
      %v956 = vrot.slane %v272, 1
      %v957 = vsel %vm927, %v955, %v956
      %v958 = vrot.slane %v273, 1
      %v959 = vrot.slane %v274, 1
      %v960 = vsel %vm927, %v958, %v959
      %v961 = vrot.slane %v275, 1
      %v962 = vrot.slane %v276, 1
      %v963 = vsel %vm927, %v961, %v962
      %v964 = vrot.slane %v277, 1
      %v965 = vrot.slane %v278, 1
      %v966 = vsel %vm927, %v964, %v965
      %v967 = vrot.slane %v279, 1
      %v968 = vrot.slane %v280, 1
      %v969 = vsel %vm927, %v967, %v968
      %v970 = vrot.slane %v281, 1
      %v971 = vrot.slane %v282, 1
      %v972 = vsel %vm927, %v970, %v971
      %v973 = vrot.slane %v283, 1
      %v974 = vrot.slane %v284, 1
      %v975 = vsel %vm927, %v973, %v974
      %s976 = scalar_lea.vmem %s1, 4
      %v977 = vld [vmem:[%s976] sm:$0x3]
      %v979 = vsel %vm485, %v930, 0
      %v982 = vsel %vm485, %v933, 0
      %v985 = vsel %vm485, %v936, 0
      %v988 = vsel %vm485, %v939, 0
      %v991 = vsel %vm485, %v942, 0
      %v994 = vsel %vm485, %v945, 0
      %v997 = vsel %vm485, %v948, 0
      %v1000 = vsel %vm485, %v951, 0
      %v1003 = vsel %vm485, %v954, 0
      %v1006 = vsel %vm485, %v957, 0
      %v1009 = vsel %vm485, %v960, 0
      %v1012 = vsel %vm485, %v963, 0
      %v1015 = vsel %vm485, %v966, 0
      %v1018 = vsel %vm485, %v969, 0
      %v1021 = vsel %vm485, %v972, 0
      %v1024 = vsel %vm485, %v975, 0
      %v1027 = vsel %vm534, %v977, 0
      %1029 = vmatprep.subr.bf16.mxu0 0
      %1030 = vmatpush1.bf16.msra.mxu0 0
      %1031 = vmatprep.subr.bf16.mxu0 0
      %1032 = vmatpush1.bf16.msra.mxu0 0
      %1033 = vmatprep.subr.bf16.mxu0 0
      %1034 = vmatpush1.bf16.msra.mxu0 0
      %1035 = vmatprep.subr.bf16.mxu0 0
      %1036 = vmatpush1.bf16.msra.mxu0 0
      %1037 = vmatprep.subr.bf16.mxu0 0
      %1038 = vmatpush1.bf16.msra.mxu0 0
      %1039 = vmatprep.subr.bf16.mxu0 0
      %1040 = vmatpush1.bf16.msra.mxu0 0
      %1041 = vmatprep.subr.bf16.mxu0 0
      %1042 = vmatpush1.bf16.msra.mxu0 0
      %1043 = vmatprep.subr.bf16.mxu0 0
      %1044 = vmatpush1.bf16.msra.mxu0 %v1027
      %1045 = vmatprep.subr.bf16.mxu0 0
      %1046 = vmatpush2.bf16.msra.mxu0 0
      %1047 = vmatprep.subr.bf16.mxu0 0
      %1048 = vmatpush2.bf16.msra.mxu0 0
      %1049 = vmatprep.subr.bf16.mxu0 0
      %1050 = vmatpush2.bf16.msra.mxu0 0
      %1051 = vmatprep.subr.bf16.mxu0 0
      %1052 = vmatpush2.bf16.msra.mxu0 0
      %1053 = vmatprep.subr.bf16.mxu0 0
      %1054 = vmatpush2.bf16.msra.mxu0 0
      %1055 = vmatprep.subr.bf16.mxu0 0
      %1056 = vmatpush2.bf16.msra.mxu0 0
      %1057 = vmatprep.subr.bf16.mxu0 0
      %1058 = vmatpush2.bf16.msra.mxu0 0
      %1059 = vmatprep.subr.bf16.mxu0 0
      %1060 = vmatpush2.bf16.msra.mxu0 0
      %1061 = vmatprep.mubr.bf16.mxu0 0
      %1062 = vmatmul.mubr.bf16.gmra.mxu0 %v979
      %v1063 = vpop.f32.mrf.mxu0
      %v1064 = vadd.f32 0.0, %v1063
      %v1065 = vpop.f32.mrf.mxu0
      %v1066 = vpop.f32.mrf.mxu0
      %v1067 = vadd.f32 0.0, %v1066
      %v1068 = vpop.f32.mrf.mxu0
      %1069 = vmatprep.mubr.bf16.mxu0 0
      %1070 = vmatmul.mubr.bf16.gmra.mxu0 %v982
      %v1071 = vpop.f32.mrf.mxu0
      %v1072 = vadd.f32 0.0, %v1071
      %v1073 = vpop.f32.mrf.mxu0
      %v1074 = vpop.f32.mrf.mxu0
      %v1075 = vadd.f32 0.0, %v1074
      %v1076 = vpop.f32.mrf.mxu0
      %1077 = vmatprep.mubr.bf16.mxu0 0
      %1078 = vmatmul.mubr.bf16.gmra.mxu0 %v985
      %v1079 = vpop.f32.mrf.mxu0
      %v1080 = vadd.f32 0.0, %v1079
      %v1081 = vpop.f32.mrf.mxu0
      %v1082 = vpop.f32.mrf.mxu0
      %v1083 = vadd.f32 0.0, %v1082
      %v1084 = vpop.f32.mrf.mxu0
      %1085 = vmatprep.mubr.bf16.mxu0 0
      %1086 = vmatmul.mubr.bf16.gmra.mxu0 %v988
      %v1087 = vpop.f32.mrf.mxu0
      %v1088 = vadd.f32 0.0, %v1087
      %v1089 = vpop.f32.mrf.mxu0
      %v1090 = vpop.f32.mrf.mxu0
      %v1091 = vadd.f32 0.0, %v1090
      %v1092 = vpop.f32.mrf.mxu0
      %1093 = vmatprep.mubr.bf16.mxu0 0
      %1094 = vmatmul.mubr.bf16.gmra.mxu0 %v991
      %v1095 = vpop.f32.mrf.mxu0
      %v1096 = vadd.f32 0.0, %v1095
      %v1097 = vpop.f32.mrf.mxu0
      %v1098 = vpop.f32.mrf.mxu0
      %v1099 = vadd.f32 0.0, %v1098
      %v1100 = vpop.f32.mrf.mxu0
      %1101 = vmatprep.mubr.bf16.mxu0 0
      %1102 = vmatmul.mubr.bf16.gmra.mxu0 %v994
      %v1103 = vpop.f32.mrf.mxu0
      %v1104 = vadd.f32 0.0, %v1103
      %v1105 = vpop.f32.mrf.mxu0
      %v1106 = vpop.f32.mrf.mxu0
      %v1107 = vadd.f32 0.0, %v1106
      %v1108 = vpop.f32.mrf.mxu0
      %1109 = vmatprep.mubr.bf16.mxu0 0
      %1110 = vmatmul.mubr.bf16.gmra.mxu0 %v997
      %v1111 = vpop.f32.mrf.mxu0
      %v1112 = vadd.f32 0.0, %v1111
      %v1113 = vpop.f32.mrf.mxu0
      %v1114 = vpop.f32.mrf.mxu0
      %v1115 = vadd.f32 0.0, %v1114
      %v1116 = vpop.f32.mrf.mxu0
      %1117 = vmatprep.mubr.bf16.mxu0 0
      %1118 = vmatmul.mubr.bf16.gmra.mxu0 %v1000
      %v1119 = vpop.f32.mrf.mxu0
      %v1120 = vadd.f32 0.0, %v1119
      %v1121 = vpop.f32.mrf.mxu0
      %v1122 = vpop.f32.mrf.mxu0
      %v1123 = vadd.f32 0.0, %v1122
      %v1124 = vpop.f32.mrf.mxu0
      %1125 = vmatprep.mubr.bf16.mxu0 0
      %1126 = vmatmul.mubr.bf16.gmra.mxu0 %v1003
      %v1127 = vpop.f32.mrf.mxu0
      %v1128 = vadd.f32 0.0, %v1127
      %v1129 = vpop.f32.mrf.mxu0
      %v1130 = vpop.f32.mrf.mxu0
      %v1131 = vadd.f32 0.0, %v1130
      %v1132 = vpop.f32.mrf.mxu0
      %1133 = vmatprep.mubr.bf16.mxu0 0
      %1134 = vmatmul.mubr.bf16.gmra.mxu0 %v1006
      %v1135 = vpop.f32.mrf.mxu0
      %v1136 = vadd.f32 0.0, %v1135
      %v1137 = vpop.f32.mrf.mxu0
      %v1138 = vpop.f32.mrf.mxu0
      %v1139 = vadd.f32 0.0, %v1138
      %v1140 = vpop.f32.mrf.mxu0
      %1141 = vmatprep.mubr.bf16.mxu0 0
      %1142 = vmatmul.mubr.bf16.gmra.mxu0 %v1009
      %v1143 = vpop.f32.mrf.mxu0
      %v1144 = vadd.f32 0.0, %v1143
      %v1145 = vpop.f32.mrf.mxu0
      %v1146 = vpop.f32.mrf.mxu0
      %v1147 = vadd.f32 0.0, %v1146
      %v1148 = vpop.f32.mrf.mxu0
      %1149 = vmatprep.mubr.bf16.mxu0 0
      %1150 = vmatmul.mubr.bf16.gmra.mxu0 %v1012
      %v1151 = vpop.f32.mrf.mxu0
      %v1152 = vadd.f32 0.0, %v1151
      %v1153 = vpop.f32.mrf.mxu0
      %v1154 = vpop.f32.mrf.mxu0
      %v1155 = vadd.f32 0.0, %v1154
      %v1156 = vpop.f32.mrf.mxu0
      %1157 = vmatprep.mubr.bf16.mxu0 0
      %1158 = vmatmul.mubr.bf16.gmra.mxu0 %v1015
      %v1159 = vpop.f32.mrf.mxu0
      %v1160 = vadd.f32 0.0, %v1159
      %v1161 = vpop.f32.mrf.mxu0
      %v1162 = vpop.f32.mrf.mxu0
      %v1163 = vadd.f32 0.0, %v1162
      %v1164 = vpop.f32.mrf.mxu0
      %1165 = vmatprep.mubr.bf16.mxu0 0
      %1166 = vmatmul.mubr.bf16.gmra.mxu0 %v1018
      %v1167 = vpop.f32.mrf.mxu0
      %v1168 = vadd.f32 0.0, %v1167
      %v1169 = vpop.f32.mrf.mxu0
      %v1170 = vpop.f32.mrf.mxu0
      %v1171 = vadd.f32 0.0, %v1170
      %v1172 = vpop.f32.mrf.mxu0
      %1173 = vmatprep.mubr.bf16.mxu0 0
      %1174 = vmatmul.mubr.bf16.gmra.mxu0 %v1021
      %v1175 = vpop.f32.mrf.mxu0
      %v1176 = vadd.f32 0.0, %v1175
      %v1177 = vpop.f32.mrf.mxu0
      %v1178 = vpop.f32.mrf.mxu0
      %v1179 = vadd.f32 0.0, %v1178
      %v1180 = vpop.f32.mrf.mxu0
      %1181 = vmatprep.mubr.bf16.mxu0 0
      %1182 = vmatmul.mubr.bf16.gmra.mxu0 %v1024
      %v1183 = vpop.f32.mrf.mxu0
      %v1184 = vadd.f32 0.0, %v1183
      %v1185 = vpop.f32.mrf.mxu0
      %v1186 = vpop.f32.mrf.mxu0
      %v1187 = vadd.f32 0.0, %v1186
      %v1188 = vpop.f32.mrf.mxu0
      %1189 = vdwg.mxu0
      %v1190 = vadd.f32 %v769, %v1064
      %v1191 = vadd.f32 %v772, %v1067
      %v1192 = vadd.f32 %v777, %v1072
      %v1193 = vadd.f32 %v780, %v1075
      %v1194 = vadd.f32 %v785, %v1080
      %v1195 = vadd.f32 %v788, %v1083
      %v1196 = vadd.f32 %v793, %v1088
      %v1197 = vadd.f32 %v796, %v1091
      %v1198 = vadd.f32 %v801, %v1096
      %v1199 = vadd.f32 %v804, %v1099
      %v1200 = vadd.f32 %v809, %v1104
      %v1201 = vadd.f32 %v812, %v1107
      %v1202 = vadd.f32 %v817, %v1112
      %v1203 = vadd.f32 %v820, %v1115
      %v1204 = vadd.f32 %v825, %v1120
      %v1205 = vadd.f32 %v828, %v1123
      %v1206 = vadd.f32 %v833, %v1128
      %v1207 = vadd.f32 %v836, %v1131
      %v1208 = vadd.f32 %v841, %v1136
      %v1209 = vadd.f32 %v844, %v1139
      %v1210 = vadd.f32 %v849, %v1144
      %v1211 = vadd.f32 %v852, %v1147
      %v1212 = vadd.f32 %v857, %v1152
      %v1213 = vadd.f32 %v860, %v1155
      %v1214 = vadd.f32 %v865, %v1160
      %v1215 = vadd.f32 %v868, %v1163
      %v1216 = vadd.f32 %v873, %v1168
      %v1217 = vadd.f32 %v876, %v1171
      %v1218 = vadd.f32 %v881, %v1176
      %v1219 = vadd.f32 %v884, %v1179
      %v1220 = vadd.f32 %v889, %v1184
      %v1221 = vadd.f32 %v892, %v1187
      %s1222 = scalar_lea.vmem %s1, 6
      %v1223 = vld [vmem:[%s1222] sm:$0x3]
      %v1225 = vsel %vm485, %v285, 0
      %v1228 = vsel %vm534, %v1223, 0
      %1230 = vmatprep.subr.bf16.mxu0 0
      %1231 = vmatpush1.bf16.msra.mxu0 0
      %1232 = vmatprep.subr.bf16.mxu0 0
      %1233 = vmatpush1.bf16.msra.mxu0 0
      %1234 = vmatprep.subr.bf16.mxu0 0
      %1235 = vmatpush1.bf16.msra.mxu0 0
      %1236 = vmatprep.subr.bf16.mxu0 0
      %1237 = vmatpush1.bf16.msra.mxu0 0
      %1238 = vmatprep.subr.bf16.mxu0 0
      %1239 = vmatpush1.bf16.msra.mxu0 0
      %1240 = vmatprep.subr.bf16.mxu0 0
      %1241 = vmatpush1.bf16.msra.mxu0 0
      %1242 = vmatprep.subr.bf16.mxu0 0
      %1243 = vmatpush1.bf16.msra.mxu0 0
      %1244 = vmatprep.subr.bf16.mxu0 0
      %1245 = vmatpush1.bf16.msra.mxu0 %v1228
      %1246 = vmatprep.subr.bf16.mxu0 0
      %1247 = vmatpush2.bf16.msra.mxu0 0
      %1248 = vmatprep.subr.bf16.mxu0 0
      %1249 = vmatpush2.bf16.msra.mxu0 0
      %1250 = vmatprep.subr.bf16.mxu0 0
      %1251 = vmatpush2.bf16.msra.mxu0 0
      %1252 = vmatprep.subr.bf16.mxu0 0
      %1253 = vmatpush2.bf16.msra.mxu0 0
      %1254 = vmatprep.subr.bf16.mxu0 0
      %1255 = vmatpush2.bf16.msra.mxu0 0
      %1256 = vmatprep.subr.bf16.mxu0 0
      %1257 = vmatpush2.bf16.msra.mxu0 0
      %1258 = vmatprep.subr.bf16.mxu0 0
      %1259 = vmatpush2.bf16.msra.mxu0 0
      %1260 = vmatprep.subr.bf16.mxu0 0
      %1261 = vmatpush2.bf16.msra.mxu0 0
      %1262 = vmatprep.mubr.bf16.mxu0 0
      %1263 = vmatmul.mubr.bf16.gmra.mxu0 %v701
      %v1264 = vpop.f32.mrf.mxu0
      %v1265 = vadd.f32 0.0, %v1264
      %v1266 = vpop.f32.mrf.mxu0
      %v1267 = vpop.f32.mrf.mxu0
      %v1268 = vadd.f32 0.0, %v1267
      %v1269 = vpop.f32.mrf.mxu0
      %1270 = vmatprep.mubr.bf16.mxu0 0
      %1271 = vmatmul.mubr.bf16.gmra.mxu0 %v703
      %v1272 = vpop.f32.mrf.mxu0
      %v1273 = vadd.f32 0.0, %v1272
      %v1274 = vpop.f32.mrf.mxu0
      %v1275 = vpop.f32.mrf.mxu0
      %v1276 = vadd.f32 0.0, %v1275
      %v1277 = vpop.f32.mrf.mxu0
      %1278 = vmatprep.mubr.bf16.mxu0 0
      %1279 = vmatmul.mubr.bf16.gmra.mxu0 %v705
      %v1280 = vpop.f32.mrf.mxu0
      %v1281 = vadd.f32 0.0, %v1280
      %v1282 = vpop.f32.mrf.mxu0
      %v1283 = vpop.f32.mrf.mxu0
      %v1284 = vadd.f32 0.0, %v1283
      %v1285 = vpop.f32.mrf.mxu0
      %1286 = vmatprep.mubr.bf16.mxu0 0
      %1287 = vmatmul.mubr.bf16.gmra.mxu0 %v707
      %v1288 = vpop.f32.mrf.mxu0
      %v1289 = vadd.f32 0.0, %v1288
      %v1290 = vpop.f32.mrf.mxu0
      %v1291 = vpop.f32.mrf.mxu0
      %v1292 = vadd.f32 0.0, %v1291
      %v1293 = vpop.f32.mrf.mxu0
      %1294 = vmatprep.mubr.bf16.mxu0 0
      %1295 = vmatmul.mubr.bf16.gmra.mxu0 %v709
      %v1296 = vpop.f32.mrf.mxu0
      %v1297 = vadd.f32 0.0, %v1296
      %v1298 = vpop.f32.mrf.mxu0
      %v1299 = vpop.f32.mrf.mxu0
      %v1300 = vadd.f32 0.0, %v1299
      %v1301 = vpop.f32.mrf.mxu0
      %1302 = vmatprep.mubr.bf16.mxu0 0
      %1303 = vmatmul.mubr.bf16.gmra.mxu0 %v711
      %v1304 = vpop.f32.mrf.mxu0
      %v1305 = vadd.f32 0.0, %v1304
      %v1306 = vpop.f32.mrf.mxu0
      %v1307 = vpop.f32.mrf.mxu0
      %v1308 = vadd.f32 0.0, %v1307
      %v1309 = vpop.f32.mrf.mxu0
      %1310 = vmatprep.mubr.bf16.mxu0 0
      %1311 = vmatmul.mubr.bf16.gmra.mxu0 %v713
      %v1312 = vpop.f32.mrf.mxu0
      %v1313 = vadd.f32 0.0, %v1312
      %v1314 = vpop.f32.mrf.mxu0
      %v1315 = vpop.f32.mrf.mxu0
      %v1316 = vadd.f32 0.0, %v1315
      %v1317 = vpop.f32.mrf.mxu0
      %1318 = vmatprep.mubr.bf16.mxu0 0
      %1319 = vmatmul.mubr.bf16.gmra.mxu0 %v715
      %v1320 = vpop.f32.mrf.mxu0
      %v1321 = vadd.f32 0.0, %v1320
      %v1322 = vpop.f32.mrf.mxu0
      %v1323 = vpop.f32.mrf.mxu0
      %v1324 = vadd.f32 0.0, %v1323
      %v1325 = vpop.f32.mrf.mxu0
      %1326 = vmatprep.mubr.bf16.mxu0 0
      %1327 = vmatmul.mubr.bf16.gmra.mxu0 %v717
      %v1328 = vpop.f32.mrf.mxu0
      %v1329 = vadd.f32 0.0, %v1328
      %v1330 = vpop.f32.mrf.mxu0
      %v1331 = vpop.f32.mrf.mxu0
      %v1332 = vadd.f32 0.0, %v1331
      %v1333 = vpop.f32.mrf.mxu0
      %1334 = vmatprep.mubr.bf16.mxu0 0
      %1335 = vmatmul.mubr.bf16.gmra.mxu0 %v719
      %v1336 = vpop.f32.mrf.mxu0
      %v1337 = vadd.f32 0.0, %v1336
      %v1338 = vpop.f32.mrf.mxu0
      %v1339 = vpop.f32.mrf.mxu0
      %v1340 = vadd.f32 0.0, %v1339
      %v1341 = vpop.f32.mrf.mxu0
      %1342 = vmatprep.mubr.bf16.mxu0 0
      %1343 = vmatmul.mubr.bf16.gmra.mxu0 %v721
      %v1344 = vpop.f32.mrf.mxu0
      %v1345 = vadd.f32 0.0, %v1344
      %v1346 = vpop.f32.mrf.mxu0
      %v1347 = vpop.f32.mrf.mxu0
      %v1348 = vadd.f32 0.0, %v1347
      %v1349 = vpop.f32.mrf.mxu0
      %1350 = vmatprep.mubr.bf16.mxu0 0
      %1351 = vmatmul.mubr.bf16.gmra.mxu0 %v723
      %v1352 = vpop.f32.mrf.mxu0
      %v1353 = vadd.f32 0.0, %v1352
      %v1354 = vpop.f32.mrf.mxu0
      %v1355 = vpop.f32.mrf.mxu0
      %v1356 = vadd.f32 0.0, %v1355
      %v1357 = vpop.f32.mrf.mxu0
      %1358 = vmatprep.mubr.bf16.mxu0 0
      %1359 = vmatmul.mubr.bf16.gmra.mxu0 %v725
      %v1360 = vpop.f32.mrf.mxu0
      %v1361 = vadd.f32 0.0, %v1360
      %v1362 = vpop.f32.mrf.mxu0
      %v1363 = vpop.f32.mrf.mxu0
      %v1364 = vadd.f32 0.0, %v1363
      %v1365 = vpop.f32.mrf.mxu0
      %1366 = vmatprep.mubr.bf16.mxu0 0
      %1367 = vmatmul.mubr.bf16.gmra.mxu0 %v727
      %v1368 = vpop.f32.mrf.mxu0
      %v1369 = vadd.f32 0.0, %v1368
      %v1370 = vpop.f32.mrf.mxu0
      %v1371 = vpop.f32.mrf.mxu0
      %v1372 = vadd.f32 0.0, %v1371
      %v1373 = vpop.f32.mrf.mxu0
      %1374 = vmatprep.mubr.bf16.mxu0 0
      %1375 = vmatmul.mubr.bf16.gmra.mxu0 %v729
      %v1376 = vpop.f32.mrf.mxu0
      %v1377 = vadd.f32 0.0, %v1376
      %v1378 = vpop.f32.mrf.mxu0
      %v1379 = vpop.f32.mrf.mxu0
      %v1380 = vadd.f32 0.0, %v1379
      %v1381 = vpop.f32.mrf.mxu0
      %1382 = vmatprep.mubr.bf16.mxu0 0
      %1383 = vmatmul.mubr.bf16.gmra.mxu0 %v1225
      %v1384 = vpop.f32.mrf.mxu0
      %v1385 = vadd.f32 0.0, %v1384
      %v1386 = vpop.f32.mrf.mxu0
      %v1387 = vpop.f32.mrf.mxu0
      %v1388 = vadd.f32 0.0, %v1387
      %v1389 = vpop.f32.mrf.mxu0
      %1390 = vdwg.mxu0
      %v1391 = vadd.f32 %v1190, %v1265
      %v1392 = vadd.f32 %v1191, %v1268
      %v1393 = vadd.f32 %v1192, %v1273
      %v1394 = vadd.f32 %v1193, %v1276
      %v1395 = vadd.f32 %v1194, %v1281
      %v1396 = vadd.f32 %v1195, %v1284
      %v1397 = vadd.f32 %v1196, %v1289
      %v1398 = vadd.f32 %v1197, %v1292
      %v1399 = vadd.f32 %v1198, %v1297
      %v1400 = vadd.f32 %v1199, %v1300
      %v1401 = vadd.f32 %v1200, %v1305
      %v1402 = vadd.f32 %v1201, %v1308
      %v1403 = vadd.f32 %v1202, %v1313
      %v1404 = vadd.f32 %v1203, %v1316
      %v1405 = vadd.f32 %v1204, %v1321
      %v1406 = vadd.f32 %v1205, %v1324
      %v1407 = vadd.f32 %v1206, %v1329
      %v1408 = vadd.f32 %v1207, %v1332
      %v1409 = vadd.f32 %v1208, %v1337
      %v1410 = vadd.f32 %v1209, %v1340
      %v1411 = vadd.f32 %v1210, %v1345
      %v1412 = vadd.f32 %v1211, %v1348
      %v1413 = vadd.f32 %v1212, %v1353
      %v1414 = vadd.f32 %v1213, %v1356
      %v1415 = vadd.f32 %v1214, %v1361
      %v1416 = vadd.f32 %v1215, %v1364
      %v1417 = vadd.f32 %v1216, %v1369
      %v1418 = vadd.f32 %v1217, %v1372
      %v1419 = vadd.f32 %v1218, %v1377
      %v1420 = vadd.f32 %v1219, %v1380
      %v1421 = vadd.f32 %v1220, %v1385
      %v1422 = vadd.f32 %v1221, %v1388
      %v1423 = vshrl.u32 %v285, 16
      %v1425 = vshll.u32 %v285, 16
      %v1427 = vrot.slane %v1425, 1
      %v1428 = vor.u32 %v1423, %v1427
      %v1430 = vshll.u32 %v286, 16
      %v1432 = vrot.slane %v1430, 1
      %v1433 = vsel %vm290, %v1428, %v1432
      %s1434 = scalar_lea.vmem %s1, 8
      %v1435 = vld [vmem:[%s1434] sm:$0x3]
      %v1437 = vsel %vm485, %v1433, 0
      %v1440 = vsel %vm534, %v1435, 0
      %1442 = vmatprep.subr.bf16.mxu0 0
      %1443 = vmatpush1.bf16.msra.mxu0 0
      %1444 = vmatprep.subr.bf16.mxu0 0
      %1445 = vmatpush1.bf16.msra.mxu0 0
      %1446 = vmatprep.subr.bf16.mxu0 0
      %1447 = vmatpush1.bf16.msra.mxu0 0
      %1448 = vmatprep.subr.bf16.mxu0 0
      %1449 = vmatpush1.bf16.msra.mxu0 0
      %1450 = vmatprep.subr.bf16.mxu0 0
      %1451 = vmatpush1.bf16.msra.mxu0 0
      %1452 = vmatprep.subr.bf16.mxu0 0
      %1453 = vmatpush1.bf16.msra.mxu0 0
      %1454 = vmatprep.subr.bf16.mxu0 0
      %1455 = vmatpush1.bf16.msra.mxu0 0
      %1456 = vmatprep.subr.bf16.mxu0 0
      %1457 = vmatpush1.bf16.msra.mxu0 %v1440
      %1458 = vmatprep.subr.bf16.mxu0 0
      %1459 = vmatpush2.bf16.msra.mxu0 0
      %1460 = vmatprep.subr.bf16.mxu0 0
      %1461 = vmatpush2.bf16.msra.mxu0 0
      %1462 = vmatprep.subr.bf16.mxu0 0
      %1463 = vmatpush2.bf16.msra.mxu0 0
      %1464 = vmatprep.subr.bf16.mxu0 0
      %1465 = vmatpush2.bf16.msra.mxu0 0
      %1466 = vmatprep.subr.bf16.mxu0 0
      %1467 = vmatpush2.bf16.msra.mxu0 0
      %1468 = vmatprep.subr.bf16.mxu0 0
      %1469 = vmatpush2.bf16.msra.mxu0 0
      %1470 = vmatprep.subr.bf16.mxu0 0
      %1471 = vmatpush2.bf16.msra.mxu0 0
      %1472 = vmatprep.subr.bf16.mxu0 0
      %1473 = vmatpush2.bf16.msra.mxu0 0
      %1474 = vmatprep.mubr.bf16.mxu0 0
      %1475 = vmatmul.mubr.bf16.gmra.mxu0 %v490
      %v1476 = vpop.f32.mrf.mxu0
      %v1477 = vadd.f32 0.0, %v1476
      %v1478 = vpop.f32.mrf.mxu0
      %v1479 = vpop.f32.mrf.mxu0
      %v1480 = vadd.f32 0.0, %v1479
      %v1481 = vpop.f32.mrf.mxu0
      %1482 = vmatprep.mubr.bf16.mxu0 0
      %1483 = vmatmul.mubr.bf16.gmra.mxu0 %v493
      %v1484 = vpop.f32.mrf.mxu0
      %v1485 = vadd.f32 0.0, %v1484
      %v1486 = vpop.f32.mrf.mxu0
      %v1487 = vpop.f32.mrf.mxu0
      %v1488 = vadd.f32 0.0, %v1487
      %v1489 = vpop.f32.mrf.mxu0
      %1490 = vmatprep.mubr.bf16.mxu0 0
      %1491 = vmatmul.mubr.bf16.gmra.mxu0 %v496
      %v1492 = vpop.f32.mrf.mxu0
      %v1493 = vadd.f32 0.0, %v1492
      %v1494 = vpop.f32.mrf.mxu0
      %v1495 = vpop.f32.mrf.mxu0
      %v1496 = vadd.f32 0.0, %v1495
      %v1497 = vpop.f32.mrf.mxu0
      %1498 = vmatprep.mubr.bf16.mxu0 0
      %1499 = vmatmul.mubr.bf16.gmra.mxu0 %v499
      %v1500 = vpop.f32.mrf.mxu0
      %v1501 = vadd.f32 0.0, %v1500
      %v1502 = vpop.f32.mrf.mxu0
      %v1503 = vpop.f32.mrf.mxu0
      %v1504 = vadd.f32 0.0, %v1503
      %v1505 = vpop.f32.mrf.mxu0
      %1506 = vmatprep.mubr.bf16.mxu0 0
      %1507 = vmatmul.mubr.bf16.gmra.mxu0 %v502
      %v1508 = vpop.f32.mrf.mxu0
      %v1509 = vadd.f32 0.0, %v1508
      %v1510 = vpop.f32.mrf.mxu0
      %v1511 = vpop.f32.mrf.mxu0
      %v1512 = vadd.f32 0.0, %v1511
      %v1513 = vpop.f32.mrf.mxu0
      %1514 = vmatprep.mubr.bf16.mxu0 0
      %1515 = vmatmul.mubr.bf16.gmra.mxu0 %v505
      %v1516 = vpop.f32.mrf.mxu0
      %v1517 = vadd.f32 0.0, %v1516
      %v1518 = vpop.f32.mrf.mxu0
      %v1519 = vpop.f32.mrf.mxu0
      %v1520 = vadd.f32 0.0, %v1519
      %v1521 = vpop.f32.mrf.mxu0
      %1522 = vmatprep.mubr.bf16.mxu0 0
      %1523 = vmatmul.mubr.bf16.gmra.mxu0 %v508
      %v1524 = vpop.f32.mrf.mxu0
      %v1525 = vadd.f32 0.0, %v1524
      %v1526 = vpop.f32.mrf.mxu0
      %v1527 = vpop.f32.mrf.mxu0
      %v1528 = vadd.f32 0.0, %v1527
      %v1529 = vpop.f32.mrf.mxu0
      %1530 = vmatprep.mubr.bf16.mxu0 0
      %1531 = vmatmul.mubr.bf16.gmra.mxu0 %v511
      %v1532 = vpop.f32.mrf.mxu0
      %v1533 = vadd.f32 0.0, %v1532
      %v1534 = vpop.f32.mrf.mxu0
      %v1535 = vpop.f32.mrf.mxu0
      %v1536 = vadd.f32 0.0, %v1535
      %v1537 = vpop.f32.mrf.mxu0
      %1538 = vmatprep.mubr.bf16.mxu0 0
      %1539 = vmatmul.mubr.bf16.gmra.mxu0 %v514
      %v1540 = vpop.f32.mrf.mxu0
      %v1541 = vadd.f32 0.0, %v1540
      %v1542 = vpop.f32.mrf.mxu0
      %v1543 = vpop.f32.mrf.mxu0
      %v1544 = vadd.f32 0.0, %v1543
      %v1545 = vpop.f32.mrf.mxu0
      %1546 = vmatprep.mubr.bf16.mxu0 0
      %1547 = vmatmul.mubr.bf16.gmra.mxu0 %v517
      %v1548 = vpop.f32.mrf.mxu0
      %v1549 = vadd.f32 0.0, %v1548
      %v1550 = vpop.f32.mrf.mxu0
      %v1551 = vpop.f32.mrf.mxu0
      %v1552 = vadd.f32 0.0, %v1551
      %v1553 = vpop.f32.mrf.mxu0
      %1554 = vmatprep.mubr.bf16.mxu0 0
      %1555 = vmatmul.mubr.bf16.gmra.mxu0 %v520
      %v1556 = vpop.f32.mrf.mxu0
      %v1557 = vadd.f32 0.0, %v1556
      %v1558 = vpop.f32.mrf.mxu0
      %v1559 = vpop.f32.mrf.mxu0
      %v1560 = vadd.f32 0.0, %v1559
      %v1561 = vpop.f32.mrf.mxu0
      %1562 = vmatprep.mubr.bf16.mxu0 0
      %1563 = vmatmul.mubr.bf16.gmra.mxu0 %v523
      %v1564 = vpop.f32.mrf.mxu0
      %v1565 = vadd.f32 0.0, %v1564
      %v1566 = vpop.f32.mrf.mxu0
      %v1567 = vpop.f32.mrf.mxu0
      %v1568 = vadd.f32 0.0, %v1567
      %v1569 = vpop.f32.mrf.mxu0
      %1570 = vmatprep.mubr.bf16.mxu0 0
      %1571 = vmatmul.mubr.bf16.gmra.mxu0 %v526
      %v1572 = vpop.f32.mrf.mxu0
      %v1573 = vadd.f32 0.0, %v1572
      %v1574 = vpop.f32.mrf.mxu0
      %v1575 = vpop.f32.mrf.mxu0
      %v1576 = vadd.f32 0.0, %v1575
      %v1577 = vpop.f32.mrf.mxu0
      %1578 = vmatprep.mubr.bf16.mxu0 0
      %1579 = vmatmul.mubr.bf16.gmra.mxu0 %v529
      %v1580 = vpop.f32.mrf.mxu0
      %v1581 = vadd.f32 0.0, %v1580
      %v1582 = vpop.f32.mrf.mxu0
      %v1583 = vpop.f32.mrf.mxu0
      %v1584 = vadd.f32 0.0, %v1583
      %v1585 = vpop.f32.mrf.mxu0
      %1586 = vmatprep.mubr.bf16.mxu0 0
      %1587 = vmatmul.mubr.bf16.gmra.mxu0 %v532
      %v1588 = vpop.f32.mrf.mxu0
      %v1589 = vadd.f32 0.0, %v1588
      %v1590 = vpop.f32.mrf.mxu0
      %v1591 = vpop.f32.mrf.mxu0
      %v1592 = vadd.f32 0.0, %v1591
      %v1593 = vpop.f32.mrf.mxu0
      %1594 = vmatprep.mubr.bf16.mxu0 0
      %1595 = vmatmul.mubr.bf16.gmra.mxu0 %v1437
      %v1596 = vpop.f32.mrf.mxu0
      %v1597 = vadd.f32 0.0, %v1596
      %v1598 = vpop.f32.mrf.mxu0
      %v1599 = vpop.f32.mrf.mxu0
      %v1600 = vadd.f32 0.0, %v1599
      %v1601 = vpop.f32.mrf.mxu0
      %1602 = vdwg.mxu0
      %v1603 = vadd.f32 %v1391, %v1477
      %v1604 = vadd.f32 %v1392, %v1480
      %v1605 = vadd.f32 %v1393, %v1485
      %v1606 = vadd.f32 %v1394, %v1488
      %v1607 = vadd.f32 %v1395, %v1493
      %v1608 = vadd.f32 %v1396, %v1496
      %v1609 = vadd.f32 %v1397, %v1501
      %v1610 = vadd.f32 %v1398, %v1504
      %v1611 = vadd.f32 %v1399, %v1509
      %v1612 = vadd.f32 %v1400, %v1512
      %v1613 = vadd.f32 %v1401, %v1517
      %v1614 = vadd.f32 %v1402, %v1520
      %v1615 = vadd.f32 %v1403, %v1525
      %v1616 = vadd.f32 %v1404, %v1528
      %v1617 = vadd.f32 %v1405, %v1533
      %v1618 = vadd.f32 %v1406, %v1536
      %v1619 = vadd.f32 %v1407, %v1541
      %v1620 = vadd.f32 %v1408, %v1544
      %v1621 = vadd.f32 %v1409, %v1549
      %v1622 = vadd.f32 %v1410, %v1552
      %v1623 = vadd.f32 %v1411, %v1557
      %v1624 = vadd.f32 %v1412, %v1560
      %v1625 = vadd.f32 %v1413, %v1565
      %v1626 = vadd.f32 %v1414, %v1568
      %v1627 = vadd.f32 %v1415, %v1573
      %v1628 = vadd.f32 %v1416, %v1576
      %v1629 = vadd.f32 %v1417, %v1581
      %v1630 = vadd.f32 %v1418, %v1584
      %v1631 = vadd.f32 %v1419, %v1589
      %v1632 = vadd.f32 %v1420, %v1592
      %v1633 = vadd.f32 %v1421, %v1597
      %v1634 = vadd.f32 %v1422, %v1600
      %v1637 = vrot.slane %v285, 1
      %v1638 = vrot.slane %v286, 1
      %v1639 = vsel %vm927, %v1637, %v1638
      %s1640 = scalar_lea.vmem %s1, 10
      %v1641 = vld [vmem:[%s1640] sm:$0x3]
      %v1643 = vsel %vm485, %v1639, 0
      %v1646 = vsel %vm534, %v1641, 0
      %1648 = vmatprep.subr.bf16.mxu0 0
      %1649 = vmatpush1.bf16.msra.mxu0 0
      %1650 = vmatprep.subr.bf16.mxu0 0
      %1651 = vmatpush1.bf16.msra.mxu0 0
      %1652 = vmatprep.subr.bf16.mxu0 0
      %1653 = vmatpush1.bf16.msra.mxu0 0
      %1654 = vmatprep.subr.bf16.mxu0 0
      %1655 = vmatpush1.bf16.msra.mxu0 0
      %1656 = vmatprep.subr.bf16.mxu0 0
      %1657 = vmatpush1.bf16.msra.mxu0 0
      %1658 = vmatprep.subr.bf16.mxu0 0
      %1659 = vmatpush1.bf16.msra.mxu0 0
      %1660 = vmatprep.subr.bf16.mxu0 0
      %1661 = vmatpush1.bf16.msra.mxu0 0
      %1662 = vmatprep.subr.bf16.mxu0 0
      %1663 = vmatpush1.bf16.msra.mxu0 %v1646
      %1664 = vmatprep.subr.bf16.mxu0 0
      %1665 = vmatpush2.bf16.msra.mxu0 0
      %1666 = vmatprep.subr.bf16.mxu0 0
      %1667 = vmatpush2.bf16.msra.mxu0 0
      %1668 = vmatprep.subr.bf16.mxu0 0
      %1669 = vmatpush2.bf16.msra.mxu0 0
      %1670 = vmatprep.subr.bf16.mxu0 0
      %1671 = vmatpush2.bf16.msra.mxu0 0
      %1672 = vmatprep.subr.bf16.mxu0 0
      %1673 = vmatpush2.bf16.msra.mxu0 0
      %1674 = vmatprep.subr.bf16.mxu0 0
      %1675 = vmatpush2.bf16.msra.mxu0 0
      %1676 = vmatprep.subr.bf16.mxu0 0
      %1677 = vmatpush2.bf16.msra.mxu0 0
      %1678 = vmatprep.subr.bf16.mxu0 0
      %1679 = vmatpush2.bf16.msra.mxu0 0
      %1680 = vmatprep.mubr.bf16.mxu0 0
      %1681 = vmatmul.mubr.bf16.gmra.mxu0 %v982
      %v1682 = vpop.f32.mrf.mxu0
      %v1683 = vadd.f32 0.0, %v1682
      %v1684 = vpop.f32.mrf.mxu0
      %v1685 = vpop.f32.mrf.mxu0
      %v1686 = vadd.f32 0.0, %v1685
      %v1687 = vpop.f32.mrf.mxu0
      %1688 = vmatprep.mubr.bf16.mxu0 0
      %1689 = vmatmul.mubr.bf16.gmra.mxu0 %v985
      %v1690 = vpop.f32.mrf.mxu0
      %v1691 = vadd.f32 0.0, %v1690
      %v1692 = vpop.f32.mrf.mxu0
      %v1693 = vpop.f32.mrf.mxu0
      %v1694 = vadd.f32 0.0, %v1693
      %v1695 = vpop.f32.mrf.mxu0
      %1696 = vmatprep.mubr.bf16.mxu0 0
      %1697 = vmatmul.mubr.bf16.gmra.mxu0 %v988
      %v1698 = vpop.f32.mrf.mxu0
      %v1699 = vadd.f32 0.0, %v1698
      %v1700 = vpop.f32.mrf.mxu0
      %v1701 = vpop.f32.mrf.mxu0
      %v1702 = vadd.f32 0.0, %v1701
      %v1703 = vpop.f32.mrf.mxu0
      %1704 = vmatprep.mubr.bf16.mxu0 0
      %1705 = vmatmul.mubr.bf16.gmra.mxu0 %v991
      %v1706 = vpop.f32.mrf.mxu0
      %v1707 = vadd.f32 0.0, %v1706
      %v1708 = vpop.f32.mrf.mxu0
      %v1709 = vpop.f32.mrf.mxu0
      %v1710 = vadd.f32 0.0, %v1709
      %v1711 = vpop.f32.mrf.mxu0
      %1712 = vmatprep.mubr.bf16.mxu0 0
      %1713 = vmatmul.mubr.bf16.gmra.mxu0 %v994
      %v1714 = vpop.f32.mrf.mxu0
      %v1715 = vadd.f32 0.0, %v1714
      %v1716 = vpop.f32.mrf.mxu0
      %v1717 = vpop.f32.mrf.mxu0
      %v1718 = vadd.f32 0.0, %v1717
      %v1719 = vpop.f32.mrf.mxu0
      %1720 = vmatprep.mubr.bf16.mxu0 0
      %1721 = vmatmul.mubr.bf16.gmra.mxu0 %v997
      %v1722 = vpop.f32.mrf.mxu0
      %v1723 = vadd.f32 0.0, %v1722
      %v1724 = vpop.f32.mrf.mxu0
      %v1725 = vpop.f32.mrf.mxu0
      %v1726 = vadd.f32 0.0, %v1725
      %v1727 = vpop.f32.mrf.mxu0
      %1728 = vmatprep.mubr.bf16.mxu0 0
      %1729 = vmatmul.mubr.bf16.gmra.mxu0 %v1000
      %v1730 = vpop.f32.mrf.mxu0
      %v1731 = vadd.f32 0.0, %v1730
      %v1732 = vpop.f32.mrf.mxu0
      %v1733 = vpop.f32.mrf.mxu0
      %v1734 = vadd.f32 0.0, %v1733
      %v1735 = vpop.f32.mrf.mxu0
      %1736 = vmatprep.mubr.bf16.mxu0 0
      %1737 = vmatmul.mubr.bf16.gmra.mxu0 %v1003
      %v1738 = vpop.f32.mrf.mxu0
      %v1739 = vadd.f32 0.0, %v1738
      %v1740 = vpop.f32.mrf.mxu0
      %v1741 = vpop.f32.mrf.mxu0
      %v1742 = vadd.f32 0.0, %v1741
      %v1743 = vpop.f32.mrf.mxu0
      %1744 = vmatprep.mubr.bf16.mxu0 0
      %1745 = vmatmul.mubr.bf16.gmra.mxu0 %v1006
      %v1746 = vpop.f32.mrf.mxu0
      %v1747 = vadd.f32 0.0, %v1746
      %v1748 = vpop.f32.mrf.mxu0
      %v1749 = vpop.f32.mrf.mxu0
      %v1750 = vadd.f32 0.0, %v1749
      %v1751 = vpop.f32.mrf.mxu0
      %1752 = vmatprep.mubr.bf16.mxu0 0
      %1753 = vmatmul.mubr.bf16.gmra.mxu0 %v1009
      %v1754 = vpop.f32.mrf.mxu0
      %v1755 = vadd.f32 0.0, %v1754
      %v1756 = vpop.f32.mrf.mxu0
      %v1757 = vpop.f32.mrf.mxu0
      %v1758 = vadd.f32 0.0, %v1757
      %v1759 = vpop.f32.mrf.mxu0
      %1760 = vmatprep.mubr.bf16.mxu0 0
      %1761 = vmatmul.mubr.bf16.gmra.mxu0 %v1012
      %v1762 = vpop.f32.mrf.mxu0
      %v1763 = vadd.f32 0.0, %v1762
      %v1764 = vpop.f32.mrf.mxu0
      %v1765 = vpop.f32.mrf.mxu0
      %v1766 = vadd.f32 0.0, %v1765
      %v1767 = vpop.f32.mrf.mxu0
      %1768 = vmatprep.mubr.bf16.mxu0 0
      %1769 = vmatmul.mubr.bf16.gmra.mxu0 %v1015
      %v1770 = vpop.f32.mrf.mxu0
      %v1771 = vadd.f32 0.0, %v1770
      %v1772 = vpop.f32.mrf.mxu0
      %v1773 = vpop.f32.mrf.mxu0
      %v1774 = vadd.f32 0.0, %v1773
      %v1775 = vpop.f32.mrf.mxu0
      %1776 = vmatprep.mubr.bf16.mxu0 0
      %1777 = vmatmul.mubr.bf16.gmra.mxu0 %v1018
      %v1778 = vpop.f32.mrf.mxu0
      %v1779 = vadd.f32 0.0, %v1778
      %v1780 = vpop.f32.mrf.mxu0
      %v1781 = vpop.f32.mrf.mxu0
      %v1782 = vadd.f32 0.0, %v1781
      %v1783 = vpop.f32.mrf.mxu0
      %1784 = vmatprep.mubr.bf16.mxu0 0
      %1785 = vmatmul.mubr.bf16.gmra.mxu0 %v1021
      %v1786 = vpop.f32.mrf.mxu0
      %v1787 = vadd.f32 0.0, %v1786
      %v1788 = vpop.f32.mrf.mxu0
      %v1789 = vpop.f32.mrf.mxu0
      %v1790 = vadd.f32 0.0, %v1789
      %v1791 = vpop.f32.mrf.mxu0
      %1792 = vmatprep.mubr.bf16.mxu0 0
      %1793 = vmatmul.mubr.bf16.gmra.mxu0 %v1024
      %v1794 = vpop.f32.mrf.mxu0
      %v1795 = vadd.f32 0.0, %v1794
      %v1796 = vpop.f32.mrf.mxu0
      %v1797 = vpop.f32.mrf.mxu0
      %v1798 = vadd.f32 0.0, %v1797
      %v1799 = vpop.f32.mrf.mxu0
      %1800 = vmatprep.mubr.bf16.mxu0 0
      %1801 = vmatmul.mubr.bf16.gmra.mxu0 %v1643
      %v1802 = vpop.f32.mrf.mxu0
      %v1803 = vadd.f32 0.0, %v1802
      %v1804 = vpop.f32.mrf.mxu0
      %v1805 = vpop.f32.mrf.mxu0
      %v1806 = vadd.f32 0.0, %v1805
      %v1807 = vpop.f32.mrf.mxu0
      %1808 = vdwg.mxu0
      %v1809 = vadd.f32 %v1603, %v1683
      %v1810 = vadd.f32 %v1604, %v1686
      %v1811 = vadd.f32 %v1605, %v1691
      %v1812 = vadd.f32 %v1606, %v1694
      %v1813 = vadd.f32 %v1607, %v1699
      %v1814 = vadd.f32 %v1608, %v1702
      %v1815 = vadd.f32 %v1609, %v1707
      %v1816 = vadd.f32 %v1610, %v1710
      %v1817 = vadd.f32 %v1611, %v1715
      %v1818 = vadd.f32 %v1612, %v1718
      %v1819 = vadd.f32 %v1613, %v1723
      %v1820 = vadd.f32 %v1614, %v1726
      %v1821 = vadd.f32 %v1615, %v1731
      %v1822 = vadd.f32 %v1616, %v1734
      %v1823 = vadd.f32 %v1617, %v1739
      %v1824 = vadd.f32 %v1618, %v1742
      %v1825 = vadd.f32 %v1619, %v1747
      %v1826 = vadd.f32 %v1620, %v1750
      %v1827 = vadd.f32 %v1621, %v1755
      %v1828 = vadd.f32 %v1622, %v1758
      %v1829 = vadd.f32 %v1623, %v1763
      %v1830 = vadd.f32 %v1624, %v1766
      %v1831 = vadd.f32 %v1625, %v1771
      %v1832 = vadd.f32 %v1626, %v1774
      %v1833 = vadd.f32 %v1627, %v1779
      %v1834 = vadd.f32 %v1628, %v1782
      %v1835 = vadd.f32 %v1629, %v1787
      %v1836 = vadd.f32 %v1630, %v1790
      %v1837 = vadd.f32 %v1631, %v1795
      %v1838 = vadd.f32 %v1632, %v1798
      %v1839 = vadd.f32 %v1633, %v1803
      %v1840 = vadd.f32 %v1634, %v1806
      %s1841 = scalar_lea.vmem %s1, 12
      %v1842 = vld [vmem:[%s1841] sm:$0x3]
      %v1844 = vsel %vm485, %v287, 0
      %v1847 = vsel %vm534, %v1842, 0
      %1849 = vmatprep.subr.bf16.mxu0 0
      %1850 = vmatpush1.bf16.msra.mxu0 0
      %1851 = vmatprep.subr.bf16.mxu0 0
      %1852 = vmatpush1.bf16.msra.mxu0 0
      %1853 = vmatprep.subr.bf16.mxu0 0
      %1854 = vmatpush1.bf16.msra.mxu0 0
      %1855 = vmatprep.subr.bf16.mxu0 0
      %1856 = vmatpush1.bf16.msra.mxu0 0
      %1857 = vmatprep.subr.bf16.mxu0 0
      %1858 = vmatpush1.bf16.msra.mxu0 0
      %1859 = vmatprep.subr.bf16.mxu0 0
      %1860 = vmatpush1.bf16.msra.mxu0 0
      %1861 = vmatprep.subr.bf16.mxu0 0
      %1862 = vmatpush1.bf16.msra.mxu0 0
      %1863 = vmatprep.subr.bf16.mxu0 0
      %1864 = vmatpush1.bf16.msra.mxu0 %v1847
      %1865 = vmatprep.subr.bf16.mxu0 0
      %1866 = vmatpush2.bf16.msra.mxu0 0
      %1867 = vmatprep.subr.bf16.mxu0 0
      %1868 = vmatpush2.bf16.msra.mxu0 0
      %1869 = vmatprep.subr.bf16.mxu0 0
      %1870 = vmatpush2.bf16.msra.mxu0 0
      %1871 = vmatprep.subr.bf16.mxu0 0
      %1872 = vmatpush2.bf16.msra.mxu0 0
      %1873 = vmatprep.subr.bf16.mxu0 0
      %1874 = vmatpush2.bf16.msra.mxu0 0
      %1875 = vmatprep.subr.bf16.mxu0 0
      %1876 = vmatpush2.bf16.msra.mxu0 0
      %1877 = vmatprep.subr.bf16.mxu0 0
      %1878 = vmatpush2.bf16.msra.mxu0 0
      %1879 = vmatprep.subr.bf16.mxu0 0
      %1880 = vmatpush2.bf16.msra.mxu0 0
      %1881 = vmatprep.mubr.bf16.mxu0 0
      %1882 = vmatmul.mubr.bf16.gmra.mxu0 %v703
      %v1883 = vpop.f32.mrf.mxu0
      %v1884 = vadd.f32 0.0, %v1883
      %v1885 = vpop.f32.mrf.mxu0
      %v1886 = vpop.f32.mrf.mxu0
      %v1887 = vadd.f32 0.0, %v1886
      %v1888 = vpop.f32.mrf.mxu0
      %1889 = vmatprep.mubr.bf16.mxu0 0
      %1890 = vmatmul.mubr.bf16.gmra.mxu0 %v705
      %v1891 = vpop.f32.mrf.mxu0
      %v1892 = vadd.f32 0.0, %v1891
      %v1893 = vpop.f32.mrf.mxu0
      %v1894 = vpop.f32.mrf.mxu0
      %v1895 = vadd.f32 0.0, %v1894
      %v1896 = vpop.f32.mrf.mxu0
      %1897 = vmatprep.mubr.bf16.mxu0 0
      %1898 = vmatmul.mubr.bf16.gmra.mxu0 %v707
      %v1899 = vpop.f32.mrf.mxu0
      %v1900 = vadd.f32 0.0, %v1899
      %v1901 = vpop.f32.mrf.mxu0
      %v1902 = vpop.f32.mrf.mxu0
      %v1903 = vadd.f32 0.0, %v1902
      %v1904 = vpop.f32.mrf.mxu0
      %1905 = vmatprep.mubr.bf16.mxu0 0
      %1906 = vmatmul.mubr.bf16.gmra.mxu0 %v709
      %v1907 = vpop.f32.mrf.mxu0
      %v1908 = vadd.f32 0.0, %v1907
      %v1909 = vpop.f32.mrf.mxu0
      %v1910 = vpop.f32.mrf.mxu0
      %v1911 = vadd.f32 0.0, %v1910
      %v1912 = vpop.f32.mrf.mxu0
      %1913 = vmatprep.mubr.bf16.mxu0 0
      %1914 = vmatmul.mubr.bf16.gmra.mxu0 %v711
      %v1915 = vpop.f32.mrf.mxu0
      %v1916 = vadd.f32 0.0, %v1915
      %v1917 = vpop.f32.mrf.mxu0
      %v1918 = vpop.f32.mrf.mxu0
      %v1919 = vadd.f32 0.0, %v1918
      %v1920 = vpop.f32.mrf.mxu0
      %1921 = vmatprep.mubr.bf16.mxu0 0
      %1922 = vmatmul.mubr.bf16.gmra.mxu0 %v713
      %v1923 = vpop.f32.mrf.mxu0
      %v1924 = vadd.f32 0.0, %v1923
      %v1925 = vpop.f32.mrf.mxu0
      %v1926 = vpop.f32.mrf.mxu0
      %v1927 = vadd.f32 0.0, %v1926
      %v1928 = vpop.f32.mrf.mxu0
      %1929 = vmatprep.mubr.bf16.mxu0 0
      %1930 = vmatmul.mubr.bf16.gmra.mxu0 %v715
      %v1931 = vpop.f32.mrf.mxu0
      %v1932 = vadd.f32 0.0, %v1931
      %v1933 = vpop.f32.mrf.mxu0
      %v1934 = vpop.f32.mrf.mxu0
      %v1935 = vadd.f32 0.0, %v1934
      %v1936 = vpop.f32.mrf.mxu0
      %1937 = vmatprep.mubr.bf16.mxu0 0
      %1938 = vmatmul.mubr.bf16.gmra.mxu0 %v717
      %v1939 = vpop.f32.mrf.mxu0
      %v1940 = vadd.f32 0.0, %v1939
      %v1941 = vpop.f32.mrf.mxu0
      %v1942 = vpop.f32.mrf.mxu0
      %v1943 = vadd.f32 0.0, %v1942
      %v1944 = vpop.f32.mrf.mxu0
      %1945 = vmatprep.mubr.bf16.mxu0 0
      %1946 = vmatmul.mubr.bf16.gmra.mxu0 %v719
      %v1947 = vpop.f32.mrf.mxu0
      %v1948 = vadd.f32 0.0, %v1947
      %v1949 = vpop.f32.mrf.mxu0
      %v1950 = vpop.f32.mrf.mxu0
      %v1951 = vadd.f32 0.0, %v1950
      %v1952 = vpop.f32.mrf.mxu0
      %1953 = vmatprep.mubr.bf16.mxu0 0
      %1954 = vmatmul.mubr.bf16.gmra.mxu0 %v721
      %v1955 = vpop.f32.mrf.mxu0
      %v1956 = vadd.f32 0.0, %v1955
      %v1957 = vpop.f32.mrf.mxu0
      %v1958 = vpop.f32.mrf.mxu0
      %v1959 = vadd.f32 0.0, %v1958
      %v1960 = vpop.f32.mrf.mxu0
      %1961 = vmatprep.mubr.bf16.mxu0 0
      %1962 = vmatmul.mubr.bf16.gmra.mxu0 %v723
      %v1963 = vpop.f32.mrf.mxu0
      %v1964 = vadd.f32 0.0, %v1963
      %v1965 = vpop.f32.mrf.mxu0
      %v1966 = vpop.f32.mrf.mxu0
      %v1967 = vadd.f32 0.0, %v1966
      %v1968 = vpop.f32.mrf.mxu0
      %1969 = vmatprep.mubr.bf16.mxu0 0
      %1970 = vmatmul.mubr.bf16.gmra.mxu0 %v725
      %v1971 = vpop.f32.mrf.mxu0
      %v1972 = vadd.f32 0.0, %v1971
      %v1973 = vpop.f32.mrf.mxu0
      %v1974 = vpop.f32.mrf.mxu0
      %v1975 = vadd.f32 0.0, %v1974
      %v1976 = vpop.f32.mrf.mxu0
      %1977 = vmatprep.mubr.bf16.mxu0 0
      %1978 = vmatmul.mubr.bf16.gmra.mxu0 %v727
      %v1979 = vpop.f32.mrf.mxu0
      %v1980 = vadd.f32 0.0, %v1979
      %v1981 = vpop.f32.mrf.mxu0
      %v1982 = vpop.f32.mrf.mxu0
      %v1983 = vadd.f32 0.0, %v1982
      %v1984 = vpop.f32.mrf.mxu0
      %1985 = vmatprep.mubr.bf16.mxu0 0
      %1986 = vmatmul.mubr.bf16.gmra.mxu0 %v729
      %v1987 = vpop.f32.mrf.mxu0
      %v1988 = vadd.f32 0.0, %v1987
      %v1989 = vpop.f32.mrf.mxu0
      %v1990 = vpop.f32.mrf.mxu0
      %v1991 = vadd.f32 0.0, %v1990
      %v1992 = vpop.f32.mrf.mxu0
      %1993 = vmatprep.mubr.bf16.mxu0 0
      %1994 = vmatmul.mubr.bf16.gmra.mxu0 %v1225
      %v1995 = vpop.f32.mrf.mxu0
      %v1996 = vadd.f32 0.0, %v1995
      %v1997 = vpop.f32.mrf.mxu0
      %v1998 = vpop.f32.mrf.mxu0
      %v1999 = vadd.f32 0.0, %v1998
      %v2000 = vpop.f32.mrf.mxu0
      %2001 = vmatprep.mubr.bf16.mxu0 0
      %2002 = vmatmul.mubr.bf16.gmra.mxu0 %v1844
      %v2003 = vpop.f32.mrf.mxu0
      %v2004 = vadd.f32 0.0, %v2003
      %v2005 = vpop.f32.mrf.mxu0
      %v2006 = vpop.f32.mrf.mxu0
      %v2007 = vadd.f32 0.0, %v2006
      %v2008 = vpop.f32.mrf.mxu0
      %2009 = vdwg.mxu0
      %v2010 = vadd.f32 %v1809, %v1884
      %v2011 = vadd.f32 %v1810, %v1887
      %v2012 = vadd.f32 %v1811, %v1892
      %v2013 = vadd.f32 %v1812, %v1895
      %v2014 = vadd.f32 %v1813, %v1900
      %v2015 = vadd.f32 %v1814, %v1903
      %v2016 = vadd.f32 %v1815, %v1908
      %v2017 = vadd.f32 %v1816, %v1911
      %v2018 = vadd.f32 %v1817, %v1916
      %v2019 = vadd.f32 %v1818, %v1919
      %v2020 = vadd.f32 %v1819, %v1924
      %v2021 = vadd.f32 %v1820, %v1927
      %v2022 = vadd.f32 %v1821, %v1932
      %v2023 = vadd.f32 %v1822, %v1935
      %v2024 = vadd.f32 %v1823, %v1940
      %v2025 = vadd.f32 %v1824, %v1943
      %v2026 = vadd.f32 %v1825, %v1948
      %v2027 = vadd.f32 %v1826, %v1951
      %v2028 = vadd.f32 %v1827, %v1956
      %v2029 = vadd.f32 %v1828, %v1959
      %v2030 = vadd.f32 %v1829, %v1964
      %v2031 = vadd.f32 %v1830, %v1967
      %v2032 = vadd.f32 %v1831, %v1972
      %v2033 = vadd.f32 %v1832, %v1975
      %v2034 = vadd.f32 %v1833, %v1980
      %v2035 = vadd.f32 %v1834, %v1983
      %v2036 = vadd.f32 %v1835, %v1988
      %v2037 = vadd.f32 %v1836, %v1991
      %v2038 = vadd.f32 %v1837, %v1996
      %v2039 = vadd.f32 %v1838, %v1999
      %v2040 = vadd.f32 %v1839, %v2004
      %v2041 = vadd.f32 %v1840, %v2007
      %v2042 = vshrl.u32 %v287, 16
      %v2044 = vshll.u32 %v287, 16
      %v2046 = vrot.slane %v2044, 1
      %v2047 = vor.u32 %v2042, %v2046
      %v2049 = vshll.u32 %v288, 16
      %v2051 = vrot.slane %v2049, 1
      %v2052 = vsel %vm290, %v2047, %v2051
      %s2053 = scalar_lea.vmem %s1, 14
      %v2054 = vld [vmem:[%s2053] sm:$0x3]
      %v2056 = vsel %vm485, %v2052, 0
      %v2059 = vsel %vm534, %v2054, 0
      %2061 = vmatprep.subr.bf16.mxu0 0
      %2062 = vmatpush1.bf16.msra.mxu0 0
      %2063 = vmatprep.subr.bf16.mxu0 0
      %2064 = vmatpush1.bf16.msra.mxu0 0
      %2065 = vmatprep.subr.bf16.mxu0 0
      %2066 = vmatpush1.bf16.msra.mxu0 0
      %2067 = vmatprep.subr.bf16.mxu0 0
      %2068 = vmatpush1.bf16.msra.mxu0 0
      %2069 = vmatprep.subr.bf16.mxu0 0
      %2070 = vmatpush1.bf16.msra.mxu0 0
      %2071 = vmatprep.subr.bf16.mxu0 0
      %2072 = vmatpush1.bf16.msra.mxu0 0
      %2073 = vmatprep.subr.bf16.mxu0 0
      %2074 = vmatpush1.bf16.msra.mxu0 0
      %2075 = vmatprep.subr.bf16.mxu0 0
      %2076 = vmatpush1.bf16.msra.mxu0 %v2059
      %2077 = vmatprep.subr.bf16.mxu0 0
      %2078 = vmatpush2.bf16.msra.mxu0 0
      %2079 = vmatprep.subr.bf16.mxu0 0
      %2080 = vmatpush2.bf16.msra.mxu0 0
      %2081 = vmatprep.subr.bf16.mxu0 0
      %2082 = vmatpush2.bf16.msra.mxu0 0
      %2083 = vmatprep.subr.bf16.mxu0 0
      %2084 = vmatpush2.bf16.msra.mxu0 0
      %2085 = vmatprep.subr.bf16.mxu0 0
      %2086 = vmatpush2.bf16.msra.mxu0 0
      %2087 = vmatprep.subr.bf16.mxu0 0
      %2088 = vmatpush2.bf16.msra.mxu0 0
      %2089 = vmatprep.subr.bf16.mxu0 0
      %2090 = vmatpush2.bf16.msra.mxu0 0
      %2091 = vmatprep.subr.bf16.mxu0 0
      %2092 = vmatpush2.bf16.msra.mxu0 0
      %2093 = vmatprep.mubr.bf16.mxu0 0
      %2094 = vmatmul.mubr.bf16.gmra.mxu0 %v493
      %v2095 = vpop.f32.mrf.mxu0
      %v2096 = vadd.f32 0.0, %v2095
      %v2097 = vpop.f32.mrf.mxu0
      %v2098 = vpop.f32.mrf.mxu0
      %v2099 = vadd.f32 0.0, %v2098
      %v2100 = vpop.f32.mrf.mxu0
      %2101 = vmatprep.mubr.bf16.mxu0 0
      %2102 = vmatmul.mubr.bf16.gmra.mxu0 %v496
      %v2103 = vpop.f32.mrf.mxu0
      %v2104 = vadd.f32 0.0, %v2103
      %v2105 = vpop.f32.mrf.mxu0
      %v2106 = vpop.f32.mrf.mxu0
      %v2107 = vadd.f32 0.0, %v2106
      %v2108 = vpop.f32.mrf.mxu0
      %2109 = vmatprep.mubr.bf16.mxu0 0
      %2110 = vmatmul.mubr.bf16.gmra.mxu0 %v499
      %v2111 = vpop.f32.mrf.mxu0
      %v2112 = vadd.f32 0.0, %v2111
      %v2113 = vpop.f32.mrf.mxu0
      %v2114 = vpop.f32.mrf.mxu0
      %v2115 = vadd.f32 0.0, %v2114
      %v2116 = vpop.f32.mrf.mxu0
      %2117 = vmatprep.mubr.bf16.mxu0 0
      %2118 = vmatmul.mubr.bf16.gmra.mxu0 %v502
      %v2119 = vpop.f32.mrf.mxu0
      %v2120 = vadd.f32 0.0, %v2119
      %v2121 = vpop.f32.mrf.mxu0
      %v2122 = vpop.f32.mrf.mxu0
      %v2123 = vadd.f32 0.0, %v2122
      %v2124 = vpop.f32.mrf.mxu0
      %2125 = vmatprep.mubr.bf16.mxu0 0
      %2126 = vmatmul.mubr.bf16.gmra.mxu0 %v505
      %v2127 = vpop.f32.mrf.mxu0
      %v2128 = vadd.f32 0.0, %v2127
      %v2129 = vpop.f32.mrf.mxu0
      %v2130 = vpop.f32.mrf.mxu0
      %v2131 = vadd.f32 0.0, %v2130
      %v2132 = vpop.f32.mrf.mxu0
      %2133 = vmatprep.mubr.bf16.mxu0 0
      %2134 = vmatmul.mubr.bf16.gmra.mxu0 %v508
      %v2135 = vpop.f32.mrf.mxu0
      %v2136 = vadd.f32 0.0, %v2135
      %v2137 = vpop.f32.mrf.mxu0
      %v2138 = vpop.f32.mrf.mxu0
      %v2139 = vadd.f32 0.0, %v2138
      %v2140 = vpop.f32.mrf.mxu0
      %2141 = vmatprep.mubr.bf16.mxu0 0
      %2142 = vmatmul.mubr.bf16.gmra.mxu0 %v511
      %v2143 = vpop.f32.mrf.mxu0
      %v2144 = vadd.f32 0.0, %v2143
      %v2145 = vpop.f32.mrf.mxu0
      %v2146 = vpop.f32.mrf.mxu0
      %v2147 = vadd.f32 0.0, %v2146
      %v2148 = vpop.f32.mrf.mxu0
      %2149 = vmatprep.mubr.bf16.mxu0 0
      %2150 = vmatmul.mubr.bf16.gmra.mxu0 %v514
      %v2151 = vpop.f32.mrf.mxu0
      %v2152 = vadd.f32 0.0, %v2151
      %v2153 = vpop.f32.mrf.mxu0
      %v2154 = vpop.f32.mrf.mxu0
      %v2155 = vadd.f32 0.0, %v2154
      %v2156 = vpop.f32.mrf.mxu0
      %2157 = vmatprep.mubr.bf16.mxu0 0
      %2158 = vmatmul.mubr.bf16.gmra.mxu0 %v517
      %v2159 = vpop.f32.mrf.mxu0
      %v2160 = vadd.f32 0.0, %v2159
      %v2161 = vpop.f32.mrf.mxu0
      %v2162 = vpop.f32.mrf.mxu0
      %v2163 = vadd.f32 0.0, %v2162
      %v2164 = vpop.f32.mrf.mxu0
      %2165 = vmatprep.mubr.bf16.mxu0 0
      %2166 = vmatmul.mubr.bf16.gmra.mxu0 %v520
      %v2167 = vpop.f32.mrf.mxu0
      %v2168 = vadd.f32 0.0, %v2167
      %v2169 = vpop.f32.mrf.mxu0
      %v2170 = vpop.f32.mrf.mxu0
      %v2171 = vadd.f32 0.0, %v2170
      %v2172 = vpop.f32.mrf.mxu0
      %2173 = vmatprep.mubr.bf16.mxu0 0
      %2174 = vmatmul.mubr.bf16.gmra.mxu0 %v523
      %v2175 = vpop.f32.mrf.mxu0
      %v2176 = vadd.f32 0.0, %v2175
      %v2177 = vpop.f32.mrf.mxu0
      %v2178 = vpop.f32.mrf.mxu0
      %v2179 = vadd.f32 0.0, %v2178
      %v2180 = vpop.f32.mrf.mxu0
      %2181 = vmatprep.mubr.bf16.mxu0 0
      %2182 = vmatmul.mubr.bf16.gmra.mxu0 %v526
      %v2183 = vpop.f32.mrf.mxu0
      %v2184 = vadd.f32 0.0, %v2183
      %v2185 = vpop.f32.mrf.mxu0
      %v2186 = vpop.f32.mrf.mxu0
      %v2187 = vadd.f32 0.0, %v2186
      %v2188 = vpop.f32.mrf.mxu0
      %2189 = vmatprep.mubr.bf16.mxu0 0
      %2190 = vmatmul.mubr.bf16.gmra.mxu0 %v529
      %v2191 = vpop.f32.mrf.mxu0
      %v2192 = vadd.f32 0.0, %v2191
      %v2193 = vpop.f32.mrf.mxu0
      %v2194 = vpop.f32.mrf.mxu0
      %v2195 = vadd.f32 0.0, %v2194
      %v2196 = vpop.f32.mrf.mxu0
      %2197 = vmatprep.mubr.bf16.mxu0 0
      %2198 = vmatmul.mubr.bf16.gmra.mxu0 %v532
      %v2199 = vpop.f32.mrf.mxu0
      %v2200 = vadd.f32 0.0, %v2199
      %v2201 = vpop.f32.mrf.mxu0
      %v2202 = vpop.f32.mrf.mxu0
      %v2203 = vadd.f32 0.0, %v2202
      %v2204 = vpop.f32.mrf.mxu0
      %2205 = vmatprep.mubr.bf16.mxu0 0
      %2206 = vmatmul.mubr.bf16.gmra.mxu0 %v1437
      %v2207 = vpop.f32.mrf.mxu0
      %v2208 = vadd.f32 0.0, %v2207
      %v2209 = vpop.f32.mrf.mxu0
      %v2210 = vpop.f32.mrf.mxu0
      %v2211 = vadd.f32 0.0, %v2210
      %v2212 = vpop.f32.mrf.mxu0
      %2213 = vmatprep.mubr.bf16.mxu0 0
      %2214 = vmatmul.mubr.bf16.gmra.mxu0 %v2056
      %v2215 = vpop.f32.mrf.mxu0
      %v2216 = vadd.f32 0.0, %v2215
      %v2217 = vpop.f32.mrf.mxu0
      %v2218 = vpop.f32.mrf.mxu0
      %v2219 = vadd.f32 0.0, %v2218
      %v2220 = vpop.f32.mrf.mxu0
      %2221 = vdwg.mxu0
      %v2222 = vadd.f32 %v2010, %v2096
      %v2223 = vadd.f32 %v2011, %v2099
      %v2224 = vadd.f32 %v2012, %v2104
      %v2225 = vadd.f32 %v2013, %v2107
      %v2226 = vadd.f32 %v2014, %v2112
      %v2227 = vadd.f32 %v2015, %v2115
      %v2228 = vadd.f32 %v2016, %v2120
      %v2229 = vadd.f32 %v2017, %v2123
      %v2230 = vadd.f32 %v2018, %v2128
      %v2231 = vadd.f32 %v2019, %v2131
      %v2232 = vadd.f32 %v2020, %v2136
      %v2233 = vadd.f32 %v2021, %v2139
      %v2234 = vadd.f32 %v2022, %v2144
      %v2235 = vadd.f32 %v2023, %v2147
      %v2236 = vadd.f32 %v2024, %v2152
      %v2237 = vadd.f32 %v2025, %v2155
      %v2238 = vadd.f32 %v2026, %v2160
      %v2239 = vadd.f32 %v2027, %v2163
      %v2240 = vadd.f32 %v2028, %v2168
      %v2241 = vadd.f32 %v2029, %v2171
      %v2242 = vadd.f32 %v2030, %v2176
      %v2243 = vadd.f32 %v2031, %v2179
      %v2244 = vadd.f32 %v2032, %v2184
      %v2245 = vadd.f32 %v2033, %v2187
      %v2246 = vadd.f32 %v2034, %v2192
      %v2247 = vadd.f32 %v2035, %v2195
      %v2248 = vadd.f32 %v2036, %v2200
      %v2249 = vadd.f32 %v2037, %v2203
      %v2250 = vadd.f32 %v2038, %v2208
      %v2251 = vadd.f32 %v2039, %v2211
      %v2252 = vadd.f32 %v2040, %v2216
      %v2253 = vadd.f32 %v2041, %v2219
      %v2256 = vrot.slane %v287, 1
      %v2257 = vrot.slane %v288, 1
      %v2258 = vsel %vm927, %v2256, %v2257
      %s2259 = scalar_lea.vmem %s1, 16
      %v2260 = vld [vmem:[%s2259] sm:$0x3]
      %v2262 = vsel %vm485, %v2258, 0
      %v2265 = vsel %vm534, %v2260, 0
      %2267 = vmatprep.subr.bf16.mxu0 0
      %2268 = vmatpush1.bf16.msra.mxu0 0
      %2269 = vmatprep.subr.bf16.mxu0 0
      %2270 = vmatpush1.bf16.msra.mxu0 0
      %2271 = vmatprep.subr.bf16.mxu0 0
      %2272 = vmatpush1.bf16.msra.mxu0 0
      %2273 = vmatprep.subr.bf16.mxu0 0
      %2274 = vmatpush1.bf16.msra.mxu0 0
      %2275 = vmatprep.subr.bf16.mxu0 0
      %2276 = vmatpush1.bf16.msra.mxu0 0
      %2277 = vmatprep.subr.bf16.mxu0 0
      %2278 = vmatpush1.bf16.msra.mxu0 0
      %2279 = vmatprep.subr.bf16.mxu0 0
      %2280 = vmatpush1.bf16.msra.mxu0 0
      %2281 = vmatprep.subr.bf16.mxu0 0
      %2282 = vmatpush1.bf16.msra.mxu0 %v2265
      %2283 = vmatprep.subr.bf16.mxu0 0
      %2284 = vmatpush2.bf16.msra.mxu0 0
      %2285 = vmatprep.subr.bf16.mxu0 0
      %2286 = vmatpush2.bf16.msra.mxu0 0
      %2287 = vmatprep.subr.bf16.mxu0 0
      %2288 = vmatpush2.bf16.msra.mxu0 0
      %2289 = vmatprep.subr.bf16.mxu0 0
      %2290 = vmatpush2.bf16.msra.mxu0 0
      %2291 = vmatprep.subr.bf16.mxu0 0
      %2292 = vmatpush2.bf16.msra.mxu0 0
      %2293 = vmatprep.subr.bf16.mxu0 0
      %2294 = vmatpush2.bf16.msra.mxu0 0
      %2295 = vmatprep.subr.bf16.mxu0 0
      %2296 = vmatpush2.bf16.msra.mxu0 0
      %2297 = vmatprep.subr.bf16.mxu0 0
      %2298 = vmatpush2.bf16.msra.mxu0 0
      %2299 = vmatprep.mubr.bf16.mxu0 0
      %2300 = vmatmul.mubr.bf16.gmra.mxu0 %v985
      %v2301 = vpop.f32.mrf.mxu0
      %v2302 = vadd.f32 0.0, %v2301
      %v2303 = vpop.f32.mrf.mxu0
      %v2304 = vpop.f32.mrf.mxu0
      %v2305 = vadd.f32 0.0, %v2304
      %v2306 = vpop.f32.mrf.mxu0
      %2307 = vmatprep.mubr.bf16.mxu0 0
      %2308 = vmatmul.mubr.bf16.gmra.mxu0 %v988
      %v2309 = vpop.f32.mrf.mxu0
      %v2310 = vadd.f32 0.0, %v2309
      %v2311 = vpop.f32.mrf.mxu0
      %v2312 = vpop.f32.mrf.mxu0
      %v2313 = vadd.f32 0.0, %v2312
      %v2314 = vpop.f32.mrf.mxu0
      %2315 = vmatprep.mubr.bf16.mxu0 0
      %2316 = vmatmul.mubr.bf16.gmra.mxu0 %v991
      %v2317 = vpop.f32.mrf.mxu0
      %v2318 = vadd.f32 0.0, %v2317
      %v2319 = vpop.f32.mrf.mxu0
      %v2320 = vpop.f32.mrf.mxu0
      %v2321 = vadd.f32 0.0, %v2320
      %v2322 = vpop.f32.mrf.mxu0
      %2323 = vmatprep.mubr.bf16.mxu0 0
      %2324 = vmatmul.mubr.bf16.gmra.mxu0 %v994
      %v2325 = vpop.f32.mrf.mxu0
      %v2326 = vadd.f32 0.0, %v2325
      %v2327 = vpop.f32.mrf.mxu0
      %v2328 = vpop.f32.mrf.mxu0
      %v2329 = vadd.f32 0.0, %v2328
      %v2330 = vpop.f32.mrf.mxu0
      %2331 = vmatprep.mubr.bf16.mxu0 0
      %2332 = vmatmul.mubr.bf16.gmra.mxu0 %v997
      %v2333 = vpop.f32.mrf.mxu0
      %v2334 = vadd.f32 0.0, %v2333
      %v2335 = vpop.f32.mrf.mxu0
      %v2336 = vpop.f32.mrf.mxu0
      %v2337 = vadd.f32 0.0, %v2336
      %v2338 = vpop.f32.mrf.mxu0
      %2339 = vmatprep.mubr.bf16.mxu0 0
      %2340 = vmatmul.mubr.bf16.gmra.mxu0 %v1000
      %v2341 = vpop.f32.mrf.mxu0
      %v2342 = vadd.f32 0.0, %v2341
      %v2343 = vpop.f32.mrf.mxu0
      %v2344 = vpop.f32.mrf.mxu0
      %v2345 = vadd.f32 0.0, %v2344
      %v2346 = vpop.f32.mrf.mxu0
      %2347 = vmatprep.mubr.bf16.mxu0 0
      %2348 = vmatmul.mubr.bf16.gmra.mxu0 %v1003
      %v2349 = vpop.f32.mrf.mxu0
      %v2350 = vadd.f32 0.0, %v2349
      %v2351 = vpop.f32.mrf.mxu0
      %v2352 = vpop.f32.mrf.mxu0
      %v2353 = vadd.f32 0.0, %v2352
      %v2354 = vpop.f32.mrf.mxu0
      %2355 = vmatprep.mubr.bf16.mxu0 0
      %2356 = vmatmul.mubr.bf16.gmra.mxu0 %v1006
      %v2357 = vpop.f32.mrf.mxu0
      %v2358 = vadd.f32 0.0, %v2357
      %v2359 = vpop.f32.mrf.mxu0
      %v2360 = vpop.f32.mrf.mxu0
      %v2361 = vadd.f32 0.0, %v2360
      %v2362 = vpop.f32.mrf.mxu0
      %2363 = vmatprep.mubr.bf16.mxu0 0
      %2364 = vmatmul.mubr.bf16.gmra.mxu0 %v1009
      %v2365 = vpop.f32.mrf.mxu0
      %v2366 = vadd.f32 0.0, %v2365
      %v2367 = vpop.f32.mrf.mxu0
      %v2368 = vpop.f32.mrf.mxu0
      %v2369 = vadd.f32 0.0, %v2368
      %v2370 = vpop.f32.mrf.mxu0
      %2371 = vmatprep.mubr.bf16.mxu0 0
      %2372 = vmatmul.mubr.bf16.gmra.mxu0 %v1012
      %v2373 = vpop.f32.mrf.mxu0
      %v2374 = vadd.f32 0.0, %v2373
      %v2375 = vpop.f32.mrf.mxu0
      %v2376 = vpop.f32.mrf.mxu0
      %v2377 = vadd.f32 0.0, %v2376
      %v2378 = vpop.f32.mrf.mxu0
      %2379 = vmatprep.mubr.bf16.mxu0 0
      %2380 = vmatmul.mubr.bf16.gmra.mxu0 %v1015
      %v2381 = vpop.f32.mrf.mxu0
      %v2382 = vadd.f32 0.0, %v2381
      %v2383 = vpop.f32.mrf.mxu0
      %v2384 = vpop.f32.mrf.mxu0
      %v2385 = vadd.f32 0.0, %v2384
      %v2386 = vpop.f32.mrf.mxu0
      %2387 = vmatprep.mubr.bf16.mxu0 0
      %2388 = vmatmul.mubr.bf16.gmra.mxu0 %v1018
      %v2389 = vpop.f32.mrf.mxu0
      %v2390 = vadd.f32 0.0, %v2389
      %v2391 = vpop.f32.mrf.mxu0
      %v2392 = vpop.f32.mrf.mxu0
      %v2393 = vadd.f32 0.0, %v2392
      %v2394 = vpop.f32.mrf.mxu0
      %2395 = vmatprep.mubr.bf16.mxu0 0
      %2396 = vmatmul.mubr.bf16.gmra.mxu0 %v1021
      %v2397 = vpop.f32.mrf.mxu0
      %v2398 = vadd.f32 0.0, %v2397
      %v2399 = vpop.f32.mrf.mxu0
      %v2400 = vpop.f32.mrf.mxu0
      %v2401 = vadd.f32 0.0, %v2400
      %v2402 = vpop.f32.mrf.mxu0
      %2403 = vmatprep.mubr.bf16.mxu0 0
      %2404 = vmatmul.mubr.bf16.gmra.mxu0 %v1024
      %v2405 = vpop.f32.mrf.mxu0
      %v2406 = vadd.f32 0.0, %v2405
      %v2407 = vpop.f32.mrf.mxu0
      %v2408 = vpop.f32.mrf.mxu0
      %v2409 = vadd.f32 0.0, %v2408
      %v2410 = vpop.f32.mrf.mxu0
      %2411 = vmatprep.mubr.bf16.mxu0 0
      %2412 = vmatmul.mubr.bf16.gmra.mxu0 %v1643
      %v2413 = vpop.f32.mrf.mxu0
      %v2414 = vadd.f32 0.0, %v2413
      %v2415 = vpop.f32.mrf.mxu0
      %v2416 = vpop.f32.mrf.mxu0
      %v2417 = vadd.f32 0.0, %v2416
      %v2418 = vpop.f32.mrf.mxu0
      %2419 = vmatprep.mubr.bf16.mxu0 0
      %2420 = vmatmul.mubr.bf16.gmra.mxu0 %v2262
      %v2421 = vpop.f32.mrf.mxu0
      %v2422 = vadd.f32 0.0, %v2421
      %v2423 = vpop.f32.mrf.mxu0
      %v2424 = vpop.f32.mrf.mxu0
      %v2425 = vadd.f32 0.0, %v2424
      %v2426 = vpop.f32.mrf.mxu0
      %2427 = vdwg.mxu0
      %v2428 = vadd.f32 %v2222, %v2302
      %v2429 = vadd.f32 %v2223, %v2305
      %v2430 = vadd.f32 %v2224, %v2310
      %v2431 = vadd.f32 %v2225, %v2313
      %v2432 = vadd.f32 %v2226, %v2318
      %v2433 = vadd.f32 %v2227, %v2321
      %v2434 = vadd.f32 %v2228, %v2326
      %v2435 = vadd.f32 %v2229, %v2329
      %v2436 = vadd.f32 %v2230, %v2334
      %v2437 = vadd.f32 %v2231, %v2337
      %v2438 = vadd.f32 %v2232, %v2342
      %v2439 = vadd.f32 %v2233, %v2345
      %v2440 = vadd.f32 %v2234, %v2350
      %v2441 = vadd.f32 %v2235, %v2353
      %v2442 = vadd.f32 %v2236, %v2358
      %v2443 = vadd.f32 %v2237, %v2361
      %v2444 = vadd.f32 %v2238, %v2366
      %v2445 = vadd.f32 %v2239, %v2369
      %v2446 = vadd.f32 %v2240, %v2374
      %v2447 = vadd.f32 %v2241, %v2377
      %v2448 = vadd.f32 %v2242, %v2382
      %v2449 = vadd.f32 %v2243, %v2385
      %v2450 = vadd.f32 %v2244, %v2390
      %v2451 = vadd.f32 %v2245, %v2393
      %v2452 = vadd.f32 %v2246, %v2398
      %v2453 = vadd.f32 %v2247, %v2401
      %v2454 = vadd.f32 %v2248, %v2406
      %v2455 = vadd.f32 %v2249, %v2409
      %v2456 = vadd.f32 %v2250, %v2414
      %v2457 = vadd.f32 %v2251, %v2417
      %v2458 = vadd.f32 %v2252, %v2422
      %v2459 = vadd.f32 %v2253, %v2425
      %v2460 = vld [vmem:[%s2] sm:$0x1]
      %v2462 = vlaneseq
      %v2463 = vshrl.u32 %v2462, 7
      %v2464 = vsub.s32 0, %v2463
      %v2465 = vrot.slane %v2460, %v2464
      %v2467 = vmul.f32 %v2428, %v2465
      %v2468 = vmul.f32 %v2429, %v2465
      %v2469 = vmul.f32 %v2430, %v2465
      %v2470 = vmul.f32 %v2431, %v2465
      %v2471 = vmul.f32 %v2432, %v2465
      %v2472 = vmul.f32 %v2433, %v2465
      %v2473 = vmul.f32 %v2434, %v2465
      %v2474 = vmul.f32 %v2435, %v2465
      %v2475 = vmul.f32 %v2436, %v2465
      %v2476 = vmul.f32 %v2437, %v2465
      %v2477 = vmul.f32 %v2438, %v2465
      %v2478 = vmul.f32 %v2439, %v2465
      %v2479 = vmul.f32 %v2440, %v2465
      %v2480 = vmul.f32 %v2441, %v2465
      %v2481 = vmul.f32 %v2442, %v2465
      %v2482 = vmul.f32 %v2443, %v2465
      %v2483 = vmul.f32 %v2444, %v2465
      %v2484 = vmul.f32 %v2445, %v2465
      %v2485 = vmul.f32 %v2446, %v2465
      %v2486 = vmul.f32 %v2447, %v2465
      %v2487 = vmul.f32 %v2448, %v2465
      %v2488 = vmul.f32 %v2449, %v2465
      %v2489 = vmul.f32 %v2450, %v2465
      %v2490 = vmul.f32 %v2451, %v2465
      %v2491 = vmul.f32 %v2452, %v2465
      %v2492 = vmul.f32 %v2453, %v2465
      %v2493 = vmul.f32 %v2454, %v2465
      %v2494 = vmul.f32 %v2455, %v2465
      %v2495 = vmul.f32 %v2456, %v2465
      %v2496 = vmul.f32 %v2457, %v2465
      %v2497 = vmul.f32 %v2458, %v2465
      %v2498 = vmul.f32 %v2459, %v2465
      %v2499 = vld [vmem:[%s3] sm:$0x1]
      %v2501 = vlaneseq
      %v2502 = vshrl.u32 %v2501, 7
      %v2503 = vsub.s32 0, %v2502
      %v2504 = vrot.slane %v2499, %v2503
      %v2506 = vadd.f32 %v2467, %v2504
      %v2507 = vadd.f32 %v2468, %v2504
      %v2508 = vadd.f32 %v2469, %v2504
      %v2509 = vadd.f32 %v2470, %v2504
      %v2510 = vadd.f32 %v2471, %v2504
      %v2511 = vadd.f32 %v2472, %v2504
      %v2512 = vadd.f32 %v2473, %v2504
      %v2513 = vadd.f32 %v2474, %v2504
      %v2514 = vadd.f32 %v2475, %v2504
      %v2515 = vadd.f32 %v2476, %v2504
      %v2516 = vadd.f32 %v2477, %v2504
      %v2517 = vadd.f32 %v2478, %v2504
      %v2518 = vadd.f32 %v2479, %v2504
      %v2519 = vadd.f32 %v2480, %v2504
      %v2520 = vadd.f32 %v2481, %v2504
      %v2521 = vadd.f32 %v2482, %v2504
      %v2522 = vadd.f32 %v2483, %v2504
      %v2523 = vadd.f32 %v2484, %v2504
      %v2524 = vadd.f32 %v2485, %v2504
      %v2525 = vadd.f32 %v2486, %v2504
      %v2526 = vadd.f32 %v2487, %v2504
      %v2527 = vadd.f32 %v2488, %v2504
      %v2528 = vadd.f32 %v2489, %v2504
      %v2529 = vadd.f32 %v2490, %v2504
      %v2530 = vadd.f32 %v2491, %v2504
      %v2531 = vadd.f32 %v2492, %v2504
      %v2532 = vadd.f32 %v2493, %v2504
      %v2533 = vadd.f32 %v2494, %v2504
      %v2534 = vadd.f32 %v2495, %v2504
      %v2535 = vadd.f32 %v2496, %v2504
      %v2536 = vadd.f32 %v2497, %v2504
      %v2537 = vadd.f32 %v2498, %v2504
      %v2538 = vmax.f32 %v2506, 0.0
      %v2539 = vmax.f32 %v2507, 0.0
      %v2540 = vmax.f32 %v2508, 0.0
      %v2541 = vmax.f32 %v2509, 0.0
      %v2542 = vmax.f32 %v2510, 0.0
      %v2543 = vmax.f32 %v2511, 0.0
      %v2544 = vmax.f32 %v2512, 0.0
      %v2545 = vmax.f32 %v2513, 0.0
      %v2546 = vmax.f32 %v2514, 0.0
      %v2547 = vmax.f32 %v2515, 0.0
      %v2548 = vmax.f32 %v2516, 0.0
      %v2549 = vmax.f32 %v2517, 0.0
      %v2550 = vmax.f32 %v2518, 0.0
      %v2551 = vmax.f32 %v2519, 0.0
      %v2552 = vmax.f32 %v2520, 0.0
      %v2553 = vmax.f32 %v2521, 0.0
      %v2554 = vmax.f32 %v2522, 0.0
      %v2555 = vmax.f32 %v2523, 0.0
      %v2556 = vmax.f32 %v2524, 0.0
      %v2557 = vmax.f32 %v2525, 0.0
      %v2558 = vmax.f32 %v2526, 0.0
      %v2559 = vmax.f32 %v2527, 0.0
      %v2560 = vmax.f32 %v2528, 0.0
      %v2561 = vmax.f32 %v2529, 0.0
      %v2562 = vmax.f32 %v2530, 0.0
      %v2563 = vmax.f32 %v2531, 0.0
      %v2564 = vmax.f32 %v2532, 0.0
      %v2565 = vmax.f32 %v2533, 0.0
      %v2566 = vmax.f32 %v2534, 0.0
      %v2567 = vmax.f32 %v2535, 0.0
      %v2568 = vmax.f32 %v2536, 0.0
      %v2569 = vmax.f32 %v2537, 0.0
      %vm2570 = vcmask 64512
      %2571 = vst.msk [vmem:[%s197] sm:$0xff] %vm2570, %v2538
      %2572 = vst.msk [vmem:[%s197 + $0x8] sm:$0xff] %vm2570, %v2539
      %2573 = vst.msk [vmem:[%s197 + $0x10] sm:$0xff] %vm2570, %v2540
      %2574 = vst.msk [vmem:[%s197 + $0x18] sm:$0xff] %vm2570, %v2541
      %2575 = vst.msk [vmem:[%s197 + $0x20] sm:$0xff] %vm2570, %v2542
      %2576 = vst.msk [vmem:[%s197 + $0x28] sm:$0xff] %vm2570, %v2543
      %2577 = vst.msk [vmem:[%s197 + $0x30] sm:$0xff] %vm2570, %v2544
      %2578 = vst.msk [vmem:[%s197 + $0x38] sm:$0xff] %vm2570, %v2545
      %2579 = vst.msk [vmem:[%s197 + $0x40] sm:$0xff] %vm2570, %v2546
      %2580 = vst.msk [vmem:[%s197 + $0x48] sm:$0xff] %vm2570, %v2547
      %2581 = vst.msk [vmem:[%s197 + $0x50] sm:$0xff] %vm2570, %v2548
      %2582 = vst.msk [vmem:[%s197 + $0x58] sm:$0xff] %vm2570, %v2549
      %2583 = vst.msk [vmem:[%s197 + $0x60] sm:$0xff] %vm2570, %v2550
      %2584 = vst.msk [vmem:[%s197 + $0x68] sm:$0xff] %vm2570, %v2551
      %2585 = vst.msk [vmem:[%s197 + $0x70] sm:$0xff] %vm2570, %v2552
      %2586 = vst.msk [vmem:[%s197 + $0x78] sm:$0xff] %vm2570, %v2553
      %2587 = vst.msk [vmem:[%s197 + $0x80] sm:$0xff] %vm2570, %v2554
      %2588 = vst.msk [vmem:[%s197 + $0x88] sm:$0xff] %vm2570, %v2555
      %2589 = vst.msk [vmem:[%s197 + $0x90] sm:$0xff] %vm2570, %v2556
      %2590 = vst.msk [vmem:[%s197 + $0x98] sm:$0xff] %vm2570, %v2557
      %2591 = vst.msk [vmem:[%s197 + $0xa0] sm:$0xff] %vm2570, %v2558
      %2592 = vst.msk [vmem:[%s197 + $0xa8] sm:$0xff] %vm2570, %v2559
      %2593 = vst.msk [vmem:[%s197 + $0xb0] sm:$0xff] %vm2570, %v2560
      %2594 = vst.msk [vmem:[%s197 + $0xb8] sm:$0xff] %vm2570, %v2561
      %2595 = vst.msk [vmem:[%s197 + $0xc0] sm:$0xff] %vm2570, %v2562
      %2596 = vst.msk [vmem:[%s197 + $0xc8] sm:$0xff] %vm2570, %v2563
      %2597 = vst.msk [vmem:[%s197 + $0xd0] sm:$0xff] %vm2570, %v2564
      %2598 = vst.msk [vmem:[%s197 + $0xd8] sm:$0xff] %vm2570, %v2565
      %2599 = vst.msk [vmem:[%s197 + $0xe0] sm:$0xff] %vm2570, %v2566
      %2600 = vst.msk [vmem:[%s197 + $0xe8] sm:$0xff] %vm2570, %v2567
      %2601 = vst.msk [vmem:[%s197 + $0xf0] sm:$0xff] %vm2570, %v2568
      %2602 = vst.msk [vmem:[%s197 + $0xf8] sm:$0xff] %vm2570, %v2569
      %p2603 = scmp.lt.s32.totalorder %s15, 1
      %s2604 = scalar_select %p2603, %s15, 1
      %s2605 = smul.addr %s2604, 32
      %s2606 = smul.addr %s2605, 8
      %s2607 = scalar_lea.vmem %s4, %s2606
      // Predicated region
      $region37: #{inception_sparse_forward.6} parent=35 // pred_check
        %p2608 = pneg %p122
      $region38: #{inception_sparse_forward.6} parent=35 // pred_check_branch
        %2610 = sbr.rel (%p2608) target = $region40
      $region39: #{inception_sparse_forward.6} parent=35 // pred_region
        _
      $region40: #{inception_sparse_forward.6} parent=35 // pred_fallthru
        _
    $region36: #{inception_sparse_forward.6} parent=5 // pred_fallthru
      _
    %p2611 = scmp.le.s32.totalorder 2, %s10
    // Predicated region
    $region41: #{inception_sparse_forward.6} parent=5 // pred_check
      %p2612 = pneg %p2611
    $region42: #{inception_sparse_forward.6} parent=5 // pred_check_branch
      %2614 = sbr.rel (%p2612) target = $region44
    $region43: #{inception_sparse_forward.6} parent=5 // pred_region
      %s2615 = ssub.s32 %s10, 2
      // Predicated region
      $region45: #{inception_sparse_forward.6} parent=43 // pred_check
        %p2616 = pneg %p128
      $region46: #{inception_sparse_forward.6} parent=43 // pred_check_branch
        %2618 = sbr.rel (%p2616) target = $region48
      $region47: #{inception_sparse_forward.6} parent=43 // pred_region
        %p2619 = scmp.lt.s32.totalorder %s16, 1
        %s2620 = scalar_select %p2619, %s16, 1
        %s2621 = smul.addr %s2620, 32
        %s2622 = smul.addr %s2621, 8
        %s2623 = scalar_lea.vmem %s4, %s2622
      $region48: #{inception_sparse_forward.6} parent=43 // pred_fallthru
        _
    $region44: #{inception_sparse_forward.6} parent=5 // pred_fallthru
      _
  $region6: #{inception_sparse_forward.6} parent=0 // loop_footer
    %s14 = sadd.s32 1, %s10
  $region7: #{inception_sparse_forward.6} parent=0 // loop_footer_branch
    %9 = sbr.rel target = $region3
  $region8: #{inception_sparse_forward.6} parent=0 // loop_exit
    _

// kernel: inception_sparse_forward.8
$region0: #{inception_sparse_forward.8}
  #allocation0 [shape = 'u32[]', space=smem, size = 0x4, offset = 0x4, fixed_abs, tag = 'smem constant byte address 0x4 - core index']
  #allocation1 [shape = 'u32[144,128]{1,0:T(1,128)}', space=vmem, size = 0x12000, scoped, tag = 'internal scratch']
  %s0 = inlined_call_operand.vmem [shape: f32[2,18,18,8], index: 0, kind: input, shape index: {}]
  %s1 = inlined_call_operand.vmem [shape: bf16[9,8,8], index: 1, kind: input, shape index: {}]
  %s2 = inlined_call_operand.vmem [shape: f32[1,8], index: 2, kind: input, shape index: {}]
  %s3 = inlined_call_operand.vmem [shape: f32[1,8], index: 3, kind: input, shape index: {}]
  %s4 = inlined_call_operand.vmem [shape: f32[2,16,16,8], index: 4, kind: output, shape index: {}]
  %s5 = sld [smem:[#allocation0]]
  $region49: #{inception_sparse_forward.8} parent=0
    _
  %s7 = ssub.s32 1, %s5
  %s8 = scalar_select 0, %s7, %s5
  loop: start=0, step=1, limit=4
  $region2: #{inception_sparse_forward.8} parent=0 // loop_pre_header
    _
  $region3: #{inception_sparse_forward.8} parent=0 // loop_header
    %s10 = sphi 0, %s14
    %p11 = scmp.ge.s32.totalorder %s10, 4
    %s20 = sphi 0, %s22
    %s23 = sphi 0, %s20
    %s24 = sphi 0, %s23
    %s40 = sphi 0, %s24
    %s44 = sphi 0, %s44
    %s46 = sphi 0, %s44
    %s47 = sphi 0, %s46
    %s61 = sphi 0, %s47
    %s65 = sphi 0, %s65
    %s67 = sphi 0, %s65
    %s68 = sphi 0, %s67
    %s82 = sphi 0, %s68
    %s86 = sphi 0, %s86
    %s88 = sphi 0, %s86
    %s89 = sphi 0, %s88
    %s103 = sphi 0, %s89
    %s109 = sphi 0, %s111
    %s112 = sphi 0, %s109
    %s113 = sphi 0, %s112
    %s129 = sphi 0, %s113
  $region4: #{inception_sparse_forward.8} parent=0 // loop_header_branch
    %13 = sbr.rel (%p11) target = $region8
  $region5: #{inception_sparse_forward.8} parent=0 // loop_body
    %s15 = ssub.s32 %s10, 1
    %s16 = ssub.s32 %s10, 2
    %s17 = sadd.s32 %s10, 1
    %s18 = ssub.s32 %s10, %s17
    %p19 = scmp.eq.s32.totalorder %s18, 0
    %s21 = sadd.s32 %s20, 1
    %s22 = scalar_select %p19, %s20, %s21
    %p25 = pneg %p19
    %p26 = scmp.eq.s32.totalorder %s10, 1
    %p27 = por %p25, %p26
    %p28 = scmp.ne.s32.totalorder %s20, %s23
    %p29 = scmp.eq.s32.totalorder %s10, 0
    %p30 = por %p28, %p29
    %p31 = scmp.ne.s32.totalorder %s20, %s23
    %p32 = scmp.eq.s32.totalorder %s15, 1
    %p33 = por %p31, %p32
    %p34 = scmp.ne.s32.totalorder %s23, %s24
    %p35 = scmp.eq.s32.totalorder %s15, 0
    %p36 = por %p34, %p35
    %p37 = scmp.ne.s32.totalorder %s23, %s24
    %p38 = scmp.eq.s32.totalorder %s16, 1
    %p39 = por %p37, %p38
    %p41 = scmp.ne.s32.totalorder %s24, %s40
    %p42 = scmp.eq.s32.totalorder %s16, 0
    %p43 = por %p41, %p42
    %s45 = sadd.s32 %s44, 1
    %p48 = scmp.eq.s32.totalorder %s10, 1
    %p49 = scmp.ne.s32.totalorder %s44, %s46
    %p50 = scmp.eq.s32.totalorder %s10, 0
    %p51 = por %p49, %p50
    %p52 = scmp.ne.s32.totalorder %s44, %s46
    %p53 = scmp.eq.s32.totalorder %s15, 1
    %p54 = por %p52, %p53
    %p55 = scmp.ne.s32.totalorder %s46, %s47
    %p56 = scmp.eq.s32.totalorder %s15, 0
    %p57 = por %p55, %p56
    %p58 = scmp.ne.s32.totalorder %s46, %s47
    %p59 = scmp.eq.s32.totalorder %s16, 1
    %p60 = por %p58, %p59
    %p62 = scmp.ne.s32.totalorder %s47, %s61
    %p63 = scmp.eq.s32.totalorder %s16, 0
    %p64 = por %p62, %p63
    %s66 = sadd.s32 %s65, 1
    %p69 = scmp.eq.s32.totalorder %s10, 1
    %p70 = scmp.ne.s32.totalorder %s65, %s67
    %p71 = scmp.eq.s32.totalorder %s10, 0
    %p72 = por %p70, %p71
    %p73 = scmp.ne.s32.totalorder %s65, %s67
    %p74 = scmp.eq.s32.totalorder %s15, 1
    %p75 = por %p73, %p74
    %p76 = scmp.ne.s32.totalorder %s67, %s68
    %p77 = scmp.eq.s32.totalorder %s15, 0
    %p78 = por %p76, %p77
    %p79 = scmp.ne.s32.totalorder %s67, %s68
    %p80 = scmp.eq.s32.totalorder %s16, 1
    %p81 = por %p79, %p80
    %p83 = scmp.ne.s32.totalorder %s68, %s82
    %p84 = scmp.eq.s32.totalorder %s16, 0
    %p85 = por %p83, %p84
    %s87 = sadd.s32 %s86, 1
    %p90 = scmp.eq.s32.totalorder %s10, 1
    %p91 = scmp.ne.s32.totalorder %s86, %s88
    %p92 = scmp.eq.s32.totalorder %s10, 0
    %p93 = por %p91, %p92
    %p94 = scmp.ne.s32.totalorder %s86, %s88
    %p95 = scmp.eq.s32.totalorder %s15, 1
    %p96 = por %p94, %p95
    %p97 = scmp.ne.s32.totalorder %s88, %s89
    %p98 = scmp.eq.s32.totalorder %s15, 0
    %p99 = por %p97, %p98
    %p100 = scmp.ne.s32.totalorder %s88, %s89
    %p101 = scmp.eq.s32.totalorder %s16, 1
    %p102 = por %p100, %p101
    %p104 = scmp.ne.s32.totalorder %s89, %s103
    %p105 = scmp.eq.s32.totalorder %s16, 0
    %p106 = por %p104, %p105
    %s107 = ssub.s32 %s10, %s17
    %p108 = scmp.eq.s32.totalorder %s107, 0
    %s110 = sadd.s32 %s109, 1
    %s111 = scalar_select %p108, %s109, %s110
    %p114 = pneg %p108
    %p115 = scmp.eq.s32.totalorder %s10, 1
    %p116 = por %p114, %p115
    %p117 = scmp.ne.s32.totalorder %s109, %s112
    %p118 = scmp.eq.s32.totalorder %s10, 0
    %p119 = por %p117, %p118
    %p120 = scmp.ne.s32.totalorder %s109, %s112
    %p121 = scmp.eq.s32.totalorder %s15, 1
    %p122 = por %p120, %p121
    %p123 = scmp.ne.s32.totalorder %s112, %s113
    %p124 = scmp.eq.s32.totalorder %s15, 0
    %p125 = por %p123, %p124
    %p126 = scmp.ne.s32.totalorder %s112, %s113
    %p127 = scmp.eq.s32.totalorder %s16, 1
    %p128 = por %p126, %p127
    %p130 = scmp.ne.s32.totalorder %s113, %s129
    %p131 = scmp.eq.s32.totalorder %s16, 0
    %p132 = por %p130, %p131
    %p133 = scmp.le.s32.totalorder 1, %s10
    %p134 = scmp.lt.s32.totalorder %s10, 3
    %p135 = pnand %p133, %p134
    %p136 = pneg %p135
    // Predicated region
    $region9: #{inception_sparse_forward.8} parent=5 // pred_check
      _
    $region10: #{inception_sparse_forward.8} parent=5 // pred_check_branch
      %138 = sbr.rel (%p135) target = $region12
    $region11: #{inception_sparse_forward.8} parent=5 // pred_region
      %s139 = ssub.s32 %s10, 1
      // Predicated region
      $region13: #{inception_sparse_forward.8} parent=11 // pred_check
        %p140 = pneg %p57
      $region14: #{inception_sparse_forward.8} parent=11 // pred_check_branch
        %142 = sbr.rel (%p140) target = $region16
      $region15: #{inception_sparse_forward.8} parent=11 // pred_region
        _
      $region16: #{inception_sparse_forward.8} parent=11 // pred_fallthru
        _
      // Predicated region
      $region17: #{inception_sparse_forward.8} parent=11 // pred_check
        %p143 = pneg %p78
      $region18: #{inception_sparse_forward.8} parent=11 // pred_check_branch
        %145 = sbr.rel (%p143) target = $region20
      $region19: #{inception_sparse_forward.8} parent=11 // pred_region
        _
      $region20: #{inception_sparse_forward.8} parent=11 // pred_fallthru
        _
      // Predicated region
      $region21: #{inception_sparse_forward.8} parent=11 // pred_check
        %p146 = pneg %p99
      $region22: #{inception_sparse_forward.8} parent=11 // pred_check_branch
        %148 = sbr.rel (%p146) target = $region24
      $region23: #{inception_sparse_forward.8} parent=11 // pred_region
        _
      $region24: #{inception_sparse_forward.8} parent=11 // pred_fallthru
        _
    $region12: #{inception_sparse_forward.8} parent=5 // pred_fallthru
      _
    %p149 = scmp.lt.s32.totalorder %s10, 2
    // Predicated region
    $region25: #{inception_sparse_forward.8} parent=5 // pred_check
      %p150 = pneg %p149
    $region26: #{inception_sparse_forward.8} parent=5 // pred_check_branch
      %152 = sbr.rel (%p150) target = $region28
    $region27: #{inception_sparse_forward.8} parent=5 // pred_region
      // Predicated region
      $region29: #{inception_sparse_forward.8} parent=27 // pred_check
        %p153 = pneg %p30
      $region30: #{inception_sparse_forward.8} parent=27 // pred_check_branch
        %155 = sbr.rel (%p153) target = $region32
      $region31: #{inception_sparse_forward.8} parent=27 // pred_region
        %p156 = scmp.lt.s32.totalorder %s10, 1
        %s157 = scalar_select %p156, %s10, 1
        %s158 = smul.addr %s157, 54
        %s159 = smul.addr %s158, 8
        %s160 = scalar_lea.vmem %s0, %s159
      $region32: #{inception_sparse_forward.8} parent=27 // pred_fallthru
        _
    $region28: #{inception_sparse_forward.8} parent=5 // pred_fallthru
      _
    %p161 = scmp.le.s32.totalorder 1, %s10
    %p162 = scmp.lt.s32.totalorder %s10, 3
    %p163 = pnand %p161, %p162
    %p164 = pneg %p163
    // Predicated region
    $region33: #{inception_sparse_forward.8} parent=5 // pred_check
      _
    $region34: #{inception_sparse_forward.8} parent=5 // pred_check_branch
      %166 = sbr.rel (%p163) target = $region36
    $region35: #{inception_sparse_forward.8} parent=5 // pred_region
      %s167 = ssub.s32 %s10, 1
      %p168 = scmp.lt.s32.totalorder %s15, 1
      %s169 = scalar_select %p168, %s15, 1
      %s170 = smul.addr %s169, 54
      %s171 = smul.addr %s170, 8
      %s172 = scalar_lea.vmem %s0, %s171
      %p173 = pneg %p36
      %p174 = pneg %p33
      %p175 = pneg %p57
      %p176 = pneg %p54
      %p177 = pneg %p78
      %p178 = pneg %p75
      %p179 = pneg %p99
      %p180 = pneg %p96
      %p181 = pneg %p125
      %p182 = pneg %p122
      %p183 = scmp.lt.s32.totalorder %s15, 1
      %s184 = scalar_select %p183, %s15, 1
      %s185 = smul.addr %s184, 32
      %s186 = smul.addr %s185, 8
      %s187 = scalar_lea.vmem %s4, %s186
      %p188 = scmp.lt.s32.totalorder %s15, 1
      %s189 = scalar_select %p188, %s15, 1
      %s190 = smul.addr %s189, 54
      %s191 = smul.addr %s190, 8
      %s192 = scalar_lea.vmem %s0, %s191
      %p193 = scmp.lt.s32.totalorder %s15, 1
      %s194 = scalar_select %p193, %s15, 1
      %s195 = smul.addr %s194, 32
      %s196 = smul.addr %s195, 8
      %s197 = scalar_lea.vmem %s4, %s196
      %v199 = vld [vmem:[%s192] sm:$0xff]
      %v200 = vld [vmem:[%s192 + $0x8] sm:$0xff]
      %v201 = vld [vmem:[%s192 + $0x10] sm:$0x3]
      %v202 = vld [vmem:[%s192 + $0x18] sm:$0xff]
      %v203 = vld [vmem:[%s192 + $0x20] sm:$0xff]
      %v204 = vld [vmem:[%s192 + $0x28] sm:$0x3]
      %v205 = vld [vmem:[%s192 + $0x30] sm:$0xff]
      %v206 = vld [vmem:[%s192 + $0x38] sm:$0xff]
      %v207 = vld [vmem:[%s192 + $0x40] sm:$0x3]
      %v208 = vld [vmem:[%s192 + $0x48] sm:$0xff]
      %v209 = vld [vmem:[%s192 + $0x50] sm:$0xff]
      %v210 = vld [vmem:[%s192 + $0x58] sm:$0x3]
      %v211 = vld [vmem:[%s192 + $0x60] sm:$0xff]
      %v212 = vld [vmem:[%s192 + $0x68] sm:$0xff]
      %v213 = vld [vmem:[%s192 + $0x70] sm:$0x3]
      %v214 = vld [vmem:[%s192 + $0x78] sm:$0xff]
      %v215 = vld [vmem:[%s192 + $0x80] sm:$0xff]
      %v216 = vld [vmem:[%s192 + $0x88] sm:$0x3]
      %v217 = vld [vmem:[%s192 + $0x90] sm:$0xff]
      %v218 = vld [vmem:[%s192 + $0x98] sm:$0xff]
      %v219 = vld [vmem:[%s192 + $0xa0] sm:$0x3]
      %v220 = vld [vmem:[%s192 + $0xa8] sm:$0xff]
      %v221 = vld [vmem:[%s192 + $0xb0] sm:$0xff]
      %v222 = vld [vmem:[%s192 + $0xb8] sm:$0x3]
      %v223 = vld [vmem:[%s192 + $0xc0] sm:$0xff]
      %v224 = vld [vmem:[%s192 + $0xc8] sm:$0xff]
      %v225 = vld [vmem:[%s192 + $0xd0] sm:$0x3]
      %v226 = vld [vmem:[%s192 + $0xd8] sm:$0xff]
      %v227 = vld [vmem:[%s192 + $0xe0] sm:$0xff]
      %v228 = vld [vmem:[%s192 + $0xe8] sm:$0x3]
      %v229 = vld [vmem:[%s192 + $0xf0] sm:$0xff]
      %v230 = vld [vmem:[%s192 + $0xf8] sm:$0xff]
      %v231 = vld [vmem:[%s192 + $0x100] sm:$0x3]
      %v232 = vld [vmem:[%s192 + $0x108] sm:$0xff]
      %v233 = vld [vmem:[%s192 + $0x110] sm:$0xff]
      %v234 = vld [vmem:[%s192 + $0x118] sm:$0x3]
      %v235 = vld [vmem:[%s192 + $0x120] sm:$0xff]
      %v236 = vld [vmem:[%s192 + $0x128] sm:$0xff]
      %v237 = vld [vmem:[%s192 + $0x130] sm:$0x3]
      %v238 = vld [vmem:[%s192 + $0x138] sm:$0xff]
      %v239 = vld [vmem:[%s192 + $0x140] sm:$0xff]
      %v240 = vld [vmem:[%s192 + $0x148] sm:$0x3]
      %v241 = vld [vmem:[%s192 + $0x150] sm:$0xff]
      %v242 = vld [vmem:[%s192 + $0x158] sm:$0xff]
      %v243 = vld [vmem:[%s192 + $0x160] sm:$0x3]
      %v244 = vld [vmem:[%s192 + $0x168] sm:$0xff]
      %v245 = vld [vmem:[%s192 + $0x170] sm:$0xff]
      %v246 = vld [vmem:[%s192 + $0x178] sm:$0x3]
      %v247 = vld [vmem:[%s192 + $0x180] sm:$0xff]
      %v248 = vld [vmem:[%s192 + $0x188] sm:$0xff]
      %v249 = vld [vmem:[%s192 + $0x190] sm:$0x3]
      %v250 = vld [vmem:[%s192 + $0x198] sm:$0xff]
      %v251 = vld [vmem:[%s192 + $0x1a0] sm:$0xff]
      %v252 = vld [vmem:[%s192 + $0x1a8] sm:$0x3]
      %v253 = vpack.c.bf16 %v200, %v199
      %v254 = vpack.c.bf16 %v201, %v201
      %v255 = vpack.c.bf16 %v203, %v202
      %v256 = vpack.c.bf16 %v204, %v204
      %v257 = vpack.c.bf16 %v206, %v205
      %v258 = vpack.c.bf16 %v207, %v207
      %v259 = vpack.c.bf16 %v209, %v208
      %v260 = vpack.c.bf16 %v210, %v210
      %v261 = vpack.c.bf16 %v212, %v211
      %v262 = vpack.c.bf16 %v213, %v213
      %v263 = vpack.c.bf16 %v215, %v214
      %v264 = vpack.c.bf16 %v216, %v216
      %v265 = vpack.c.bf16 %v218, %v217
      %v266 = vpack.c.bf16 %v219, %v219
      %v267 = vpack.c.bf16 %v221, %v220
      %v268 = vpack.c.bf16 %v222, %v222
      %v269 = vpack.c.bf16 %v224, %v223
      %v270 = vpack.c.bf16 %v225, %v225
      %v271 = vpack.c.bf16 %v227, %v226
      %v272 = vpack.c.bf16 %v228, %v228
      %v273 = vpack.c.bf16 %v230, %v229
      %v274 = vpack.c.bf16 %v231, %v231
      %v275 = vpack.c.bf16 %v233, %v232
      %v276 = vpack.c.bf16 %v234, %v234
      %v277 = vpack.c.bf16 %v236, %v235
      %v278 = vpack.c.bf16 %v237, %v237
      %v279 = vpack.c.bf16 %v239, %v238
      %v280 = vpack.c.bf16 %v240, %v240
      %v281 = vpack.c.bf16 %v242, %v241
      %v282 = vpack.c.bf16 %v243, %v243
      %v283 = vpack.c.bf16 %v245, %v244
      %v284 = vpack.c.bf16 %v246, %v246
      %v285 = vpack.c.bf16 %v248, %v247
      %v286 = vpack.c.bf16 %v249, %v249
      %v287 = vpack.c.bf16 %v251, %v250
      %v288 = vpack.c.bf16 %v252, %v252
      %v289 = vld [vmem:[%s1] sm:$0xf]
      %vm290 = vsmask.f32 7424
      %v292 = vshrl.u32 %v253, 16
      %v294 = vshll.u32 %v253, 16
      %v296 = vrot.slane %v294, 1
      %v297 = vor.u32 %v292, %v296
      %v299 = vshll.u32 %v254, 16
      %v301 = vrot.slane %v299, 1
      %v302 = vsel %vm290, %v297, %v301
      %v304 = vshrl.u32 %v255, 16
      %v306 = vshll.u32 %v255, 16
      %v308 = vrot.slane %v306, 1
      %v309 = vor.u32 %v304, %v308
      %v311 = vshll.u32 %v256, 16
      %v313 = vrot.slane %v311, 1
      %v314 = vsel %vm290, %v309, %v313
      %v316 = vshrl.u32 %v257, 16
      %v318 = vshll.u32 %v257, 16
      %v320 = vrot.slane %v318, 1
      %v321 = vor.u32 %v316, %v320
      %v323 = vshll.u32 %v258, 16
      %v325 = vrot.slane %v323, 1
      %v326 = vsel %vm290, %v321, %v325
      %v328 = vshrl.u32 %v259, 16
      %v330 = vshll.u32 %v259, 16
      %v332 = vrot.slane %v330, 1
      %v333 = vor.u32 %v328, %v332
      %v335 = vshll.u32 %v260, 16
      %v337 = vrot.slane %v335, 1
      %v338 = vsel %vm290, %v333, %v337
      %v340 = vshrl.u32 %v261, 16
      %v342 = vshll.u32 %v261, 16
      %v344 = vrot.slane %v342, 1
      %v345 = vor.u32 %v340, %v344
      %v347 = vshll.u32 %v262, 16
      %v349 = vrot.slane %v347, 1
      %v350 = vsel %vm290, %v345, %v349
      %v352 = vshrl.u32 %v263, 16
      %v354 = vshll.u32 %v263, 16
      %v356 = vrot.slane %v354, 1
      %v357 = vor.u32 %v352, %v356
      %v359 = vshll.u32 %v264, 16
      %v361 = vrot.slane %v359, 1
      %v362 = vsel %vm290, %v357, %v361
      %v364 = vshrl.u32 %v265, 16
      %v366 = vshll.u32 %v265, 16
      %v368 = vrot.slane %v366, 1
      %v369 = vor.u32 %v364, %v368
      %v371 = vshll.u32 %v266, 16
      %v373 = vrot.slane %v371, 1
      %v374 = vsel %vm290, %v369, %v373
      %v376 = vshrl.u32 %v267, 16
      %v378 = vshll.u32 %v267, 16
      %v380 = vrot.slane %v378, 1
      %v381 = vor.u32 %v376, %v380
      %v383 = vshll.u32 %v268, 16
      %v385 = vrot.slane %v383, 1
      %v386 = vsel %vm290, %v381, %v385
      %v388 = vshrl.u32 %v269, 16
      %v390 = vshll.u32 %v269, 16
      %v392 = vrot.slane %v390, 1
      %v393 = vor.u32 %v388, %v392
      %v395 = vshll.u32 %v270, 16
      %v397 = vrot.slane %v395, 1
      %v398 = vsel %vm290, %v393, %v397
      %v400 = vshrl.u32 %v271, 16
      %v402 = vshll.u32 %v271, 16
      %v404 = vrot.slane %v402, 1
      %v405 = vor.u32 %v400, %v404
      %v407 = vshll.u32 %v272, 16
      %v409 = vrot.slane %v407, 1
      %v410 = vsel %vm290, %v405, %v409
      %v412 = vshrl.u32 %v273, 16
      %v414 = vshll.u32 %v273, 16
      %v416 = vrot.slane %v414, 1
      %v417 = vor.u32 %v412, %v416
      %v419 = vshll.u32 %v274, 16
      %v421 = vrot.slane %v419, 1
      %v422 = vsel %vm290, %v417, %v421
      %v424 = vshrl.u32 %v275, 16
      %v426 = vshll.u32 %v275, 16
      %v428 = vrot.slane %v426, 1
      %v429 = vor.u32 %v424, %v428
      %v431 = vshll.u32 %v276, 16
      %v433 = vrot.slane %v431, 1
      %v434 = vsel %vm290, %v429, %v433
      %v436 = vshrl.u32 %v277, 16
      %v438 = vshll.u32 %v277, 16
      %v440 = vrot.slane %v438, 1
      %v441 = vor.u32 %v436, %v440
      %v443 = vshll.u32 %v278, 16
      %v445 = vrot.slane %v443, 1
      %v446 = vsel %vm290, %v441, %v445
      %v448 = vshrl.u32 %v279, 16
      %v450 = vshll.u32 %v279, 16
      %v452 = vrot.slane %v450, 1
      %v453 = vor.u32 %v448, %v452
      %v455 = vshll.u32 %v280, 16
      %v457 = vrot.slane %v455, 1
      %v458 = vsel %vm290, %v453, %v457
      %v460 = vshrl.u32 %v281, 16
      %v462 = vshll.u32 %v281, 16
      %v464 = vrot.slane %v462, 1
      %v465 = vor.u32 %v460, %v464
      %v467 = vshll.u32 %v282, 16
      %v469 = vrot.slane %v467, 1
      %v470 = vsel %vm290, %v465, %v469
      %v472 = vshrl.u32 %v283, 16
      %v474 = vshll.u32 %v283, 16
      %v476 = vrot.slane %v474, 1
      %v477 = vor.u32 %v472, %v476
      %v479 = vshll.u32 %v284, 16
      %v481 = vrot.slane %v479, 1
      %v482 = vsel %vm290, %v477, %v481
      %s483 = scalar_lea.vmem %s1, 4
      %v484 = vld [vmem:[%s483] sm:$0xf]
      %vm485 = vcmask 64512
      %v487 = vsel %vm485, %v302, 0
      %v490 = vsel %vm485, %v314, 0
      %v493 = vsel %vm485, %v326, 0
      %v496 = vsel %vm485, %v338, 0
      %v499 = vsel %vm485, %v350, 0
      %v502 = vsel %vm485, %v362, 0
      %v505 = vsel %vm485, %v374, 0
      %v508 = vsel %vm485, %v386, 0
      %v511 = vsel %vm485, %v398, 0
      %v514 = vsel %vm485, %v410, 0
      %v517 = vsel %vm485, %v422, 0
      %v520 = vsel %vm485, %v434, 0
      %v523 = vsel %vm485, %v446, 0
      %v526 = vsel %vm485, %v458, 0
      %v529 = vsel %vm485, %v470, 0
      %v532 = vsel %vm485, %v482, 0
      %vm534 = vcmask 1043456
      %v536 = vsel %vm534, %v484, 0
      %538 = vmatprep.subr.bf16.mxu0 0
      %539 = vmatpush1.bf16.msra.mxu0 0
      %540 = vmatprep.subr.bf16.mxu0 0
      %541 = vmatpush1.bf16.msra.mxu0 0
      %542 = vmatprep.subr.bf16.mxu0 0
      %543 = vmatpush1.bf16.msra.mxu0 0
      %544 = vmatprep.subr.bf16.mxu0 0
      %545 = vmatpush1.bf16.msra.mxu0 0
      %546 = vmatprep.subr.bf16.mxu0 0
      %547 = vmatpush1.bf16.msra.mxu0 0
      %548 = vmatprep.subr.bf16.mxu0 0
      %549 = vmatpush1.bf16.msra.mxu0 0
      %550 = vmatprep.subr.bf16.mxu0 0
      %551 = vmatpush1.bf16.msra.mxu0 0
      %552 = vmatprep.subr.bf16.mxu0 0
      %553 = vmatpush1.bf16.msra.mxu0 %v536
      %554 = vmatprep.subr.bf16.mxu0 0
      %555 = vmatpush2.bf16.msra.mxu0 0
      %556 = vmatprep.subr.bf16.mxu0 0
      %557 = vmatpush2.bf16.msra.mxu0 0
      %558 = vmatprep.subr.bf16.mxu0 0
      %559 = vmatpush2.bf16.msra.mxu0 0
      %560 = vmatprep.subr.bf16.mxu0 0
      %561 = vmatpush2.bf16.msra.mxu0 0
      %562 = vmatprep.subr.bf16.mxu0 0
      %563 = vmatpush2.bf16.msra.mxu0 0
      %564 = vmatprep.subr.bf16.mxu0 0
      %565 = vmatpush2.bf16.msra.mxu0 0
      %566 = vmatprep.subr.bf16.mxu0 0
      %567 = vmatpush2.bf16.msra.mxu0 0
      %568 = vmatprep.subr.bf16.mxu0 0
      %569 = vmatpush2.bf16.msra.mxu0 0
      %570 = vmatprep.mubr.bf16.mxu0 0
      %571 = vmatmul.mubr.bf16.gmra.mxu0 %v487
      %v572 = vpop.f32.mrf.mxu0
      %v573 = vadd.f32 0.0, %v572
      %v574 = vpop.f32.mrf.mxu0
      %v575 = vpop.f32.mrf.mxu0
      %v576 = vadd.f32 0.0, %v575
      %v577 = vpop.f32.mrf.mxu0
      %578 = vmatprep.mubr.bf16.mxu0 0
      %579 = vmatmul.mubr.bf16.gmra.mxu0 %v490
      %v580 = vpop.f32.mrf.mxu0
      %v581 = vadd.f32 0.0, %v580
      %v582 = vpop.f32.mrf.mxu0
      %v583 = vpop.f32.mrf.mxu0
      %v584 = vadd.f32 0.0, %v583
      %v585 = vpop.f32.mrf.mxu0
      %586 = vmatprep.mubr.bf16.mxu0 0
      %587 = vmatmul.mubr.bf16.gmra.mxu0 %v493
      %v588 = vpop.f32.mrf.mxu0
      %v589 = vadd.f32 0.0, %v588
      %v590 = vpop.f32.mrf.mxu0
      %v591 = vpop.f32.mrf.mxu0
      %v592 = vadd.f32 0.0, %v591
      %v593 = vpop.f32.mrf.mxu0
      %594 = vmatprep.mubr.bf16.mxu0 0
      %595 = vmatmul.mubr.bf16.gmra.mxu0 %v496
      %v596 = vpop.f32.mrf.mxu0
      %v597 = vadd.f32 0.0, %v596
      %v598 = vpop.f32.mrf.mxu0
      %v599 = vpop.f32.mrf.mxu0
      %v600 = vadd.f32 0.0, %v599
      %v601 = vpop.f32.mrf.mxu0
      %602 = vmatprep.mubr.bf16.mxu0 0
      %603 = vmatmul.mubr.bf16.gmra.mxu0 %v499
      %v604 = vpop.f32.mrf.mxu0
      %v605 = vadd.f32 0.0, %v604
      %v606 = vpop.f32.mrf.mxu0
      %v607 = vpop.f32.mrf.mxu0
      %v608 = vadd.f32 0.0, %v607
      %v609 = vpop.f32.mrf.mxu0
      %610 = vmatprep.mubr.bf16.mxu0 0
      %611 = vmatmul.mubr.bf16.gmra.mxu0 %v502
      %v612 = vpop.f32.mrf.mxu0
      %v613 = vadd.f32 0.0, %v612
      %v614 = vpop.f32.mrf.mxu0
      %v615 = vpop.f32.mrf.mxu0
      %v616 = vadd.f32 0.0, %v615
      %v617 = vpop.f32.mrf.mxu0
      %618 = vmatprep.mubr.bf16.mxu0 0
      %619 = vmatmul.mubr.bf16.gmra.mxu0 %v505
      %v620 = vpop.f32.mrf.mxu0
      %v621 = vadd.f32 0.0, %v620
      %v622 = vpop.f32.mrf.mxu0
      %v623 = vpop.f32.mrf.mxu0
      %v624 = vadd.f32 0.0, %v623
      %v625 = vpop.f32.mrf.mxu0
      %626 = vmatprep.mubr.bf16.mxu0 0
      %627 = vmatmul.mubr.bf16.gmra.mxu0 %v508
      %v628 = vpop.f32.mrf.mxu0
      %v629 = vadd.f32 0.0, %v628
      %v630 = vpop.f32.mrf.mxu0
      %v631 = vpop.f32.mrf.mxu0
      %v632 = vadd.f32 0.0, %v631
      %v633 = vpop.f32.mrf.mxu0
      %634 = vmatprep.mubr.bf16.mxu0 0
      %635 = vmatmul.mubr.bf16.gmra.mxu0 %v511
      %v636 = vpop.f32.mrf.mxu0
      %v637 = vadd.f32 0.0, %v636
      %v638 = vpop.f32.mrf.mxu0
      %v639 = vpop.f32.mrf.mxu0
      %v640 = vadd.f32 0.0, %v639
      %v641 = vpop.f32.mrf.mxu0
      %642 = vmatprep.mubr.bf16.mxu0 0
      %643 = vmatmul.mubr.bf16.gmra.mxu0 %v514
      %v644 = vpop.f32.mrf.mxu0
      %v645 = vadd.f32 0.0, %v644
      %v646 = vpop.f32.mrf.mxu0
      %v647 = vpop.f32.mrf.mxu0
      %v648 = vadd.f32 0.0, %v647
      %v649 = vpop.f32.mrf.mxu0
      %650 = vmatprep.mubr.bf16.mxu0 0
      %651 = vmatmul.mubr.bf16.gmra.mxu0 %v517
      %v652 = vpop.f32.mrf.mxu0
      %v653 = vadd.f32 0.0, %v652
      %v654 = vpop.f32.mrf.mxu0
      %v655 = vpop.f32.mrf.mxu0
      %v656 = vadd.f32 0.0, %v655
      %v657 = vpop.f32.mrf.mxu0
      %658 = vmatprep.mubr.bf16.mxu0 0
      %659 = vmatmul.mubr.bf16.gmra.mxu0 %v520
      %v660 = vpop.f32.mrf.mxu0
      %v661 = vadd.f32 0.0, %v660
      %v662 = vpop.f32.mrf.mxu0
      %v663 = vpop.f32.mrf.mxu0
      %v664 = vadd.f32 0.0, %v663
      %v665 = vpop.f32.mrf.mxu0
      %666 = vmatprep.mubr.bf16.mxu0 0
      %667 = vmatmul.mubr.bf16.gmra.mxu0 %v523
      %v668 = vpop.f32.mrf.mxu0
      %v669 = vadd.f32 0.0, %v668
      %v670 = vpop.f32.mrf.mxu0
      %v671 = vpop.f32.mrf.mxu0
      %v672 = vadd.f32 0.0, %v671
      %v673 = vpop.f32.mrf.mxu0
      %674 = vmatprep.mubr.bf16.mxu0 0
      %675 = vmatmul.mubr.bf16.gmra.mxu0 %v526
      %v676 = vpop.f32.mrf.mxu0
      %v677 = vadd.f32 0.0, %v676
      %v678 = vpop.f32.mrf.mxu0
      %v679 = vpop.f32.mrf.mxu0
      %v680 = vadd.f32 0.0, %v679
      %v681 = vpop.f32.mrf.mxu0
      %682 = vmatprep.mubr.bf16.mxu0 0
      %683 = vmatmul.mubr.bf16.gmra.mxu0 %v529
      %v684 = vpop.f32.mrf.mxu0
      %v685 = vadd.f32 0.0, %v684
      %v686 = vpop.f32.mrf.mxu0
      %v687 = vpop.f32.mrf.mxu0
      %v688 = vadd.f32 0.0, %v687
      %v689 = vpop.f32.mrf.mxu0
      %690 = vmatprep.mubr.bf16.mxu0 0
      %691 = vmatmul.mubr.bf16.gmra.mxu0 %v532
      %v692 = vpop.f32.mrf.mxu0
      %v693 = vadd.f32 0.0, %v692
      %v694 = vpop.f32.mrf.mxu0
      %v695 = vpop.f32.mrf.mxu0
      %v696 = vadd.f32 0.0, %v695
      %v697 = vpop.f32.mrf.mxu0
      %698 = vdwg.mxu0
      %v699 = vsel %vm485, %v253, 0
      %v701 = vsel %vm485, %v255, 0
      %v703 = vsel %vm485, %v257, 0
      %v705 = vsel %vm485, %v259, 0
      %v707 = vsel %vm485, %v261, 0
      %v709 = vsel %vm485, %v263, 0
      %v711 = vsel %vm485, %v265, 0
      %v713 = vsel %vm485, %v267, 0
      %v715 = vsel %vm485, %v269, 0
      %v717 = vsel %vm485, %v271, 0
      %v719 = vsel %vm485, %v273, 0
      %v721 = vsel %vm485, %v275, 0
      %v723 = vsel %vm485, %v277, 0
      %v725 = vsel %vm485, %v279, 0
      %v727 = vsel %vm485, %v281, 0
      %v729 = vsel %vm485, %v283, 0
      %v732 = vsel %vm534, %v289, 0
      %734 = vmatprep.subr.bf16.mxu0 0
      %735 = vmatpush1.bf16.msra.mxu0 0
      %736 = vmatprep.subr.bf16.mxu0 0
      %737 = vmatpush1.bf16.msra.mxu0 0
      %738 = vmatprep.subr.bf16.mxu0 0
      %739 = vmatpush1.bf16.msra.mxu0 0
      %740 = vmatprep.subr.bf16.mxu0 0
      %741 = vmatpush1.bf16.msra.mxu0 0
      %742 = vmatprep.subr.bf16.mxu0 0
      %743 = vmatpush1.bf16.msra.mxu0 0
      %744 = vmatprep.subr.bf16.mxu0 0
      %745 = vmatpush1.bf16.msra.mxu0 0
      %746 = vmatprep.subr.bf16.mxu0 0
      %747 = vmatpush1.bf16.msra.mxu0 0
      %748 = vmatprep.subr.bf16.mxu0 0
      %749 = vmatpush1.bf16.msra.mxu0 %v732
      %750 = vmatprep.subr.bf16.mxu0 0
      %751 = vmatpush2.bf16.msra.mxu0 0
      %752 = vmatprep.subr.bf16.mxu0 0
      %753 = vmatpush2.bf16.msra.mxu0 0
      %754 = vmatprep.subr.bf16.mxu0 0
      %755 = vmatpush2.bf16.msra.mxu0 0
      %756 = vmatprep.subr.bf16.mxu0 0
      %757 = vmatpush2.bf16.msra.mxu0 0
      %758 = vmatprep.subr.bf16.mxu0 0
      %759 = vmatpush2.bf16.msra.mxu0 0
      %760 = vmatprep.subr.bf16.mxu0 0
      %761 = vmatpush2.bf16.msra.mxu0 0
      %762 = vmatprep.subr.bf16.mxu0 0
      %763 = vmatpush2.bf16.msra.mxu0 0
      %764 = vmatprep.subr.bf16.mxu0 0
      %765 = vmatpush2.bf16.msra.mxu0 0
      %766 = vmatprep.mubr.bf16.mxu0 0
      %767 = vmatmul.mubr.bf16.gmra.mxu0 %v699
      %v768 = vpop.f32.mrf.mxu0
      %v769 = vadd.f32 %v573, %v768
      %v770 = vpop.f32.mrf.mxu0
      %v771 = vpop.f32.mrf.mxu0
      %v772 = vadd.f32 %v576, %v771
      %v773 = vpop.f32.mrf.mxu0
      %774 = vmatprep.mubr.bf16.mxu0 0
      %775 = vmatmul.mubr.bf16.gmra.mxu0 %v701
      %v776 = vpop.f32.mrf.mxu0
      %v777 = vadd.f32 %v581, %v776
      %v778 = vpop.f32.mrf.mxu0
      %v779 = vpop.f32.mrf.mxu0
      %v780 = vadd.f32 %v584, %v779
      %v781 = vpop.f32.mrf.mxu0
      %782 = vmatprep.mubr.bf16.mxu0 0
      %783 = vmatmul.mubr.bf16.gmra.mxu0 %v703
      %v784 = vpop.f32.mrf.mxu0
      %v785 = vadd.f32 %v589, %v784
      %v786 = vpop.f32.mrf.mxu0
      %v787 = vpop.f32.mrf.mxu0
      %v788 = vadd.f32 %v592, %v787
      %v789 = vpop.f32.mrf.mxu0
      %790 = vmatprep.mubr.bf16.mxu0 0
      %791 = vmatmul.mubr.bf16.gmra.mxu0 %v705
      %v792 = vpop.f32.mrf.mxu0
      %v793 = vadd.f32 %v597, %v792
      %v794 = vpop.f32.mrf.mxu0
      %v795 = vpop.f32.mrf.mxu0
      %v796 = vadd.f32 %v600, %v795
      %v797 = vpop.f32.mrf.mxu0
      %798 = vmatprep.mubr.bf16.mxu0 0
      %799 = vmatmul.mubr.bf16.gmra.mxu0 %v707
      %v800 = vpop.f32.mrf.mxu0
      %v801 = vadd.f32 %v605, %v800
      %v802 = vpop.f32.mrf.mxu0
      %v803 = vpop.f32.mrf.mxu0
      %v804 = vadd.f32 %v608, %v803
      %v805 = vpop.f32.mrf.mxu0
      %806 = vmatprep.mubr.bf16.mxu0 0
      %807 = vmatmul.mubr.bf16.gmra.mxu0 %v709
      %v808 = vpop.f32.mrf.mxu0
      %v809 = vadd.f32 %v613, %v808
      %v810 = vpop.f32.mrf.mxu0
      %v811 = vpop.f32.mrf.mxu0
      %v812 = vadd.f32 %v616, %v811
      %v813 = vpop.f32.mrf.mxu0
      %814 = vmatprep.mubr.bf16.mxu0 0
      %815 = vmatmul.mubr.bf16.gmra.mxu0 %v711
      %v816 = vpop.f32.mrf.mxu0
      %v817 = vadd.f32 %v621, %v816
      %v818 = vpop.f32.mrf.mxu0
      %v819 = vpop.f32.mrf.mxu0
      %v820 = vadd.f32 %v624, %v819
      %v821 = vpop.f32.mrf.mxu0
      %822 = vmatprep.mubr.bf16.mxu0 0
      %823 = vmatmul.mubr.bf16.gmra.mxu0 %v713
      %v824 = vpop.f32.mrf.mxu0
      %v825 = vadd.f32 %v629, %v824
      %v826 = vpop.f32.mrf.mxu0
      %v827 = vpop.f32.mrf.mxu0
      %v828 = vadd.f32 %v632, %v827
      %v829 = vpop.f32.mrf.mxu0
      %830 = vmatprep.mubr.bf16.mxu0 0
      %831 = vmatmul.mubr.bf16.gmra.mxu0 %v715
      %v832 = vpop.f32.mrf.mxu0
      %v833 = vadd.f32 %v637, %v832
      %v834 = vpop.f32.mrf.mxu0
      %v835 = vpop.f32.mrf.mxu0
      %v836 = vadd.f32 %v640, %v835
      %v837 = vpop.f32.mrf.mxu0
      %838 = vmatprep.mubr.bf16.mxu0 0
      %839 = vmatmul.mubr.bf16.gmra.mxu0 %v717
      %v840 = vpop.f32.mrf.mxu0
      %v841 = vadd.f32 %v645, %v840
      %v842 = vpop.f32.mrf.mxu0
      %v843 = vpop.f32.mrf.mxu0
      %v844 = vadd.f32 %v648, %v843
      %v845 = vpop.f32.mrf.mxu0
      %846 = vmatprep.mubr.bf16.mxu0 0
      %847 = vmatmul.mubr.bf16.gmra.mxu0 %v719
      %v848 = vpop.f32.mrf.mxu0
      %v849 = vadd.f32 %v653, %v848
      %v850 = vpop.f32.mrf.mxu0
      %v851 = vpop.f32.mrf.mxu0
      %v852 = vadd.f32 %v656, %v851
      %v853 = vpop.f32.mrf.mxu0
      %854 = vmatprep.mubr.bf16.mxu0 0
      %855 = vmatmul.mubr.bf16.gmra.mxu0 %v721
      %v856 = vpop.f32.mrf.mxu0
      %v857 = vadd.f32 %v661, %v856
      %v858 = vpop.f32.mrf.mxu0
      %v859 = vpop.f32.mrf.mxu0
      %v860 = vadd.f32 %v664, %v859
      %v861 = vpop.f32.mrf.mxu0
      %862 = vmatprep.mubr.bf16.mxu0 0
      %863 = vmatmul.mubr.bf16.gmra.mxu0 %v723
      %v864 = vpop.f32.mrf.mxu0
      %v865 = vadd.f32 %v669, %v864
      %v866 = vpop.f32.mrf.mxu0
      %v867 = vpop.f32.mrf.mxu0
      %v868 = vadd.f32 %v672, %v867
      %v869 = vpop.f32.mrf.mxu0
      %870 = vmatprep.mubr.bf16.mxu0 0
      %871 = vmatmul.mubr.bf16.gmra.mxu0 %v725
      %v872 = vpop.f32.mrf.mxu0
      %v873 = vadd.f32 %v677, %v872
      %v874 = vpop.f32.mrf.mxu0
      %v875 = vpop.f32.mrf.mxu0
      %v876 = vadd.f32 %v680, %v875
      %v877 = vpop.f32.mrf.mxu0
      %878 = vmatprep.mubr.bf16.mxu0 0
      %879 = vmatmul.mubr.bf16.gmra.mxu0 %v727
      %v880 = vpop.f32.mrf.mxu0
      %v881 = vadd.f32 %v685, %v880
      %v882 = vpop.f32.mrf.mxu0
      %v883 = vpop.f32.mrf.mxu0
      %v884 = vadd.f32 %v688, %v883
      %v885 = vpop.f32.mrf.mxu0
      %886 = vmatprep.mubr.bf16.mxu0 0
      %887 = vmatmul.mubr.bf16.gmra.mxu0 %v729
      %v888 = vpop.f32.mrf.mxu0
      %v889 = vadd.f32 %v693, %v888
      %v890 = vpop.f32.mrf.mxu0
      %v891 = vpop.f32.mrf.mxu0
      %v892 = vadd.f32 %v696, %v891
      %v893 = vpop.f32.mrf.mxu0
      %894 = vdwg.mxu0
      %vm927 = vcmask 1046528
      %v928 = vrot.slane %v253, 1
      %v929 = vrot.slane %v254, 1
      %v930 = vsel %vm927, %v928, %v929
      %v931 = vrot.slane %v255, 1
      %v932 = vrot.slane %v256, 1
      %v933 = vsel %vm927, %v931, %v932
      %v934 = vrot.slane %v257, 1
      %v935 = vrot.slane %v258, 1
      %v936 = vsel %vm927, %v934, %v935
      %v937 = vrot.slane %v259, 1
      %v938 = vrot.slane %v260, 1
      %v939 = vsel %vm927, %v937, %v938
      %v940 = vrot.slane %v261, 1
      %v941 = vrot.slane %v262, 1
      %v942 = vsel %vm927, %v940, %v941
      %v943 = vrot.slane %v263, 1
      %v944 = vrot.slane %v264, 1
      %v945 = vsel %vm927, %v943, %v944
      %v946 = vrot.slane %v265, 1
      %v947 = vrot.slane %v266, 1
      %v948 = vsel %vm927, %v946, %v947
      %v949 = vrot.slane %v267, 1
      %v950 = vrot.slane %v268, 1
      %v951 = vsel %vm927, %v949, %v950
      %v952 = vrot.slane %v269, 1
      %v953 = vrot.slane %v270, 1
      %v954 = vsel %vm927, %v952, %v953
      %v955 = vrot.slane %v271, 1
      %v956 = vrot.slane %v272, 1
      %v957 = vsel %vm927, %v955, %v956
      %v958 = vrot.slane %v273, 1
      %v959 = vrot.slane %v274, 1
      %v960 = vsel %vm927, %v958, %v959
      %v961 = vrot.slane %v275, 1
      %v962 = vrot.slane %v276, 1
      %v963 = vsel %vm927, %v961, %v962
      %v964 = vrot.slane %v277, 1
      %v965 = vrot.slane %v278, 1
      %v966 = vsel %vm927, %v964, %v965
      %v967 = vrot.slane %v279, 1
      %v968 = vrot.slane %v280, 1
      %v969 = vsel %vm927, %v967, %v968
      %v970 = vrot.slane %v281, 1
      %v971 = vrot.slane %v282, 1
      %v972 = vsel %vm927, %v970, %v971
      %v973 = vrot.slane %v283, 1
      %v974 = vrot.slane %v284, 1
      %v975 = vsel %vm927, %v973, %v974
      %s976 = scalar_lea.vmem %s1, 8
      %v977 = vld [vmem:[%s976] sm:$0xf]
      %v979 = vsel %vm485, %v930, 0
      %v982 = vsel %vm485, %v933, 0
      %v985 = vsel %vm485, %v936, 0
      %v988 = vsel %vm485, %v939, 0
      %v991 = vsel %vm485, %v942, 0
      %v994 = vsel %vm485, %v945, 0
      %v997 = vsel %vm485, %v948, 0
      %v1000 = vsel %vm485, %v951, 0
      %v1003 = vsel %vm485, %v954, 0
      %v1006 = vsel %vm485, %v957, 0
      %v1009 = vsel %vm485, %v960, 0
      %v1012 = vsel %vm485, %v963, 0
      %v1015 = vsel %vm485, %v966, 0
      %v1018 = vsel %vm485, %v969, 0
      %v1021 = vsel %vm485, %v972, 0
      %v1024 = vsel %vm485, %v975, 0
      %v1027 = vsel %vm534, %v977, 0
      %1029 = vmatprep.subr.bf16.mxu0 0
      %1030 = vmatpush1.bf16.msra.mxu0 0
      %1031 = vmatprep.subr.bf16.mxu0 0
      %1032 = vmatpush1.bf16.msra.mxu0 0
      %1033 = vmatprep.subr.bf16.mxu0 0
      %1034 = vmatpush1.bf16.msra.mxu0 0
      %1035 = vmatprep.subr.bf16.mxu0 0
      %1036 = vmatpush1.bf16.msra.mxu0 0
      %1037 = vmatprep.subr.bf16.mxu0 0
      %1038 = vmatpush1.bf16.msra.mxu0 0
      %1039 = vmatprep.subr.bf16.mxu0 0
      %1040 = vmatpush1.bf16.msra.mxu0 0
      %1041 = vmatprep.subr.bf16.mxu0 0
      %1042 = vmatpush1.bf16.msra.mxu0 0
      %1043 = vmatprep.subr.bf16.mxu0 0
      %1044 = vmatpush1.bf16.msra.mxu0 %v1027
      %1045 = vmatprep.subr.bf16.mxu0 0
      %1046 = vmatpush2.bf16.msra.mxu0 0
      %1047 = vmatprep.subr.bf16.mxu0 0
      %1048 = vmatpush2.bf16.msra.mxu0 0
      %1049 = vmatprep.subr.bf16.mxu0 0
      %1050 = vmatpush2.bf16.msra.mxu0 0
      %1051 = vmatprep.subr.bf16.mxu0 0
      %1052 = vmatpush2.bf16.msra.mxu0 0
      %1053 = vmatprep.subr.bf16.mxu0 0
      %1054 = vmatpush2.bf16.msra.mxu0 0
      %1055 = vmatprep.subr.bf16.mxu0 0
      %1056 = vmatpush2.bf16.msra.mxu0 0
      %1057 = vmatprep.subr.bf16.mxu0 0
      %1058 = vmatpush2.bf16.msra.mxu0 0
      %1059 = vmatprep.subr.bf16.mxu0 0
      %1060 = vmatpush2.bf16.msra.mxu0 0
      %1061 = vmatprep.mubr.bf16.mxu0 0
      %1062 = vmatmul.mubr.bf16.gmra.mxu0 %v979
      %v1063 = vpop.f32.mrf.mxu0
      %v1064 = vadd.f32 0.0, %v1063
      %v1065 = vpop.f32.mrf.mxu0
      %v1066 = vpop.f32.mrf.mxu0
      %v1067 = vadd.f32 0.0, %v1066
      %v1068 = vpop.f32.mrf.mxu0
      %1069 = vmatprep.mubr.bf16.mxu0 0
      %1070 = vmatmul.mubr.bf16.gmra.mxu0 %v982
      %v1071 = vpop.f32.mrf.mxu0
      %v1072 = vadd.f32 0.0, %v1071
      %v1073 = vpop.f32.mrf.mxu0
      %v1074 = vpop.f32.mrf.mxu0
      %v1075 = vadd.f32 0.0, %v1074
      %v1076 = vpop.f32.mrf.mxu0
      %1077 = vmatprep.mubr.bf16.mxu0 0
      %1078 = vmatmul.mubr.bf16.gmra.mxu0 %v985
      %v1079 = vpop.f32.mrf.mxu0
      %v1080 = vadd.f32 0.0, %v1079
      %v1081 = vpop.f32.mrf.mxu0
      %v1082 = vpop.f32.mrf.mxu0
      %v1083 = vadd.f32 0.0, %v1082
      %v1084 = vpop.f32.mrf.mxu0
      %1085 = vmatprep.mubr.bf16.mxu0 0
      %1086 = vmatmul.mubr.bf16.gmra.mxu0 %v988
      %v1087 = vpop.f32.mrf.mxu0
      %v1088 = vadd.f32 0.0, %v1087
      %v1089 = vpop.f32.mrf.mxu0
      %v1090 = vpop.f32.mrf.mxu0
      %v1091 = vadd.f32 0.0, %v1090
      %v1092 = vpop.f32.mrf.mxu0
      %1093 = vmatprep.mubr.bf16.mxu0 0
      %1094 = vmatmul.mubr.bf16.gmra.mxu0 %v991
      %v1095 = vpop.f32.mrf.mxu0
      %v1096 = vadd.f32 0.0, %v1095
      %v1097 = vpop.f32.mrf.mxu0
      %v1098 = vpop.f32.mrf.mxu0
      %v1099 = vadd.f32 0.0, %v1098
      %v1100 = vpop.f32.mrf.mxu0
      %1101 = vmatprep.mubr.bf16.mxu0 0
      %1102 = vmatmul.mubr.bf16.gmra.mxu0 %v994
      %v1103 = vpop.f32.mrf.mxu0
      %v1104 = vadd.f32 0.0, %v1103
      %v1105 = vpop.f32.mrf.mxu0
      %v1106 = vpop.f32.mrf.mxu0
      %v1107 = vadd.f32 0.0, %v1106
      %v1108 = vpop.f32.mrf.mxu0
      %1109 = vmatprep.mubr.bf16.mxu0 0
      %1110 = vmatmul.mubr.bf16.gmra.mxu0 %v997
      %v1111 = vpop.f32.mrf.mxu0
      %v1112 = vadd.f32 0.0, %v1111
      %v1113 = vpop.f32.mrf.mxu0
      %v1114 = vpop.f32.mrf.mxu0
      %v1115 = vadd.f32 0.0, %v1114
      %v1116 = vpop.f32.mrf.mxu0
      %1117 = vmatprep.mubr.bf16.mxu0 0
      %1118 = vmatmul.mubr.bf16.gmra.mxu0 %v1000
      %v1119 = vpop.f32.mrf.mxu0
      %v1120 = vadd.f32 0.0, %v1119
      %v1121 = vpop.f32.mrf.mxu0
      %v1122 = vpop.f32.mrf.mxu0
      %v1123 = vadd.f32 0.0, %v1122
      %v1124 = vpop.f32.mrf.mxu0
      %1125 = vmatprep.mubr.bf16.mxu0 0
      %1126 = vmatmul.mubr.bf16.gmra.mxu0 %v1003
      %v1127 = vpop.f32.mrf.mxu0
      %v1128 = vadd.f32 0.0, %v1127
      %v1129 = vpop.f32.mrf.mxu0
      %v1130 = vpop.f32.mrf.mxu0
      %v1131 = vadd.f32 0.0, %v1130
      %v1132 = vpop.f32.mrf.mxu0
      %1133 = vmatprep.mubr.bf16.mxu0 0
      %1134 = vmatmul.mubr.bf16.gmra.mxu0 %v1006
      %v1135 = vpop.f32.mrf.mxu0
      %v1136 = vadd.f32 0.0, %v1135
      %v1137 = vpop.f32.mrf.mxu0
      %v1138 = vpop.f32.mrf.mxu0
      %v1139 = vadd.f32 0.0, %v1138
      %v1140 = vpop.f32.mrf.mxu0
      %1141 = vmatprep.mubr.bf16.mxu0 0
      %1142 = vmatmul.mubr.bf16.gmra.mxu0 %v1009
      %v1143 = vpop.f32.mrf.mxu0
      %v1144 = vadd.f32 0.0, %v1143
      %v1145 = vpop.f32.mrf.mxu0
      %v1146 = vpop.f32.mrf.mxu0
      %v1147 = vadd.f32 0.0, %v1146
      %v1148 = vpop.f32.mrf.mxu0
      %1149 = vmatprep.mubr.bf16.mxu0 0
      %1150 = vmatmul.mubr.bf16.gmra.mxu0 %v1012
      %v1151 = vpop.f32.mrf.mxu0
      %v1152 = vadd.f32 0.0, %v1151
      %v1153 = vpop.f32.mrf.mxu0
      %v1154 = vpop.f32.mrf.mxu0
      %v1155 = vadd.f32 0.0, %v1154
      %v1156 = vpop.f32.mrf.mxu0
      %1157 = vmatprep.mubr.bf16.mxu0 0
      %1158 = vmatmul.mubr.bf16.gmra.mxu0 %v1015
      %v1159 = vpop.f32.mrf.mxu0
      %v1160 = vadd.f32 0.0, %v1159
      %v1161 = vpop.f32.mrf.mxu0
      %v1162 = vpop.f32.mrf.mxu0
      %v1163 = vadd.f32 0.0, %v1162
      %v1164 = vpop.f32.mrf.mxu0
      %1165 = vmatprep.mubr.bf16.mxu0 0
      %1166 = vmatmul.mubr.bf16.gmra.mxu0 %v1018
      %v1167 = vpop.f32.mrf.mxu0
      %v1168 = vadd.f32 0.0, %v1167
      %v1169 = vpop.f32.mrf.mxu0
      %v1170 = vpop.f32.mrf.mxu0
      %v1171 = vadd.f32 0.0, %v1170
      %v1172 = vpop.f32.mrf.mxu0
      %1173 = vmatprep.mubr.bf16.mxu0 0
      %1174 = vmatmul.mubr.bf16.gmra.mxu0 %v1021
      %v1175 = vpop.f32.mrf.mxu0
      %v1176 = vadd.f32 0.0, %v1175
      %v1177 = vpop.f32.mrf.mxu0
      %v1178 = vpop.f32.mrf.mxu0
      %v1179 = vadd.f32 0.0, %v1178
      %v1180 = vpop.f32.mrf.mxu0
      %1181 = vmatprep.mubr.bf16.mxu0 0
      %1182 = vmatmul.mubr.bf16.gmra.mxu0 %v1024
      %v1183 = vpop.f32.mrf.mxu0
      %v1184 = vadd.f32 0.0, %v1183
      %v1185 = vpop.f32.mrf.mxu0
      %v1186 = vpop.f32.mrf.mxu0
      %v1187 = vadd.f32 0.0, %v1186
      %v1188 = vpop.f32.mrf.mxu0
      %1189 = vdwg.mxu0
      %v1190 = vadd.f32 %v769, %v1064
      %v1191 = vadd.f32 %v772, %v1067
      %v1192 = vadd.f32 %v777, %v1072
      %v1193 = vadd.f32 %v780, %v1075
      %v1194 = vadd.f32 %v785, %v1080
      %v1195 = vadd.f32 %v788, %v1083
      %v1196 = vadd.f32 %v793, %v1088
      %v1197 = vadd.f32 %v796, %v1091
      %v1198 = vadd.f32 %v801, %v1096
      %v1199 = vadd.f32 %v804, %v1099
      %v1200 = vadd.f32 %v809, %v1104
      %v1201 = vadd.f32 %v812, %v1107
      %v1202 = vadd.f32 %v817, %v1112
      %v1203 = vadd.f32 %v820, %v1115
      %v1204 = vadd.f32 %v825, %v1120
      %v1205 = vadd.f32 %v828, %v1123
      %v1206 = vadd.f32 %v833, %v1128
      %v1207 = vadd.f32 %v836, %v1131
      %v1208 = vadd.f32 %v841, %v1136
      %v1209 = vadd.f32 %v844, %v1139
      %v1210 = vadd.f32 %v849, %v1144
      %v1211 = vadd.f32 %v852, %v1147
      %v1212 = vadd.f32 %v857, %v1152
      %v1213 = vadd.f32 %v860, %v1155
      %v1214 = vadd.f32 %v865, %v1160
      %v1215 = vadd.f32 %v868, %v1163
      %v1216 = vadd.f32 %v873, %v1168
      %v1217 = vadd.f32 %v876, %v1171
      %v1218 = vadd.f32 %v881, %v1176
      %v1219 = vadd.f32 %v884, %v1179
      %v1220 = vadd.f32 %v889, %v1184
      %v1221 = vadd.f32 %v892, %v1187
      %s1222 = scalar_lea.vmem %s1, 12
      %v1223 = vld [vmem:[%s1222] sm:$0xf]
      %v1225 = vsel %vm485, %v285, 0
      %v1228 = vsel %vm534, %v1223, 0
      %1230 = vmatprep.subr.bf16.mxu0 0
      %1231 = vmatpush1.bf16.msra.mxu0 0
      %1232 = vmatprep.subr.bf16.mxu0 0
      %1233 = vmatpush1.bf16.msra.mxu0 0
      %1234 = vmatprep.subr.bf16.mxu0 0
      %1235 = vmatpush1.bf16.msra.mxu0 0
      %1236 = vmatprep.subr.bf16.mxu0 0
      %1237 = vmatpush1.bf16.msra.mxu0 0
      %1238 = vmatprep.subr.bf16.mxu0 0
      %1239 = vmatpush1.bf16.msra.mxu0 0
      %1240 = vmatprep.subr.bf16.mxu0 0
      %1241 = vmatpush1.bf16.msra.mxu0 0
      %1242 = vmatprep.subr.bf16.mxu0 0
      %1243 = vmatpush1.bf16.msra.mxu0 0
      %1244 = vmatprep.subr.bf16.mxu0 0
      %1245 = vmatpush1.bf16.msra.mxu0 %v1228
      %1246 = vmatprep.subr.bf16.mxu0 0
      %1247 = vmatpush2.bf16.msra.mxu0 0
      %1248 = vmatprep.subr.bf16.mxu0 0
      %1249 = vmatpush2.bf16.msra.mxu0 0
      %1250 = vmatprep.subr.bf16.mxu0 0
      %1251 = vmatpush2.bf16.msra.mxu0 0
      %1252 = vmatprep.subr.bf16.mxu0 0
      %1253 = vmatpush2.bf16.msra.mxu0 0
      %1254 = vmatprep.subr.bf16.mxu0 0
      %1255 = vmatpush2.bf16.msra.mxu0 0
      %1256 = vmatprep.subr.bf16.mxu0 0
      %1257 = vmatpush2.bf16.msra.mxu0 0
      %1258 = vmatprep.subr.bf16.mxu0 0
      %1259 = vmatpush2.bf16.msra.mxu0 0
      %1260 = vmatprep.subr.bf16.mxu0 0
      %1261 = vmatpush2.bf16.msra.mxu0 0
      %1262 = vmatprep.mubr.bf16.mxu0 0
      %1263 = vmatmul.mubr.bf16.gmra.mxu0 %v701
      %v1264 = vpop.f32.mrf.mxu0
      %v1265 = vadd.f32 0.0, %v1264
      %v1266 = vpop.f32.mrf.mxu0
      %v1267 = vpop.f32.mrf.mxu0
      %v1268 = vadd.f32 0.0, %v1267
      %v1269 = vpop.f32.mrf.mxu0
      %1270 = vmatprep.mubr.bf16.mxu0 0
      %1271 = vmatmul.mubr.bf16.gmra.mxu0 %v703
      %v1272 = vpop.f32.mrf.mxu0
      %v1273 = vadd.f32 0.0, %v1272
      %v1274 = vpop.f32.mrf.mxu0
      %v1275 = vpop.f32.mrf.mxu0
      %v1276 = vadd.f32 0.0, %v1275
      %v1277 = vpop.f32.mrf.mxu0
      %1278 = vmatprep.mubr.bf16.mxu0 0
      %1279 = vmatmul.mubr.bf16.gmra.mxu0 %v705
      %v1280 = vpop.f32.mrf.mxu0
      %v1281 = vadd.f32 0.0, %v1280
      %v1282 = vpop.f32.mrf.mxu0
      %v1283 = vpop.f32.mrf.mxu0
      %v1284 = vadd.f32 0.0, %v1283
      %v1285 = vpop.f32.mrf.mxu0
      %1286 = vmatprep.mubr.bf16.mxu0 0
      %1287 = vmatmul.mubr.bf16.gmra.mxu0 %v707
      %v1288 = vpop.f32.mrf.mxu0
      %v1289 = vadd.f32 0.0, %v1288
      %v1290 = vpop.f32.mrf.mxu0
      %v1291 = vpop.f32.mrf.mxu0
      %v1292 = vadd.f32 0.0, %v1291
      %v1293 = vpop.f32.mrf.mxu0
      %1294 = vmatprep.mubr.bf16.mxu0 0
      %1295 = vmatmul.mubr.bf16.gmra.mxu0 %v709
      %v1296 = vpop.f32.mrf.mxu0
      %v1297 = vadd.f32 0.0, %v1296
      %v1298 = vpop.f32.mrf.mxu0
      %v1299 = vpop.f32.mrf.mxu0
      %v1300 = vadd.f32 0.0, %v1299
      %v1301 = vpop.f32.mrf.mxu0
      %1302 = vmatprep.mubr.bf16.mxu0 0
      %1303 = vmatmul.mubr.bf16.gmra.mxu0 %v711
      %v1304 = vpop.f32.mrf.mxu0
      %v1305 = vadd.f32 0.0, %v1304
      %v1306 = vpop.f32.mrf.mxu0
      %v1307 = vpop.f32.mrf.mxu0
      %v1308 = vadd.f32 0.0, %v1307
      %v1309 = vpop.f32.mrf.mxu0
      %1310 = vmatprep.mubr.bf16.mxu0 0
      %1311 = vmatmul.mubr.bf16.gmra.mxu0 %v713
      %v1312 = vpop.f32.mrf.mxu0
      %v1313 = vadd.f32 0.0, %v1312
      %v1314 = vpop.f32.mrf.mxu0
      %v1315 = vpop.f32.mrf.mxu0
      %v1316 = vadd.f32 0.0, %v1315
      %v1317 = vpop.f32.mrf.mxu0
      %1318 = vmatprep.mubr.bf16.mxu0 0
      %1319 = vmatmul.mubr.bf16.gmra.mxu0 %v715
      %v1320 = vpop.f32.mrf.mxu0
      %v1321 = vadd.f32 0.0, %v1320
      %v1322 = vpop.f32.mrf.mxu0
      %v1323 = vpop.f32.mrf.mxu0
      %v1324 = vadd.f32 0.0, %v1323
      %v1325 = vpop.f32.mrf.mxu0
      %1326 = vmatprep.mubr.bf16.mxu0 0
      %1327 = vmatmul.mubr.bf16.gmra.mxu0 %v717
      %v1328 = vpop.f32.mrf.mxu0
      %v1329 = vadd.f32 0.0, %v1328
      %v1330 = vpop.f32.mrf.mxu0
      %v1331 = vpop.f32.mrf.mxu0
      %v1332 = vadd.f32 0.0, %v1331
      %v1333 = vpop.f32.mrf.mxu0
      %1334 = vmatprep.mubr.bf16.mxu0 0
      %1335 = vmatmul.mubr.bf16.gmra.mxu0 %v719
      %v1336 = vpop.f32.mrf.mxu0
      %v1337 = vadd.f32 0.0, %v1336
      %v1338 = vpop.f32.mrf.mxu0
      %v1339 = vpop.f32.mrf.mxu0
      %v1340 = vadd.f32 0.0, %v1339
      %v1341 = vpop.f32.mrf.mxu0
      %1342 = vmatprep.mubr.bf16.mxu0 0
      %1343 = vmatmul.mubr.bf16.gmra.mxu0 %v721
      %v1344 = vpop.f32.mrf.mxu0
      %v1345 = vadd.f32 0.0, %v1344
      %v1346 = vpop.f32.mrf.mxu0
      %v1347 = vpop.f32.mrf.mxu0
      %v1348 = vadd.f32 0.0, %v1347
      %v1349 = vpop.f32.mrf.mxu0
      %1350 = vmatprep.mubr.bf16.mxu0 0
      %1351 = vmatmul.mubr.bf16.gmra.mxu0 %v723
      %v1352 = vpop.f32.mrf.mxu0
      %v1353 = vadd.f32 0.0, %v1352
      %v1354 = vpop.f32.mrf.mxu0
      %v1355 = vpop.f32.mrf.mxu0
      %v1356 = vadd.f32 0.0, %v1355
      %v1357 = vpop.f32.mrf.mxu0
      %1358 = vmatprep.mubr.bf16.mxu0 0
      %1359 = vmatmul.mubr.bf16.gmra.mxu0 %v725
      %v1360 = vpop.f32.mrf.mxu0
      %v1361 = vadd.f32 0.0, %v1360
      %v1362 = vpop.f32.mrf.mxu0
      %v1363 = vpop.f32.mrf.mxu0
      %v1364 = vadd.f32 0.0, %v1363
      %v1365 = vpop.f32.mrf.mxu0
      %1366 = vmatprep.mubr.bf16.mxu0 0
      %1367 = vmatmul.mubr.bf16.gmra.mxu0 %v727
      %v1368 = vpop.f32.mrf.mxu0
      %v1369 = vadd.f32 0.0, %v1368
      %v1370 = vpop.f32.mrf.mxu0
      %v1371 = vpop.f32.mrf.mxu0
      %v1372 = vadd.f32 0.0, %v1371
      %v1373 = vpop.f32.mrf.mxu0
      %1374 = vmatprep.mubr.bf16.mxu0 0
      %1375 = vmatmul.mubr.bf16.gmra.mxu0 %v729
      %v1376 = vpop.f32.mrf.mxu0
      %v1377 = vadd.f32 0.0, %v1376
      %v1378 = vpop.f32.mrf.mxu0
      %v1379 = vpop.f32.mrf.mxu0
      %v1380 = vadd.f32 0.0, %v1379
      %v1381 = vpop.f32.mrf.mxu0
      %1382 = vmatprep.mubr.bf16.mxu0 0
      %1383 = vmatmul.mubr.bf16.gmra.mxu0 %v1225
      %v1384 = vpop.f32.mrf.mxu0
      %v1385 = vadd.f32 0.0, %v1384
      %v1386 = vpop.f32.mrf.mxu0
      %v1387 = vpop.f32.mrf.mxu0
      %v1388 = vadd.f32 0.0, %v1387
      %v1389 = vpop.f32.mrf.mxu0
      %1390 = vdwg.mxu0
      %v1391 = vadd.f32 %v1190, %v1265
      %v1392 = vadd.f32 %v1191, %v1268
      %v1393 = vadd.f32 %v1192, %v1273
      %v1394 = vadd.f32 %v1193, %v1276
      %v1395 = vadd.f32 %v1194, %v1281
      %v1396 = vadd.f32 %v1195, %v1284
      %v1397 = vadd.f32 %v1196, %v1289
      %v1398 = vadd.f32 %v1197, %v1292
      %v1399 = vadd.f32 %v1198, %v1297
      %v1400 = vadd.f32 %v1199, %v1300
      %v1401 = vadd.f32 %v1200, %v1305
      %v1402 = vadd.f32 %v1201, %v1308
      %v1403 = vadd.f32 %v1202, %v1313
      %v1404 = vadd.f32 %v1203, %v1316
      %v1405 = vadd.f32 %v1204, %v1321
      %v1406 = vadd.f32 %v1205, %v1324
      %v1407 = vadd.f32 %v1206, %v1329
      %v1408 = vadd.f32 %v1207, %v1332
      %v1409 = vadd.f32 %v1208, %v1337
      %v1410 = vadd.f32 %v1209, %v1340
      %v1411 = vadd.f32 %v1210, %v1345
      %v1412 = vadd.f32 %v1211, %v1348
      %v1413 = vadd.f32 %v1212, %v1353
      %v1414 = vadd.f32 %v1213, %v1356
      %v1415 = vadd.f32 %v1214, %v1361
      %v1416 = vadd.f32 %v1215, %v1364
      %v1417 = vadd.f32 %v1216, %v1369
      %v1418 = vadd.f32 %v1217, %v1372
      %v1419 = vadd.f32 %v1218, %v1377
      %v1420 = vadd.f32 %v1219, %v1380
      %v1421 = vadd.f32 %v1220, %v1385
      %v1422 = vadd.f32 %v1221, %v1388
      %v1423 = vshrl.u32 %v285, 16
      %v1425 = vshll.u32 %v285, 16
      %v1427 = vrot.slane %v1425, 1
      %v1428 = vor.u32 %v1423, %v1427
      %v1430 = vshll.u32 %v286, 16
      %v1432 = vrot.slane %v1430, 1
      %v1433 = vsel %vm290, %v1428, %v1432
      %s1434 = scalar_lea.vmem %s1, 16
      %v1435 = vld [vmem:[%s1434] sm:$0xf]
      %v1437 = vsel %vm485, %v1433, 0
      %v1440 = vsel %vm534, %v1435, 0
      %1442 = vmatprep.subr.bf16.mxu0 0
      %1443 = vmatpush1.bf16.msra.mxu0 0
      %1444 = vmatprep.subr.bf16.mxu0 0
      %1445 = vmatpush1.bf16.msra.mxu0 0
      %1446 = vmatprep.subr.bf16.mxu0 0
      %1447 = vmatpush1.bf16.msra.mxu0 0
      %1448 = vmatprep.subr.bf16.mxu0 0
      %1449 = vmatpush1.bf16.msra.mxu0 0
      %1450 = vmatprep.subr.bf16.mxu0 0
      %1451 = vmatpush1.bf16.msra.mxu0 0
      %1452 = vmatprep.subr.bf16.mxu0 0
      %1453 = vmatpush1.bf16.msra.mxu0 0
      %1454 = vmatprep.subr.bf16.mxu0 0
      %1455 = vmatpush1.bf16.msra.mxu0 0
      %1456 = vmatprep.subr.bf16.mxu0 0
      %1457 = vmatpush1.bf16.msra.mxu0 %v1440
      %1458 = vmatprep.subr.bf16.mxu0 0
      %1459 = vmatpush2.bf16.msra.mxu0 0
      %1460 = vmatprep.subr.bf16.mxu0 0
      %1461 = vmatpush2.bf16.msra.mxu0 0
      %1462 = vmatprep.subr.bf16.mxu0 0
      %1463 = vmatpush2.bf16.msra.mxu0 0
      %1464 = vmatprep.subr.bf16.mxu0 0
      %1465 = vmatpush2.bf16.msra.mxu0 0
      %1466 = vmatprep.subr.bf16.mxu0 0
      %1467 = vmatpush2.bf16.msra.mxu0 0
      %1468 = vmatprep.subr.bf16.mxu0 0
      %1469 = vmatpush2.bf16.msra.mxu0 0
      %1470 = vmatprep.subr.bf16.mxu0 0
      %1471 = vmatpush2.bf16.msra.mxu0 0
      %1472 = vmatprep.subr.bf16.mxu0 0
      %1473 = vmatpush2.bf16.msra.mxu0 0
      %1474 = vmatprep.mubr.bf16.mxu0 0
      %1475 = vmatmul.mubr.bf16.gmra.mxu0 %v490
      %v1476 = vpop.f32.mrf.mxu0
      %v1477 = vadd.f32 0.0, %v1476
      %v1478 = vpop.f32.mrf.mxu0
      %v1479 = vpop.f32.mrf.mxu0
      %v1480 = vadd.f32 0.0, %v1479
      %v1481 = vpop.f32.mrf.mxu0
      %1482 = vmatprep.mubr.bf16.mxu0 0
      %1483 = vmatmul.mubr.bf16.gmra.mxu0 %v493
      %v1484 = vpop.f32.mrf.mxu0
      %v1485 = vadd.f32 0.0, %v1484
      %v1486 = vpop.f32.mrf.mxu0
      %v1487 = vpop.f32.mrf.mxu0
      %v1488 = vadd.f32 0.0, %v1487
      %v1489 = vpop.f32.mrf.mxu0
      %1490 = vmatprep.mubr.bf16.mxu0 0
      %1491 = vmatmul.mubr.bf16.gmra.mxu0 %v496
      %v1492 = vpop.f32.mrf.mxu0
      %v1493 = vadd.f32 0.0, %v1492
      %v1494 = vpop.f32.mrf.mxu0
      %v1495 = vpop.f32.mrf.mxu0
      %v1496 = vadd.f32 0.0, %v1495
      %v1497 = vpop.f32.mrf.mxu0
      %1498 = vmatprep.mubr.bf16.mxu0 0
      %1499 = vmatmul.mubr.bf16.gmra.mxu0 %v499
      %v1500 = vpop.f32.mrf.mxu0
      %v1501 = vadd.f32 0.0, %v1500
      %v1502 = vpop.f32.mrf.mxu0
      %v1503 = vpop.f32.mrf.mxu0
      %v1504 = vadd.f32 0.0, %v1503
      %v1505 = vpop.f32.mrf.mxu0
      %1506 = vmatprep.mubr.bf16.mxu0 0
      %1507 = vmatmul.mubr.bf16.gmra.mxu0 %v502
      %v1508 = vpop.f32.mrf.mxu0
      %v1509 = vadd.f32 0.0, %v1508
      %v1510 = vpop.f32.mrf.mxu0
      %v1511 = vpop.f32.mrf.mxu0
      %v1512 = vadd.f32 0.0, %v1511
      %v1513 = vpop.f32.mrf.mxu0
      %1514 = vmatprep.mubr.bf16.mxu0 0
      %1515 = vmatmul.mubr.bf16.gmra.mxu0 %v505
      %v1516 = vpop.f32.mrf.mxu0
      %v1517 = vadd.f32 0.0, %v1516
      %v1518 = vpop.f32.mrf.mxu0
      %v1519 = vpop.f32.mrf.mxu0
      %v1520 = vadd.f32 0.0, %v1519
      %v1521 = vpop.f32.mrf.mxu0
      %1522 = vmatprep.mubr.bf16.mxu0 0
      %1523 = vmatmul.mubr.bf16.gmra.mxu0 %v508
      %v1524 = vpop.f32.mrf.mxu0
      %v1525 = vadd.f32 0.0, %v1524
      %v1526 = vpop.f32.mrf.mxu0
      %v1527 = vpop.f32.mrf.mxu0
      %v1528 = vadd.f32 0.0, %v1527
      %v1529 = vpop.f32.mrf.mxu0
      %1530 = vmatprep.mubr.bf16.mxu0 0
      %1531 = vmatmul.mubr.bf16.gmra.mxu0 %v511
      %v1532 = vpop.f32.mrf.mxu0
      %v1533 = vadd.f32 0.0, %v1532
      %v1534 = vpop.f32.mrf.mxu0
      %v1535 = vpop.f32.mrf.mxu0
      %v1536 = vadd.f32 0.0, %v1535
      %v1537 = vpop.f32.mrf.mxu0
      %1538 = vmatprep.mubr.bf16.mxu0 0
      %1539 = vmatmul.mubr.bf16.gmra.mxu0 %v514
      %v1540 = vpop.f32.mrf.mxu0
      %v1541 = vadd.f32 0.0, %v1540
      %v1542 = vpop.f32.mrf.mxu0
      %v1543 = vpop.f32.mrf.mxu0
      %v1544 = vadd.f32 0.0, %v1543
      %v1545 = vpop.f32.mrf.mxu0
      %1546 = vmatprep.mubr.bf16.mxu0 0
      %1547 = vmatmul.mubr.bf16.gmra.mxu0 %v517
      %v1548 = vpop.f32.mrf.mxu0
      %v1549 = vadd.f32 0.0, %v1548
      %v1550 = vpop.f32.mrf.mxu0
      %v1551 = vpop.f32.mrf.mxu0
      %v1552 = vadd.f32 0.0, %v1551
      %v1553 = vpop.f32.mrf.mxu0
      %1554 = vmatprep.mubr.bf16.mxu0 0
      %1555 = vmatmul.mubr.bf16.gmra.mxu0 %v520
      %v1556 = vpop.f32.mrf.mxu0
      %v1557 = vadd.f32 0.0, %v1556
      %v1558 = vpop.f32.mrf.mxu0
      %v1559 = vpop.f32.mrf.mxu0
      %v1560 = vadd.f32 0.0, %v1559
      %v1561 = vpop.f32.mrf.mxu0
      %1562 = vmatprep.mubr.bf16.mxu0 0
      %1563 = vmatmul.mubr.bf16.gmra.mxu0 %v523
      %v1564 = vpop.f32.mrf.mxu0
      %v1565 = vadd.f32 0.0, %v1564
      %v1566 = vpop.f32.mrf.mxu0
      %v1567 = vpop.f32.mrf.mxu0
      %v1568 = vadd.f32 0.0, %v1567
      %v1569 = vpop.f32.mrf.mxu0
      %1570 = vmatprep.mubr.bf16.mxu0 0
      %1571 = vmatmul.mubr.bf16.gmra.mxu0 %v526
      %v1572 = vpop.f32.mrf.mxu0
      %v1573 = vadd.f32 0.0, %v1572
      %v1574 = vpop.f32.mrf.mxu0
      %v1575 = vpop.f32.mrf.mxu0
      %v1576 = vadd.f32 0.0, %v1575
      %v1577 = vpop.f32.mrf.mxu0
      %1578 = vmatprep.mubr.bf16.mxu0 0
      %1579 = vmatmul.mubr.bf16.gmra.mxu0 %v529
      %v1580 = vpop.f32.mrf.mxu0
      %v1581 = vadd.f32 0.0, %v1580
      %v1582 = vpop.f32.mrf.mxu0
      %v1583 = vpop.f32.mrf.mxu0
      %v1584 = vadd.f32 0.0, %v1583
      %v1585 = vpop.f32.mrf.mxu0
      %1586 = vmatprep.mubr.bf16.mxu0 0
      %1587 = vmatmul.mubr.bf16.gmra.mxu0 %v532
      %v1588 = vpop.f32.mrf.mxu0
      %v1589 = vadd.f32 0.0, %v1588
      %v1590 = vpop.f32.mrf.mxu0
      %v1591 = vpop.f32.mrf.mxu0
      %v1592 = vadd.f32 0.0, %v1591
      %v1593 = vpop.f32.mrf.mxu0
      %1594 = vmatprep.mubr.bf16.mxu0 0
      %1595 = vmatmul.mubr.bf16.gmra.mxu0 %v1437
      %v1596 = vpop.f32.mrf.mxu0
      %v1597 = vadd.f32 0.0, %v1596
      %v1598 = vpop.f32.mrf.mxu0
      %v1599 = vpop.f32.mrf.mxu0
      %v1600 = vadd.f32 0.0, %v1599
      %v1601 = vpop.f32.mrf.mxu0
      %1602 = vdwg.mxu0
      %v1603 = vadd.f32 %v1391, %v1477
      %v1604 = vadd.f32 %v1392, %v1480
      %v1605 = vadd.f32 %v1393, %v1485
      %v1606 = vadd.f32 %v1394, %v1488
      %v1607 = vadd.f32 %v1395, %v1493
      %v1608 = vadd.f32 %v1396, %v1496
      %v1609 = vadd.f32 %v1397, %v1501
      %v1610 = vadd.f32 %v1398, %v1504
      %v1611 = vadd.f32 %v1399, %v1509
      %v1612 = vadd.f32 %v1400, %v1512
      %v1613 = vadd.f32 %v1401, %v1517
      %v1614 = vadd.f32 %v1402, %v1520
      %v1615 = vadd.f32 %v1403, %v1525
      %v1616 = vadd.f32 %v1404, %v1528
      %v1617 = vadd.f32 %v1405, %v1533
      %v1618 = vadd.f32 %v1406, %v1536
      %v1619 = vadd.f32 %v1407, %v1541
      %v1620 = vadd.f32 %v1408, %v1544
      %v1621 = vadd.f32 %v1409, %v1549
      %v1622 = vadd.f32 %v1410, %v1552
      %v1623 = vadd.f32 %v1411, %v1557
      %v1624 = vadd.f32 %v1412, %v1560
      %v1625 = vadd.f32 %v1413, %v1565
      %v1626 = vadd.f32 %v1414, %v1568
      %v1627 = vadd.f32 %v1415, %v1573
      %v1628 = vadd.f32 %v1416, %v1576
      %v1629 = vadd.f32 %v1417, %v1581
      %v1630 = vadd.f32 %v1418, %v1584
      %v1631 = vadd.f32 %v1419, %v1589
      %v1632 = vadd.f32 %v1420, %v1592
      %v1633 = vadd.f32 %v1421, %v1597
      %v1634 = vadd.f32 %v1422, %v1600
      %v1637 = vrot.slane %v285, 1
      %v1638 = vrot.slane %v286, 1
      %v1639 = vsel %vm927, %v1637, %v1638
      %s1640 = scalar_lea.vmem %s1, 20
      %v1641 = vld [vmem:[%s1640] sm:$0xf]
      %v1643 = vsel %vm485, %v1639, 0
      %v1646 = vsel %vm534, %v1641, 0
      %1648 = vmatprep.subr.bf16.mxu0 0
      %1649 = vmatpush1.bf16.msra.mxu0 0
      %1650 = vmatprep.subr.bf16.mxu0 0
      %1651 = vmatpush1.bf16.msra.mxu0 0
      %1652 = vmatprep.subr.bf16.mxu0 0
      %1653 = vmatpush1.bf16.msra.mxu0 0
      %1654 = vmatprep.subr.bf16.mxu0 0
      %1655 = vmatpush1.bf16.msra.mxu0 0
      %1656 = vmatprep.subr.bf16.mxu0 0
      %1657 = vmatpush1.bf16.msra.mxu0 0
      %1658 = vmatprep.subr.bf16.mxu0 0
      %1659 = vmatpush1.bf16.msra.mxu0 0
      %1660 = vmatprep.subr.bf16.mxu0 0
      %1661 = vmatpush1.bf16.msra.mxu0 0
      %1662 = vmatprep.subr.bf16.mxu0 0
      %1663 = vmatpush1.bf16.msra.mxu0 %v1646
      %1664 = vmatprep.subr.bf16.mxu0 0
      %1665 = vmatpush2.bf16.msra.mxu0 0
      %1666 = vmatprep.subr.bf16.mxu0 0
      %1667 = vmatpush2.bf16.msra.mxu0 0
      %1668 = vmatprep.subr.bf16.mxu0 0
      %1669 = vmatpush2.bf16.msra.mxu0 0
      %1670 = vmatprep.subr.bf16.mxu0 0
      %1671 = vmatpush2.bf16.msra.mxu0 0
      %1672 = vmatprep.subr.bf16.mxu0 0
      %1673 = vmatpush2.bf16.msra.mxu0 0
      %1674 = vmatprep.subr.bf16.mxu0 0
      %1675 = vmatpush2.bf16.msra.mxu0 0
      %1676 = vmatprep.subr.bf16.mxu0 0
      %1677 = vmatpush2.bf16.msra.mxu0 0
      %1678 = vmatprep.subr.bf16.mxu0 0
      %1679 = vmatpush2.bf16.msra.mxu0 0
      %1680 = vmatprep.mubr.bf16.mxu0 0
      %1681 = vmatmul.mubr.bf16.gmra.mxu0 %v982
      %v1682 = vpop.f32.mrf.mxu0
      %v1683 = vadd.f32 0.0, %v1682
      %v1684 = vpop.f32.mrf.mxu0
      %v1685 = vpop.f32.mrf.mxu0
      %v1686 = vadd.f32 0.0, %v1685
      %v1687 = vpop.f32.mrf.mxu0
      %1688 = vmatprep.mubr.bf16.mxu0 0
      %1689 = vmatmul.mubr.bf16.gmra.mxu0 %v985
      %v1690 = vpop.f32.mrf.mxu0
      %v1691 = vadd.f32 0.0, %v1690
      %v1692 = vpop.f32.mrf.mxu0
      %v1693 = vpop.f32.mrf.mxu0
      %v1694 = vadd.f32 0.0, %v1693
      %v1695 = vpop.f32.mrf.mxu0
      %1696 = vmatprep.mubr.bf16.mxu0 0
      %1697 = vmatmul.mubr.bf16.gmra.mxu0 %v988
      %v1698 = vpop.f32.mrf.mxu0
      %v1699 = vadd.f32 0.0, %v1698
      %v1700 = vpop.f32.mrf.mxu0
      %v1701 = vpop.f32.mrf.mxu0
      %v1702 = vadd.f32 0.0, %v1701
      %v1703 = vpop.f32.mrf.mxu0
      %1704 = vmatprep.mubr.bf16.mxu0 0
      %1705 = vmatmul.mubr.bf16.gmra.mxu0 %v991
      %v1706 = vpop.f32.mrf.mxu0
      %v1707 = vadd.f32 0.0, %v1706
      %v1708 = vpop.f32.mrf.mxu0
      %v1709 = vpop.f32.mrf.mxu0
      %v1710 = vadd.f32 0.0, %v1709
      %v1711 = vpop.f32.mrf.mxu0
      %1712 = vmatprep.mubr.bf16.mxu0 0
      %1713 = vmatmul.mubr.bf16.gmra.mxu0 %v994
      %v1714 = vpop.f32.mrf.mxu0
      %v1715 = vadd.f32 0.0, %v1714
      %v1716 = vpop.f32.mrf.mxu0
      %v1717 = vpop.f32.mrf.mxu0
      %v1718 = vadd.f32 0.0, %v1717
      %v1719 = vpop.f32.mrf.mxu0
      %1720 = vmatprep.mubr.bf16.mxu0 0
      %1721 = vmatmul.mubr.bf16.gmra.mxu0 %v997
      %v1722 = vpop.f32.mrf.mxu0
      %v1723 = vadd.f32 0.0, %v1722
      %v1724 = vpop.f32.mrf.mxu0
      %v1725 = vpop.f32.mrf.mxu0
      %v1726 = vadd.f32 0.0, %v1725
      %v1727 = vpop.f32.mrf.mxu0
      %1728 = vmatprep.mubr.bf16.mxu0 0
      %1729 = vmatmul.mubr.bf16.gmra.mxu0 %v1000
      %v1730 = vpop.f32.mrf.mxu0
      %v1731 = vadd.f32 0.0, %v1730
      %v1732 = vpop.f32.mrf.mxu0
      %v1733 = vpop.f32.mrf.mxu0
      %v1734 = vadd.f32 0.0, %v1733
      %v1735 = vpop.f32.mrf.mxu0
      %1736 = vmatprep.mubr.bf16.mxu0 0
      %1737 = vmatmul.mubr.bf16.gmra.mxu0 %v1003
      %v1738 = vpop.f32.mrf.mxu0
      %v1739 = vadd.f32 0.0, %v1738
      %v1740 = vpop.f32.mrf.mxu0
      %v1741 = vpop.f32.mrf.mxu0
      %v1742 = vadd.f32 0.0, %v1741
      %v1743 = vpop.f32.mrf.mxu0
      %1744 = vmatprep.mubr.bf16.mxu0 0
      %1745 = vmatmul.mubr.bf16.gmra.mxu0 %v1006
      %v1746 = vpop.f32.mrf.mxu0
      %v1747 = vadd.f32 0.0, %v1746
      %v1748 = vpop.f32.mrf.mxu0
      %v1749 = vpop.f32.mrf.mxu0
      %v1750 = vadd.f32 0.0, %v1749
      %v1751 = vpop.f32.mrf.mxu0
      %1752 = vmatprep.mubr.bf16.mxu0 0
      %1753 = vmatmul.mubr.bf16.gmra.mxu0 %v1009
      %v1754 = vpop.f32.mrf.mxu0
      %v1755 = vadd.f32 0.0, %v1754
      %v1756 = vpop.f32.mrf.mxu0
      %v1757 = vpop.f32.mrf.mxu0
      %v1758 = vadd.f32 0.0, %v1757
      %v1759 = vpop.f32.mrf.mxu0
      %1760 = vmatprep.mubr.bf16.mxu0 0
      %1761 = vmatmul.mubr.bf16.gmra.mxu0 %v1012
      %v1762 = vpop.f32.mrf.mxu0
      %v1763 = vadd.f32 0.0, %v1762
      %v1764 = vpop.f32.mrf.mxu0
      %v1765 = vpop.f32.mrf.mxu0
      %v1766 = vadd.f32 0.0, %v1765
      %v1767 = vpop.f32.mrf.mxu0
      %1768 = vmatprep.mubr.bf16.mxu0 0
      %1769 = vmatmul.mubr.bf16.gmra.mxu0 %v1015
      %v1770 = vpop.f32.mrf.mxu0
      %v1771 = vadd.f32 0.0, %v1770
      %v1772 = vpop.f32.mrf.mxu0
      %v1773 = vpop.f32.mrf.mxu0
      %v1774 = vadd.f32 0.0, %v1773
      %v1775 = vpop.f32.mrf.mxu0
      %1776 = vmatprep.mubr.bf16.mxu0 0
      %1777 = vmatmul.mubr.bf16.gmra.mxu0 %v1018
      %v1778 = vpop.f32.mrf.mxu0
      %v1779 = vadd.f32 0.0, %v1778
      %v1780 = vpop.f32.mrf.mxu0
      %v1781 = vpop.f32.mrf.mxu0
      %v1782 = vadd.f32 0.0, %v1781
      %v1783 = vpop.f32.mrf.mxu0
      %1784 = vmatprep.mubr.bf16.mxu0 0
      %1785 = vmatmul.mubr.bf16.gmra.mxu0 %v1021
      %v1786 = vpop.f32.mrf.mxu0
      %v1787 = vadd.f32 0.0, %v1786
      %v1788 = vpop.f32.mrf.mxu0
      %v1789 = vpop.f32.mrf.mxu0
      %v1790 = vadd.f32 0.0, %v1789
      %v1791 = vpop.f32.mrf.mxu0
      %1792 = vmatprep.mubr.bf16.mxu0 0
      %1793 = vmatmul.mubr.bf16.gmra.mxu0 %v1024
      %v1794 = vpop.f32.mrf.mxu0
      %v1795 = vadd.f32 0.0, %v1794
      %v1796 = vpop.f32.mrf.mxu0
      %v1797 = vpop.f32.mrf.mxu0
      %v1798 = vadd.f32 0.0, %v1797
      %v1799 = vpop.f32.mrf.mxu0
      %1800 = vmatprep.mubr.bf16.mxu0 0
      %1801 = vmatmul.mubr.bf16.gmra.mxu0 %v1643
      %v1802 = vpop.f32.mrf.mxu0
      %v1803 = vadd.f32 0.0, %v1802
      %v1804 = vpop.f32.mrf.mxu0
      %v1805 = vpop.f32.mrf.mxu0
      %v1806 = vadd.f32 0.0, %v1805
      %v1807 = vpop.f32.mrf.mxu0
      %1808 = vdwg.mxu0
      %v1809 = vadd.f32 %v1603, %v1683
      %v1810 = vadd.f32 %v1604, %v1686
      %v1811 = vadd.f32 %v1605, %v1691
      %v1812 = vadd.f32 %v1606, %v1694
      %v1813 = vadd.f32 %v1607, %v1699
      %v1814 = vadd.f32 %v1608, %v1702
      %v1815 = vadd.f32 %v1609, %v1707
      %v1816 = vadd.f32 %v1610, %v1710
      %v1817 = vadd.f32 %v1611, %v1715
      %v1818 = vadd.f32 %v1612, %v1718
      %v1819 = vadd.f32 %v1613, %v1723
      %v1820 = vadd.f32 %v1614, %v1726
      %v1821 = vadd.f32 %v1615, %v1731
      %v1822 = vadd.f32 %v1616, %v1734
      %v1823 = vadd.f32 %v1617, %v1739
      %v1824 = vadd.f32 %v1618, %v1742
      %v1825 = vadd.f32 %v1619, %v1747
      %v1826 = vadd.f32 %v1620, %v1750
      %v1827 = vadd.f32 %v1621, %v1755
      %v1828 = vadd.f32 %v1622, %v1758
      %v1829 = vadd.f32 %v1623, %v1763
      %v1830 = vadd.f32 %v1624, %v1766
      %v1831 = vadd.f32 %v1625, %v1771
      %v1832 = vadd.f32 %v1626, %v1774
      %v1833 = vadd.f32 %v1627, %v1779
      %v1834 = vadd.f32 %v1628, %v1782
      %v1835 = vadd.f32 %v1629, %v1787
      %v1836 = vadd.f32 %v1630, %v1790
      %v1837 = vadd.f32 %v1631, %v1795
      %v1838 = vadd.f32 %v1632, %v1798
      %v1839 = vadd.f32 %v1633, %v1803
      %v1840 = vadd.f32 %v1634, %v1806
      %s1841 = scalar_lea.vmem %s1, 24
      %v1842 = vld [vmem:[%s1841] sm:$0xf]
      %v1844 = vsel %vm485, %v287, 0
      %v1847 = vsel %vm534, %v1842, 0
      %1849 = vmatprep.subr.bf16.mxu0 0
      %1850 = vmatpush1.bf16.msra.mxu0 0
      %1851 = vmatprep.subr.bf16.mxu0 0
      %1852 = vmatpush1.bf16.msra.mxu0 0
      %1853 = vmatprep.subr.bf16.mxu0 0
      %1854 = vmatpush1.bf16.msra.mxu0 0
      %1855 = vmatprep.subr.bf16.mxu0 0
      %1856 = vmatpush1.bf16.msra.mxu0 0
      %1857 = vmatprep.subr.bf16.mxu0 0
      %1858 = vmatpush1.bf16.msra.mxu0 0
      %1859 = vmatprep.subr.bf16.mxu0 0
      %1860 = vmatpush1.bf16.msra.mxu0 0
      %1861 = vmatprep.subr.bf16.mxu0 0
      %1862 = vmatpush1.bf16.msra.mxu0 0
      %1863 = vmatprep.subr.bf16.mxu0 0
      %1864 = vmatpush1.bf16.msra.mxu0 %v1847
      %1865 = vmatprep.subr.bf16.mxu0 0
      %1866 = vmatpush2.bf16.msra.mxu0 0
      %1867 = vmatprep.subr.bf16.mxu0 0
      %1868 = vmatpush2.bf16.msra.mxu0 0
      %1869 = vmatprep.subr.bf16.mxu0 0
      %1870 = vmatpush2.bf16.msra.mxu0 0
      %1871 = vmatprep.subr.bf16.mxu0 0
      %1872 = vmatpush2.bf16.msra.mxu0 0
      %1873 = vmatprep.subr.bf16.mxu0 0
      %1874 = vmatpush2.bf16.msra.mxu0 0
      %1875 = vmatprep.subr.bf16.mxu0 0
      %1876 = vmatpush2.bf16.msra.mxu0 0
      %1877 = vmatprep.subr.bf16.mxu0 0
      %1878 = vmatpush2.bf16.msra.mxu0 0
      %1879 = vmatprep.subr.bf16.mxu0 0
      %1880 = vmatpush2.bf16.msra.mxu0 0
      %1881 = vmatprep.mubr.bf16.mxu0 0
      %1882 = vmatmul.mubr.bf16.gmra.mxu0 %v703
      %v1883 = vpop.f32.mrf.mxu0
      %v1884 = vadd.f32 0.0, %v1883
      %v1885 = vpop.f32.mrf.mxu0
      %v1886 = vpop.f32.mrf.mxu0
      %v1887 = vadd.f32 0.0, %v1886
      %v1888 = vpop.f32.mrf.mxu0
      %1889 = vmatprep.mubr.bf16.mxu0 0
      %1890 = vmatmul.mubr.bf16.gmra.mxu0 %v705
      %v1891 = vpop.f32.mrf.mxu0
      %v1892 = vadd.f32 0.0, %v1891
      %v1893 = vpop.f32.mrf.mxu0
      %v1894 = vpop.f32.mrf.mxu0
      %v1895 = vadd.f32 0.0, %v1894
      %v1896 = vpop.f32.mrf.mxu0
      %1897 = vmatprep.mubr.bf16.mxu0 0
      %1898 = vmatmul.mubr.bf16.gmra.mxu0 %v707
      %v1899 = vpop.f32.mrf.mxu0
      %v1900 = vadd.f32 0.0, %v1899
      %v1901 = vpop.f32.mrf.mxu0
      %v1902 = vpop.f32.mrf.mxu0
      %v1903 = vadd.f32 0.0, %v1902
      %v1904 = vpop.f32.mrf.mxu0
      %1905 = vmatprep.mubr.bf16.mxu0 0
      %1906 = vmatmul.mubr.bf16.gmra.mxu0 %v709
      %v1907 = vpop.f32.mrf.mxu0
      %v1908 = vadd.f32 0.0, %v1907
      %v1909 = vpop.f32.mrf.mxu0
      %v1910 = vpop.f32.mrf.mxu0
      %v1911 = vadd.f32 0.0, %v1910
      %v1912 = vpop.f32.mrf.mxu0
      %1913 = vmatprep.mubr.bf16.mxu0 0
      %1914 = vmatmul.mubr.bf16.gmra.mxu0 %v711
      %v1915 = vpop.f32.mrf.mxu0
      %v1916 = vadd.f32 0.0, %v1915
      %v1917 = vpop.f32.mrf.mxu0
      %v1918 = vpop.f32.mrf.mxu0
      %v1919 = vadd.f32 0.0, %v1918
      %v1920 = vpop.f32.mrf.mxu0
      %1921 = vmatprep.mubr.bf16.mxu0 0
      %1922 = vmatmul.mubr.bf16.gmra.mxu0 %v713
      %v1923 = vpop.f32.mrf.mxu0
      %v1924 = vadd.f32 0.0, %v1923
      %v1925 = vpop.f32.mrf.mxu0
      %v1926 = vpop.f32.mrf.mxu0
      %v1927 = vadd.f32 0.0, %v1926
      %v1928 = vpop.f32.mrf.mxu0
      %1929 = vmatprep.mubr.bf16.mxu0 0
      %1930 = vmatmul.mubr.bf16.gmra.mxu0 %v715
      %v1931 = vpop.f32.mrf.mxu0
      %v1932 = vadd.f32 0.0, %v1931
      %v1933 = vpop.f32.mrf.mxu0
      %v1934 = vpop.f32.mrf.mxu0
      %v1935 = vadd.f32 0.0, %v1934
      %v1936 = vpop.f32.mrf.mxu0
      %1937 = vmatprep.mubr.bf16.mxu0 0
      %1938 = vmatmul.mubr.bf16.gmra.mxu0 %v717
      %v1939 = vpop.f32.mrf.mxu0
      %v1940 = vadd.f32 0.0, %v1939
      %v1941 = vpop.f32.mrf.mxu0
      %v1942 = vpop.f32.mrf.mxu0
      %v1943 = vadd.f32 0.0, %v1942
      %v1944 = vpop.f32.mrf.mxu0
      %1945 = vmatprep.mubr.bf16.mxu0 0
      %1946 = vmatmul.mubr.bf16.gmra.mxu0 %v719
      %v1947 = vpop.f32.mrf.mxu0
      %v1948 = vadd.f32 0.0, %v1947
      %v1949 = vpop.f32.mrf.mxu0
      %v1950 = vpop.f32.mrf.mxu0
      %v1951 = vadd.f32 0.0, %v1950
      %v1952 = vpop.f32.mrf.mxu0
      %1953 = vmatprep.mubr.bf16.mxu0 0
      %1954 = vmatmul.mubr.bf16.gmra.mxu0 %v721
      %v1955 = vpop.f32.mrf.mxu0
      %v1956 = vadd.f32 0.0, %v1955
      %v1957 = vpop.f32.mrf.mxu0
      %v1958 = vpop.f32.mrf.mxu0
      %v1959 = vadd.f32 0.0, %v1958
      %v1960 = vpop.f32.mrf.mxu0
      %1961 = vmatprep.mubr.bf16.mxu0 0
      %1962 = vmatmul.mubr.bf16.gmra.mxu0 %v723
      %v1963 = vpop.f32.mrf.mxu0
      %v1964 = vadd.f32 0.0, %v1963
      %v1965 = vpop.f32.mrf.mxu0
      %v1966 = vpop.f32.mrf.mxu0
      %v1967 = vadd.f32 0.0, %v1966
      %v1968 = vpop.f32.mrf.mxu0
      %1969 = vmatprep.mubr.bf16.mxu0 0
      %1970 = vmatmul.mubr.bf16.gmra.mxu0 %v725
      %v1971 = vpop.f32.mrf.mxu0
      %v1972 = vadd.f32 0.0, %v1971
      %v1973 = vpop.f32.mrf.mxu0
      %v1974 = vpop.f32.mrf.mxu0
      %v1975 = vadd.f32 0.0, %v1974
      %v1976 = vpop.f32.mrf.mxu0
      %1977 = vmatprep.mubr.bf16.mxu0 0
      %1978 = vmatmul.mubr.bf16.gmra.mxu0 %v727
      %v1979 = vpop.f32.mrf.mxu0
      %v1980 = vadd.f32 0.0, %v1979
      %v1981 = vpop.f32.mrf.mxu0
      %v1982 = vpop.f32.mrf.mxu0
      %v1983 = vadd.f32 0.0, %v1982
      %v1984 = vpop.f32.mrf.mxu0
      %1985 = vmatprep.mubr.bf16.mxu0 0
      %1986 = vmatmul.mubr.bf16.gmra.mxu0 %v729
      %v1987 = vpop.f32.mrf.mxu0
      %v1988 = vadd.f32 0.0, %v1987
      %v1989 = vpop.f32.mrf.mxu0
      %v1990 = vpop.f32.mrf.mxu0
      %v1991 = vadd.f32 0.0, %v1990
      %v1992 = vpop.f32.mrf.mxu0
      %1993 = vmatprep.mubr.bf16.mxu0 0
      %1994 = vmatmul.mubr.bf16.gmra.mxu0 %v1225
      %v1995 = vpop.f32.mrf.mxu0
      %v1996 = vadd.f32 0.0, %v1995
      %v1997 = vpop.f32.mrf.mxu0
      %v1998 = vpop.f32.mrf.mxu0
      %v1999 = vadd.f32 0.0, %v1998
      %v2000 = vpop.f32.mrf.mxu0
      %2001 = vmatprep.mubr.bf16.mxu0 0
      %2002 = vmatmul.mubr.bf16.gmra.mxu0 %v1844
      %v2003 = vpop.f32.mrf.mxu0
      %v2004 = vadd.f32 0.0, %v2003
      %v2005 = vpop.f32.mrf.mxu0
      %v2006 = vpop.f32.mrf.mxu0
      %v2007 = vadd.f32 0.0, %v2006
      %v2008 = vpop.f32.mrf.mxu0
      %2009 = vdwg.mxu0
      %v2010 = vadd.f32 %v1809, %v1884
      %v2011 = vadd.f32 %v1810, %v1887
      %v2012 = vadd.f32 %v1811, %v1892
      %v2013 = vadd.f32 %v1812, %v1895
      %v2014 = vadd.f32 %v1813, %v1900
      %v2015 = vadd.f32 %v1814, %v1903
      %v2016 = vadd.f32 %v1815, %v1908
      %v2017 = vadd.f32 %v1816, %v1911
      %v2018 = vadd.f32 %v1817, %v1916
      %v2019 = vadd.f32 %v1818, %v1919
      %v2020 = vadd.f32 %v1819, %v1924
      %v2021 = vadd.f32 %v1820, %v1927
      %v2022 = vadd.f32 %v1821, %v1932
      %v2023 = vadd.f32 %v1822, %v1935
      %v2024 = vadd.f32 %v1823, %v1940
      %v2025 = vadd.f32 %v1824, %v1943
      %v2026 = vadd.f32 %v1825, %v1948
      %v2027 = vadd.f32 %v1826, %v1951
      %v2028 = vadd.f32 %v1827, %v1956
      %v2029 = vadd.f32 %v1828, %v1959
      %v2030 = vadd.f32 %v1829, %v1964
      %v2031 = vadd.f32 %v1830, %v1967
      %v2032 = vadd.f32 %v1831, %v1972
      %v2033 = vadd.f32 %v1832, %v1975
      %v2034 = vadd.f32 %v1833, %v1980
      %v2035 = vadd.f32 %v1834, %v1983
      %v2036 = vadd.f32 %v1835, %v1988
      %v2037 = vadd.f32 %v1836, %v1991
      %v2038 = vadd.f32 %v1837, %v1996
      %v2039 = vadd.f32 %v1838, %v1999
      %v2040 = vadd.f32 %v1839, %v2004
      %v2041 = vadd.f32 %v1840, %v2007
      %v2042 = vshrl.u32 %v287, 16
      %v2044 = vshll.u32 %v287, 16
      %v2046 = vrot.slane %v2044, 1
      %v2047 = vor.u32 %v2042, %v2046
      %v2049 = vshll.u32 %v288, 16
      %v2051 = vrot.slane %v2049, 1
      %v2052 = vsel %vm290, %v2047, %v2051
      %s2053 = scalar_lea.vmem %s1, 28
      %v2054 = vld [vmem:[%s2053] sm:$0xf]
      %v2056 = vsel %vm485, %v2052, 0
      %v2059 = vsel %vm534, %v2054, 0
      %2061 = vmatprep.subr.bf16.mxu0 0
      %2062 = vmatpush1.bf16.msra.mxu0 0
      %2063 = vmatprep.subr.bf16.mxu0 0
      %2064 = vmatpush1.bf16.msra.mxu0 0
      %2065 = vmatprep.subr.bf16.mxu0 0
      %2066 = vmatpush1.bf16.msra.mxu0 0
      %2067 = vmatprep.subr.bf16.mxu0 0
      %2068 = vmatpush1.bf16.msra.mxu0 0
      %2069 = vmatprep.subr.bf16.mxu0 0
      %2070 = vmatpush1.bf16.msra.mxu0 0
      %2071 = vmatprep.subr.bf16.mxu0 0
      %2072 = vmatpush1.bf16.msra.mxu0 0
      %2073 = vmatprep.subr.bf16.mxu0 0
      %2074 = vmatpush1.bf16.msra.mxu0 0
      %2075 = vmatprep.subr.bf16.mxu0 0
      %2076 = vmatpush1.bf16.msra.mxu0 %v2059
      %2077 = vmatprep.subr.bf16.mxu0 0
      %2078 = vmatpush2.bf16.msra.mxu0 0
      %2079 = vmatprep.subr.bf16.mxu0 0
      %2080 = vmatpush2.bf16.msra.mxu0 0
      %2081 = vmatprep.subr.bf16.mxu0 0
      %2082 = vmatpush2.bf16.msra.mxu0 0
      %2083 = vmatprep.subr.bf16.mxu0 0
      %2084 = vmatpush2.bf16.msra.mxu0 0
      %2085 = vmatprep.subr.bf16.mxu0 0
      %2086 = vmatpush2.bf16.msra.mxu0 0
      %2087 = vmatprep.subr.bf16.mxu0 0
      %2088 = vmatpush2.bf16.msra.mxu0 0
      %2089 = vmatprep.subr.bf16.mxu0 0
      %2090 = vmatpush2.bf16.msra.mxu0 0
      %2091 = vmatprep.subr.bf16.mxu0 0
      %2092 = vmatpush2.bf16.msra.mxu0 0
      %2093 = vmatprep.mubr.bf16.mxu0 0
      %2094 = vmatmul.mubr.bf16.gmra.mxu0 %v493
      %v2095 = vpop.f32.mrf.mxu0
      %v2096 = vadd.f32 0.0, %v2095
      %v2097 = vpop.f32.mrf.mxu0
      %v2098 = vpop.f32.mrf.mxu0
      %v2099 = vadd.f32 0.0, %v2098
      %v2100 = vpop.f32.mrf.mxu0
      %2101 = vmatprep.mubr.bf16.mxu0 0
      %2102 = vmatmul.mubr.bf16.gmra.mxu0 %v496
      %v2103 = vpop.f32.mrf.mxu0
      %v2104 = vadd.f32 0.0, %v2103
      %v2105 = vpop.f32.mrf.mxu0
      %v2106 = vpop.f32.mrf.mxu0
      %v2107 = vadd.f32 0.0, %v2106
      %v2108 = vpop.f32.mrf.mxu0
      %2109 = vmatprep.mubr.bf16.mxu0 0
      %2110 = vmatmul.mubr.bf16.gmra.mxu0 %v499
      %v2111 = vpop.f32.mrf.mxu0
      %v2112 = vadd.f32 0.0, %v2111
      %v2113 = vpop.f32.mrf.mxu0
      %v2114 = vpop.f32.mrf.mxu0
      %v2115 = vadd.f32 0.0, %v2114
      %v2116 = vpop.f32.mrf.mxu0
      %2117 = vmatprep.mubr.bf16.mxu0 0
      %2118 = vmatmul.mubr.bf16.gmra.mxu0 %v502
      %v2119 = vpop.f32.mrf.mxu0
      %v2120 = vadd.f32 0.0, %v2119
      %v2121 = vpop.f32.mrf.mxu0
      %v2122 = vpop.f32.mrf.mxu0
      %v2123 = vadd.f32 0.0, %v2122
      %v2124 = vpop.f32.mrf.mxu0
      %2125 = vmatprep.mubr.bf16.mxu0 0
      %2126 = vmatmul.mubr.bf16.gmra.mxu0 %v505
      %v2127 = vpop.f32.mrf.mxu0
      %v2128 = vadd.f32 0.0, %v2127
      %v2129 = vpop.f32.mrf.mxu0
      %v2130 = vpop.f32.mrf.mxu0
      %v2131 = vadd.f32 0.0, %v2130
      %v2132 = vpop.f32.mrf.mxu0
      %2133 = vmatprep.mubr.bf16.mxu0 0
      %2134 = vmatmul.mubr.bf16.gmra.mxu0 %v508
      %v2135 = vpop.f32.mrf.mxu0
      %v2136 = vadd.f32 0.0, %v2135
      %v2137 = vpop.f32.mrf.mxu0
      %v2138 = vpop.f32.mrf.mxu0
      %v2139 = vadd.f32 0.0, %v2138
      %v2140 = vpop.f32.mrf.mxu0
      %2141 = vmatprep.mubr.bf16.mxu0 0
      %2142 = vmatmul.mubr.bf16.gmra.mxu0 %v511
      %v2143 = vpop.f32.mrf.mxu0
      %v2144 = vadd.f32 0.0, %v2143
      %v2145 = vpop.f32.mrf.mxu0
      %v2146 = vpop.f32.mrf.mxu0
      %v2147 = vadd.f32 0.0, %v2146
      %v2148 = vpop.f32.mrf.mxu0
      %2149 = vmatprep.mubr.bf16.mxu0 0
      %2150 = vmatmul.mubr.bf16.gmra.mxu0 %v514
      %v2151 = vpop.f32.mrf.mxu0
      %v2152 = vadd.f32 0.0, %v2151
      %v2153 = vpop.f32.mrf.mxu0
      %v2154 = vpop.f32.mrf.mxu0
      %v2155 = vadd.f32 0.0, %v2154
      %v2156 = vpop.f32.mrf.mxu0
      %2157 = vmatprep.mubr.bf16.mxu0 0
      %2158 = vmatmul.mubr.bf16.gmra.mxu0 %v517
      %v2159 = vpop.f32.mrf.mxu0
      %v2160 = vadd.f32 0.0, %v2159
      %v2161 = vpop.f32.mrf.mxu0
      %v2162 = vpop.f32.mrf.mxu0
      %v2163 = vadd.f32 0.0, %v2162
      %v2164 = vpop.f32.mrf.mxu0
      %2165 = vmatprep.mubr.bf16.mxu0 0
      %2166 = vmatmul.mubr.bf16.gmra.mxu0 %v520
      %v2167 = vpop.f32.mrf.mxu0
      %v2168 = vadd.f32 0.0, %v2167
      %v2169 = vpop.f32.mrf.mxu0
      %v2170 = vpop.f32.mrf.mxu0
      %v2171 = vadd.f32 0.0, %v2170
      %v2172 = vpop.f32.mrf.mxu0
      %2173 = vmatprep.mubr.bf16.mxu0 0
      %2174 = vmatmul.mubr.bf16.gmra.mxu0 %v523
      %v2175 = vpop.f32.mrf.mxu0
      %v2176 = vadd.f32 0.0, %v2175
      %v2177 = vpop.f32.mrf.mxu0
      %v2178 = vpop.f32.mrf.mxu0
      %v2179 = vadd.f32 0.0, %v2178
      %v2180 = vpop.f32.mrf.mxu0
      %2181 = vmatprep.mubr.bf16.mxu0 0
      %2182 = vmatmul.mubr.bf16.gmra.mxu0 %v526
      %v2183 = vpop.f32.mrf.mxu0
      %v2184 = vadd.f32 0.0, %v2183
      %v2185 = vpop.f32.mrf.mxu0
      %v2186 = vpop.f32.mrf.mxu0
      %v2187 = vadd.f32 0.0, %v2186
      %v2188 = vpop.f32.mrf.mxu0
      %2189 = vmatprep.mubr.bf16.mxu0 0
      %2190 = vmatmul.mubr.bf16.gmra.mxu0 %v529
      %v2191 = vpop.f32.mrf.mxu0
      %v2192 = vadd.f32 0.0, %v2191
      %v2193 = vpop.f32.mrf.mxu0
      %v2194 = vpop.f32.mrf.mxu0
      %v2195 = vadd.f32 0.0, %v2194
      %v2196 = vpop.f32.mrf.mxu0
      %2197 = vmatprep.mubr.bf16.mxu0 0
      %2198 = vmatmul.mubr.bf16.gmra.mxu0 %v532
      %v2199 = vpop.f32.mrf.mxu0
      %v2200 = vadd.f32 0.0, %v2199
      %v2201 = vpop.f32.mrf.mxu0
      %v2202 = vpop.f32.mrf.mxu0
      %v2203 = vadd.f32 0.0, %v2202
      %v2204 = vpop.f32.mrf.mxu0
      %2205 = vmatprep.mubr.bf16.mxu0 0
      %2206 = vmatmul.mubr.bf16.gmra.mxu0 %v1437
      %v2207 = vpop.f32.mrf.mxu0
      %v2208 = vadd.f32 0.0, %v2207
      %v2209 = vpop.f32.mrf.mxu0
      %v2210 = vpop.f32.mrf.mxu0
      %v2211 = vadd.f32 0.0, %v2210
      %v2212 = vpop.f32.mrf.mxu0
      %2213 = vmatprep.mubr.bf16.mxu0 0
      %2214 = vmatmul.mubr.bf16.gmra.mxu0 %v2056
      %v2215 = vpop.f32.mrf.mxu0
      %v2216 = vadd.f32 0.0, %v2215
      %v2217 = vpop.f32.mrf.mxu0
      %v2218 = vpop.f32.mrf.mxu0
      %v2219 = vadd.f32 0.0, %v2218
      %v2220 = vpop.f32.mrf.mxu0
      %2221 = vdwg.mxu0
      %v2222 = vadd.f32 %v2010, %v2096
      %v2223 = vadd.f32 %v2011, %v2099
      %v2224 = vadd.f32 %v2012, %v2104
      %v2225 = vadd.f32 %v2013, %v2107
      %v2226 = vadd.f32 %v2014, %v2112
      %v2227 = vadd.f32 %v2015, %v2115
      %v2228 = vadd.f32 %v2016, %v2120
      %v2229 = vadd.f32 %v2017, %v2123
      %v2230 = vadd.f32 %v2018, %v2128
      %v2231 = vadd.f32 %v2019, %v2131
      %v2232 = vadd.f32 %v2020, %v2136
      %v2233 = vadd.f32 %v2021, %v2139
      %v2234 = vadd.f32 %v2022, %v2144
      %v2235 = vadd.f32 %v2023, %v2147
      %v2236 = vadd.f32 %v2024, %v2152
      %v2237 = vadd.f32 %v2025, %v2155
      %v2238 = vadd.f32 %v2026, %v2160
      %v2239 = vadd.f32 %v2027, %v2163
      %v2240 = vadd.f32 %v2028, %v2168
      %v2241 = vadd.f32 %v2029, %v2171
      %v2242 = vadd.f32 %v2030, %v2176
      %v2243 = vadd.f32 %v2031, %v2179
      %v2244 = vadd.f32 %v2032, %v2184
      %v2245 = vadd.f32 %v2033, %v2187
      %v2246 = vadd.f32 %v2034, %v2192
      %v2247 = vadd.f32 %v2035, %v2195
      %v2248 = vadd.f32 %v2036, %v2200
      %v2249 = vadd.f32 %v2037, %v2203
      %v2250 = vadd.f32 %v2038, %v2208
      %v2251 = vadd.f32 %v2039, %v2211
      %v2252 = vadd.f32 %v2040, %v2216
      %v2253 = vadd.f32 %v2041, %v2219
      %v2256 = vrot.slane %v287, 1
      %v2257 = vrot.slane %v288, 1
      %v2258 = vsel %vm927, %v2256, %v2257
      %s2259 = scalar_lea.vmem %s1, 32
      %v2260 = vld [vmem:[%s2259] sm:$0xf]
      %v2262 = vsel %vm485, %v2258, 0
      %v2265 = vsel %vm534, %v2260, 0
      %2267 = vmatprep.subr.bf16.mxu0 0
      %2268 = vmatpush1.bf16.msra.mxu0 0
      %2269 = vmatprep.subr.bf16.mxu0 0
      %2270 = vmatpush1.bf16.msra.mxu0 0
      %2271 = vmatprep.subr.bf16.mxu0 0
      %2272 = vmatpush1.bf16.msra.mxu0 0
      %2273 = vmatprep.subr.bf16.mxu0 0
      %2274 = vmatpush1.bf16.msra.mxu0 0
      %2275 = vmatprep.subr.bf16.mxu0 0
      %2276 = vmatpush1.bf16.msra.mxu0 0
      %2277 = vmatprep.subr.bf16.mxu0 0
      %2278 = vmatpush1.bf16.msra.mxu0 0
      %2279 = vmatprep.subr.bf16.mxu0 0
      %2280 = vmatpush1.bf16.msra.mxu0 0
      %2281 = vmatprep.subr.bf16.mxu0 0
      %2282 = vmatpush1.bf16.msra.mxu0 %v2265
      %2283 = vmatprep.subr.bf16.mxu0 0
      %2284 = vmatpush2.bf16.msra.mxu0 0
      %2285 = vmatprep.subr.bf16.mxu0 0
      %2286 = vmatpush2.bf16.msra.mxu0 0
      %2287 = vmatprep.subr.bf16.mxu0 0
      %2288 = vmatpush2.bf16.msra.mxu0 0
      %2289 = vmatprep.subr.bf16.mxu0 0
      %2290 = vmatpush2.bf16.msra.mxu0 0
      %2291 = vmatprep.subr.bf16.mxu0 0
      %2292 = vmatpush2.bf16.msra.mxu0 0
      %2293 = vmatprep.subr.bf16.mxu0 0
      %2294 = vmatpush2.bf16.msra.mxu0 0
      %2295 = vmatprep.subr.bf16.mxu0 0
      %2296 = vmatpush2.bf16.msra.mxu0 0
      %2297 = vmatprep.subr.bf16.mxu0 0
      %2298 = vmatpush2.bf16.msra.mxu0 0
      %2299 = vmatprep.mubr.bf16.mxu0 0
      %2300 = vmatmul.mubr.bf16.gmra.mxu0 %v985
      %v2301 = vpop.f32.mrf.mxu0
      %v2302 = vadd.f32 0.0, %v2301
      %v2303 = vpop.f32.mrf.mxu0
      %v2304 = vpop.f32.mrf.mxu0
      %v2305 = vadd.f32 0.0, %v2304
      %v2306 = vpop.f32.mrf.mxu0
      %2307 = vmatprep.mubr.bf16.mxu0 0
      %2308 = vmatmul.mubr.bf16.gmra.mxu0 %v988
      %v2309 = vpop.f32.mrf.mxu0
      %v2310 = vadd.f32 0.0, %v2309
      %v2311 = vpop.f32.mrf.mxu0
      %v2312 = vpop.f32.mrf.mxu0
      %v2313 = vadd.f32 0.0, %v2312
      %v2314 = vpop.f32.mrf.mxu0
      %2315 = vmatprep.mubr.bf16.mxu0 0
      %2316 = vmatmul.mubr.bf16.gmra.mxu0 %v991
      %v2317 = vpop.f32.mrf.mxu0
      %v2318 = vadd.f32 0.0, %v2317
      %v2319 = vpop.f32.mrf.mxu0
      %v2320 = vpop.f32.mrf.mxu0
      %v2321 = vadd.f32 0.0, %v2320
      %v2322 = vpop.f32.mrf.mxu0
      %2323 = vmatprep.mubr.bf16.mxu0 0
      %2324 = vmatmul.mubr.bf16.gmra.mxu0 %v994
      %v2325 = vpop.f32.mrf.mxu0
      %v2326 = vadd.f32 0.0, %v2325
      %v2327 = vpop.f32.mrf.mxu0
      %v2328 = vpop.f32.mrf.mxu0
      %v2329 = vadd.f32 0.0, %v2328
      %v2330 = vpop.f32.mrf.mxu0
      %2331 = vmatprep.mubr.bf16.mxu0 0
      %2332 = vmatmul.mubr.bf16.gmra.mxu0 %v997
      %v2333 = vpop.f32.mrf.mxu0
      %v2334 = vadd.f32 0.0, %v2333
      %v2335 = vpop.f32.mrf.mxu0
      %v2336 = vpop.f32.mrf.mxu0
      %v2337 = vadd.f32 0.0, %v2336
      %v2338 = vpop.f32.mrf.mxu0
      %2339 = vmatprep.mubr.bf16.mxu0 0
      %2340 = vmatmul.mubr.bf16.gmra.mxu0 %v1000
      %v2341 = vpop.f32.mrf.mxu0
      %v2342 = vadd.f32 0.0, %v2341
      %v2343 = vpop.f32.mrf.mxu0
      %v2344 = vpop.f32.mrf.mxu0
      %v2345 = vadd.f32 0.0, %v2344
      %v2346 = vpop.f32.mrf.mxu0
      %2347 = vmatprep.mubr.bf16.mxu0 0
      %2348 = vmatmul.mubr.bf16.gmra.mxu0 %v1003
      %v2349 = vpop.f32.mrf.mxu0
      %v2350 = vadd.f32 0.0, %v2349
      %v2351 = vpop.f32.mrf.mxu0
      %v2352 = vpop.f32.mrf.mxu0
      %v2353 = vadd.f32 0.0, %v2352
      %v2354 = vpop.f32.mrf.mxu0
      %2355 = vmatprep.mubr.bf16.mxu0 0
      %2356 = vmatmul.mubr.bf16.gmra.mxu0 %v1006
      %v2357 = vpop.f32.mrf.mxu0
      %v2358 = vadd.f32 0.0, %v2357
      %v2359 = vpop.f32.mrf.mxu0
      %v2360 = vpop.f32.mrf.mxu0
      %v2361 = vadd.f32 0.0, %v2360
      %v2362 = vpop.f32.mrf.mxu0
      %2363 = vmatprep.mubr.bf16.mxu0 0
      %2364 = vmatmul.mubr.bf16.gmra.mxu0 %v1009
      %v2365 = vpop.f32.mrf.mxu0
      %v2366 = vadd.f32 0.0, %v2365
      %v2367 = vpop.f32.mrf.mxu0
      %v2368 = vpop.f32.mrf.mxu0
      %v2369 = vadd.f32 0.0, %v2368
      %v2370 = vpop.f32.mrf.mxu0
      %2371 = vmatprep.mubr.bf16.mxu0 0
      %2372 = vmatmul.mubr.bf16.gmra.mxu0 %v1012
      %v2373 = vpop.f32.mrf.mxu0
      %v2374 = vadd.f32 0.0, %v2373
      %v2375 = vpop.f32.mrf.mxu0
      %v2376 = vpop.f32.mrf.mxu0
      %v2377 = vadd.f32 0.0, %v2376
      %v2378 = vpop.f32.mrf.mxu0
      %2379 = vmatprep.mubr.bf16.mxu0 0
      %2380 = vmatmul.mubr.bf16.gmra.mxu0 %v1015
      %v2381 = vpop.f32.mrf.mxu0
      %v2382 = vadd.f32 0.0, %v2381
      %v2383 = vpop.f32.mrf.mxu0
      %v2384 = vpop.f32.mrf.mxu0
      %v2385 = vadd.f32 0.0, %v2384
      %v2386 = vpop.f32.mrf.mxu0
      %2387 = vmatprep.mubr.bf16.mxu0 0
      %2388 = vmatmul.mubr.bf16.gmra.mxu0 %v1018
      %v2389 = vpop.f32.mrf.mxu0
      %v2390 = vadd.f32 0.0, %v2389
      %v2391 = vpop.f32.mrf.mxu0
      %v2392 = vpop.f32.mrf.mxu0
      %v2393 = vadd.f32 0.0, %v2392
      %v2394 = vpop.f32.mrf.mxu0
      %2395 = vmatprep.mubr.bf16.mxu0 0
      %2396 = vmatmul.mubr.bf16.gmra.mxu0 %v1021
      %v2397 = vpop.f32.mrf.mxu0
      %v2398 = vadd.f32 0.0, %v2397
      %v2399 = vpop.f32.mrf.mxu0
      %v2400 = vpop.f32.mrf.mxu0
      %v2401 = vadd.f32 0.0, %v2400
      %v2402 = vpop.f32.mrf.mxu0
      %2403 = vmatprep.mubr.bf16.mxu0 0
      %2404 = vmatmul.mubr.bf16.gmra.mxu0 %v1024
      %v2405 = vpop.f32.mrf.mxu0
      %v2406 = vadd.f32 0.0, %v2405
      %v2407 = vpop.f32.mrf.mxu0
      %v2408 = vpop.f32.mrf.mxu0
      %v2409 = vadd.f32 0.0, %v2408
      %v2410 = vpop.f32.mrf.mxu0
      %2411 = vmatprep.mubr.bf16.mxu0 0
      %2412 = vmatmul.mubr.bf16.gmra.mxu0 %v1643
      %v2413 = vpop.f32.mrf.mxu0
      %v2414 = vadd.f32 0.0, %v2413
      %v2415 = vpop.f32.mrf.mxu0
      %v2416 = vpop.f32.mrf.mxu0
      %v2417 = vadd.f32 0.0, %v2416
      %v2418 = vpop.f32.mrf.mxu0
      %2419 = vmatprep.mubr.bf16.mxu0 0
      %2420 = vmatmul.mubr.bf16.gmra.mxu0 %v2262
      %v2421 = vpop.f32.mrf.mxu0
      %v2422 = vadd.f32 0.0, %v2421
      %v2423 = vpop.f32.mrf.mxu0
      %v2424 = vpop.f32.mrf.mxu0
      %v2425 = vadd.f32 0.0, %v2424
      %v2426 = vpop.f32.mrf.mxu0
      %2427 = vdwg.mxu0
      %v2428 = vadd.f32 %v2222, %v2302
      %v2429 = vadd.f32 %v2223, %v2305
      %v2430 = vadd.f32 %v2224, %v2310
      %v2431 = vadd.f32 %v2225, %v2313
      %v2432 = vadd.f32 %v2226, %v2318
      %v2433 = vadd.f32 %v2227, %v2321
      %v2434 = vadd.f32 %v2228, %v2326
      %v2435 = vadd.f32 %v2229, %v2329
      %v2436 = vadd.f32 %v2230, %v2334
      %v2437 = vadd.f32 %v2231, %v2337
      %v2438 = vadd.f32 %v2232, %v2342
      %v2439 = vadd.f32 %v2233, %v2345
      %v2440 = vadd.f32 %v2234, %v2350
      %v2441 = vadd.f32 %v2235, %v2353
      %v2442 = vadd.f32 %v2236, %v2358
      %v2443 = vadd.f32 %v2237, %v2361
      %v2444 = vadd.f32 %v2238, %v2366
      %v2445 = vadd.f32 %v2239, %v2369
      %v2446 = vadd.f32 %v2240, %v2374
      %v2447 = vadd.f32 %v2241, %v2377
      %v2448 = vadd.f32 %v2242, %v2382
      %v2449 = vadd.f32 %v2243, %v2385
      %v2450 = vadd.f32 %v2244, %v2390
      %v2451 = vadd.f32 %v2245, %v2393
      %v2452 = vadd.f32 %v2246, %v2398
      %v2453 = vadd.f32 %v2247, %v2401
      %v2454 = vadd.f32 %v2248, %v2406
      %v2455 = vadd.f32 %v2249, %v2409
      %v2456 = vadd.f32 %v2250, %v2414
      %v2457 = vadd.f32 %v2251, %v2417
      %v2458 = vadd.f32 %v2252, %v2422
      %v2459 = vadd.f32 %v2253, %v2425
      %v2460 = vld [vmem:[%s2] sm:$0x1]
      %v2462 = vlaneseq
      %v2463 = vshrl.u32 %v2462, 7
      %v2464 = vsub.s32 0, %v2463
      %v2465 = vrot.slane %v2460, %v2464
      %v2467 = vmul.f32 %v2428, %v2465
      %v2468 = vmul.f32 %v2429, %v2465
      %v2469 = vmul.f32 %v2430, %v2465
      %v2470 = vmul.f32 %v2431, %v2465
      %v2471 = vmul.f32 %v2432, %v2465
      %v2472 = vmul.f32 %v2433, %v2465
      %v2473 = vmul.f32 %v2434, %v2465
      %v2474 = vmul.f32 %v2435, %v2465
      %v2475 = vmul.f32 %v2436, %v2465
      %v2476 = vmul.f32 %v2437, %v2465
      %v2477 = vmul.f32 %v2438, %v2465
      %v2478 = vmul.f32 %v2439, %v2465
      %v2479 = vmul.f32 %v2440, %v2465
      %v2480 = vmul.f32 %v2441, %v2465
      %v2481 = vmul.f32 %v2442, %v2465
      %v2482 = vmul.f32 %v2443, %v2465
      %v2483 = vmul.f32 %v2444, %v2465
      %v2484 = vmul.f32 %v2445, %v2465
      %v2485 = vmul.f32 %v2446, %v2465
      %v2486 = vmul.f32 %v2447, %v2465
      %v2487 = vmul.f32 %v2448, %v2465
      %v2488 = vmul.f32 %v2449, %v2465
      %v2489 = vmul.f32 %v2450, %v2465
      %v2490 = vmul.f32 %v2451, %v2465
      %v2491 = vmul.f32 %v2452, %v2465
      %v2492 = vmul.f32 %v2453, %v2465
      %v2493 = vmul.f32 %v2454, %v2465
      %v2494 = vmul.f32 %v2455, %v2465
      %v2495 = vmul.f32 %v2456, %v2465
      %v2496 = vmul.f32 %v2457, %v2465
      %v2497 = vmul.f32 %v2458, %v2465
      %v2498 = vmul.f32 %v2459, %v2465
      %v2499 = vld [vmem:[%s3] sm:$0x1]
      %v2501 = vlaneseq
      %v2502 = vshrl.u32 %v2501, 7
      %v2503 = vsub.s32 0, %v2502
      %v2504 = vrot.slane %v2499, %v2503
      %v2506 = vadd.f32 %v2467, %v2504
      %v2507 = vadd.f32 %v2468, %v2504
      %v2508 = vadd.f32 %v2469, %v2504
      %v2509 = vadd.f32 %v2470, %v2504
      %v2510 = vadd.f32 %v2471, %v2504
      %v2511 = vadd.f32 %v2472, %v2504
      %v2512 = vadd.f32 %v2473, %v2504
      %v2513 = vadd.f32 %v2474, %v2504
      %v2514 = vadd.f32 %v2475, %v2504
      %v2515 = vadd.f32 %v2476, %v2504
      %v2516 = vadd.f32 %v2477, %v2504
      %v2517 = vadd.f32 %v2478, %v2504
      %v2518 = vadd.f32 %v2479, %v2504
      %v2519 = vadd.f32 %v2480, %v2504
      %v2520 = vadd.f32 %v2481, %v2504
      %v2521 = vadd.f32 %v2482, %v2504
      %v2522 = vadd.f32 %v2483, %v2504
      %v2523 = vadd.f32 %v2484, %v2504
      %v2524 = vadd.f32 %v2485, %v2504
      %v2525 = vadd.f32 %v2486, %v2504
      %v2526 = vadd.f32 %v2487, %v2504
      %v2527 = vadd.f32 %v2488, %v2504
      %v2528 = vadd.f32 %v2489, %v2504
      %v2529 = vadd.f32 %v2490, %v2504
      %v2530 = vadd.f32 %v2491, %v2504
      %v2531 = vadd.f32 %v2492, %v2504
      %v2532 = vadd.f32 %v2493, %v2504
      %v2533 = vadd.f32 %v2494, %v2504
      %v2534 = vadd.f32 %v2495, %v2504
      %v2535 = vadd.f32 %v2496, %v2504
      %v2536 = vadd.f32 %v2497, %v2504
      %v2537 = vadd.f32 %v2498, %v2504
      %v2538 = vmax.f32 %v2506, 0.0
      %v2539 = vmax.f32 %v2507, 0.0
      %v2540 = vmax.f32 %v2508, 0.0
      %v2541 = vmax.f32 %v2509, 0.0
      %v2542 = vmax.f32 %v2510, 0.0
      %v2543 = vmax.f32 %v2511, 0.0
      %v2544 = vmax.f32 %v2512, 0.0
      %v2545 = vmax.f32 %v2513, 0.0
      %v2546 = vmax.f32 %v2514, 0.0
      %v2547 = vmax.f32 %v2515, 0.0
      %v2548 = vmax.f32 %v2516, 0.0
      %v2549 = vmax.f32 %v2517, 0.0
      %v2550 = vmax.f32 %v2518, 0.0
      %v2551 = vmax.f32 %v2519, 0.0
      %v2552 = vmax.f32 %v2520, 0.0
      %v2553 = vmax.f32 %v2521, 0.0
      %v2554 = vmax.f32 %v2522, 0.0
      %v2555 = vmax.f32 %v2523, 0.0
      %v2556 = vmax.f32 %v2524, 0.0
      %v2557 = vmax.f32 %v2525, 0.0
      %v2558 = vmax.f32 %v2526, 0.0
      %v2559 = vmax.f32 %v2527, 0.0
      %v2560 = vmax.f32 %v2528, 0.0
      %v2561 = vmax.f32 %v2529, 0.0
      %v2562 = vmax.f32 %v2530, 0.0
      %v2563 = vmax.f32 %v2531, 0.0
      %v2564 = vmax.f32 %v2532, 0.0
      %v2565 = vmax.f32 %v2533, 0.0
      %v2566 = vmax.f32 %v2534, 0.0
      %v2567 = vmax.f32 %v2535, 0.0
      %v2568 = vmax.f32 %v2536, 0.0
      %v2569 = vmax.f32 %v2537, 0.0
      %2570 = vst.msk [vmem:[%s197] sm:$0xff] %vm485, %v2538
      %2571 = vst.msk [vmem:[%s197 + $0x8] sm:$0xff] %vm485, %v2539
      %2572 = vst.msk [vmem:[%s197 + $0x10] sm:$0xff] %vm485, %v2540
      %2573 = vst.msk [vmem:[%s197 + $0x18] sm:$0xff] %vm485, %v2541
      %2574 = vst.msk [vmem:[%s197 + $0x20] sm:$0xff] %vm485, %v2542
      %2575 = vst.msk [vmem:[%s197 + $0x28] sm:$0xff] %vm485, %v2543
      %2576 = vst.msk [vmem:[%s197 + $0x30] sm:$0xff] %vm485, %v2544
      %2577 = vst.msk [vmem:[%s197 + $0x38] sm:$0xff] %vm485, %v2545
      %2578 = vst.msk [vmem:[%s197 + $0x40] sm:$0xff] %vm485, %v2546
      %2579 = vst.msk [vmem:[%s197 + $0x48] sm:$0xff] %vm485, %v2547
      %2580 = vst.msk [vmem:[%s197 + $0x50] sm:$0xff] %vm485, %v2548
      %2581 = vst.msk [vmem:[%s197 + $0x58] sm:$0xff] %vm485, %v2549
      %2582 = vst.msk [vmem:[%s197 + $0x60] sm:$0xff] %vm485, %v2550
      %2583 = vst.msk [vmem:[%s197 + $0x68] sm:$0xff] %vm485, %v2551
      %2584 = vst.msk [vmem:[%s197 + $0x70] sm:$0xff] %vm485, %v2552
      %2585 = vst.msk [vmem:[%s197 + $0x78] sm:$0xff] %vm485, %v2553
      %2586 = vst.msk [vmem:[%s197 + $0x80] sm:$0xff] %vm485, %v2554
      %2587 = vst.msk [vmem:[%s197 + $0x88] sm:$0xff] %vm485, %v2555
      %2588 = vst.msk [vmem:[%s197 + $0x90] sm:$0xff] %vm485, %v2556
      %2589 = vst.msk [vmem:[%s197 + $0x98] sm:$0xff] %vm485, %v2557
      %2590 = vst.msk [vmem:[%s197 + $0xa0] sm:$0xff] %vm485, %v2558
      %2591 = vst.msk [vmem:[%s197 + $0xa8] sm:$0xff] %vm485, %v2559
      %2592 = vst.msk [vmem:[%s197 + $0xb0] sm:$0xff] %vm485, %v2560
      %2593 = vst.msk [vmem:[%s197 + $0xb8] sm:$0xff] %vm485, %v2561
      %2594 = vst.msk [vmem:[%s197 + $0xc0] sm:$0xff] %vm485, %v2562
      %2595 = vst.msk [vmem:[%s197 + $0xc8] sm:$0xff] %vm485, %v2563
      %2596 = vst.msk [vmem:[%s197 + $0xd0] sm:$0xff] %vm485, %v2564
      %2597 = vst.msk [vmem:[%s197 + $0xd8] sm:$0xff] %vm485, %v2565
      %2598 = vst.msk [vmem:[%s197 + $0xe0] sm:$0xff] %vm485, %v2566
      %2599 = vst.msk [vmem:[%s197 + $0xe8] sm:$0xff] %vm485, %v2567
      %2600 = vst.msk [vmem:[%s197 + $0xf0] sm:$0xff] %vm485, %v2568
      %2601 = vst.msk [vmem:[%s197 + $0xf8] sm:$0xff] %vm485, %v2569
      %p2602 = scmp.lt.s32.totalorder %s15, 1
      %s2603 = scalar_select %p2602, %s15, 1
      %s2604 = smul.addr %s2603, 32
      %s2605 = smul.addr %s2604, 8
      %s2606 = scalar_lea.vmem %s4, %s2605
      // Predicated region
      $region37: #{inception_sparse_forward.8} parent=35 // pred_check
        %p2607 = pneg %p122
      $region38: #{inception_sparse_forward.8} parent=35 // pred_check_branch
        %2609 = sbr.rel (%p2607) target = $region40
      $region39: #{inception_sparse_forward.8} parent=35 // pred_region
        _
      $region40: #{inception_sparse_forward.8} parent=35 // pred_fallthru
        _
    $region36: #{inception_sparse_forward.8} parent=5 // pred_fallthru
      _
    %p2610 = scmp.le.s32.totalorder 2, %s10
    // Predicated region
    $region41: #{inception_sparse_forward.8} parent=5 // pred_check
      %p2611 = pneg %p2610
    $region42: #{inception_sparse_forward.8} parent=5 // pred_check_branch
      %2613 = sbr.rel (%p2611) target = $region44
    $region43: #{inception_sparse_forward.8} parent=5 // pred_region
      %s2614 = ssub.s32 %s10, 2
      // Predicated region
      $region45: #{inception_sparse_forward.8} parent=43 // pred_check
        %p2615 = pneg %p128
      $region46: #{inception_sparse_forward.8} parent=43 // pred_check_branch
        %2617 = sbr.rel (%p2615) target = $region48
      $region47: #{inception_sparse_forward.8} parent=43 // pred_region
        %p2618 = scmp.lt.s32.totalorder %s16, 1
        %s2619 = scalar_select %p2618, %s16, 1
        %s2620 = smul.addr %s2619, 32
        %s2621 = smul.addr %s2620, 8
        %s2622 = scalar_lea.vmem %s4, %s2621
      $region48: #{inception_sparse_forward.8} parent=43 // pred_fallthru
        _
    $region44: #{inception_sparse_forward.8} parent=5 // pred_fallthru
      _
  $region6: #{inception_sparse_forward.8} parent=0 // loop_footer
    %s14 = sadd.s32 1, %s10
  $region7: #{inception_sparse_forward.8} parent=0 // loop_footer_branch
    %9 = sbr.rel target = $region3
  $region8: #{inception_sparse_forward.8} parent=0 // loop_exit
    _

</llo_original>
